<compile_context>
chip_gen: v7x
topology: tpu7x:2x2x1
jax: 0.10.0
libtpu: 0.0.40
codegen_flags: <defaults>
</compile_context>

<pallas_src>
import numpy as np
import jax
import jax.numpy as jnp
from jax.experimental import pallas as pl
from jax.experimental.pallas import tpu as pltpu


# ----------------------------------------------------------------------------
# Pallas kernel: one grid step == Bt batch elements, full forward pass.
# ----------------------------------------------------------------------------
def _famifm_kernel(
    xl_ref, xm_ref, xs_ref, xn_ref,
    w0_ref, b0_ref,
    k1_ref, c1_ref, k2_ref, c2_ref, k3_ref, c3_ref,
    wf_ref, bf_ref,
    o_ref,
):
    Bt, H, W, Cs = xs_ref.shape
    M = Bt * H * W
    Ep = w0_ref.shape[1]

    def avg_pool(x_ref):
        # Exact adaptive avg-pool for divisible ratios: reshape + unrolled VPU adds,
        # f32 accumulation.  No pooling matrices, no per-batch matmul loop.
        _, Hi, Wi, C = x_ref.shape
        rh, rw = Hi // H, Wi // W
        x = x_ref[...]
        xh = x.reshape(Bt, H, rh, Wi, C)           # split H only; (Wi, C) layout untouched
        sh = xh[:, :, 0].astype(jnp.float32)
        for j in range(1, rh):
            sh = sh + xh[:, :, j].astype(jnp.float32)
        sw = sh.reshape(Bt, H, W, rw, C)           # split W; lane dim C untouched
        s = sw[:, :, :, 0]
        for j in range(1, rw):
            s = s + sw[:, :, :, j]
        return (s * (1.0 / (rh * rw))).astype(jnp.bfloat16).reshape(M, C)

    def upsample2x(x_ref):
        # Exact bilinear (align_corners=False) 2x upsample as a fixed 0.25/0.75
        # stencil + even/odd interleave.  Pure VPU, no kron matrix / matmul.
        _, Hn, Wn, C = x_ref.shape
        if (Hn, Wn) == (H, W):
            return x_ref[...].reshape(M, C)
        x = x_ref[...].astype(jnp.float32)
        xp = jnp.concatenate([x[:, :, :1], x[:, :, :-1]], axis=2)   # prev col (edge clamp)
        xq = jnp.concatenate([x[:, :, 1:], x[:, :, -1:]], axis=2)   # next col (edge clamp)
        ev = 0.25 * xp + 0.75 * x
        od = 0.75 * x + 0.25 * xq
        xw = jnp.stack([ev, od], axis=3).reshape(Bt, Hn, 2 * Wn, C)
        yp = jnp.concatenate([xw[:, :1], xw[:, :-1]], axis=1)       # prev row (edge clamp)
        yq = jnp.concatenate([xw[:, 1:], xw[:, -1:]], axis=1)       # next row (edge clamp)
        ev = 0.25 * yp + 0.75 * xw
        od = 0.75 * xw + 0.25 * yq
        out = jnp.stack([ev, od], axis=2).reshape(Bt, 2 * Hn, 2 * Wn, C)
        return out.astype(jnp.bfloat16).reshape(M, C)

    # low_FAM: resize to (H, W) and concat on channels -- all bf16, no f32 round trips.
    xs = xs_ref[...].reshape(M, Cs)
    xl = avg_pool(xl_ref)
    xm = avg_pool(xm_ref)
    xn = upsample2x(xn_ref)
    fused = jnp.concatenate([xl, xm, xs, xn], axis=-1)              # (M, fusion_in) bf16

    # low_IFM stage 1: fused 1x1 Conv(+BN folded) + SiLU -> one MXU dot (K = fusion_in).
    y = jnp.dot(fused, w0_ref[...], preferred_element_type=jnp.float32) + b0_ref[...]
    y = y * jax.nn.sigmoid(y)                                       # SiLU (f32)

    def rep_block(y2d, k_ref, b_ref):
        # Folded RepVGG block as one im2col matmul (K = 9*Ep) + ReLU.
        # im2col is built entirely in bf16 and Ep is 128-padded, so every concat
        # boundary is vreg-aligned and the matmul is lane/column dense.
        x = y2d.astype(jnp.bfloat16).reshape(Bt, H, W, Ep)
        zr = jnp.zeros((Bt, 1, W, Ep), jnp.bfloat16)
        xp = jnp.concatenate([zr, x, zr], axis=1)                   # (Bt, H+2, W, Ep)
        zc = jnp.zeros((Bt, H + 2, 1, Ep), jnp.bfloat16)
        xp = jnp.concatenate([zc, xp, zc], axis=2)                  # (Bt, H+2, W+2, Ep)
        cols = [xp[:, dy:dy + H, dx:dx + W, :]
                for dy in range(3) for dx in range(3)]              # 9 shifted views
        col = jnp.concatenate(cols, axis=-1).reshape(M, 9 * Ep)
        acc = jnp.dot(col, k_ref[...], preferred_element_type=jnp.float32) + b_ref[...]
        return jnp.maximum(acc, 0.0)                                # ReLU (f32)

    y = rep_block(y, k1_ref, c1_ref)
    y = rep_block(y, k2_ref, c2_ref)
    y = rep_block(y, k3_ref, c3_ref)

    # Final 1x1 Conv(+BN folded) + SiLU; lane-dense (128-padded) bf16 store.
    z = jnp.dot(y.astype(jnp.bfloat16), wf_ref[...],
                preferred_element_type=jnp.float32) + bf_ref[...]
    z = z * jax.nn.sigmoid(z)
    o_ref[...] = z.reshape(Bt, H * W, o_ref.shape[2]).astype(o_ref.dtype)


# ----------------------------------------------------------------------------
# Resize matrices (used by the pure-JAX reference only).
# ----------------------------------------------------------------------------
def adaptive_avgpool_matrix(out_size, in_size):
    m = np.zeros((out_size, in_size), np.float32)
    for i in range(out_size):
        s = (i * in_size) // out_size
        e = -((-(i + 1) * in_size) // out_size)
        m[i, s:e] = 1.0 / (e - s)
    return m


def bilinear_matrix(out_size, in_size):
    m = np.zeros((out_size, in_size), np.float32)
    scale = in_size / out_size
    for i in range(out_size):
        src = max((i + 0.5) * scale - 0.5, 0.0)
        j0 = min(int(np.floor(src)), in_size - 1)
        j1 = min(j0 + 1, in_size - 1)
        f = src - j0
        m[i, j0] += 1.0 - f
        m[i, j1] += f
    return m


# ----------------------------------------------------------------------------
# Deterministic parameter setup with BN / RepVGG folding (eval-mode exact).
# ----------------------------------------------------------------------------
_EPS = 1e-5


def _rand_bn(key, c):
    k1, k2, k3, k4 = jax.random.split(key, 4)
    gamma = jax.random.uniform(k1, (c,), jnp.float32, 0.5, 1.5)
    beta = 0.1 * jax.random.normal(k2, (c,), jnp.float32)
    mean = 0.1 * jax.random.normal(k3, (c,), jnp.float32)
    var = jax.random.uniform(k4, (c,), jnp.float32, 0.5, 1.5)
    return gamma, beta, mean, var


def _rand_conv_bn(key, cout, cin, ksize):
    kw, kb = jax.random.split(key)
    fan_in = cin * ksize * ksize
    w = jax.random.normal(kw, (cout, cin, ksize, ksize), jnp.float32) / np.sqrt(fan_in)
    return w, _rand_bn(kb, cout)


def fold_conv_bn(w, gamma, beta, mean, var, eps=_EPS):
    scale = gamma / jnp.sqrt(var + eps)
    wf = w * scale[:, None, None, None]
    bf = beta - mean * scale
    return wf, bf


def fold_repvgg(key, c, eps=_EPS):
    kd, k1, ki = jax.random.split(key, 3)
    wd, bnd = _rand_conv_bn(kd, c, c, 3)
    w1, bn1 = _rand_conv_bn(k1, c, c, 1)
    bni = _rand_bn(ki, c)
    Kd, bd = fold_conv_bn(wd, *bnd, eps)
    K1, b1 = fold_conv_bn(w1, *bn1, eps)
    K1 = jnp.pad(K1, ((0, 0), (0, 0), (1, 1), (1, 1)))
    wid = jnp.zeros((c, c, 3, 3), jnp.float32).at[
        jnp.arange(c), jnp.arange(c), 1, 1].set(1.0)
    Ki, bi = fold_conv_bn(wid, *bni, eps)
    K = Kd + K1 + Ki
    b = bd + b1 + bi
    # (Cout, Cin, 3, 3) -> HWIO (3, 3, Cin, Cout) for NHWC compute.
    return jnp.transpose(K, (2, 3, 1, 0)), b.reshape(1, c)


def init_params(key, fusion_in, embed_dim_p, out_ch, fuse_block_num=3):
    ks = jax.random.split(key, 2 + fuse_block_num)
    p = {}
    w, bn = _rand_conv_bn(ks[0], embed_dim_p, fusion_in, 1)
    wf, bf = fold_conv_bn(w, *bn)
    p["w0"] = jnp.transpose(wf[:, :, 0, 0])          # (Cin_total, E)
    p["b0"] = bf.reshape(1, embed_dim_p)
    p["rep"] = [fold_repvgg(ks[1 + i], embed_dim_p) for i in range(fuse_block_num)]
    w, bn = _rand_conv_bn(ks[1 + fuse_block_num], out_ch, embed_dim_p, 1)
    wf, bf = fold_conv_bn(w, *bn)
    p["wf"] = jnp.transpose(wf[:, :, 0, 0])          # (E, out_ch)
    p["bf"] = bf.reshape(1, out_ch)
    return p


# ----------------------------------------------------------------------------
# Wrapper: NCHW in / NCHW out.  Packs weights to bf16 with E padded to 128,
# pads output channels to a 128 multiple, picks a batch tile with >=2 grid
# steps, and does channel split + NCHW transpose in XLA.
# ----------------------------------------------------------------------------
def famifm_forward(x_tuple, params, trans_channels, block_batch=None):
    xl, xm, xs, xn = x_tuple                                         # NCHW
    to_nhwc = lambda a: jnp.transpose(a, (0, 2, 3, 1)).astype(jnp.bfloat16)
    xl, xm, xs, xn = map(to_nhwc, (xl, xm, xs, xn))
    B, H, W, Cs = xs.shape
    N = H * W

    # Gold-YOLO low-branch geometry: x_l / x_m pool down by integer ratios and
    # x_n is exactly 2x upsampled (or already at target size).
    # TODO(synk): generic non-divisible adaptive_avg_pool2d bins / arbitrary
    # bilinear scales would need a separable matrix-resize path (not included).
    assert xl.shape[1] % H == 0 and xl.shape[2] % W == 0
    assert xm.shape[1] % H == 0 and xm.shape[2] % W == 0
    assert ((xn.shape[1], xn.shape[2]) == (H, W)
            or (2 * xn.shape[1], 2 * xn.shape[2]) == (H, W))

    # Batch tile: >=2 grid steps when possible (keeps both v7x TensorCores fed
    # via the "parallel" axis) while capping rows per step.
    if block_batch is None:
        cap = B if B == 1 else B // 2
        block_batch = 1
        for c in range(1, cap + 1):
            if B % c == 0 and c * N <= 2048:
                block_batch = c
    Bt = block_batch
    assert B % Bt == 0, "block_batch must divide batch"

    # ---- weight packing: bf16 MXU operands, f32 biases, E padded to 128 ----
    E = params["w0"].shape[1]
    Ep = ((E + 127) // 128) * 128
    Cin = params["w0"].shape[0]
    assert Cin == xl.shape[3] + xm.shape[3] + Cs + xn.shape[3]

    w0 = jnp.zeros((Cin, Ep), jnp.bfloat16).at[:, :E].set(
        params["w0"].astype(jnp.bfloat16))
    b0 = jnp.zeros((1, Ep), jnp.float32).at[:, :E].set(params["b0"])

    def pack_rep(K, b):
        Kp = jnp.zeros((3, 3, Ep, Ep), jnp.float32).at[:, :, :E, :E].set(K)
        return (Kp.reshape(9 * Ep, Ep).astype(jnp.bfloat16),
                jnp.zeros((1, Ep), jnp.float32).at[:, :E].set(b))

    (k1, c1), (k2, c2), (k3, c3) = [pack_rep(K, b) for K, b in params["rep"]]

    Cout = params["wf"].shape[1]
    Cpad = ((Cout + 127) // 128) * 128               # lane-dense output stores
    wf = jnp.zeros((Ep, Cpad), jnp.bfloat16).at[:E, :Cout].set(
        params["wf"].astype(jnp.bfloat16))
    bf = jnp.zeros((1, Cpad), jnp.float32).at[:, :Cout].set(params["bf"])

    inputs = (xl, xm, xs, xn, w0, b0, k1, c1, k2, c2, k3, c3, wf, bf)

    def batch_spec(a):
        return pl.BlockSpec((Bt,) + a.shape[1:], lambda g: (g, 0, 0, 0))

    def const_spec(a):
        nd = a.ndim
        # TODO(synk): pipeline_mode=pl.Buffered(1) here once single-buffering of
        # grid-invariant operands is confirmed stable in the target JAX build.
        return pl.BlockSpec(a.shape, lambda g, _nd=nd: (0,) * _nd)

    in_specs = [batch_spec(a) for a in inputs[:4]] + [const_spec(a) for a in inputs[4:]]
    out_specs = pl.BlockSpec((Bt, N, Cpad), lambda g: (g, 0, 0))
    out_shape = jax.ShapeDtypeStruct((B, N, Cpad), jnp.bfloat16)

    # Explicit VMEM budget from the per-step working set (never below the default).
    # TODO(synk): add a spatial row-tile grid axis (1-row halo) for production H*W.
    Mrows = Bt * N
    blk_in = 2 * Bt * sum(int(np.prod(a.shape[1:])) for a in (xl, xm, xs, xn))
    consts = sum(int(a.size) * a.dtype.itemsize for a in inputs[4:])
    blk_out = Bt * N * Cpad * 2
    tmps = (Mrows * 9 * Ep * 2                     # im2col slab (bf16)
            + Bt * (H + 2) * (W + 2) * Ep * 2      # padded activation (bf16)
            + 4 * Mrows * Ep * 4                   # f32 activations / accumulators
            + 2 * Mrows * Cin * 2)                 # FAM concat + resize temps
    vmem_limit = int(min(56 * 2 ** 20,
                         max(32 * 2 ** 20,
                             2 * (blk_in + blk_out) + 2 * consts + 2 * tmps)))

    z = pl.pallas_call(
        _famifm_kernel,
        out_shape=out_shape,
        grid_spec=pltpu.PrefetchScalarGridSpec(
            num_scalar_prefetch=0,
            grid=(B // Bt,),
            in_specs=in_specs,
            out_specs=out_specs,
        ),
        compiler_params=pltpu.CompilerParams(
            dimension_semantics=("parallel",),
            vmem_limit_bytes=vmem_limit,
        ),
    )(*inputs)

    # Split + NCHW transpose in XLA (keeps the kernel's stores lane-dense).
    z = z.reshape(B, H, W, Cpad)[..., :Cout]
    t0, t1, t2 = trans_channels[0], trans_channels[1], trans_channels[2]
    splits = (z[..., :t0], z[..., t0:t0 + t1], z[..., t0 + t1:t0 + t1 + t2])
    return tuple(jnp.transpose(s, (0, 3, 1, 2)) for s in splits)


# ----------------------------------------------------------------------------
# Pure-JAX f32 reference (independent conv / resize implementation).
# ----------------------------------------------------------------------------
def reference_forward(x_tuple, params, trans_channels):
    xl, xm, xs, xn = x_tuple
    nhwc = lambda a: jnp.transpose(a, (0, 2, 3, 1)).astype(jnp.float32)
    xl, xm, xs, xn = nhwc(xl), nhwc(xm), nhwc(xs), nhwc(xn)
    B, H, W, _ = xs.shape

    def resize(x, mh, mw):
        return jnp.einsum('uh,vw,bhwc->buvc', mh, mw, x)

    mlh = adaptive_avgpool_matrix(H, xl.shape[1])
    mlw = adaptive_avgpool_matrix(W, xl.shape[2])
    mmh = adaptive_avgpool_matrix(H, xm.shape[1])
    mmw = adaptive_avgpool_matrix(W, xm.shape[2])
    mnh = bilinear_matrix(H, xn.shape[1])
    mnw = bilinear_matrix(W, xn.shape[2])

    fused = jnp.concatenate(
        [resize(xl, mlh, mlw), resize(xm, mmh, mmw), xs, resize(xn, mnh, mnw)],
        axis=-1)
    y = jnp.einsum('bhwc,cd->bhwd', fused, params["w0"]) + params["b0"][0]
    y = y * jax.nn.sigmoid(y)
    for K, b in params["rep"]:
        y = jax.lax.conv_general_dilated(
            y, K, (1, 1), 'SAME',
            dimension_numbers=('NHWC', 'HWIO', 'NHWC')) + b[0]
        y = jnp.maximum(y, 0.0)
    z = jnp.einsum('bhwc,cd->bhwd', y, params["wf"]) + params["bf"][0]
    z = z * jax.nn.sigmoid(z)
    t0, t1, t2 = trans_channels[:3]
    splits = (z[..., :t0], z[..., t0:t0 + t1], z[..., t0 + t1:t0 + t1 + t2])
    return tuple(jnp.transpose(s, (0, 3, 1, 2)) for s in splits)


if __name__ == "__main__":
    key = jax.random.PRNGKey(0)

    # Small synthetic config (mirrors FAMIFM(fusion_in, embed_dim_p, 3, trans_channels)).
    B = 2
    Cl, Cm, Cs, Cn = 8, 16, 16, 24
    fusion_in = Cl + Cm + Cs + Cn            # 64
    embed_dim_p = 32
    trans_channels = [16, 32, 48, 64]        # kernel output split into first 3
    H = W = 8

    keys = jax.random.split(key, 5)
    # x = [x_l, x_m, x_s, x_n] in NCHW (multi-scale features, as in Gold-YOLO).
    xl = jax.random.normal(keys[0], (B, Cl, 4 * H, 4 * W), jnp.float32)
    xm = jax.random.normal(keys[1], (B, Cm, 2 * H, 2 * W), jnp.float32)
    xs = jax.random.normal(keys[2], (B, Cs, H, W), jnp.float32)
    xn = jax.random.normal(keys[3], (B, Cn, H // 2, W // 2), jnp.float32)

    params = init_params(keys[4], fusion_in, embed_dim_p, sum(trans_channels[:3]))

    outs = famifm_forward((xl, xm, xs, xn), params, trans_channels)
    outs = jax.block_until_ready(outs)

    # Kernel uses bf16 MXU operands / bf16 output (f32 accumulation); reference
    # is pure f32, so allow a few-percent tolerance for bf16 quantization.
    ref = reference_forward((xl, xm, xs, xn), params, trans_channels)
    for a, b in zip(outs, ref):
        np.testing.assert_allclose(np.asarray(a, dtype=np.float32),
                                   np.asarray(b), rtol=3e-2, atol=3e-2)

    print("KERNEL_OK")
</pallas_src>

<mosaic_0001>
module attributes {stable_mosaic.version = 11 : i64} {
  func.func @_famifm_kernel(%arg0: i32, %arg1: memref<1x32x32x8xbf16, #tpu.memory_space<vmem>>, %arg2: memref<1x16x16x16xbf16, #tpu.memory_space<vmem>>, %arg3: memref<1x8x8x16xbf16, #tpu.memory_space<vmem>>, %arg4: memref<1x4x4x24xbf16, #tpu.memory_space<vmem>>, %arg5: memref<64x128xbf16, #tpu.memory_space<vmem>>, %arg6: memref<1x128xf32, #tpu.memory_space<vmem>>, %arg7: memref<1152x128xbf16, #tpu.memory_space<vmem>>, %arg8: memref<1x128xf32, #tpu.memory_space<vmem>>, %arg9: memref<1152x128xbf16, #tpu.memory_space<vmem>>, %arg10: memref<1x128xf32, #tpu.memory_space<vmem>>, %arg11: memref<1152x128xbf16, #tpu.memory_space<vmem>>, %arg12: memref<1x128xf32, #tpu.memory_space<vmem>>, %arg13: memref<128x128xbf16, #tpu.memory_space<vmem>>, %arg14: memref<1x128xf32, #tpu.memory_space<vmem>>, %arg15: memref<1x64x128xbf16, #tpu.memory_space<vmem>>) attributes {dimension_semantics = [#tpu.dimension_semantics<parallel>], iteration_bounds = array<i64: 2>, scalar_prefetch = 0 : i64, scratch_operands = 0 : i64, tpu.core_type = #tpu.core_type<tc>, window_params = [{transform_indices = @transform_0, window_bounds = array<i64: 1, 32, 32, 8>}, {transform_indices = @transform_1, window_bounds = array<i64: 1, 16, 16, 16>}, {transform_indices = @transform_2, window_bounds = array<i64: 1, 8, 8, 16>}, {transform_indices = @transform_3, window_bounds = array<i64: 1, 4, 4, 24>}, {pipeline_mode = #tpu.pipeline_mode<synchronous>, transform_indices = @transform_4, window_bounds = array<i64: 64, 128>}, {pipeline_mode = #tpu.pipeline_mode<synchronous>, transform_indices = @transform_5, window_bounds = array<i64: 1, 128>}, {pipeline_mode = #tpu.pipeline_mode<synchronous>, transform_indices = @transform_6, window_bounds = array<i64: 1152, 128>}, {pipeline_mode = #tpu.pipeline_mode<synchronous>, transform_indices = @transform_7, window_bounds = array<i64: 1, 128>}, {pipeline_mode = #tpu.pipeline_mode<synchronous>, transform_indices = @transform_8, window_bounds = array<i64: 1152, 128>}, {pipeline_mode = #tpu.pipeline_mode<synchronous>, transform_indices = @transform_9, window_bounds = array<i64: 1, 128>}, {pipeline_mode = #tpu.pipeline_mode<synchronous>, transform_indices = @transform_10, window_bounds = array<i64: 1152, 128>}, {pipeline_mode = #tpu.pipeline_mode<synchronous>, transform_indices = @transform_11, window_bounds = array<i64: 1, 128>}, {pipeline_mode = #tpu.pipeline_mode<synchronous>, transform_indices = @transform_12, window_bounds = array<i64: 128, 128>}, {pipeline_mode = #tpu.pipeline_mode<synchronous>, transform_indices = @transform_13, window_bounds = array<i64: 1, 128>}, {transform_indices = @transform_14, window_bounds = array<i64: 1, 64, 128>}]} {
    %c0 = arith.constant 0 : index
    %c0_0 = arith.constant 0 : index
    %c0_1 = arith.constant 0 : index
    %c0_2 = arith.constant 0 : index
    %0 = vector.load %arg3[%c0, %c0_0, %c0_1, %c0_2] : memref<1x8x8x16xbf16, #tpu.memory_space<vmem>>, vector<1x8x8x16xbf16>
    %1 = vector.shape_cast %0 : vector<1x8x8x16xbf16> to vector<64x16xbf16>
    %c0_3 = arith.constant 0 : index
    %c0_4 = arith.constant 0 : index
    %c0_5 = arith.constant 0 : index
    %c0_6 = arith.constant 0 : index
    %2 = vector.load %arg1[%c0_3, %c0_4, %c0_5, %c0_6] : memref<1x32x32x8xbf16, #tpu.memory_space<vmem>>, vector<1x32x32x8xbf16>
    %3 = vector.shape_cast %2 : vector<1x32x32x8xbf16> to vector<1x8x4x32x8xbf16>
    %4 = vector.extract_strided_slice %3 {offsets = [0, 0, 0, 0, 0], sizes = [1, 8, 1, 32, 8], strides = [1, 1, 1, 1, 1]} : vector<1x8x4x32x8xbf16> to vector<1x8x1x32x8xbf16>
    %5 = vector.shape_cast %4 : vector<1x8x1x32x8xbf16> to vector<1x8x32x8xbf16>
    %6 = arith.extf %5 : vector<1x8x32x8xbf16> to vector<1x8x32x8xf32>
    %7 = vector.extract_strided_slice %3 {offsets = [0, 0, 1, 0, 0], sizes = [1, 8, 1, 32, 8], strides = [1, 1, 1, 1, 1]} : vector<1x8x4x32x8xbf16> to vector<1x8x1x32x8xbf16>
    %8 = vector.shape_cast %7 : vector<1x8x1x32x8xbf16> to vector<1x8x32x8xbf16>
    %9 = arith.extf %8 : vector<1x8x32x8xbf16> to vector<1x8x32x8xf32>
    %10 = arith.addf %6, %9 : vector<1x8x32x8xf32>
    %11 = vector.extract_strided_slice %3 {offsets = [0, 0, 2, 0, 0], sizes = [1, 8, 1, 32, 8], strides = [1, 1, 1, 1, 1]} : vector<1x8x4x32x8xbf16> to vector<1x8x1x32x8xbf16>
    %12 = vector.shape_cast %11 : vector<1x8x1x32x8xbf16> to vector<1x8x32x8xbf16>
    %13 = arith.extf %12 : vector<1x8x32x8xbf16> to vector<1x8x32x8xf32>
    %14 = arith.addf %10, %13 : vector<1x8x32x8xf32>
    %15 = vector.extract_strided_slice %3 {offsets = [0, 0, 3, 0, 0], sizes = [1, 8, 1, 32, 8], strides = [1, 1, 1, 1, 1]} : vector<1x8x4x32x8xbf16> to vector<1x8x1x32x8xbf16>
    %16 = vector.shape_cast %15 : vector<1x8x1x32x8xbf16> to vector<1x8x32x8xbf16>
    %17 = arith.extf %16 : vector<1x8x32x8xbf16> to vector<1x8x32x8xf32>
    %18 = arith.addf %14, %17 : vector<1x8x32x8xf32>
    %19 = vector.shape_cast %18 : vector<1x8x32x8xf32> to vector<1x8x8x4x8xf32>
    %20 = vector.extract_strided_slice %19 {offsets = [0, 0, 0, 0, 0], sizes = [1, 8, 8, 1, 8], strides = [1, 1, 1, 1, 1]} : vector<1x8x8x4x8xf32> to vector<1x8x8x1x8xf32>
    %21 = vector.shape_cast %20 : vector<1x8x8x1x8xf32> to vector<1x8x8x8xf32>
    %22 = vector.extract_strided_slice %19 {offsets = [0, 0, 0, 1, 0], sizes = [1, 8, 8, 1, 8], strides = [1, 1, 1, 1, 1]} : vector<1x8x8x4x8xf32> to vector<1x8x8x1x8xf32>
    %23 = vector.shape_cast %22 : vector<1x8x8x1x8xf32> to vector<1x8x8x8xf32>
    %24 = arith.addf %21, %23 : vector<1x8x8x8xf32>
    %25 = vector.extract_strided_slice %19 {offsets = [0, 0, 0, 2, 0], sizes = [1, 8, 8, 1, 8], strides = [1, 1, 1, 1, 1]} : vector<1x8x8x4x8xf32> to vector<1x8x8x1x8xf32>
    %26 = vector.shape_cast %25 : vector<1x8x8x1x8xf32> to vector<1x8x8x8xf32>
    %27 = arith.addf %24, %26 : vector<1x8x8x8xf32>
    %28 = vector.extract_strided_slice %19 {offsets = [0, 0, 0, 3, 0], sizes = [1, 8, 8, 1, 8], strides = [1, 1, 1, 1, 1]} : vector<1x8x8x4x8xf32> to vector<1x8x8x1x8xf32>
    %29 = vector.shape_cast %28 : vector<1x8x8x1x8xf32> to vector<1x8x8x8xf32>
    %30 = arith.addf %27, %29 : vector<1x8x8x8xf32>
    %cst = arith.constant 6.250000e-02 : f32
    %31 = vector.broadcast %cst : f32 to vector<1x8x8x8xf32>
    %32 = arith.mulf %30, %31 : vector<1x8x8x8xf32>
    %33 = arith.truncf %32 : vector<1x8x8x8xf32> to vector<1x8x8x8xbf16>
    %34 = vector.shape_cast %33 : vector<1x8x8x8xbf16> to vector<64x8xbf16>
    %c0_7 = arith.constant 0 : index
    %c0_8 = arith.constant 0 : index
    %c0_9 = arith.constant 0 : index
    %c0_10 = arith.constant 0 : index
    %35 = vector.load %arg2[%c0_7, %c0_8, %c0_9, %c0_10] : memref<1x16x16x16xbf16, #tpu.memory_space<vmem>>, vector<1x16x16x16xbf16>
    %36 = vector.shape_cast %35 : vector<1x16x16x16xbf16> to vector<1x8x2x16x16xbf16>
    %37 = vector.extract_strided_slice %36 {offsets = [0, 0, 0, 0, 0], sizes = [1, 8, 1, 16, 16], strides = [1, 1, 1, 1, 1]} : vector<1x8x2x16x16xbf16> to vector<1x8x1x16x16xbf16>
    %38 = vector.shape_cast %37 : vector<1x8x1x16x16xbf16> to vector<1x8x16x16xbf16>
    %39 = arith.extf %38 : vector<1x8x16x16xbf16> to vector<1x8x16x16xf32>
    %40 = vector.extract_strided_slice %36 {offsets = [0, 0, 1, 0, 0], sizes = [1, 8, 1, 16, 16], strides = [1, 1, 1, 1, 1]} : vector<1x8x2x16x16xbf16> to vector<1x8x1x16x16xbf16>
    %41 = vector.shape_cast %40 : vector<1x8x1x16x16xbf16> to vector<1x8x16x16xbf16>
    %42 = arith.extf %41 : vector<1x8x16x16xbf16> to vector<1x8x16x16xf32>
    %43 = arith.addf %39, %42 : vector<1x8x16x16xf32>
    %44 = vector.shape_cast %43 : vector<1x8x16x16xf32> to vector<1x8x8x2x16xf32>
    %45 = vector.extract_strided_slice %44 {offsets = [0, 0, 0, 0, 0], sizes = [1, 8, 8, 1, 16], strides = [1, 1, 1, 1, 1]} : vector<1x8x8x2x16xf32> to vector<1x8x8x1x16xf32>
    %46 = vector.shape_cast %45 : vector<1x8x8x1x16xf32> to vector<1x8x8x16xf32>
    %47 = vector.extract_strided_slice %44 {offsets = [0, 0, 0, 1, 0], sizes = [1, 8, 8, 1, 16], strides = [1, 1, 1, 1, 1]} : vector<1x8x8x2x16xf32> to vector<1x8x8x1x16xf32>
    %48 = vector.shape_cast %47 : vector<1x8x8x1x16xf32> to vector<1x8x8x16xf32>
    %49 = arith.addf %46, %48 : vector<1x8x8x16xf32>
    %cst_11 = arith.constant 2.500000e-01 : f32
    %50 = vector.broadcast %cst_11 : f32 to vector<1x8x8x16xf32>
    %51 = arith.mulf %49, %50 : vector<1x8x8x16xf32>
    %52 = arith.truncf %51 : vector<1x8x8x16xf32> to vector<1x8x8x16xbf16>
    %53 = vector.shape_cast %52 : vector<1x8x8x16xbf16> to vector<64x16xbf16>
    %c0_12 = arith.constant 0 : index
    %c0_13 = arith.constant 0 : index
    %c0_14 = arith.constant 0 : index
    %c0_15 = arith.constant 0 : index
    %54 = vector.load %arg4[%c0_12, %c0_13, %c0_14, %c0_15] : memref<1x4x4x24xbf16, #tpu.memory_space<vmem>>, vector<1x4x4x24xbf16>
    %55 = arith.extf %54 : vector<1x4x4x24xbf16> to vector<1x4x4x24xf32>
    %56 = vector.extract_strided_slice %55 {offsets = [0, 0, 0, 0], sizes = [1, 4, 1, 24], strides = [1, 1, 1, 1]} : vector<1x4x4x24xf32> to vector<1x4x1x24xf32>
    %57 = vector.extract_strided_slice %55 {offsets = [0, 0, 0, 0], sizes = [1, 4, 3, 24], strides = [1, 1, 1, 1]} : vector<1x4x4x24xf32> to vector<1x4x3x24xf32>
    %58 = tpu.concatenate %56, %57 in 2 : vector<1x4x1x24xf32>, vector<1x4x3x24xf32> -> vector<1x4x4x24xf32>
    %59 = vector.extract_strided_slice %55 {offsets = [0, 0, 1, 0], sizes = [1, 4, 3, 24], strides = [1, 1, 1, 1]} : vector<1x4x4x24xf32> to vector<1x4x3x24xf32>
    %60 = vector.extract_strided_slice %55 {offsets = [0, 0, 3, 0], sizes = [1, 4, 1, 24], strides = [1, 1, 1, 1]} : vector<1x4x4x24xf32> to vector<1x4x1x24xf32>
    %61 = tpu.concatenate %59, %60 in 2 : vector<1x4x3x24xf32>, vector<1x4x1x24xf32> -> vector<1x4x4x24xf32>
    %cst_16 = arith.constant 2.500000e-01 : f32
    %62 = vector.broadcast %cst_16 : f32 to vector<1x4x4x24xf32>
    %63 = arith.mulf %62, %58 : vector<1x4x4x24xf32>
    %cst_17 = arith.constant 7.500000e-01 : f32
    %64 = vector.broadcast %cst_17 : f32 to vector<1x4x4x24xf32>
    %65 = arith.mulf %64, %55 : vector<1x4x4x24xf32>
    %66 = arith.addf %63, %65 : vector<1x4x4x24xf32>
    %cst_18 = arith.constant 7.500000e-01 : f32
    %67 = vector.broadcast %cst_18 : f32 to vector<1x4x4x24xf32>
    %68 = arith.mulf %67, %55 : vector<1x4x4x24xf32>
    %cst_19 = arith.constant 2.500000e-01 : f32
    %69 = vector.broadcast %cst_19 : f32 to vector<1x4x4x24xf32>
    %70 = arith.mulf %69, %61 : vector<1x4x4x24xf32>
    %71 = arith.addf %68, %70 : vector<1x4x4x24xf32>
    %72 = vector.shape_cast %66 : vector<1x4x4x24xf32> to vector<1x4x4x1x24xf32>
    %73 = vector.shape_cast %71 : vector<1x4x4x24xf32> to vector<1x4x4x1x24xf32>
    %74 = tpu.concatenate %72, %73 in 3 : vector<1x4x4x1x24xf32>, vector<1x4x4x1x24xf32> -> vector<1x4x4x2x24xf32>
    %75 = vector.shape_cast %74 : vector<1x4x4x2x24xf32> to vector<1x4x8x24xf32>
    %76 = vector.extract_strided_slice %75 {offsets = [0, 0, 0, 0], sizes = [1, 1, 8, 24], strides = [1, 1, 1, 1]} : vector<1x4x8x24xf32> to vector<1x1x8x24xf32>
    %77 = vector.extract_strided_slice %75 {offsets = [0, 0, 0, 0], sizes = [1, 3, 8, 24], strides = [1, 1, 1, 1]} : vector<1x4x8x24xf32> to vector<1x3x8x24xf32>
    %78 = tpu.concatenate %76, %77 in 1 : vector<1x1x8x24xf32>, vector<1x3x8x24xf32> -> vector<1x4x8x24xf32>
    %79 = vector.extract_strided_slice %75 {offsets = [0, 1, 0, 0], sizes = [1, 3, 8, 24], strides = [1, 1, 1, 1]} : vector<1x4x8x24xf32> to vector<1x3x8x24xf32>
    %80 = vector.extract_strided_slice %75 {offsets = [0, 3, 0, 0], sizes = [1, 1, 8, 24], strides = [1, 1, 1, 1]} : vector<1x4x8x24xf32> to vector<1x1x8x24xf32>
    %81 = tpu.concatenate %79, %80 in 1 : vector<1x3x8x24xf32>, vector<1x1x8x24xf32> -> vector<1x4x8x24xf32>
    %cst_20 = arith.constant 2.500000e-01 : f32
    %82 = vector.broadcast %cst_20 : f32 to vector<1x4x8x24xf32>
    %83 = arith.mulf %82, %78 : vector<1x4x8x24xf32>
    %cst_21 = arith.constant 7.500000e-01 : f32
    %84 = vector.broadcast %cst_21 : f32 to vector<1x4x8x24xf32>
    %85 = arith.mulf %84, %75 : vector<1x4x8x24xf32>
    %86 = arith.addf %83, %85 : vector<1x4x8x24xf32>
    %cst_22 = arith.constant 7.500000e-01 : f32
    %87 = vector.broadcast %cst_22 : f32 to vector<1x4x8x24xf32>
    %88 = arith.mulf %87, %75 : vector<1x4x8x24xf32>
    %cst_23 = arith.constant 2.500000e-01 : f32
    %89 = vector.broadcast %cst_23 : f32 to vector<1x4x8x24xf32>
    %90 = arith.mulf %89, %81 : vector<1x4x8x24xf32>
    %91 = arith.addf %88, %90 : vector<1x4x8x24xf32>
    %92 = vector.shape_cast %86 : vector<1x4x8x24xf32> to vector<1x4x1x8x24xf32>
    %93 = vector.shape_cast %91 : vector<1x4x8x24xf32> to vector<1x4x1x8x24xf32>
    %94 = tpu.concatenate %92, %93 in 2 : vector<1x4x1x8x24xf32>, vector<1x4x1x8x24xf32> -> vector<1x4x2x8x24xf32>
    %95 = vector.shape_cast %94 : vector<1x4x2x8x24xf32> to vector<1x8x8x24xf32>
    %96 = arith.truncf %95 : vector<1x8x8x24xf32> to vector<1x8x8x24xbf16>
    %97 = vector.shape_cast %96 : vector<1x8x8x24xbf16> to vector<64x24xbf16>
    %98 = tpu.concatenate %34, %53, %1, %97 in 1 : vector<64x8xbf16>, vector<64x16xbf16>, vector<64x16xbf16>, vector<64x24xbf16> -> vector<64x64xbf16>
    %c0_24 = arith.constant 0 : index
    %c0_25 = arith.constant 0 : index
    %99 = vector.load %arg5[%c0_24, %c0_25] : memref<64x128xbf16, #tpu.memory_space<vmem>>, vector<64x128xbf16>
    %cst_26 = arith.constant dense<0.000000e+00> : vector<64x128xf32>
    %100 = tpu.matmul %98, %99, %cst_26 {dimension_numbers = #tpu.dot_dimension_numbers<[1], [0], [0], [1], [0, 0, 1, 1], [], []>} : vector<64x64xbf16>, vector<64x128xbf16>, vector<64x128xf32> -> vector<64x128xf32>
    %c0_27 = arith.constant 0 : index
    %c0_28 = arith.constant 0 : index
    %101 = vector.load %arg6[%c0_27, %c0_28] : memref<1x128xf32, #tpu.memory_space<vmem>>, vector<1x128xf32>
    %102 = vector.broadcast %101 : vector<1x128xf32> to vector<64x128xf32>
    %103 = arith.addf %100, %102 : vector<64x128xf32>
    %104 = arith.negf %103 : vector<64x128xf32>
    %105 = math.exp %104 : vector<64x128xf32>
    %cst_29 = arith.constant 1.000000e+00 : f32
    %106 = vector.broadcast %cst_29 : f32 to vector<64x128xf32>
    %107 = arith.addf %106, %105 : vector<64x128xf32>
    %108 = arith.divf %106, %107 : vector<64x128xf32>
    %109 = arith.mulf %103, %108 : vector<64x128xf32>
    %110 = arith.truncf %109 : vector<64x128xf32> to vector<64x128xbf16>
    %111 = vector.shape_cast %110 : vector<64x128xbf16> to vector<1x8x8x128xbf16>
    %cst_30 = arith.constant 0.000000e+00 : bf16
    %112 = vector.broadcast %cst_30 : bf16 to vector<1x1x8x128xbf16>
    %113 = tpu.concatenate %112, %111, %112 in 1 : vector<1x1x8x128xbf16>, vector<1x8x8x128xbf16>, vector<1x1x8x128xbf16> -> vector<1x10x8x128xbf16>
    %cst_31 = arith.constant 0.000000e+00 : bf16
    %114 = vector.broadcast %cst_31 : bf16 to vector<1x10x1x128xbf16>
    %115 = tpu.concatenate %114, %113, %114 in 2 : vector<1x10x1x128xbf16>, vector<1x10x8x128xbf16>, vector<1x10x1x128xbf16> -> vector<1x10x10x128xbf16>
    %116 = vector.extract_strided_slice %115 {offsets = [0, 0, 0, 0], sizes = [1, 8, 8, 128], strides = [1, 1, 1, 1]} : vector<1x10x10x128xbf16> to vector<1x8x8x128xbf16>
    %117 = vector.extract_strided_slice %115 {offsets = [0, 0, 1, 0], sizes = [1, 8, 8, 128], strides = [1, 1, 1, 1]} : vector<1x10x10x128xbf16> to vector<1x8x8x128xbf16>
    %118 = vector.extract_strided_slice %115 {offsets = [0, 0, 2, 0], sizes = [1, 8, 8, 128], strides = [1, 1, 1, 1]} : vector<1x10x10x128xbf16> to vector<1x8x8x128xbf16>
    %119 = vector.extract_strided_slice %115 {offsets = [0, 1, 0, 0], sizes = [1, 8, 8, 128], strides = [1, 1, 1, 1]} : vector<1x10x10x128xbf16> to vector<1x8x8x128xbf16>
    %120 = vector.extract_strided_slice %115 {offsets = [0, 1, 1, 0], sizes = [1, 8, 8, 128], strides = [1, 1, 1, 1]} : vector<1x10x10x128xbf16> to vector<1x8x8x128xbf16>
    %121 = vector.extract_strided_slice %115 {offsets = [0, 1, 2, 0], sizes = [1, 8, 8, 128], strides = [1, 1, 1, 1]} : vector<1x10x10x128xbf16> to vector<1x8x8x128xbf16>
    %122 = vector.extract_strided_slice %115 {offsets = [0, 2, 0, 0], sizes = [1, 8, 8, 128], strides = [1, 1, 1, 1]} : vector<1x10x10x128xbf16> to vector<1x8x8x128xbf16>
    %123 = vector.extract_strided_slice %115 {offsets = [0, 2, 1, 0], sizes = [1, 8, 8, 128], strides = [1, 1, 1, 1]} : vector<1x10x10x128xbf16> to vector<1x8x8x128xbf16>
    %124 = vector.extract_strided_slice %115 {offsets = [0, 2, 2, 0], sizes = [1, 8, 8, 128], strides = [1, 1, 1, 1]} : vector<1x10x10x128xbf16> to vector<1x8x8x128xbf16>
    %125 = tpu.concatenate %116, %117, %118, %119, %120, %121, %122, %123, %124 in 3 : vector<1x8x8x128xbf16>, vector<1x8x8x128xbf16>, vector<1x8x8x128xbf16>, vector<1x8x8x128xbf16>, vector<1x8x8x128xbf16>, vector<1x8x8x128xbf16>, vector<1x8x8x128xbf16>, vector<1x8x8x128xbf16>, vector<1x8x8x128xbf16> -> vector<1x8x8x1152xbf16>
    %126 = vector.shape_cast %125 : vector<1x8x8x1152xbf16> to vector<64x1152xbf16>
    %c0_32 = arith.constant 0 : index
    %c0_33 = arith.constant 0 : index
    %127 = vector.load %arg7[%c0_32, %c0_33] : memref<1152x128xbf16, #tpu.memory_space<vmem>>, vector<1152x128xbf16>
    %cst_34 = arith.constant dense<0.000000e+00> : vector<64x128xf32>
    %128 = tpu.matmul %126, %127, %cst_34 {dimension_numbers = #tpu.dot_dimension_numbers<[1], [0], [0], [1], [0, 0, 1, 1], [], []>} : vector<64x1152xbf16>, vector<1152x128xbf16>, vector<64x128xf32> -> vector<64x128xf32>
    %c0_35 = arith.constant 0 : index
    %c0_36 = arith.constant 0 : index
    %129 = vector.load %arg8[%c0_35, %c0_36] : memref<1x128xf32, #tpu.memory_space<vmem>>, vector<1x128xf32>
    %130 = vector.broadcast %129 : vector<1x128xf32> to vector<64x128xf32>
    %131 = arith.addf %128, %130 : vector<64x128xf32>
    %cst_37 = arith.constant 0.000000e+00 : f32
    %132 = vector.broadcast %cst_37 : f32 to vector<64x128xf32>
    %133 = arith.maximumf %131, %132 : vector<64x128xf32>
    %134 = arith.truncf %133 : vector<64x128xf32> to vector<64x128xbf16>
    %135 = vector.shape_cast %134 : vector<64x128xbf16> to vector<1x8x8x128xbf16>
    %cst_38 = arith.constant 0.000000e+00 : bf16
    %136 = vector.broadcast %cst_38 : bf16 to vector<1x1x8x128xbf16>
    %137 = tpu.concatenate %136, %135, %136 in 1 : vector<1x1x8x128xbf16>, vector<1x8x8x128xbf16>, vector<1x1x8x128xbf16> -> vector<1x10x8x128xbf16>
    %cst_39 = arith.constant 0.000000e+00 : bf16
    %138 = vector.broadcast %cst_39 : bf16 to vector<1x10x1x128xbf16>
    %139 = tpu.concatenate %138, %137, %138 in 2 : vector<1x10x1x128xbf16>, vector<1x10x8x128xbf16>, vector<1x10x1x128xbf16> -> vector<1x10x10x128xbf16>
    %140 = vector.extract_strided_slice %139 {offsets = [0, 0, 0, 0], sizes = [1, 8, 8, 128], strides = [1, 1, 1, 1]} : vector<1x10x10x128xbf16> to vector<1x8x8x128xbf16>
    %141 = vector.extract_strided_slice %139 {offsets = [0, 0, 1, 0], sizes = [1, 8, 8, 128], strides = [1, 1, 1, 1]} : vector<1x10x10x128xbf16> to vector<1x8x8x128xbf16>
    %142 = vector.extract_strided_slice %139 {offsets = [0, 0, 2, 0], sizes = [1, 8, 8, 128], strides = [1, 1, 1, 1]} : vector<1x10x10x128xbf16> to vector<1x8x8x128xbf16>
    %143 = vector.extract_strided_slice %139 {offsets = [0, 1, 0, 0], sizes = [1, 8, 8, 128], strides = [1, 1, 1, 1]} : vector<1x10x10x128xbf16> to vector<1x8x8x128xbf16>
    %144 = vector.extract_strided_slice %139 {offsets = [0, 1, 1, 0], sizes = [1, 8, 8, 128], strides = [1, 1, 1, 1]} : vector<1x10x10x128xbf16> to vector<1x8x8x128xbf16>
    %145 = vector.extract_strided_slice %139 {offsets = [0, 1, 2, 0], sizes = [1, 8, 8, 128], strides = [1, 1, 1, 1]} : vector<1x10x10x128xbf16> to vector<1x8x8x128xbf16>
    %146 = vector.extract_strided_slice %139 {offsets = [0, 2, 0, 0], sizes = [1, 8, 8, 128], strides = [1, 1, 1, 1]} : vector<1x10x10x128xbf16> to vector<1x8x8x128xbf16>
    %147 = vector.extract_strided_slice %139 {offsets = [0, 2, 1, 0], sizes = [1, 8, 8, 128], strides = [1, 1, 1, 1]} : vector<1x10x10x128xbf16> to vector<1x8x8x128xbf16>
    %148 = vector.extract_strided_slice %139 {offsets = [0, 2, 2, 0], sizes = [1, 8, 8, 128], strides = [1, 1, 1, 1]} : vector<1x10x10x128xbf16> to vector<1x8x8x128xbf16>
    %149 = tpu.concatenate %140, %141, %142, %143, %144, %145, %146, %147, %148 in 3 : vector<1x8x8x128xbf16>, vector<1x8x8x128xbf16>, vector<1x8x8x128xbf16>, vector<1x8x8x128xbf16>, vector<1x8x8x128xbf16>, vector<1x8x8x128xbf16>, vector<1x8x8x128xbf16>, vector<1x8x8x128xbf16>, vector<1x8x8x128xbf16> -> vector<1x8x8x1152xbf16>
    %150 = vector.shape_cast %149 : vector<1x8x8x1152xbf16> to vector<64x1152xbf16>
    %c0_40 = arith.constant 0 : index
    %c0_41 = arith.constant 0 : index
    %151 = vector.load %arg9[%c0_40, %c0_41] : memref<1152x128xbf16, #tpu.memory_space<vmem>>, vector<1152x128xbf16>
    %cst_42 = arith.constant dense<0.000000e+00> : vector<64x128xf32>
    %152 = tpu.matmul %150, %151, %cst_42 {dimension_numbers = #tpu.dot_dimension_numbers<[1], [0], [0], [1], [0, 0, 1, 1], [], []>} : vector<64x1152xbf16>, vector<1152x128xbf16>, vector<64x128xf32> -> vector<64x128xf32>
    %c0_43 = arith.constant 0 : index
    %c0_44 = arith.constant 0 : index
    %153 = vector.load %arg10[%c0_43, %c0_44] : memref<1x128xf32, #tpu.memory_space<vmem>>, vector<1x128xf32>
    %154 = vector.broadcast %153 : vector<1x128xf32> to vector<64x128xf32>
    %155 = arith.addf %152, %154 : vector<64x128xf32>
    %cst_45 = arith.constant 0.000000e+00 : f32
    %156 = vector.broadcast %cst_45 : f32 to vector<64x128xf32>
    %157 = arith.maximumf %155, %156 : vector<64x128xf32>
    %158 = arith.truncf %157 : vector<64x128xf32> to vector<64x128xbf16>
    %159 = vector.shape_cast %158 : vector<64x128xbf16> to vector<1x8x8x128xbf16>
    %cst_46 = arith.constant 0.000000e+00 : bf16
    %160 = vector.broadcast %cst_46 : bf16 to vector<1x1x8x128xbf16>
    %161 = tpu.concatenate %160, %159, %160 in 1 : vector<1x1x8x128xbf16>, vector<1x8x8x128xbf16>, vector<1x1x8x128xbf16> -> vector<1x10x8x128xbf16>
    %cst_47 = arith.constant 0.000000e+00 : bf16
    %162 = vector.broadcast %cst_47 : bf16 to vector<1x10x1x128xbf16>
    %163 = tpu.concatenate %162, %161, %162 in 2 : vector<1x10x1x128xbf16>, vector<1x10x8x128xbf16>, vector<1x10x1x128xbf16> -> vector<1x10x10x128xbf16>
    %164 = vector.extract_strided_slice %163 {offsets = [0, 0, 0, 0], sizes = [1, 8, 8, 128], strides = [1, 1, 1, 1]} : vector<1x10x10x128xbf16> to vector<1x8x8x128xbf16>
    %165 = vector.extract_strided_slice %163 {offsets = [0, 0, 1, 0], sizes = [1, 8, 8, 128], strides = [1, 1, 1, 1]} : vector<1x10x10x128xbf16> to vector<1x8x8x128xbf16>
    %166 = vector.extract_strided_slice %163 {offsets = [0, 0, 2, 0], sizes = [1, 8, 8, 128], strides = [1, 1, 1, 1]} : vector<1x10x10x128xbf16> to vector<1x8x8x128xbf16>
    %167 = vector.extract_strided_slice %163 {offsets = [0, 1, 0, 0], sizes = [1, 8, 8, 128], strides = [1, 1, 1, 1]} : vector<1x10x10x128xbf16> to vector<1x8x8x128xbf16>
    %168 = vector.extract_strided_slice %163 {offsets = [0, 1, 1, 0], sizes = [1, 8, 8, 128], strides = [1, 1, 1, 1]} : vector<1x10x10x128xbf16> to vector<1x8x8x128xbf16>
    %169 = vector.extract_strided_slice %163 {offsets = [0, 1, 2, 0], sizes = [1, 8, 8, 128], strides = [1, 1, 1, 1]} : vector<1x10x10x128xbf16> to vector<1x8x8x128xbf16>
    %170 = vector.extract_strided_slice %163 {offsets = [0, 2, 0, 0], sizes = [1, 8, 8, 128], strides = [1, 1, 1, 1]} : vector<1x10x10x128xbf16> to vector<1x8x8x128xbf16>
    %171 = vector.extract_strided_slice %163 {offsets = [0, 2, 1, 0], sizes = [1, 8, 8, 128], strides = [1, 1, 1, 1]} : vector<1x10x10x128xbf16> to vector<1x8x8x128xbf16>
    %172 = vector.extract_strided_slice %163 {offsets = [0, 2, 2, 0], sizes = [1, 8, 8, 128], strides = [1, 1, 1, 1]} : vector<1x10x10x128xbf16> to vector<1x8x8x128xbf16>
    %173 = tpu.concatenate %164, %165, %166, %167, %168, %169, %170, %171, %172 in 3 : vector<1x8x8x128xbf16>, vector<1x8x8x128xbf16>, vector<1x8x8x128xbf16>, vector<1x8x8x128xbf16>, vector<1x8x8x128xbf16>, vector<1x8x8x128xbf16>, vector<1x8x8x128xbf16>, vector<1x8x8x128xbf16>, vector<1x8x8x128xbf16> -> vector<1x8x8x1152xbf16>
    %174 = vector.shape_cast %173 : vector<1x8x8x1152xbf16> to vector<64x1152xbf16>
    %c0_48 = arith.constant 0 : index
    %c0_49 = arith.constant 0 : index
    %175 = vector.load %arg11[%c0_48, %c0_49] : memref<1152x128xbf16, #tpu.memory_space<vmem>>, vector<1152x128xbf16>
    %cst_50 = arith.constant dense<0.000000e+00> : vector<64x128xf32>
    %176 = tpu.matmul %174, %175, %cst_50 {dimension_numbers = #tpu.dot_dimension_numbers<[1], [0], [0], [1], [0, 0, 1, 1], [], []>} : vector<64x1152xbf16>, vector<1152x128xbf16>, vector<64x128xf32> -> vector<64x128xf32>
    %c0_51 = arith.constant 0 : index
    %c0_52 = arith.constant 0 : index
    %177 = vector.load %arg12[%c0_51, %c0_52] : memref<1x128xf32, #tpu.memory_space<vmem>>, vector<1x128xf32>
    %178 = vector.broadcast %177 : vector<1x128xf32> to vector<64x128xf32>
    %179 = arith.addf %176, %178 : vector<64x128xf32>
    %cst_53 = arith.constant 0.000000e+00 : f32
    %180 = vector.broadcast %cst_53 : f32 to vector<64x128xf32>
    %181 = arith.maximumf %179, %180 : vector<64x128xf32>
    %182 = arith.truncf %181 : vector<64x128xf32> to vector<64x128xbf16>
    %c0_54 = arith.constant 0 : index
    %c0_55 = arith.constant 0 : index
    %183 = vector.load %arg13[%c0_54, %c0_55] : memref<128x128xbf16, #tpu.memory_space<vmem>>, vector<128x128xbf16>
    %cst_56 = arith.constant dense<0.000000e+00> : vector<64x128xf32>
    %184 = tpu.matmul %182, %183, %cst_56 {dimension_numbers = #tpu.dot_dimension_numbers<[1], [0], [0], [1], [0, 0, 1, 1], [], []>} : vector<64x128xbf16>, vector<128x128xbf16>, vector<64x128xf32> -> vector<64x128xf32>
    %c0_57 = arith.constant 0 : index
    %c0_58 = arith.constant 0 : index
    %185 = vector.load %arg14[%c0_57, %c0_58] : memref<1x128xf32, #tpu.memory_space<vmem>>, vector<1x128xf32>
    %186 = vector.broadcast %185 : vector<1x128xf32> to vector<64x128xf32>
    %187 = arith.addf %184, %186 : vector<64x128xf32>
    %188 = arith.negf %187 : vector<64x128xf32>
    %189 = math.exp %188 : vector<64x128xf32>
    %cst_59 = arith.constant 1.000000e+00 : f32
    %190 = vector.broadcast %cst_59 : f32 to vector<64x128xf32>
    %191 = arith.addf %190, %189 : vector<64x128xf32>
    %192 = arith.divf %190, %191 : vector<64x128xf32>
    %193 = arith.mulf %187, %192 : vector<64x128xf32>
    %194 = vector.shape_cast %193 : vector<64x128xf32> to vector<1x64x128xf32>
    %195 = arith.truncf %194 : vector<1x64x128xf32> to vector<1x64x128xbf16>
    %c0_60 = arith.constant 0 : index
    %c0_61 = arith.constant 0 : index
    %c0_62 = arith.constant 0 : index
    %196 = vector.load %arg15[%c0_60, %c0_61, %c0_62] : memref<1x64x128xbf16, #tpu.memory_space<vmem>>, vector<1x64x128xbf16>
    tpu.vector_store %arg15[%c0_60, %c0_61, %c0_62], %195 {strides = array<i32>} : memref<1x64x128xbf16, #tpu.memory_space<vmem>>, vector<1x64x128xbf16>,
    return
  }
  func.func @transform_0(%arg0: i32) -> (i32, i32, i32, i32) {
    %c0_i32 = arith.constant 0 : i32
    %c0_i32_0 = arith.constant 0 : i32
    %c0_i32_1 = arith.constant 0 : i32
    %c0_i32_2 = arith.constant 0 : i32
    return %arg0, %c0_i32, %c0_i32_0, %c0_i32_1 : i32, i32, i32, i32
  }
  func.func @transform_1(%arg0: i32) -> (i32, i32, i32, i32) {
    %c0_i32 = arith.constant 0 : i32
    %c0_i32_0 = arith.constant 0 : i32
    %c0_i32_1 = arith.constant 0 : i32
    %c0_i32_2 = arith.constant 0 : i32
    return %arg0, %c0_i32, %c0_i32_0, %c0_i32_1 : i32, i32, i32, i32
  }
  func.func @transform_2(%arg0: i32) -> (i32, i32, i32, i32) {
    %c0_i32 = arith.constant 0 : i32
    %c0_i32_0 = arith.constant 0 : i32
    %c0_i32_1 = arith.constant 0 : i32
    %c0_i32_2 = arith.constant 0 : i32
    return %arg0, %c0_i32, %c0_i32_0, %c0_i32_1 : i32, i32, i32, i32
  }
  func.func @transform_3(%arg0: i32) -> (i32, i32, i32, i32) {
    %c0_i32 = arith.constant 0 : i32
    %c0_i32_0 = arith.constant 0 : i32
    %c0_i32_1 = arith.constant 0 : i32
    %c0_i32_2 = arith.constant 0 : i32
    return %arg0, %c0_i32, %c0_i32_0, %c0_i32_1 : i32, i32, i32, i32
  }
  func.func @transform_4(%arg0: i32) -> (i32, i32) {
    %c0_i32 = arith.constant 0 : i32
    %c0_i32_0 = arith.constant 0 : i32
    %c0_i32_1 = arith.constant 0 : i32
    return %c0_i32, %c0_i32_0 : i32, i32
  }
  func.func @transform_5(%arg0: i32) -> (i32, i32) {
    %c0_i32 = arith.constant 0 : i32
    %c0_i32_0 = arith.constant 0 : i32
    %c0_i32_1 = arith.constant 0 : i32
    return %c0_i32, %c0_i32_0 : i32, i32
  }
  func.func @transform_6(%arg0: i32) -> (i32, i32) {
    %c0_i32 = arith.constant 0 : i32
    %c0_i32_0 = arith.constant 0 : i32
    %c0_i32_1 = arith.constant 0 : i32
    return %c0_i32, %c0_i32_0 : i32, i32
  }
  func.func @transform_7(%arg0: i32) -> (i32, i32) {
    %c0_i32 = arith.constant 0 : i32
    %c0_i32_0 = arith.constant 0 : i32
    %c0_i32_1 = arith.constant 0 : i32
    return %c0_i32, %c0_i32_0 : i32, i32
  }
  func.func @transform_8(%arg0: i32) -> (i32, i32) {
    %c0_i32 = arith.constant 0 : i32
    %c0_i32_0 = arith.constant 0 : i32
    %c0_i32_1 = arith.constant 0 : i32
    return %c0_i32, %c0_i32_0 : i32, i32
  }
  func.func @transform_9(%arg0: i32) -> (i32, i32) {
    %c0_i32 = arith.constant 0 : i32
    %c0_i32_0 = arith.constant 0 : i32
    %c0_i32_1 = arith.constant 0 : i32
    return %c0_i32, %c0_i32_0 : i32, i32
  }
  func.func @transform_10(%arg0: i32) -> (i32, i32) {
    %c0_i32 = arith.constant 0 : i32
    %c0_i32_0 = arith.constant 0 : i32
    %c0_i32_1 = arith.constant 0 : i32
    return %c0_i32, %c0_i32_0 : i32, i32
  }
  func.func @transform_11(%arg0: i32) -> (i32, i32) {
    %c0_i32 = arith.constant 0 : i32
    %c0_i32_0 = arith.constant 0 : i32
    %c0_i32_1 = arith.constant 0 : i32
    return %c0_i32, %c0_i32_0 : i32, i32
  }
  func.func @transform_12(%arg0: i32) -> (i32, i32) {
    %c0_i32 = arith.constant 0 : i32
    %c0_i32_0 = arith.constant 0 : i32
    %c0_i32_1 = arith.constant 0 : i32
    return %c0_i32, %c0_i32_0 : i32, i32
  }
  func.func @transform_13(%arg0: i32) -> (i32, i32) {
    %c0_i32 = arith.constant 0 : i32
    %c0_i32_0 = arith.constant 0 : i32
    %c0_i32_1 = arith.constant 0 : i32
    return %c0_i32, %c0_i32_0 : i32, i32
  }
  func.func @transform_14(%arg0: i32) -> (i32, i32, i32) {
    %c0_i32 = arith.constant 0 : i32
    %c0_i32_0 = arith.constant 0 : i32
    %c0_i32_1 = arith.constant 0 : i32
    return %arg0, %c0_i32, %c0_i32_0 : i32, i32, i32
  }
}

</mosaic_0001>

<llo_original>
// kernel: tpu_custom_call.1
$region0: #{tpu_custom_call.1}
  #allocation0 [shape = 'u32[]', space=smem, size = 0x4, offset = 0x4, fixed_abs, tag = 'smem constant byte address 0x4 - core index']
  #allocation1 [shape = 'u32[144,128]{1,0:T(1,128)}', space=vmem, size = 0x12000, scoped, tag = 'internal scratch']
  %s0 = inlined_call_operand.vmem [shape: bf16[2,32,32,8], index: 0, kind: input, shape index: {}]
  %s1 = inlined_call_operand.hbm [shape: bf16[2,16,16,16], index: 1, kind: input, shape index: {}]
  %s2 = inlined_call_operand.vmem [shape: bf16[2,8,8,16], index: 2, kind: input, shape index: {}]
  %s3 = inlined_call_operand.hbm [shape: bf16[2,4,4,24], index: 3, kind: input, shape index: {}]
  %s4 = inlined_call_operand.hbm [shape: bf16[64,128], index: 4, kind: input, shape index: {}]
  %s5 = inlined_call_operand.vmem [shape: f32[1,128], index: 5, kind: input, shape index: {}]
  %s6 = inlined_call_operand.vmem [shape: bf16[1152,128], index: 6, kind: input, shape index: {}]
  %s7 = inlined_call_operand.vmem [shape: f32[1,128], index: 7, kind: input, shape index: {}]
  %s8 = inlined_call_operand.vmem [shape: bf16[1152,128], index: 8, kind: input, shape index: {}]
  %s9 = inlined_call_operand.vmem [shape: f32[1,128], index: 9, kind: input, shape index: {}]
  %s10 = inlined_call_operand.hbm [shape: bf16[1152,128], index: 10, kind: input, shape index: {}]
  %s11 = inlined_call_operand.vmem [shape: f32[1,128], index: 11, kind: input, shape index: {}]
  %s12 = inlined_call_operand.vmem [shape: bf16[128,128], index: 12, kind: input, shape index: {}]
  %s13 = inlined_call_operand.vmem [shape: f32[1,128], index: 13, kind: input, shape index: {}]
  %s14 = inlined_call_operand.hbm [shape: bf16[2,64,128], index: 14, kind: output, shape index: {}]
  %s15 = sld [smem:[#allocation0]]
  $region105: #{tpu_custom_call.1} parent=0
    _
  %s17 = ssub.s32 1, %s15
  %s18 = scalar_select 0, %s17, %s15
  $region1: #{tpu_custom_call.1} parent=0
    #allocation2 [shape = 'u8[131072]{0}', space=vmem, size = 0x20000, scoped, tag = 'input window, operand 1']
    #allocation3 [shape = 's32[2]{0}', space=sflag, size = 0x8, scoped, tag = 'scoped memory for tpu_custom_call.1']
    #allocation4 [shape = 's32[2]{0}', space=sflag, size = 0x8, scoped, tag = 'scoped memory for tpu_custom_call.1']
    #allocation5 [shape = 'u8[8192]{0}', space=vmem, size = 0x2000, scoped, tag = 'input window, operand 3']
    #allocation6 [shape = 's32[2]{0}', space=sflag, size = 0x8, scoped, tag = 'scoped memory for tpu_custom_call.1']
    #allocation7 [shape = 'u8[16384]{0}', space=vmem, size = 0x4000, scoped, tag = 'input window, operand 4, single buffered']
    #allocation8 [shape = 'u8[294912]{0}', space=vmem, size = 0x48000, scoped, tag = 'input window, operand 10, single buffered']
    #allocation9 [shape = 's32[1]{0}', space=sflag, size = 0x4, scoped, tag = 'scoped memory for tpu_custom_call.1']
    #allocation10 [shape = 'u8[32768]{0}', space=vmem, size = 0x8000, scoped, tag = 'output window, operand 0']
    %19 = vsyncpa [#allocation3], 0
    %s20 = scalar_lea.sflag [#allocation3], 1
    %21 = vsyncpa %s20, 0
    %22 = vsyncpa [#allocation6], 0
    %s23 = scalar_lea.sflag [#allocation6], 1
    %24 = vsyncpa %s23, 0
    %25 = vsyncpa [#allocation9], 0
    %26 = vsyncpa [#allocation4], 0
    %s27 = scalar_lea.sflag [#allocation4], 1
    %28 = vsyncpa %s27, 0
    loop: start=0, step=1, limit=4
    $region2: #{tpu_custom_call.1} parent=1 // loop_pre_header
      _
    $region3: #{tpu_custom_call.1} parent=1 // loop_header
      %s30 = sphi 0, %s34
      %p31 = scmp.ge.s32.totalorder %s30, 4
      %s40 = sphi 0, %s42
      %s43 = sphi 0, %s40
      %s44 = sphi 0, %s43
      %s60 = sphi 0, %s44
      %s66 = sphi 0, %s68
      %s69 = sphi 0, %s66
      %s70 = sphi 0, %s69
      %s86 = sphi 0, %s70
      %s92 = sphi 0, %s94
      %s95 = sphi 0, %s92
      %s96 = sphi 0, %s95
      %s112 = sphi 0, %s96
      %s118 = sphi 0, %s120
      %s121 = sphi 0, %s118
      %s122 = sphi 0, %s121
      %s138 = sphi 0, %s122
      %s142 = sphi 0, %s142
      %s144 = sphi 0, %s142
      %s145 = sphi 0, %s144
      %s159 = sphi 0, %s145
      %s163 = sphi 0, %s163
      %s165 = sphi 0, %s163
      %s166 = sphi 0, %s165
      %s180 = sphi 0, %s166
      %s184 = sphi 0, %s184
      %s186 = sphi 0, %s184
      %s187 = sphi 0, %s186
      %s201 = sphi 0, %s187
      %s205 = sphi 0, %s205
      %s207 = sphi 0, %s205
      %s208 = sphi 0, %s207
      %s222 = sphi 0, %s208
      %s226 = sphi 0, %s226
      %s228 = sphi 0, %s226
      %s229 = sphi 0, %s228
      %s243 = sphi 0, %s229
      %s247 = sphi 0, %s247
      %s249 = sphi 0, %s247
      %s250 = sphi 0, %s249
      %s264 = sphi 0, %s250
      %s268 = sphi 0, %s268
      %s270 = sphi 0, %s268
      %s271 = sphi 0, %s270
      %s285 = sphi 0, %s271
      %s289 = sphi 0, %s289
      %s291 = sphi 0, %s289
      %s292 = sphi 0, %s291
      %s306 = sphi 0, %s292
      %s310 = sphi 0, %s310
      %s312 = sphi 0, %s310
      %s313 = sphi 0, %s312
      %s327 = sphi 0, %s313
      %s331 = sphi 0, %s331
      %s333 = sphi 0, %s331
      %s334 = sphi 0, %s333
      %s348 = sphi 0, %s334
      %s354 = sphi 0, %s356
      %s357 = sphi 0, %s354
      %s358 = sphi 0, %s357
      %s374 = sphi 0, %s358
    $region4: #{tpu_custom_call.1} parent=1 // loop_header_branch
      %33 = sbr.rel (%p31) target = $region8
    $region5: #{tpu_custom_call.1} parent=1 // loop_body
      %s35 = ssub.s32 %s30, 1
      %s36 = ssub.s32 %s30, 2
      %s37 = sadd.s32 %s30, 1
      %s38 = ssub.s32 %s30, %s37
      %p39 = scmp.eq.s32.totalorder %s38, 0
      %s41 = sadd.s32 %s40, 1
      %s42 = scalar_select %p39, %s40, %s41
      %p45 = pneg %p39
      %p46 = scmp.eq.s32.totalorder %s30, 1
      %p47 = por %p45, %p46
      %p48 = scmp.ne.s32.totalorder %s40, %s43
      %p49 = scmp.eq.s32.totalorder %s30, 0
      %p50 = por %p48, %p49
      %p51 = scmp.ne.s32.totalorder %s40, %s43
      %p52 = scmp.eq.s32.totalorder %s35, 1
      %p53 = por %p51, %p52
      %p54 = scmp.ne.s32.totalorder %s43, %s44
      %p55 = scmp.eq.s32.totalorder %s35, 0
      %p56 = por %p54, %p55
      %p57 = scmp.ne.s32.totalorder %s43, %s44
      %p58 = scmp.eq.s32.totalorder %s36, 1
      %p59 = por %p57, %p58
      %p61 = scmp.ne.s32.totalorder %s44, %s60
      %p62 = scmp.eq.s32.totalorder %s36, 0
      %p63 = por %p61, %p62
      %s64 = ssub.s32 %s30, %s37
      %p65 = scmp.eq.s32.totalorder %s64, 0
      %s67 = sadd.s32 %s66, 1
      %s68 = scalar_select %p65, %s66, %s67
      %p71 = pneg %p65
      %p72 = scmp.eq.s32.totalorder %s30, 1
      %p73 = por %p71, %p72
      %p74 = scmp.ne.s32.totalorder %s66, %s69
      %p75 = scmp.eq.s32.totalorder %s30, 0
      %p76 = por %p74, %p75
      %p77 = scmp.ne.s32.totalorder %s66, %s69
      %p78 = scmp.eq.s32.totalorder %s35, 1
      %p79 = por %p77, %p78
      %p80 = scmp.ne.s32.totalorder %s69, %s70
      %p81 = scmp.eq.s32.totalorder %s35, 0
      %p82 = por %p80, %p81
      %p83 = scmp.ne.s32.totalorder %s69, %s70
      %p84 = scmp.eq.s32.totalorder %s36, 1
      %p85 = por %p83, %p84
      %p87 = scmp.ne.s32.totalorder %s70, %s86
      %p88 = scmp.eq.s32.totalorder %s36, 0
      %p89 = por %p87, %p88
      %s90 = ssub.s32 %s30, %s37
      %p91 = scmp.eq.s32.totalorder %s90, 0
      %s93 = sadd.s32 %s92, 1
      %s94 = scalar_select %p91, %s92, %s93
      %p97 = pneg %p91
      %p98 = scmp.eq.s32.totalorder %s30, 1
      %p99 = por %p97, %p98
      %p100 = scmp.ne.s32.totalorder %s92, %s95
      %p101 = scmp.eq.s32.totalorder %s30, 0
      %p102 = por %p100, %p101
      %p103 = scmp.ne.s32.totalorder %s92, %s95
      %p104 = scmp.eq.s32.totalorder %s35, 1
      %p105 = por %p103, %p104
      %p106 = scmp.ne.s32.totalorder %s95, %s96
      %p107 = scmp.eq.s32.totalorder %s35, 0
      %p108 = por %p106, %p107
      %p109 = scmp.ne.s32.totalorder %s95, %s96
      %p110 = scmp.eq.s32.totalorder %s36, 1
      %p111 = por %p109, %p110
      %p113 = scmp.ne.s32.totalorder %s96, %s112
      %p114 = scmp.eq.s32.totalorder %s36, 0
      %p115 = por %p113, %p114
      %s116 = ssub.s32 %s30, %s37
      %p117 = scmp.eq.s32.totalorder %s116, 0
      %s119 = sadd.s32 %s118, 1
      %s120 = scalar_select %p117, %s118, %s119
      %p123 = pneg %p117
      %p124 = scmp.eq.s32.totalorder %s30, 1
      %p125 = por %p123, %p124
      %p126 = scmp.ne.s32.totalorder %s118, %s121
      %p127 = scmp.eq.s32.totalorder %s30, 0
      %p128 = por %p126, %p127
      %p129 = scmp.ne.s32.totalorder %s118, %s121
      %p130 = scmp.eq.s32.totalorder %s35, 1
      %p131 = por %p129, %p130
      %p132 = scmp.ne.s32.totalorder %s121, %s122
      %p133 = scmp.eq.s32.totalorder %s35, 0
      %p134 = por %p132, %p133
      %p135 = scmp.ne.s32.totalorder %s121, %s122
      %p136 = scmp.eq.s32.totalorder %s36, 1
      %p137 = por %p135, %p136
      %p139 = scmp.ne.s32.totalorder %s122, %s138
      %p140 = scmp.eq.s32.totalorder %s36, 0
      %p141 = por %p139, %p140
      %s143 = sadd.s32 %s142, 1
      %p146 = scmp.eq.s32.totalorder %s30, 1
      %p147 = scmp.ne.s32.totalorder %s142, %s144
      %p148 = scmp.eq.s32.totalorder %s30, 0
      %p149 = por %p147, %p148
      %p150 = scmp.ne.s32.totalorder %s142, %s144
      %p151 = scmp.eq.s32.totalorder %s35, 1
      %p152 = por %p150, %p151
      %p153 = scmp.ne.s32.totalorder %s144, %s145
      %p154 = scmp.eq.s32.totalorder %s35, 0
      %p155 = por %p153, %p154
      %p156 = scmp.ne.s32.totalorder %s144, %s145
      %p157 = scmp.eq.s32.totalorder %s36, 1
      %p158 = por %p156, %p157
      %p160 = scmp.ne.s32.totalorder %s145, %s159
      %p161 = scmp.eq.s32.totalorder %s36, 0
      %p162 = por %p160, %p161
      %s164 = sadd.s32 %s163, 1
      %p167 = scmp.eq.s32.totalorder %s30, 1
      %p168 = scmp.ne.s32.totalorder %s163, %s165
      %p169 = scmp.eq.s32.totalorder %s30, 0
      %p170 = por %p168, %p169
      %p171 = scmp.ne.s32.totalorder %s163, %s165
      %p172 = scmp.eq.s32.totalorder %s35, 1
      %p173 = por %p171, %p172
      %p174 = scmp.ne.s32.totalorder %s165, %s166
      %p175 = scmp.eq.s32.totalorder %s35, 0
      %p176 = por %p174, %p175
      %p177 = scmp.ne.s32.totalorder %s165, %s166
      %p178 = scmp.eq.s32.totalorder %s36, 1
      %p179 = por %p177, %p178
      %p181 = scmp.ne.s32.totalorder %s166, %s180
      %p182 = scmp.eq.s32.totalorder %s36, 0
      %p183 = por %p181, %p182
      %s185 = sadd.s32 %s184, 1
      %p188 = scmp.eq.s32.totalorder %s30, 1
      %p189 = scmp.ne.s32.totalorder %s184, %s186
      %p190 = scmp.eq.s32.totalorder %s30, 0
      %p191 = por %p189, %p190
      %p192 = scmp.ne.s32.totalorder %s184, %s186
      %p193 = scmp.eq.s32.totalorder %s35, 1
      %p194 = por %p192, %p193
      %p195 = scmp.ne.s32.totalorder %s186, %s187
      %p196 = scmp.eq.s32.totalorder %s35, 0
      %p197 = por %p195, %p196
      %p198 = scmp.ne.s32.totalorder %s186, %s187
      %p199 = scmp.eq.s32.totalorder %s36, 1
      %p200 = por %p198, %p199
      %p202 = scmp.ne.s32.totalorder %s187, %s201
      %p203 = scmp.eq.s32.totalorder %s36, 0
      %p204 = por %p202, %p203
      %s206 = sadd.s32 %s205, 1
      %p209 = scmp.eq.s32.totalorder %s30, 1
      %p210 = scmp.ne.s32.totalorder %s205, %s207
      %p211 = scmp.eq.s32.totalorder %s30, 0
      %p212 = por %p210, %p211
      %p213 = scmp.ne.s32.totalorder %s205, %s207
      %p214 = scmp.eq.s32.totalorder %s35, 1
      %p215 = por %p213, %p214
      %p216 = scmp.ne.s32.totalorder %s207, %s208
      %p217 = scmp.eq.s32.totalorder %s35, 0
      %p218 = por %p216, %p217
      %p219 = scmp.ne.s32.totalorder %s207, %s208
      %p220 = scmp.eq.s32.totalorder %s36, 1
      %p221 = por %p219, %p220
      %p223 = scmp.ne.s32.totalorder %s208, %s222
      %p224 = scmp.eq.s32.totalorder %s36, 0
      %p225 = por %p223, %p224
      %s227 = sadd.s32 %s226, 1
      %p230 = scmp.eq.s32.totalorder %s30, 1
      %p231 = scmp.ne.s32.totalorder %s226, %s228
      %p232 = scmp.eq.s32.totalorder %s30, 0
      %p233 = por %p231, %p232
      %p234 = scmp.ne.s32.totalorder %s226, %s228
      %p235 = scmp.eq.s32.totalorder %s35, 1
      %p236 = por %p234, %p235
      %p237 = scmp.ne.s32.totalorder %s228, %s229
      %p238 = scmp.eq.s32.totalorder %s35, 0
      %p239 = por %p237, %p238
      %p240 = scmp.ne.s32.totalorder %s228, %s229
      %p241 = scmp.eq.s32.totalorder %s36, 1
      %p242 = por %p240, %p241
      %p244 = scmp.ne.s32.totalorder %s229, %s243
      %p245 = scmp.eq.s32.totalorder %s36, 0
      %p246 = por %p244, %p245
      %s248 = sadd.s32 %s247, 1
      %p251 = scmp.eq.s32.totalorder %s30, 1
      %p252 = scmp.ne.s32.totalorder %s247, %s249
      %p253 = scmp.eq.s32.totalorder %s30, 0
      %p254 = por %p252, %p253
      %p255 = scmp.ne.s32.totalorder %s247, %s249
      %p256 = scmp.eq.s32.totalorder %s35, 1
      %p257 = por %p255, %p256
      %p258 = scmp.ne.s32.totalorder %s249, %s250
      %p259 = scmp.eq.s32.totalorder %s35, 0
      %p260 = por %p258, %p259
      %p261 = scmp.ne.s32.totalorder %s249, %s250
      %p262 = scmp.eq.s32.totalorder %s36, 1
      %p263 = por %p261, %p262
      %p265 = scmp.ne.s32.totalorder %s250, %s264
      %p266 = scmp.eq.s32.totalorder %s36, 0
      %p267 = por %p265, %p266
      %s269 = sadd.s32 %s268, 1
      %p272 = scmp.eq.s32.totalorder %s30, 1
      %p273 = scmp.ne.s32.totalorder %s268, %s270
      %p274 = scmp.eq.s32.totalorder %s30, 0
      %p275 = por %p273, %p274
      %p276 = scmp.ne.s32.totalorder %s268, %s270
      %p277 = scmp.eq.s32.totalorder %s35, 1
      %p278 = por %p276, %p277
      %p279 = scmp.ne.s32.totalorder %s270, %s271
      %p280 = scmp.eq.s32.totalorder %s35, 0
      %p281 = por %p279, %p280
      %p282 = scmp.ne.s32.totalorder %s270, %s271
      %p283 = scmp.eq.s32.totalorder %s36, 1
      %p284 = por %p282, %p283
      %p286 = scmp.ne.s32.totalorder %s271, %s285
      %p287 = scmp.eq.s32.totalorder %s36, 0
      %p288 = por %p286, %p287
      %s290 = sadd.s32 %s289, 1
      %p293 = scmp.eq.s32.totalorder %s30, 1
      %p294 = scmp.ne.s32.totalorder %s289, %s291
      %p295 = scmp.eq.s32.totalorder %s30, 0
      %p296 = por %p294, %p295
      %p297 = scmp.ne.s32.totalorder %s289, %s291
      %p298 = scmp.eq.s32.totalorder %s35, 1
      %p299 = por %p297, %p298
      %p300 = scmp.ne.s32.totalorder %s291, %s292
      %p301 = scmp.eq.s32.totalorder %s35, 0
      %p302 = por %p300, %p301
      %p303 = scmp.ne.s32.totalorder %s291, %s292
      %p304 = scmp.eq.s32.totalorder %s36, 1
      %p305 = por %p303, %p304
      %p307 = scmp.ne.s32.totalorder %s292, %s306
      %p308 = scmp.eq.s32.totalorder %s36, 0
      %p309 = por %p307, %p308
      %s311 = sadd.s32 %s310, 1
      %p314 = scmp.eq.s32.totalorder %s30, 1
      %p315 = scmp.ne.s32.totalorder %s310, %s312
      %p316 = scmp.eq.s32.totalorder %s30, 0
      %p317 = por %p315, %p316
      %p318 = scmp.ne.s32.totalorder %s310, %s312
      %p319 = scmp.eq.s32.totalorder %s35, 1
      %p320 = por %p318, %p319
      %p321 = scmp.ne.s32.totalorder %s312, %s313
      %p322 = scmp.eq.s32.totalorder %s35, 0
      %p323 = por %p321, %p322
      %p324 = scmp.ne.s32.totalorder %s312, %s313
      %p325 = scmp.eq.s32.totalorder %s36, 1
      %p326 = por %p324, %p325
      %p328 = scmp.ne.s32.totalorder %s313, %s327
      %p329 = scmp.eq.s32.totalorder %s36, 0
      %p330 = por %p328, %p329
      %s332 = sadd.s32 %s331, 1
      %p335 = scmp.eq.s32.totalorder %s30, 1
      %p336 = scmp.ne.s32.totalorder %s331, %s333
      %p337 = scmp.eq.s32.totalorder %s30, 0
      %p338 = por %p336, %p337
      %p339 = scmp.ne.s32.totalorder %s331, %s333
      %p340 = scmp.eq.s32.totalorder %s35, 1
      %p341 = por %p339, %p340
      %p342 = scmp.ne.s32.totalorder %s333, %s334
      %p343 = scmp.eq.s32.totalorder %s35, 0
      %p344 = por %p342, %p343
      %p345 = scmp.ne.s32.totalorder %s333, %s334
      %p346 = scmp.eq.s32.totalorder %s36, 1
      %p347 = por %p345, %p346
      %p349 = scmp.ne.s32.totalorder %s334, %s348
      %p350 = scmp.eq.s32.totalorder %s36, 0
      %p351 = por %p349, %p350
      %s352 = ssub.s32 %s30, %s37
      %p353 = scmp.eq.s32.totalorder %s352, 0
      %s355 = sadd.s32 %s354, 1
      %s356 = scalar_select %p353, %s354, %s355
      %p359 = pneg %p353
      %p360 = scmp.eq.s32.totalorder %s30, 1
      %p361 = por %p359, %p360
      %p362 = scmp.ne.s32.totalorder %s354, %s357
      %p363 = scmp.eq.s32.totalorder %s30, 0
      %p364 = por %p362, %p363
      %p365 = scmp.ne.s32.totalorder %s354, %s357
      %p366 = scmp.eq.s32.totalorder %s35, 1
      %p367 = por %p365, %p366
      %p368 = scmp.ne.s32.totalorder %s357, %s358
      %p369 = scmp.eq.s32.totalorder %s35, 0
      %p370 = por %p368, %p369
      %p371 = scmp.ne.s32.totalorder %s357, %s358
      %p372 = scmp.eq.s32.totalorder %s36, 1
      %p373 = por %p371, %p372
      %p375 = scmp.ne.s32.totalorder %s358, %s374
      %p376 = scmp.eq.s32.totalorder %s36, 0
      %p377 = por %p375, %p376
      %p378 = scmp.le.s32.totalorder 1, %s30
      %p379 = scmp.lt.s32.totalorder %s30, 3
      %p380 = pnand %p378, %p379
      %p381 = pneg %p380
      // Predicated region
      $region9: #{tpu_custom_call.1} parent=5 // pred_check
        _
      $region10: #{tpu_custom_call.1} parent=5 // pred_check_branch
        %383 = sbr.rel (%p380) target = $region12
      $region11: #{tpu_custom_call.1} parent=5 // pred_region
        %s384 = ssub.s32 %s30, 1
        // Predicated region
        $region13: #{tpu_custom_call.1} parent=11 // pred_check
          %p385 = pneg %p155
        $region14: #{tpu_custom_call.1} parent=11 // pred_check_branch
          %387 = sbr.rel (%p385) target = $region16
        $region15: #{tpu_custom_call.1} parent=11 // pred_region
          %s389 = ssub.s32 512, 512
          %390 = vsyncadd [#allocation6], %s389
          %s391 = sshll.u32 [#allocation7], 4
          %s392 = int_to_ptr.vmem [resolvable:$true] %s391
          %397 = dma.hbm_to_vmem [thread:$0]  %s4, 512, %s392, [#allocation6], 64, 64, 4
        $region16: #{tpu_custom_call.1} parent=11 // pred_fallthru
          _
        // Predicated region
        $region17: #{tpu_custom_call.1} parent=11 // pred_check
          %p398 = pneg %p176
        $region18: #{tpu_custom_call.1} parent=11 // pred_check_branch
          %400 = sbr.rel (%p398) target = $region20
        $region19: #{tpu_custom_call.1} parent=11 // pred_region
          _
        $region20: #{tpu_custom_call.1} parent=11 // pred_fallthru
          _
        // Predicated region
        $region21: #{tpu_custom_call.1} parent=11 // pred_check
          %p401 = pneg %p197
        $region22: #{tpu_custom_call.1} parent=11 // pred_check_branch
          %403 = sbr.rel (%p401) target = $region24
        $region23: #{tpu_custom_call.1} parent=11 // pred_region
          _
        $region24: #{tpu_custom_call.1} parent=11 // pred_fallthru
          _
        // Predicated region
        $region25: #{tpu_custom_call.1} parent=11 // pred_check
          %p404 = pneg %p218
        $region26: #{tpu_custom_call.1} parent=11 // pred_check_branch
          %406 = sbr.rel (%p404) target = $region28
        $region27: #{tpu_custom_call.1} parent=11 // pred_region
          _
        $region28: #{tpu_custom_call.1} parent=11 // pred_fallthru
          _
        // Predicated region
        $region29: #{tpu_custom_call.1} parent=11 // pred_check
          %p407 = pneg %p239
        $region30: #{tpu_custom_call.1} parent=11 // pred_check_branch
          %409 = sbr.rel (%p407) target = $region32
        $region31: #{tpu_custom_call.1} parent=11 // pred_region
          _
        $region32: #{tpu_custom_call.1} parent=11 // pred_fallthru
          _
        // Predicated region
        $region33: #{tpu_custom_call.1} parent=11 // pred_check
          %p410 = pneg %p260
        $region34: #{tpu_custom_call.1} parent=11 // pred_check_branch
          %412 = sbr.rel (%p410) target = $region36
        $region35: #{tpu_custom_call.1} parent=11 // pred_region
          _
        $region36: #{tpu_custom_call.1} parent=11 // pred_fallthru
          _
        // Predicated region
        $region37: #{tpu_custom_call.1} parent=11 // pred_check
          %p413 = pneg %p281
        $region38: #{tpu_custom_call.1} parent=11 // pred_check_branch
          %415 = sbr.rel (%p413) target = $region40
        $region39: #{tpu_custom_call.1} parent=11 // pred_region
          %s417 = ssub.s32 9216, 9216
          %418 = vsyncadd [#allocation9], %s417
          %s419 = sshll.u32 [#allocation8], 4
          %s420 = int_to_ptr.vmem [resolvable:$true] %s419
          %425 = dma.hbm_to_vmem [thread:$0]  %s10, 9216, %s420, [#allocation9], 64, 64, 4
        $region40: #{tpu_custom_call.1} parent=11 // pred_fallthru
          _
        // Predicated region
        $region41: #{tpu_custom_call.1} parent=11 // pred_check
          %p426 = pneg %p302
        $region42: #{tpu_custom_call.1} parent=11 // pred_check_branch
          %428 = sbr.rel (%p426) target = $region44
        $region43: #{tpu_custom_call.1} parent=11 // pred_region
          _
        $region44: #{tpu_custom_call.1} parent=11 // pred_fallthru
          _
        // Predicated region
        $region45: #{tpu_custom_call.1} parent=11 // pred_check
          %p429 = pneg %p323
        $region46: #{tpu_custom_call.1} parent=11 // pred_check_branch
          %431 = sbr.rel (%p429) target = $region48
        $region47: #{tpu_custom_call.1} parent=11 // pred_region
          _
        $region48: #{tpu_custom_call.1} parent=11 // pred_fallthru
          _
        // Predicated region
        $region49: #{tpu_custom_call.1} parent=11 // pred_check
          %p432 = pneg %p344
        $region50: #{tpu_custom_call.1} parent=11 // pred_check_branch
          %434 = sbr.rel (%p432) target = $region52
        $region51: #{tpu_custom_call.1} parent=11 // pred_region
          _
        $region52: #{tpu_custom_call.1} parent=11 // pred_fallthru
          _
      $region12: #{tpu_custom_call.1} parent=5 // pred_fallthru
        _
      %p435 = scmp.lt.s32.totalorder %s30, 2
      // Predicated region
      $region53: #{tpu_custom_call.1} parent=5 // pred_check
        %p436 = pneg %p435
      $region54: #{tpu_custom_call.1} parent=5 // pred_check_branch
        %438 = sbr.rel (%p436) target = $region56
      $region55: #{tpu_custom_call.1} parent=5 // pred_region
        // Predicated region
        $region57: #{tpu_custom_call.1} parent=55 // pred_check
          %p439 = pneg %p50
        $region58: #{tpu_custom_call.1} parent=55 // pred_check_branch
          %441 = sbr.rel (%p439) target = $region60
        $region59: #{tpu_custom_call.1} parent=55 // pred_region
          %p442 = scmp.lt.s32.totalorder %s30, 1
          %s443 = scalar_select %p442, %s30, 1
          %s444 = smul.addr %s443, 128
          %s445 = smul.addr %s444, 4
          %s446 = scalar_lea.vmem %s0, %s445
        $region60: #{tpu_custom_call.1} parent=55 // pred_fallthru
          _
        // Predicated region
        $region61: #{tpu_custom_call.1} parent=55 // pred_check
          %p447 = pneg %p76
        $region62: #{tpu_custom_call.1} parent=55 // pred_check_branch
          %449 = sbr.rel (%p447) target = $region64
        $region63: #{tpu_custom_call.1} parent=55 // pred_region
          %s450 = sand.u32 %s66, 1
          %s451 = scalar_lea.sflag [#allocation3], %s450
          %s452 = sand.u32 %s66, 1
          %s453 = smul.addr %s452, 128
          %s454 = scalar_lea.vmem [#allocation2], %s453
          %s456 = ssub.s32 2048, 2048
          %457 = vsyncadd %s451, %s456
          %s458 = smul.addr %s30, 32
          %s459 = smul.addr %s458, 64
          %s460 = scalar_lea.hbm %s1, %s459
          %s461 = sshll.u32 %s454, 4
          %s462 = int_to_ptr.vmem [resolvable:$true] %s461
          %467 = dma.hbm_to_vmem [thread:$0]  %s460, 2048, %s462, %s451, 64, 64, 4
        $region64: #{tpu_custom_call.1} parent=55 // pred_fallthru
          _
        // Predicated region
        $region65: #{tpu_custom_call.1} parent=55 // pred_check
          %p468 = pneg %p102
        $region66: #{tpu_custom_call.1} parent=55 // pred_check_branch
          %470 = sbr.rel (%p468) target = $region68
        $region67: #{tpu_custom_call.1} parent=55 // pred_region
          %p471 = scmp.lt.s32.totalorder %s30, 1
          %s472 = scalar_select %p471, %s30, 1
          %s473 = smul.addr %s472, 8
          %s474 = smul.addr %s473, 4
          %s475 = scalar_lea.vmem %s2, %s474
        $region68: #{tpu_custom_call.1} parent=55 // pred_fallthru
          _
        // Predicated region
        $region69: #{tpu_custom_call.1} parent=55 // pred_check
          %p476 = pneg %p128
        $region70: #{tpu_custom_call.1} parent=55 // pred_check_branch
          %478 = sbr.rel (%p476) target = $region72
        $region71: #{tpu_custom_call.1} parent=55 // pred_region
          %s479 = sand.u32 %s30, 1
          %s480 = scalar_lea.sflag [#allocation6], %s479
          %s481 = sand.u32 %s118, 1
          %s482 = smul.addr %s481, 8
          %s483 = scalar_lea.vmem [#allocation5], %s482
          %s485 = ssub.s32 128, 128
          %486 = vsyncadd %s480, %s485
          %s487 = smul.addr %s30, 4
          %s488 = smul.addr %s487, 32
          %s489 = scalar_lea.hbm %s3, %s488
          %s490 = sshll.u32 %s483, 4
          %s491 = int_to_ptr.vmem [resolvable:$true] %s490
          %496 = dma.hbm_to_vmem [thread:$0]  %s489, 128, %s491, %s480, 32, 32, 2
        $region72: #{tpu_custom_call.1} parent=55 // pred_fallthru
          _
      $region56: #{tpu_custom_call.1} parent=5 // pred_fallthru
        _
      %p497 = scmp.le.s32.totalorder 1, %s30
      %p498 = scmp.lt.s32.totalorder %s30, 3
      %p499 = pnand %p497, %p498
      %p500 = pneg %p499
      // Predicated region
      $region73: #{tpu_custom_call.1} parent=5 // pred_check
        _
      $region74: #{tpu_custom_call.1} parent=5 // pred_check_branch
        %502 = sbr.rel (%p499) target = $region76
      $region75: #{tpu_custom_call.1} parent=5 // pred_region
        %s503 = ssub.s32 %s30, 1
        %s504 = sand.u32 %s69, 1
        %s505 = scalar_lea.sflag [#allocation3], %s504
        %s506 = sand.u32 %s69, 1
        %s507 = smul.addr %s506, 128
        %s508 = scalar_lea.vmem [#allocation2], %s507
        // Predicated region
        $region77: #{tpu_custom_call.1} parent=75 // pred_check
          %p509 = pneg %p82
        $region78: #{tpu_custom_call.1} parent=75 // pred_check_branch
          %511 = sbr.rel (%p509) target = $region80
        $region79: #{tpu_custom_call.1} parent=75 // pred_region
          %512 = dma.done %s505, 2048
        $region80: #{tpu_custom_call.1} parent=75 // pred_fallthru
          _
        %s513 = sand.u32 %s35, 1
        %s514 = scalar_lea.sflag [#allocation6], %s513
        %s515 = sand.u32 %s121, 1
        %s516 = smul.addr %s515, 8
        %s517 = scalar_lea.vmem [#allocation5], %s516
        // Predicated region
        $region81: #{tpu_custom_call.1} parent=75 // pred_check
          %p518 = pneg %p134
        $region82: #{tpu_custom_call.1} parent=75 // pred_check_branch
          %520 = sbr.rel (%p518) target = $region84
        $region83: #{tpu_custom_call.1} parent=75 // pred_region
          %521 = dma.done %s514, 128
        $region84: #{tpu_custom_call.1} parent=75 // pred_fallthru
          _
        // Predicated region
        $region85: #{tpu_custom_call.1} parent=75 // pred_check
          %p522 = pneg %p155
        $region86: #{tpu_custom_call.1} parent=75 // pred_check_branch
          %524 = sbr.rel (%p522) target = $region88
        $region87: #{tpu_custom_call.1} parent=75 // pred_region
          %525 = dma.done [#allocation6], 512
        $region88: #{tpu_custom_call.1} parent=75 // pred_fallthru
          _
        // Predicated region
        $region89: #{tpu_custom_call.1} parent=75 // pred_check
          %p526 = pneg %p281
        $region90: #{tpu_custom_call.1} parent=75 // pred_check_branch
          %528 = sbr.rel (%p526) target = $region92
        $region91: #{tpu_custom_call.1} parent=75 // pred_region
          %529 = dma.done [#allocation9], 9216
        $region92: #{tpu_custom_call.1} parent=75 // pred_fallthru
          _
        %p530 = scmp.lt.s32.totalorder %s35, 1
        %s531 = scalar_select %p530, %s35, 1
        %s532 = smul.addr %s531, 128
        %s533 = smul.addr %s532, 4
        %s534 = scalar_lea.vmem %s0, %s533
        %p535 = pneg %p56
        %p536 = pneg %p53
        %s537 = sand.u32 %s69, 1
        %s538 = scalar_lea.sflag [#allocation3], %s537
        %s539 = sand.u32 %s69, 1
        %s540 = smul.addr %s539, 128
        %s541 = scalar_lea.vmem [#allocation2], %s540
        %p542 = pneg %p82
        %p543 = pneg %p79
        %p544 = scmp.lt.s32.totalorder %s35, 1
        %s545 = scalar_select %p544, %s35, 1
        %s546 = smul.addr %s545, 8
        %s547 = smul.addr %s546, 4
        %s548 = scalar_lea.vmem %s2, %s547
        %p549 = pneg %p108
        %p550 = pneg %p105
        %s551 = sand.u32 %s35, 1
        %s552 = scalar_lea.sflag [#allocation6], %s551
        %s553 = sand.u32 %s121, 1
        %s554 = smul.addr %s553, 8
        %s555 = scalar_lea.vmem [#allocation5], %s554
        %p556 = pneg %p134
        %p557 = pneg %p131
        %p558 = pneg %p155
        %p559 = pneg %p152
        %p560 = pneg %p176
        %p561 = pneg %p173
        %p562 = pneg %p197
        %p563 = pneg %p194
        %p564 = pneg %p218
        %p565 = pneg %p215
        %p566 = pneg %p239
        %p567 = pneg %p236
        %p568 = pneg %p260
        %p569 = pneg %p257
        %p570 = pneg %p281
        %p571 = pneg %p278
        %p572 = pneg %p302
        %p573 = pneg %p299
        %p574 = pneg %p323
        %p575 = pneg %p320
        %p576 = pneg %p344
        %p577 = pneg %p341
        %p578 = pneg %p370
        %p579 = pneg %p367
        %s580 = sand.u32 %s357, 1
        %s581 = scalar_lea.sflag [#allocation4], %s580
        %s582 = sand.u32 %s357, 1
        %s583 = smul.addr %s582, 32
        %s584 = scalar_lea.vmem [#allocation10], %s583
        %p585 = scmp.lt.s32.totalorder %s35, 1
        %s586 = scalar_select %p585, %s35, 1
        %s587 = smul.addr %s586, 128
        %s588 = smul.addr %s587, 4
        %s589 = scalar_lea.vmem %s0, %s588
        %p590 = scmp.lt.s32.totalorder %s35, 1
        %s591 = scalar_select %p590, %s35, 1
        %s592 = smul.addr %s591, 8
        %s593 = smul.addr %s592, 4
        %s594 = scalar_lea.vmem %s2, %s593
        %v596 = vld [vmem:[%s594] sm:$0xf]
        %v597 = vld [vmem:[%s594 + $0x4] sm:$0xf]
        %v598 = vld [vmem:[%s594 + $0x8] sm:$0xf]
        %v599 = vld [vmem:[%s594 + $0xc] sm:$0xf]
        %v600 = vld [vmem:[%s594 + $0x10] sm:$0xf]
        %v601 = vld [vmem:[%s594 + $0x14] sm:$0xf]
        %v602 = vld [vmem:[%s594 + $0x18] sm:$0xf]
        %v603 = vld [vmem:[%s594 + $0x1c] sm:$0xf]
        %v604 = vld [vmem:[%s589] sm:$0xf]
        %v605 = vld [vmem:[%s589 + $0x4] sm:$0xf]
        %v606 = vld [vmem:[%s589 + $0x8] sm:$0xf]
        %v607 = vld [vmem:[%s589 + $0xc] sm:$0xf]
        %v608 = vld [vmem:[%s589 + $0x10] sm:$0xf]
        %v609 = vld [vmem:[%s589 + $0x14] sm:$0xf]
        %v610 = vld [vmem:[%s589 + $0x18] sm:$0xf]
        %v611 = vld [vmem:[%s589 + $0x1c] sm:$0xf]
        %v612 = vld [vmem:[%s589 + $0x20] sm:$0xf]
        %v613 = vld [vmem:[%s589 + $0x24] sm:$0xf]
        %v614 = vld [vmem:[%s589 + $0x28] sm:$0xf]
        %v615 = vld [vmem:[%s589 + $0x2c] sm:$0xf]
        %v616 = vld [vmem:[%s589 + $0x30] sm:$0xf]
        %v617 = vld [vmem:[%s589 + $0x34] sm:$0xf]
        %v618 = vld [vmem:[%s589 + $0x38] sm:$0xf]
        %v619 = vld [vmem:[%s589 + $0x3c] sm:$0xf]
        %v620 = vld [vmem:[%s589 + $0x40] sm:$0xf]
        %v621 = vld [vmem:[%s589 + $0x44] sm:$0xf]
        %v622 = vld [vmem:[%s589 + $0x48] sm:$0xf]
        %v623 = vld [vmem:[%s589 + $0x4c] sm:$0xf]
        %v624 = vld [vmem:[%s589 + $0x50] sm:$0xf]
        %v625 = vld [vmem:[%s589 + $0x54] sm:$0xf]
        %v626 = vld [vmem:[%s589 + $0x58] sm:$0xf]
        %v627 = vld [vmem:[%s589 + $0x5c] sm:$0xf]
        %v628 = vld [vmem:[%s589 + $0x60] sm:$0xf]
        %v629 = vld [vmem:[%s589 + $0x64] sm:$0xf]
        %v630 = vld [vmem:[%s589 + $0x68] sm:$0xf]
        %v631 = vld [vmem:[%s589 + $0x6c] sm:$0xf]
        %v632 = vld [vmem:[%s589 + $0x70] sm:$0xf]
        %v633 = vld [vmem:[%s589 + $0x74] sm:$0xf]
        %v634 = vld [vmem:[%s589 + $0x78] sm:$0xf]
        %v635 = vld [vmem:[%s589 + $0x7c] sm:$0xf]
        %v636 = vld [vmem:[%s589 + $0x80] sm:$0xf]
        %v637 = vld [vmem:[%s589 + $0x84] sm:$0xf]
        %v638 = vld [vmem:[%s589 + $0x88] sm:$0xf]
        %v639 = vld [vmem:[%s589 + $0x8c] sm:$0xf]
        %v640 = vld [vmem:[%s589 + $0x90] sm:$0xf]
        %v641 = vld [vmem:[%s589 + $0x94] sm:$0xf]
        %v642 = vld [vmem:[%s589 + $0x98] sm:$0xf]
        %v643 = vld [vmem:[%s589 + $0x9c] sm:$0xf]
        %v644 = vld [vmem:[%s589 + $0xa0] sm:$0xf]
        %v645 = vld [vmem:[%s589 + $0xa4] sm:$0xf]
        %v646 = vld [vmem:[%s589 + $0xa8] sm:$0xf]
        %v647 = vld [vmem:[%s589 + $0xac] sm:$0xf]
        %v648 = vld [vmem:[%s589 + $0xb0] sm:$0xf]
        %v649 = vld [vmem:[%s589 + $0xb4] sm:$0xf]
        %v650 = vld [vmem:[%s589 + $0xb8] sm:$0xf]
        %v651 = vld [vmem:[%s589 + $0xbc] sm:$0xf]
        %v652 = vld [vmem:[%s589 + $0xc0] sm:$0xf]
        %v653 = vld [vmem:[%s589 + $0xc4] sm:$0xf]
        %v654 = vld [vmem:[%s589 + $0xc8] sm:$0xf]
        %v655 = vld [vmem:[%s589 + $0xcc] sm:$0xf]
        %v656 = vld [vmem:[%s589 + $0xd0] sm:$0xf]
        %v657 = vld [vmem:[%s589 + $0xd4] sm:$0xf]
        %v658 = vld [vmem:[%s589 + $0xd8] sm:$0xf]
        %v659 = vld [vmem:[%s589 + $0xdc] sm:$0xf]
        %v660 = vld [vmem:[%s589 + $0xe0] sm:$0xf]
        %v661 = vld [vmem:[%s589 + $0xe4] sm:$0xf]
        %v662 = vld [vmem:[%s589 + $0xe8] sm:$0xf]
        %v663 = vld [vmem:[%s589 + $0xec] sm:$0xf]
        %v664 = vld [vmem:[%s589 + $0xf0] sm:$0xf]
        %v665 = vld [vmem:[%s589 + $0xf4] sm:$0xf]
        %v666 = vld [vmem:[%s589 + $0xf8] sm:$0xf]
        %v667 = vld [vmem:[%s589 + $0xfc] sm:$0xf]
        %v668 = vld [vmem:[%s589 + $0x100] sm:$0xf]
        %v669 = vld [vmem:[%s589 + $0x104] sm:$0xf]
        %v670 = vld [vmem:[%s589 + $0x108] sm:$0xf]
        %v671 = vld [vmem:[%s589 + $0x10c] sm:$0xf]
        %v672 = vld [vmem:[%s589 + $0x110] sm:$0xf]
        %v673 = vld [vmem:[%s589 + $0x114] sm:$0xf]
        %v674 = vld [vmem:[%s589 + $0x118] sm:$0xf]
        %v675 = vld [vmem:[%s589 + $0x11c] sm:$0xf]
        %v676 = vld [vmem:[%s589 + $0x120] sm:$0xf]
        %v677 = vld [vmem:[%s589 + $0x124] sm:$0xf]
        %v678 = vld [vmem:[%s589 + $0x128] sm:$0xf]
        %v679 = vld [vmem:[%s589 + $0x12c] sm:$0xf]
        %v680 = vld [vmem:[%s589 + $0x130] sm:$0xf]
        %v681 = vld [vmem:[%s589 + $0x134] sm:$0xf]
        %v682 = vld [vmem:[%s589 + $0x138] sm:$0xf]
        %v683 = vld [vmem:[%s589 + $0x13c] sm:$0xf]
        %v684 = vld [vmem:[%s589 + $0x140] sm:$0xf]
        %v685 = vld [vmem:[%s589 + $0x144] sm:$0xf]
        %v686 = vld [vmem:[%s589 + $0x148] sm:$0xf]
        %v687 = vld [vmem:[%s589 + $0x14c] sm:$0xf]
        %v688 = vld [vmem:[%s589 + $0x150] sm:$0xf]
        %v689 = vld [vmem:[%s589 + $0x154] sm:$0xf]
        %v690 = vld [vmem:[%s589 + $0x158] sm:$0xf]
        %v691 = vld [vmem:[%s589 + $0x15c] sm:$0xf]
        %v692 = vld [vmem:[%s589 + $0x160] sm:$0xf]
        %v693 = vld [vmem:[%s589 + $0x164] sm:$0xf]
        %v694 = vld [vmem:[%s589 + $0x168] sm:$0xf]
        %v695 = vld [vmem:[%s589 + $0x16c] sm:$0xf]
        %v696 = vld [vmem:[%s589 + $0x170] sm:$0xf]
        %v697 = vld [vmem:[%s589 + $0x174] sm:$0xf]
        %v698 = vld [vmem:[%s589 + $0x178] sm:$0xf]
        %v699 = vld [vmem:[%s589 + $0x17c] sm:$0xf]
        %v700 = vld [vmem:[%s589 + $0x180] sm:$0xf]
        %v701 = vld [vmem:[%s589 + $0x184] sm:$0xf]
        %v702 = vld [vmem:[%s589 + $0x188] sm:$0xf]
        %v703 = vld [vmem:[%s589 + $0x18c] sm:$0xf]
        %v704 = vld [vmem:[%s589 + $0x190] sm:$0xf]
        %v705 = vld [vmem:[%s589 + $0x194] sm:$0xf]
        %v706 = vld [vmem:[%s589 + $0x198] sm:$0xf]
        %v707 = vld [vmem:[%s589 + $0x19c] sm:$0xf]
        %v708 = vld [vmem:[%s589 + $0x1a0] sm:$0xf]
        %v709 = vld [vmem:[%s589 + $0x1a4] sm:$0xf]
        %v710 = vld [vmem:[%s589 + $0x1a8] sm:$0xf]
        %v711 = vld [vmem:[%s589 + $0x1ac] sm:$0xf]
        %v712 = vld [vmem:[%s589 + $0x1b0] sm:$0xf]
        %v713 = vld [vmem:[%s589 + $0x1b4] sm:$0xf]
        %v714 = vld [vmem:[%s589 + $0x1b8] sm:$0xf]
        %v715 = vld [vmem:[%s589 + $0x1bc] sm:$0xf]
        %v716 = vld [vmem:[%s589 + $0x1c0] sm:$0xf]
        %v717 = vld [vmem:[%s589 + $0x1c4] sm:$0xf]
        %v718 = vld [vmem:[%s589 + $0x1c8] sm:$0xf]
        %v719 = vld [vmem:[%s589 + $0x1cc] sm:$0xf]
        %v720 = vld [vmem:[%s589 + $0x1d0] sm:$0xf]
        %v721 = vld [vmem:[%s589 + $0x1d4] sm:$0xf]
        %v722 = vld [vmem:[%s589 + $0x1d8] sm:$0xf]
        %v723 = vld [vmem:[%s589 + $0x1dc] sm:$0xf]
        %v724 = vld [vmem:[%s589 + $0x1e0] sm:$0xf]
        %v725 = vld [vmem:[%s589 + $0x1e4] sm:$0xf]
        %v726 = vld [vmem:[%s589 + $0x1e8] sm:$0xf]
        %v727 = vld [vmem:[%s589 + $0x1ec] sm:$0xf]
        %v728 = vld [vmem:[%s589 + $0x1f0] sm:$0xf]
        %v729 = vld [vmem:[%s589 + $0x1f4] sm:$0xf]
        %v730 = vld [vmem:[%s589 + $0x1f8] sm:$0xf]
        %v731 = vld [vmem:[%s589 + $0x1fc] sm:$0xf]
        %v732 = vunpack.c.l.bf16 %v604
        %v733 = vunpack.c.l.bf16 %v605
        %v734 = vunpack.c.l.bf16 %v606
        %v735 = vunpack.c.l.bf16 %v607
        %v736 = vunpack.c.l.bf16 %v620
        %v737 = vunpack.c.l.bf16 %v621
        %v738 = vunpack.c.l.bf16 %v622
        %v739 = vunpack.c.l.bf16 %v623
        %v740 = vunpack.c.l.bf16 %v636
        %v741 = vunpack.c.l.bf16 %v637
        %v742 = vunpack.c.l.bf16 %v638
        %v743 = vunpack.c.l.bf16 %v639
        %v744 = vunpack.c.l.bf16 %v652
        %v745 = vunpack.c.l.bf16 %v653
        %v746 = vunpack.c.l.bf16 %v654
        %v747 = vunpack.c.l.bf16 %v655
        %v748 = vunpack.c.l.bf16 %v668
        %v749 = vunpack.c.l.bf16 %v669
        %v750 = vunpack.c.l.bf16 %v670
        %v751 = vunpack.c.l.bf16 %v671
        %v752 = vunpack.c.l.bf16 %v684
        %v753 = vunpack.c.l.bf16 %v685
        %v754 = vunpack.c.l.bf16 %v686
        %v755 = vunpack.c.l.bf16 %v687
        %v756 = vunpack.c.l.bf16 %v700
        %v757 = vunpack.c.l.bf16 %v701
        %v758 = vunpack.c.l.bf16 %v702
        %v759 = vunpack.c.l.bf16 %v703
        %v760 = vunpack.c.l.bf16 %v716
        %v761 = vunpack.c.l.bf16 %v717
        %v762 = vunpack.c.l.bf16 %v718
        %v763 = vunpack.c.l.bf16 %v719
        %v764 = vunpack.c.l.bf16 %v608
        %v765 = vunpack.c.l.bf16 %v609
        %v766 = vunpack.c.l.bf16 %v610
        %v767 = vunpack.c.l.bf16 %v611
        %v768 = vunpack.c.l.bf16 %v624
        %v769 = vunpack.c.l.bf16 %v625
        %v770 = vunpack.c.l.bf16 %v626
        %v771 = vunpack.c.l.bf16 %v627
        %v772 = vunpack.c.l.bf16 %v640
        %v773 = vunpack.c.l.bf16 %v641
        %v774 = vunpack.c.l.bf16 %v642
        %v775 = vunpack.c.l.bf16 %v643
        %v776 = vunpack.c.l.bf16 %v656
        %v777 = vunpack.c.l.bf16 %v657
        %v778 = vunpack.c.l.bf16 %v658
        %v779 = vunpack.c.l.bf16 %v659
        %v780 = vunpack.c.l.bf16 %v672
        %v781 = vunpack.c.l.bf16 %v673
        %v782 = vunpack.c.l.bf16 %v674
        %v783 = vunpack.c.l.bf16 %v675
        %v784 = vunpack.c.l.bf16 %v688
        %v785 = vunpack.c.l.bf16 %v689
        %v786 = vunpack.c.l.bf16 %v690
        %v787 = vunpack.c.l.bf16 %v691
        %v788 = vunpack.c.l.bf16 %v704
        %v789 = vunpack.c.l.bf16 %v705
        %v790 = vunpack.c.l.bf16 %v706
        %v791 = vunpack.c.l.bf16 %v707
        %v792 = vunpack.c.l.bf16 %v720
        %v793 = vunpack.c.l.bf16 %v721
        %v794 = vunpack.c.l.bf16 %v722
        %v795 = vunpack.c.l.bf16 %v723
        %v796 = vadd.f32 %v732, %v764
        %v797 = vadd.f32 %v733, %v765
        %v798 = vadd.f32 %v734, %v766
        %v799 = vadd.f32 %v735, %v767
        %v800 = vadd.f32 %v736, %v768
        %v801 = vadd.f32 %v737, %v769
        %v802 = vadd.f32 %v738, %v770
        %v803 = vadd.f32 %v739, %v771
        %v804 = vadd.f32 %v740, %v772
        %v805 = vadd.f32 %v741, %v773
        %v806 = vadd.f32 %v742, %v774
        %v807 = vadd.f32 %v743, %v775
        %v808 = vadd.f32 %v744, %v776
        %v809 = vadd.f32 %v745, %v777
        %v810 = vadd.f32 %v746, %v778
        %v811 = vadd.f32 %v747, %v779
        %v812 = vadd.f32 %v748, %v780
        %v813 = vadd.f32 %v749, %v781
        %v814 = vadd.f32 %v750, %v782
        %v815 = vadd.f32 %v751, %v783
        %v816 = vadd.f32 %v752, %v784
        %v817 = vadd.f32 %v753, %v785
        %v818 = vadd.f32 %v754, %v786
        %v819 = vadd.f32 %v755, %v787
        %v820 = vadd.f32 %v756, %v788
        %v821 = vadd.f32 %v757, %v789
        %v822 = vadd.f32 %v758, %v790
        %v823 = vadd.f32 %v759, %v791
        %v824 = vadd.f32 %v760, %v792
        %v825 = vadd.f32 %v761, %v793
        %v826 = vadd.f32 %v762, %v794
        %v827 = vadd.f32 %v763, %v795
        %v828 = vunpack.c.l.bf16 %v612
        %v829 = vunpack.c.l.bf16 %v613
        %v830 = vunpack.c.l.bf16 %v614
        %v831 = vunpack.c.l.bf16 %v615
        %v832 = vunpack.c.l.bf16 %v628
        %v833 = vunpack.c.l.bf16 %v629
        %v834 = vunpack.c.l.bf16 %v630
        %v835 = vunpack.c.l.bf16 %v631
        %v836 = vunpack.c.l.bf16 %v644
        %v837 = vunpack.c.l.bf16 %v645
        %v838 = vunpack.c.l.bf16 %v646
        %v839 = vunpack.c.l.bf16 %v647
        %v840 = vunpack.c.l.bf16 %v660
        %v841 = vunpack.c.l.bf16 %v661
        %v842 = vunpack.c.l.bf16 %v662
        %v843 = vunpack.c.l.bf16 %v663
        %v844 = vunpack.c.l.bf16 %v676
        %v845 = vunpack.c.l.bf16 %v677
        %v846 = vunpack.c.l.bf16 %v678
        %v847 = vunpack.c.l.bf16 %v679
        %v848 = vunpack.c.l.bf16 %v692
        %v849 = vunpack.c.l.bf16 %v693
        %v850 = vunpack.c.l.bf16 %v694
        %v851 = vunpack.c.l.bf16 %v695
        %v852 = vunpack.c.l.bf16 %v708
        %v853 = vunpack.c.l.bf16 %v709
        %v854 = vunpack.c.l.bf16 %v710
        %v855 = vunpack.c.l.bf16 %v711
        %v856 = vunpack.c.l.bf16 %v724
        %v857 = vunpack.c.l.bf16 %v725
        %v858 = vunpack.c.l.bf16 %v726
        %v859 = vunpack.c.l.bf16 %v727
        %v860 = vadd.f32 %v796, %v828
        %v861 = vadd.f32 %v797, %v829
        %v862 = vadd.f32 %v798, %v830
        %v863 = vadd.f32 %v799, %v831
        %v864 = vadd.f32 %v800, %v832
        %v865 = vadd.f32 %v801, %v833
        %v866 = vadd.f32 %v802, %v834
        %v867 = vadd.f32 %v803, %v835
        %v868 = vadd.f32 %v804, %v836
        %v869 = vadd.f32 %v805, %v837
        %v870 = vadd.f32 %v806, %v838
        %v871 = vadd.f32 %v807, %v839
        %v872 = vadd.f32 %v808, %v840
        %v873 = vadd.f32 %v809, %v841
        %v874 = vadd.f32 %v810, %v842
        %v875 = vadd.f32 %v811, %v843
        %v876 = vadd.f32 %v812, %v844
        %v877 = vadd.f32 %v813, %v845
        %v878 = vadd.f32 %v814, %v846
        %v879 = vadd.f32 %v815, %v847
        %v880 = vadd.f32 %v816, %v848
        %v881 = vadd.f32 %v817, %v849
        %v882 = vadd.f32 %v818, %v850
        %v883 = vadd.f32 %v819, %v851
        %v884 = vadd.f32 %v820, %v852
        %v885 = vadd.f32 %v821, %v853
        %v886 = vadd.f32 %v822, %v854
        %v887 = vadd.f32 %v823, %v855
        %v888 = vadd.f32 %v824, %v856
        %v889 = vadd.f32 %v825, %v857
        %v890 = vadd.f32 %v826, %v858
        %v891 = vadd.f32 %v827, %v859
        %v892 = vunpack.c.l.bf16 %v616
        %v893 = vunpack.c.l.bf16 %v617
        %v894 = vunpack.c.l.bf16 %v618
        %v895 = vunpack.c.l.bf16 %v619
        %v896 = vunpack.c.l.bf16 %v632
        %v897 = vunpack.c.l.bf16 %v633
        %v898 = vunpack.c.l.bf16 %v634
        %v899 = vunpack.c.l.bf16 %v635
        %v900 = vunpack.c.l.bf16 %v648
        %v901 = vunpack.c.l.bf16 %v649
        %v902 = vunpack.c.l.bf16 %v650
        %v903 = vunpack.c.l.bf16 %v651
        %v904 = vunpack.c.l.bf16 %v664
        %v905 = vunpack.c.l.bf16 %v665
        %v906 = vunpack.c.l.bf16 %v666
        %v907 = vunpack.c.l.bf16 %v667
        %v908 = vunpack.c.l.bf16 %v680
        %v909 = vunpack.c.l.bf16 %v681
        %v910 = vunpack.c.l.bf16 %v682
        %v911 = vunpack.c.l.bf16 %v683
        %v912 = vunpack.c.l.bf16 %v696
        %v913 = vunpack.c.l.bf16 %v697
        %v914 = vunpack.c.l.bf16 %v698
        %v915 = vunpack.c.l.bf16 %v699
        %v916 = vunpack.c.l.bf16 %v712
        %v917 = vunpack.c.l.bf16 %v713
        %v918 = vunpack.c.l.bf16 %v714
        %v919 = vunpack.c.l.bf16 %v715
        %v920 = vunpack.c.l.bf16 %v728
        %v921 = vunpack.c.l.bf16 %v729
        %v922 = vunpack.c.l.bf16 %v730
        %v923 = vunpack.c.l.bf16 %v731
        %v924 = vadd.f32 %v860, %v892
        %v925 = vadd.f32 %v861, %v893
        %v926 = vadd.f32 %v862, %v894
        %v927 = vadd.f32 %v863, %v895
        %v928 = vadd.f32 %v864, %v896
        %v929 = vadd.f32 %v865, %v897
        %v930 = vadd.f32 %v866, %v898
        %v931 = vadd.f32 %v867, %v899
        %v932 = vadd.f32 %v868, %v900
        %v933 = vadd.f32 %v869, %v901
        %v934 = vadd.f32 %v870, %v902
        %v935 = vadd.f32 %v871, %v903
        %v936 = vadd.f32 %v872, %v904
        %v937 = vadd.f32 %v873, %v905
        %v938 = vadd.f32 %v874, %v906
        %v939 = vadd.f32 %v875, %v907
        %v940 = vadd.f32 %v876, %v908
        %v941 = vadd.f32 %v877, %v909
        %v942 = vadd.f32 %v878, %v910
        %v943 = vadd.f32 %v879, %v911
        %v944 = vadd.f32 %v880, %v912
        %v945 = vadd.f32 %v881, %v913
        %v946 = vadd.f32 %v882, %v914
        %v947 = vadd.f32 %v883, %v915
        %v948 = vadd.f32 %v884, %v916
        %v949 = vadd.f32 %v885, %v917
        %v950 = vadd.f32 %v886, %v918
        %v951 = vadd.f32 %v887, %v919
        %v952 = vadd.f32 %v888, %v920
        %v953 = vadd.f32 %v889, %v921
        %v954 = vadd.f32 %v890, %v922
        %v955 = vadd.f32 %v891, %v923
        %v988 = vcombine.high %v924, %v924
        %v989 = vcombine.high %v925, %v925
        %v990 = vcombine.high %v926, %v926
        %v991 = vcombine.high %v927, %v927
        %v992 = vcombine.high %v928, %v928
        %v993 = vcombine.high %v929, %v929
        %v994 = vcombine.high %v930, %v930
        %v995 = vcombine.high %v931, %v931
        %v996 = vcombine.high %v932, %v932
        %v997 = vcombine.high %v933, %v933
        %v998 = vcombine.high %v934, %v934
        %v999 = vcombine.high %v935, %v935
        %v1000 = vcombine.high %v936, %v936
        %v1001 = vcombine.high %v937, %v937
        %v1002 = vcombine.high %v938, %v938
        %v1003 = vcombine.high %v939, %v939
        %v1004 = vcombine.high %v940, %v940
        %v1005 = vcombine.high %v941, %v941
        %v1006 = vcombine.high %v942, %v942
        %v1007 = vcombine.high %v943, %v943
        %v1008 = vcombine.high %v944, %v944
        %v1009 = vcombine.high %v945, %v945
        %v1010 = vcombine.high %v946, %v946
        %v1011 = vcombine.high %v947, %v947
        %v1012 = vcombine.high %v948, %v948
        %v1013 = vcombine.high %v949, %v949
        %v1014 = vcombine.high %v950, %v950
        %v1015 = vcombine.high %v951, %v951
        %v1016 = vcombine.high %v952, %v952
        %v1017 = vcombine.high %v953, %v953
        %v1018 = vcombine.high %v954, %v954
        %v1019 = vcombine.high %v955, %v955
        %v1052 = vrot.slane %v924, 5
        %v1053 = vrot.slane %v1052, 4
        %v1054 = vrot.slane %v988, 5
        %v1055 = vrot.slane %v1054, 4
        %v1056 = vrot.slane %v925, 5
        %v1057 = vrot.slane %v1056, 4
        %v1058 = vrot.slane %v989, 5
        %v1059 = vrot.slane %v1058, 4
        %v1060 = vrot.slane %v926, 5
        %v1061 = vrot.slane %v1060, 4
        %v1062 = vrot.slane %v990, 5
        %v1063 = vrot.slane %v1062, 4
        %v1064 = vrot.slane %v927, 5
        %v1065 = vrot.slane %v1064, 4
        %v1066 = vrot.slane %v991, 5
        %v1067 = vrot.slane %v1066, 4
        %v1068 = vrot.slane %v928, 5
        %v1069 = vrot.slane %v1068, 4
        %v1070 = vrot.slane %v992, 5
        %v1071 = vrot.slane %v1070, 4
        %v1072 = vrot.slane %v929, 5
        %v1073 = vrot.slane %v1072, 4
        %v1074 = vrot.slane %v993, 5
        %v1075 = vrot.slane %v1074, 4
        %v1076 = vrot.slane %v930, 5
        %v1077 = vrot.slane %v1076, 4
        %v1078 = vrot.slane %v994, 5
        %v1079 = vrot.slane %v1078, 4
        %v1080 = vrot.slane %v931, 5
        %v1081 = vrot.slane %v1080, 4
        %v1082 = vrot.slane %v995, 5
        %v1083 = vrot.slane %v1082, 4
        %v1084 = vrot.slane %v932, 5
        %v1085 = vrot.slane %v1084, 4
        %v1086 = vrot.slane %v996, 5
        %v1087 = vrot.slane %v1086, 4
        %v1088 = vrot.slane %v933, 5
        %v1089 = vrot.slane %v1088, 4
        %v1090 = vrot.slane %v997, 5
        %v1091 = vrot.slane %v1090, 4
        %v1092 = vrot.slane %v934, 5
        %v1093 = vrot.slane %v1092, 4
        %v1094 = vrot.slane %v998, 5
        %v1095 = vrot.slane %v1094, 4
        %v1096 = vrot.slane %v935, 5
        %v1097 = vrot.slane %v1096, 4
        %v1098 = vrot.slane %v999, 5
        %v1099 = vrot.slane %v1098, 4
        %v1100 = vrot.slane %v936, 5
        %v1101 = vrot.slane %v1100, 4
        %v1102 = vrot.slane %v1000, 5
        %v1103 = vrot.slane %v1102, 4
        %v1104 = vrot.slane %v937, 5
        %v1105 = vrot.slane %v1104, 4
        %v1106 = vrot.slane %v1001, 5
        %v1107 = vrot.slane %v1106, 4
        %v1108 = vrot.slane %v938, 5
        %v1109 = vrot.slane %v1108, 4
        %v1110 = vrot.slane %v1002, 5
        %v1111 = vrot.slane %v1110, 4
        %v1112 = vrot.slane %v939, 5
        %v1113 = vrot.slane %v1112, 4
        %v1114 = vrot.slane %v1003, 5
        %v1115 = vrot.slane %v1114, 4
        %v1116 = vrot.slane %v940, 5
        %v1117 = vrot.slane %v1116, 4
        %v1118 = vrot.slane %v1004, 5
        %v1119 = vrot.slane %v1118, 4
        %v1120 = vrot.slane %v941, 5
        %v1121 = vrot.slane %v1120, 4
        %v1122 = vrot.slane %v1005, 5
        %v1123 = vrot.slane %v1122, 4
        %v1124 = vrot.slane %v942, 5
        %v1125 = vrot.slane %v1124, 4
        %v1126 = vrot.slane %v1006, 5
        %v1127 = vrot.slane %v1126, 4
        %v1128 = vrot.slane %v943, 5
        %v1129 = vrot.slane %v1128, 4
        %v1130 = vrot.slane %v1007, 5
        %v1131 = vrot.slane %v1130, 4
        %v1132 = vrot.slane %v944, 5
        %v1133 = vrot.slane %v1132, 4
        %v1134 = vrot.slane %v1008, 5
        %v1135 = vrot.slane %v1134, 4
        %v1136 = vrot.slane %v945, 5
        %v1137 = vrot.slane %v1136, 4
        %v1138 = vrot.slane %v1009, 5
        %v1139 = vrot.slane %v1138, 4
        %v1140 = vrot.slane %v946, 5
        %v1141 = vrot.slane %v1140, 4
        %v1142 = vrot.slane %v1010, 5
        %v1143 = vrot.slane %v1142, 4
        %v1144 = vrot.slane %v947, 5
        %v1145 = vrot.slane %v1144, 4
        %v1146 = vrot.slane %v1011, 5
        %v1147 = vrot.slane %v1146, 4
        %v1148 = vrot.slane %v948, 5
        %v1149 = vrot.slane %v1148, 4
        %v1150 = vrot.slane %v1012, 5
        %v1151 = vrot.slane %v1150, 4
        %v1152 = vrot.slane %v949, 5
        %v1153 = vrot.slane %v1152, 4
        %v1154 = vrot.slane %v1013, 5
        %v1155 = vrot.slane %v1154, 4
        %v1156 = vrot.slane %v950, 5
        %v1157 = vrot.slane %v1156, 4
        %v1158 = vrot.slane %v1014, 5
        %v1159 = vrot.slane %v1158, 4
        %v1160 = vrot.slane %v951, 5
        %v1161 = vrot.slane %v1160, 4
        %v1162 = vrot.slane %v1015, 5
        %v1163 = vrot.slane %v1162, 4
        %v1164 = vrot.slane %v952, 5
        %v1165 = vrot.slane %v1164, 4
        %v1166 = vrot.slane %v1016, 5
        %v1167 = vrot.slane %v1166, 4
        %v1168 = vrot.slane %v953, 5
        %v1169 = vrot.slane %v1168, 4
        %v1170 = vrot.slane %v1017, 5
        %v1171 = vrot.slane %v1170, 4
        %v1172 = vrot.slane %v954, 5
        %v1173 = vrot.slane %v1172, 4
        %v1174 = vrot.slane %v1018, 5
        %v1175 = vrot.slane %v1174, 4
        %v1176 = vrot.slane %v955, 5
        %v1177 = vrot.slane %v1176, 4
        %v1178 = vrot.slane %v1019, 5
        %v1179 = vrot.slane %v1178, 4
        %v1244 = vadd.f32 %v924, %v1053
        %v1245 = vadd.f32 %v988, %v1055
        %v1246 = vadd.f32 %v925, %v1057
        %v1247 = vadd.f32 %v989, %v1059
        %v1248 = vadd.f32 %v926, %v1061
        %v1249 = vadd.f32 %v990, %v1063
        %v1250 = vadd.f32 %v927, %v1065
        %v1251 = vadd.f32 %v991, %v1067
        %v1252 = vadd.f32 %v928, %v1069
        %v1253 = vadd.f32 %v992, %v1071
        %v1254 = vadd.f32 %v929, %v1073
        %v1255 = vadd.f32 %v993, %v1075
        %v1256 = vadd.f32 %v930, %v1077
        %v1257 = vadd.f32 %v994, %v1079
        %v1258 = vadd.f32 %v931, %v1081
        %v1259 = vadd.f32 %v995, %v1083
        %v1260 = vadd.f32 %v932, %v1085
        %v1261 = vadd.f32 %v996, %v1087
        %v1262 = vadd.f32 %v933, %v1089
        %v1263 = vadd.f32 %v997, %v1091
        %v1264 = vadd.f32 %v934, %v1093
        %v1265 = vadd.f32 %v998, %v1095
        %v1266 = vadd.f32 %v935, %v1097
        %v1267 = vadd.f32 %v999, %v1099
        %v1268 = vadd.f32 %v936, %v1101
        %v1269 = vadd.f32 %v1000, %v1103
        %v1270 = vadd.f32 %v937, %v1105
        %v1271 = vadd.f32 %v1001, %v1107
        %v1272 = vadd.f32 %v938, %v1109
        %v1273 = vadd.f32 %v1002, %v1111
        %v1274 = vadd.f32 %v939, %v1113
        %v1275 = vadd.f32 %v1003, %v1115
        %v1276 = vadd.f32 %v940, %v1117
        %v1277 = vadd.f32 %v1004, %v1119
        %v1278 = vadd.f32 %v941, %v1121
        %v1279 = vadd.f32 %v1005, %v1123
        %v1280 = vadd.f32 %v942, %v1125
        %v1281 = vadd.f32 %v1006, %v1127
        %v1282 = vadd.f32 %v943, %v1129
        %v1283 = vadd.f32 %v1007, %v1131
        %v1284 = vadd.f32 %v944, %v1133
        %v1285 = vadd.f32 %v1008, %v1135
        %v1286 = vadd.f32 %v945, %v1137
        %v1287 = vadd.f32 %v1009, %v1139
        %v1288 = vadd.f32 %v946, %v1141
        %v1289 = vadd.f32 %v1010, %v1143
        %v1290 = vadd.f32 %v947, %v1145
        %v1291 = vadd.f32 %v1011, %v1147
        %v1292 = vadd.f32 %v948, %v1149
        %v1293 = vadd.f32 %v1012, %v1151
        %v1294 = vadd.f32 %v949, %v1153
        %v1295 = vadd.f32 %v1013, %v1155
        %v1296 = vadd.f32 %v950, %v1157
        %v1297 = vadd.f32 %v1014, %v1159
        %v1298 = vadd.f32 %v951, %v1161
        %v1299 = vadd.f32 %v1015, %v1163
        %v1300 = vadd.f32 %v952, %v1165
        %v1301 = vadd.f32 %v1016, %v1167
        %v1302 = vadd.f32 %v953, %v1169
        %v1303 = vadd.f32 %v1017, %v1171
        %v1304 = vadd.f32 %v954, %v1173
        %v1305 = vadd.f32 %v1018, %v1175
        %v1306 = vadd.f32 %v955, %v1177
        %v1307 = vadd.f32 %v1019, %v1179
        %v1308 = vrot.slane %v924, 6
        %v1309 = vrot.slane %v1308, 4
        %v1310 = vrot.slane %v988, 6
        %v1311 = vrot.slane %v1310, 4
        %v1312 = vrot.slane %v925, 6
        %v1313 = vrot.slane %v1312, 4
        %v1314 = vrot.slane %v989, 6
        %v1315 = vrot.slane %v1314, 4
        %v1316 = vrot.slane %v926, 6
        %v1317 = vrot.slane %v1316, 4
        %v1318 = vrot.slane %v990, 6
        %v1319 = vrot.slane %v1318, 4
        %v1320 = vrot.slane %v927, 6
        %v1321 = vrot.slane %v1320, 4
        %v1322 = vrot.slane %v991, 6
        %v1323 = vrot.slane %v1322, 4
        %v1324 = vrot.slane %v928, 6
        %v1325 = vrot.slane %v1324, 4
        %v1326 = vrot.slane %v992, 6
        %v1327 = vrot.slane %v1326, 4
        %v1328 = vrot.slane %v929, 6
        %v1329 = vrot.slane %v1328, 4
        %v1330 = vrot.slane %v993, 6
        %v1331 = vrot.slane %v1330, 4
        %v1332 = vrot.slane %v930, 6
        %v1333 = vrot.slane %v1332, 4
        %v1334 = vrot.slane %v994, 6
        %v1335 = vrot.slane %v1334, 4
        %v1336 = vrot.slane %v931, 6
        %v1337 = vrot.slane %v1336, 4
        %v1338 = vrot.slane %v995, 6
        %v1339 = vrot.slane %v1338, 4
        %v1340 = vrot.slane %v932, 6
        %v1341 = vrot.slane %v1340, 4
        %v1342 = vrot.slane %v996, 6
        %v1343 = vrot.slane %v1342, 4
        %v1344 = vrot.slane %v933, 6
        %v1345 = vrot.slane %v1344, 4
        %v1346 = vrot.slane %v997, 6
        %v1347 = vrot.slane %v1346, 4
        %v1348 = vrot.slane %v934, 6
        %v1349 = vrot.slane %v1348, 4
        %v1350 = vrot.slane %v998, 6
        %v1351 = vrot.slane %v1350, 4
        %v1352 = vrot.slane %v935, 6
        %v1353 = vrot.slane %v1352, 4
        %v1354 = vrot.slane %v999, 6
        %v1355 = vrot.slane %v1354, 4
        %v1356 = vrot.slane %v936, 6
        %v1357 = vrot.slane %v1356, 4
        %v1358 = vrot.slane %v1000, 6
        %v1359 = vrot.slane %v1358, 4
        %v1360 = vrot.slane %v937, 6
        %v1361 = vrot.slane %v1360, 4
        %v1362 = vrot.slane %v1001, 6
        %v1363 = vrot.slane %v1362, 4
        %v1364 = vrot.slane %v938, 6
        %v1365 = vrot.slane %v1364, 4
        %v1366 = vrot.slane %v1002, 6
        %v1367 = vrot.slane %v1366, 4
        %v1368 = vrot.slane %v939, 6
        %v1369 = vrot.slane %v1368, 4
        %v1370 = vrot.slane %v1003, 6
        %v1371 = vrot.slane %v1370, 4
        %v1372 = vrot.slane %v940, 6
        %v1373 = vrot.slane %v1372, 4
        %v1374 = vrot.slane %v1004, 6
        %v1375 = vrot.slane %v1374, 4
        %v1376 = vrot.slane %v941, 6
        %v1377 = vrot.slane %v1376, 4
        %v1378 = vrot.slane %v1005, 6
        %v1379 = vrot.slane %v1378, 4
        %v1380 = vrot.slane %v942, 6
        %v1381 = vrot.slane %v1380, 4
        %v1382 = vrot.slane %v1006, 6
        %v1383 = vrot.slane %v1382, 4
        %v1384 = vrot.slane %v943, 6
        %v1385 = vrot.slane %v1384, 4
        %v1386 = vrot.slane %v1007, 6
        %v1387 = vrot.slane %v1386, 4
        %v1388 = vrot.slane %v944, 6
        %v1389 = vrot.slane %v1388, 4
        %v1390 = vrot.slane %v1008, 6
        %v1391 = vrot.slane %v1390, 4
        %v1392 = vrot.slane %v945, 6
        %v1393 = vrot.slane %v1392, 4
        %v1394 = vrot.slane %v1009, 6
        %v1395 = vrot.slane %v1394, 4
        %v1396 = vrot.slane %v946, 6
        %v1397 = vrot.slane %v1396, 4
        %v1398 = vrot.slane %v1010, 6
        %v1399 = vrot.slane %v1398, 4
        %v1400 = vrot.slane %v947, 6
        %v1401 = vrot.slane %v1400, 4
        %v1402 = vrot.slane %v1011, 6
        %v1403 = vrot.slane %v1402, 4
        %v1404 = vrot.slane %v948, 6
        %v1405 = vrot.slane %v1404, 4
        %v1406 = vrot.slane %v1012, 6
        %v1407 = vrot.slane %v1406, 4
        %v1408 = vrot.slane %v949, 6
        %v1409 = vrot.slane %v1408, 4
        %v1410 = vrot.slane %v1013, 6
        %v1411 = vrot.slane %v1410, 4
        %v1412 = vrot.slane %v950, 6
        %v1413 = vrot.slane %v1412, 4
        %v1414 = vrot.slane %v1014, 6
        %v1415 = vrot.slane %v1414, 4
        %v1416 = vrot.slane %v951, 6
        %v1417 = vrot.slane %v1416, 4
        %v1418 = vrot.slane %v1015, 6
        %v1419 = vrot.slane %v1418, 4
        %v1420 = vrot.slane %v952, 6
        %v1421 = vrot.slane %v1420, 4
        %v1422 = vrot.slane %v1016, 6
        %v1423 = vrot.slane %v1422, 4
        %v1424 = vrot.slane %v953, 6
        %v1425 = vrot.slane %v1424, 4
        %v1426 = vrot.slane %v1017, 6
        %v1427 = vrot.slane %v1426, 4
        %v1428 = vrot.slane %v954, 6
        %v1429 = vrot.slane %v1428, 4
        %v1430 = vrot.slane %v1018, 6
        %v1431 = vrot.slane %v1430, 4
        %v1432 = vrot.slane %v955, 6
        %v1433 = vrot.slane %v1432, 4
        %v1434 = vrot.slane %v1019, 6
        %v1435 = vrot.slane %v1434, 4
        %v1500 = vadd.f32 %v1244, %v1309
        %v1501 = vadd.f32 %v1245, %v1311
        %v1502 = vadd.f32 %v1246, %v1313
        %v1503 = vadd.f32 %v1247, %v1315
        %v1504 = vadd.f32 %v1248, %v1317
        %v1505 = vadd.f32 %v1249, %v1319
        %v1506 = vadd.f32 %v1250, %v1321
        %v1507 = vadd.f32 %v1251, %v1323
        %v1508 = vadd.f32 %v1252, %v1325
        %v1509 = vadd.f32 %v1253, %v1327
        %v1510 = vadd.f32 %v1254, %v1329
        %v1511 = vadd.f32 %v1255, %v1331
        %v1512 = vadd.f32 %v1256, %v1333
        %v1513 = vadd.f32 %v1257, %v1335
        %v1514 = vadd.f32 %v1258, %v1337
        %v1515 = vadd.f32 %v1259, %v1339
        %v1516 = vadd.f32 %v1260, %v1341
        %v1517 = vadd.f32 %v1261, %v1343
        %v1518 = vadd.f32 %v1262, %v1345
        %v1519 = vadd.f32 %v1263, %v1347
        %v1520 = vadd.f32 %v1264, %v1349
        %v1521 = vadd.f32 %v1265, %v1351
        %v1522 = vadd.f32 %v1266, %v1353
        %v1523 = vadd.f32 %v1267, %v1355
        %v1524 = vadd.f32 %v1268, %v1357
        %v1525 = vadd.f32 %v1269, %v1359
        %v1526 = vadd.f32 %v1270, %v1361
        %v1527 = vadd.f32 %v1271, %v1363
        %v1528 = vadd.f32 %v1272, %v1365
        %v1529 = vadd.f32 %v1273, %v1367
        %v1530 = vadd.f32 %v1274, %v1369
        %v1531 = vadd.f32 %v1275, %v1371
        %v1532 = vadd.f32 %v1276, %v1373
        %v1533 = vadd.f32 %v1277, %v1375
        %v1534 = vadd.f32 %v1278, %v1377
        %v1535 = vadd.f32 %v1279, %v1379
        %v1536 = vadd.f32 %v1280, %v1381
        %v1537 = vadd.f32 %v1281, %v1383
        %v1538 = vadd.f32 %v1282, %v1385
        %v1539 = vadd.f32 %v1283, %v1387
        %v1540 = vadd.f32 %v1284, %v1389
        %v1541 = vadd.f32 %v1285, %v1391
        %v1542 = vadd.f32 %v1286, %v1393
        %v1543 = vadd.f32 %v1287, %v1395
        %v1544 = vadd.f32 %v1288, %v1397
        %v1545 = vadd.f32 %v1289, %v1399
        %v1546 = vadd.f32 %v1290, %v1401
        %v1547 = vadd.f32 %v1291, %v1403
        %v1548 = vadd.f32 %v1292, %v1405
        %v1549 = vadd.f32 %v1293, %v1407
        %v1550 = vadd.f32 %v1294, %v1409
        %v1551 = vadd.f32 %v1295, %v1411
        %v1552 = vadd.f32 %v1296, %v1413
        %v1553 = vadd.f32 %v1297, %v1415
        %v1554 = vadd.f32 %v1298, %v1417
        %v1555 = vadd.f32 %v1299, %v1419
        %v1556 = vadd.f32 %v1300, %v1421
        %v1557 = vadd.f32 %v1301, %v1423
        %v1558 = vadd.f32 %v1302, %v1425
        %v1559 = vadd.f32 %v1303, %v1427
        %v1560 = vadd.f32 %v1304, %v1429
        %v1561 = vadd.f32 %v1305, %v1431
        %v1562 = vadd.f32 %v1306, %v1433
        %v1563 = vadd.f32 %v1307, %v1435
        %v1564 = vrot.slane %v924, 7
        %v1565 = vrot.slane %v1564, 4
        %v1566 = vrot.slane %v988, 7
        %v1567 = vrot.slane %v1566, 4
        %v1568 = vrot.slane %v925, 7
        %v1569 = vrot.slane %v1568, 4
        %v1570 = vrot.slane %v989, 7
        %v1571 = vrot.slane %v1570, 4
        %v1572 = vrot.slane %v926, 7
        %v1573 = vrot.slane %v1572, 4
        %v1574 = vrot.slane %v990, 7
        %v1575 = vrot.slane %v1574, 4
        %v1576 = vrot.slane %v927, 7
        %v1577 = vrot.slane %v1576, 4
        %v1578 = vrot.slane %v991, 7
        %v1579 = vrot.slane %v1578, 4
        %v1580 = vrot.slane %v928, 7
        %v1581 = vrot.slane %v1580, 4
        %v1582 = vrot.slane %v992, 7
        %v1583 = vrot.slane %v1582, 4
        %v1584 = vrot.slane %v929, 7
        %v1585 = vrot.slane %v1584, 4
        %v1586 = vrot.slane %v993, 7
        %v1587 = vrot.slane %v1586, 4
        %v1588 = vrot.slane %v930, 7
        %v1589 = vrot.slane %v1588, 4
        %v1590 = vrot.slane %v994, 7
        %v1591 = vrot.slane %v1590, 4
        %v1592 = vrot.slane %v931, 7
        %v1593 = vrot.slane %v1592, 4
        %v1594 = vrot.slane %v995, 7
        %v1595 = vrot.slane %v1594, 4
        %v1596 = vrot.slane %v932, 7
        %v1597 = vrot.slane %v1596, 4
        %v1598 = vrot.slane %v996, 7
        %v1599 = vrot.slane %v1598, 4
        %v1600 = vrot.slane %v933, 7
        %v1601 = vrot.slane %v1600, 4
        %v1602 = vrot.slane %v997, 7
        %v1603 = vrot.slane %v1602, 4
        %v1604 = vrot.slane %v934, 7
        %v1605 = vrot.slane %v1604, 4
        %v1606 = vrot.slane %v998, 7
        %v1607 = vrot.slane %v1606, 4
        %v1608 = vrot.slane %v935, 7
        %v1609 = vrot.slane %v1608, 4
        %v1610 = vrot.slane %v999, 7
        %v1611 = vrot.slane %v1610, 4
        %v1612 = vrot.slane %v936, 7
        %v1613 = vrot.slane %v1612, 4
        %v1614 = vrot.slane %v1000, 7
        %v1615 = vrot.slane %v1614, 4
        %v1616 = vrot.slane %v937, 7
        %v1617 = vrot.slane %v1616, 4
        %v1618 = vrot.slane %v1001, 7
        %v1619 = vrot.slane %v1618, 4
        %v1620 = vrot.slane %v938, 7
        %v1621 = vrot.slane %v1620, 4
        %v1622 = vrot.slane %v1002, 7
        %v1623 = vrot.slane %v1622, 4
        %v1624 = vrot.slane %v939, 7
        %v1625 = vrot.slane %v1624, 4
        %v1626 = vrot.slane %v1003, 7
        %v1627 = vrot.slane %v1626, 4
        %v1628 = vrot.slane %v940, 7
        %v1629 = vrot.slane %v1628, 4
        %v1630 = vrot.slane %v1004, 7
        %v1631 = vrot.slane %v1630, 4
        %v1632 = vrot.slane %v941, 7
        %v1633 = vrot.slane %v1632, 4
        %v1634 = vrot.slane %v1005, 7
        %v1635 = vrot.slane %v1634, 4
        %v1636 = vrot.slane %v942, 7
        %v1637 = vrot.slane %v1636, 4
        %v1638 = vrot.slane %v1006, 7
        %v1639 = vrot.slane %v1638, 4
        %v1640 = vrot.slane %v943, 7
        %v1641 = vrot.slane %v1640, 4
        %v1642 = vrot.slane %v1007, 7
        %v1643 = vrot.slane %v1642, 4
        %v1644 = vrot.slane %v944, 7
        %v1645 = vrot.slane %v1644, 4
        %v1646 = vrot.slane %v1008, 7
        %v1647 = vrot.slane %v1646, 4
        %v1648 = vrot.slane %v945, 7
        %v1649 = vrot.slane %v1648, 4
        %v1650 = vrot.slane %v1009, 7
        %v1651 = vrot.slane %v1650, 4
        %v1652 = vrot.slane %v946, 7
        %v1653 = vrot.slane %v1652, 4
        %v1654 = vrot.slane %v1010, 7
        %v1655 = vrot.slane %v1654, 4
        %v1656 = vrot.slane %v947, 7
        %v1657 = vrot.slane %v1656, 4
        %v1658 = vrot.slane %v1011, 7
        %v1659 = vrot.slane %v1658, 4
        %v1660 = vrot.slane %v948, 7
        %v1661 = vrot.slane %v1660, 4
        %v1662 = vrot.slane %v1012, 7
        %v1663 = vrot.slane %v1662, 4
        %v1664 = vrot.slane %v949, 7
        %v1665 = vrot.slane %v1664, 4
        %v1666 = vrot.slane %v1013, 7
        %v1667 = vrot.slane %v1666, 4
        %v1668 = vrot.slane %v950, 7
        %v1669 = vrot.slane %v1668, 4
        %v1670 = vrot.slane %v1014, 7
        %v1671 = vrot.slane %v1670, 4
        %v1672 = vrot.slane %v951, 7
        %v1673 = vrot.slane %v1672, 4
        %v1674 = vrot.slane %v1015, 7
        %v1675 = vrot.slane %v1674, 4
        %v1676 = vrot.slane %v952, 7
        %v1677 = vrot.slane %v1676, 4
        %v1678 = vrot.slane %v1016, 7
        %v1679 = vrot.slane %v1678, 4
        %v1680 = vrot.slane %v953, 7
        %v1681 = vrot.slane %v1680, 4
        %v1682 = vrot.slane %v1017, 7
        %v1683 = vrot.slane %v1682, 4
        %v1684 = vrot.slane %v954, 7
        %v1685 = vrot.slane %v1684, 4
        %v1686 = vrot.slane %v1018, 7
        %v1687 = vrot.slane %v1686, 4
        %v1688 = vrot.slane %v955, 7
        %v1689 = vrot.slane %v1688, 4
        %v1690 = vrot.slane %v1019, 7
        %v1691 = vrot.slane %v1690, 4
        %v1756 = vadd.f32 %v1500, %v1565
        %v1757 = vadd.f32 %v1501, %v1567
        %v1758 = vadd.f32 %v1502, %v1569
        %v1759 = vadd.f32 %v1503, %v1571
        %v1760 = vadd.f32 %v1504, %v1573
        %v1761 = vadd.f32 %v1505, %v1575
        %v1762 = vadd.f32 %v1506, %v1577
        %v1763 = vadd.f32 %v1507, %v1579
        %v1764 = vadd.f32 %v1508, %v1581
        %v1765 = vadd.f32 %v1509, %v1583
        %v1766 = vadd.f32 %v1510, %v1585
        %v1767 = vadd.f32 %v1511, %v1587
        %v1768 = vadd.f32 %v1512, %v1589
        %v1769 = vadd.f32 %v1513, %v1591
        %v1770 = vadd.f32 %v1514, %v1593
        %v1771 = vadd.f32 %v1515, %v1595
        %v1772 = vadd.f32 %v1516, %v1597
        %v1773 = vadd.f32 %v1517, %v1599
        %v1774 = vadd.f32 %v1518, %v1601
        %v1775 = vadd.f32 %v1519, %v1603
        %v1776 = vadd.f32 %v1520, %v1605
        %v1777 = vadd.f32 %v1521, %v1607
        %v1778 = vadd.f32 %v1522, %v1609
        %v1779 = vadd.f32 %v1523, %v1611
        %v1780 = vadd.f32 %v1524, %v1613
        %v1781 = vadd.f32 %v1525, %v1615
        %v1782 = vadd.f32 %v1526, %v1617
        %v1783 = vadd.f32 %v1527, %v1619
        %v1784 = vadd.f32 %v1528, %v1621
        %v1785 = vadd.f32 %v1529, %v1623
        %v1786 = vadd.f32 %v1530, %v1625
        %v1787 = vadd.f32 %v1531, %v1627
        %v1788 = vadd.f32 %v1532, %v1629
        %v1789 = vadd.f32 %v1533, %v1631
        %v1790 = vadd.f32 %v1534, %v1633
        %v1791 = vadd.f32 %v1535, %v1635
        %v1792 = vadd.f32 %v1536, %v1637
        %v1793 = vadd.f32 %v1537, %v1639
        %v1794 = vadd.f32 %v1538, %v1641
        %v1795 = vadd.f32 %v1539, %v1643
        %v1796 = vadd.f32 %v1540, %v1645
        %v1797 = vadd.f32 %v1541, %v1647
        %v1798 = vadd.f32 %v1542, %v1649
        %v1799 = vadd.f32 %v1543, %v1651
        %v1800 = vadd.f32 %v1544, %v1653
        %v1801 = vadd.f32 %v1545, %v1655
        %v1802 = vadd.f32 %v1546, %v1657
        %v1803 = vadd.f32 %v1547, %v1659
        %v1804 = vadd.f32 %v1548, %v1661
        %v1805 = vadd.f32 %v1549, %v1663
        %v1806 = vadd.f32 %v1550, %v1665
        %v1807 = vadd.f32 %v1551, %v1667
        %v1808 = vadd.f32 %v1552, %v1669
        %v1809 = vadd.f32 %v1553, %v1671
        %v1810 = vadd.f32 %v1554, %v1673
        %v1811 = vadd.f32 %v1555, %v1675
        %v1812 = vadd.f32 %v1556, %v1677
        %v1813 = vadd.f32 %v1557, %v1679
        %v1814 = vadd.f32 %v1558, %v1681
        %v1815 = vadd.f32 %v1559, %v1683
        %v1816 = vadd.f32 %v1560, %v1685
        %v1817 = vadd.f32 %v1561, %v1687
        %v1818 = vadd.f32 %v1562, %v1689
        %v1819 = vadd.f32 %v1563, %v1691
        %v1820 = vmul.f32 %v1756, 0.0625
        %v1821 = vmul.f32 %v1757, 0.0625
        %v1822 = vmul.f32 %v1758, 0.0625
        %v1823 = vmul.f32 %v1759, 0.0625
        %v1824 = vmul.f32 %v1760, 0.0625
        %v1825 = vmul.f32 %v1761, 0.0625
        %v1826 = vmul.f32 %v1762, 0.0625
        %v1827 = vmul.f32 %v1763, 0.0625
        %v1828 = vmul.f32 %v1764, 0.0625
        %v1829 = vmul.f32 %v1765, 0.0625
        %v1830 = vmul.f32 %v1766, 0.0625
        %v1831 = vmul.f32 %v1767, 0.0625
        %v1832 = vmul.f32 %v1768, 0.0625
        %v1833 = vmul.f32 %v1769, 0.0625
        %v1834 = vmul.f32 %v1770, 0.0625
        %v1835 = vmul.f32 %v1771, 0.0625
        %v1836 = vmul.f32 %v1772, 0.0625
        %v1837 = vmul.f32 %v1773, 0.0625
        %v1838 = vmul.f32 %v1774, 0.0625
        %v1839 = vmul.f32 %v1775, 0.0625
        %v1840 = vmul.f32 %v1776, 0.0625
        %v1841 = vmul.f32 %v1777, 0.0625
        %v1842 = vmul.f32 %v1778, 0.0625
        %v1843 = vmul.f32 %v1779, 0.0625
        %v1844 = vmul.f32 %v1780, 0.0625
        %v1845 = vmul.f32 %v1781, 0.0625
        %v1846 = vmul.f32 %v1782, 0.0625
        %v1847 = vmul.f32 %v1783, 0.0625
        %v1848 = vmul.f32 %v1784, 0.0625
        %v1849 = vmul.f32 %v1785, 0.0625
        %v1850 = vmul.f32 %v1786, 0.0625
        %v1851 = vmul.f32 %v1787, 0.0625
        %v1852 = vmul.f32 %v1788, 0.0625
        %v1853 = vmul.f32 %v1789, 0.0625
        %v1854 = vmul.f32 %v1790, 0.0625
        %v1855 = vmul.f32 %v1791, 0.0625
        %v1856 = vmul.f32 %v1792, 0.0625
        %v1857 = vmul.f32 %v1793, 0.0625
        %v1858 = vmul.f32 %v1794, 0.0625
        %v1859 = vmul.f32 %v1795, 0.0625
        %v1860 = vmul.f32 %v1796, 0.0625
        %v1861 = vmul.f32 %v1797, 0.0625
        %v1862 = vmul.f32 %v1798, 0.0625
        %v1863 = vmul.f32 %v1799, 0.0625
        %v1864 = vmul.f32 %v1800, 0.0625
        %v1865 = vmul.f32 %v1801, 0.0625
        %v1866 = vmul.f32 %v1802, 0.0625
        %v1867 = vmul.f32 %v1803, 0.0625
        %v1868 = vmul.f32 %v1804, 0.0625
        %v1869 = vmul.f32 %v1805, 0.0625
        %v1870 = vmul.f32 %v1806, 0.0625
        %v1871 = vmul.f32 %v1807, 0.0625
        %v1872 = vmul.f32 %v1808, 0.0625
        %v1873 = vmul.f32 %v1809, 0.0625
        %v1874 = vmul.f32 %v1810, 0.0625
        %v1875 = vmul.f32 %v1811, 0.0625
        %v1876 = vmul.f32 %v1812, 0.0625
        %v1877 = vmul.f32 %v1813, 0.0625
        %v1878 = vmul.f32 %v1814, 0.0625
        %v1879 = vmul.f32 %v1815, 0.0625
        %v1880 = vmul.f32 %v1816, 0.0625
        %v1881 = vmul.f32 %v1817, 0.0625
        %v1882 = vmul.f32 %v1818, 0.0625
        %v1883 = vmul.f32 %v1819, 0.0625
        %v1884 = vpack.c.bf16 %v1820, %v1820
        %v1885 = vpack.c.bf16 %v1821, %v1821
        %v1886 = vpack.c.bf16 %v1822, %v1822
        %v1887 = vpack.c.bf16 %v1823, %v1823
        %v1888 = vpack.c.bf16 %v1824, %v1824
        %v1889 = vpack.c.bf16 %v1825, %v1825
        %v1890 = vpack.c.bf16 %v1826, %v1826
        %v1891 = vpack.c.bf16 %v1827, %v1827
        %v1892 = vpack.c.bf16 %v1828, %v1828
        %v1893 = vpack.c.bf16 %v1829, %v1829
        %v1894 = vpack.c.bf16 %v1830, %v1830
        %v1895 = vpack.c.bf16 %v1831, %v1831
        %v1896 = vpack.c.bf16 %v1832, %v1832
        %v1897 = vpack.c.bf16 %v1833, %v1833
        %v1898 = vpack.c.bf16 %v1834, %v1834
        %v1899 = vpack.c.bf16 %v1835, %v1835
        %v1900 = vpack.c.bf16 %v1836, %v1836
        %v1901 = vpack.c.bf16 %v1837, %v1837
        %v1902 = vpack.c.bf16 %v1838, %v1838
        %v1903 = vpack.c.bf16 %v1839, %v1839
        %v1904 = vpack.c.bf16 %v1840, %v1840
        %v1905 = vpack.c.bf16 %v1841, %v1841
        %v1906 = vpack.c.bf16 %v1842, %v1842
        %v1907 = vpack.c.bf16 %v1843, %v1843
        %v1908 = vpack.c.bf16 %v1844, %v1844
        %v1909 = vpack.c.bf16 %v1845, %v1845
        %v1910 = vpack.c.bf16 %v1846, %v1846
        %v1911 = vpack.c.bf16 %v1847, %v1847
        %v1912 = vpack.c.bf16 %v1848, %v1848
        %v1913 = vpack.c.bf16 %v1849, %v1849
        %v1914 = vpack.c.bf16 %v1850, %v1850
        %v1915 = vpack.c.bf16 %v1851, %v1851
        %v1916 = vpack.c.bf16 %v1852, %v1852
        %v1917 = vpack.c.bf16 %v1853, %v1853
        %v1918 = vpack.c.bf16 %v1854, %v1854
        %v1919 = vpack.c.bf16 %v1855, %v1855
        %v1920 = vpack.c.bf16 %v1856, %v1856
        %v1921 = vpack.c.bf16 %v1857, %v1857
        %v1922 = vpack.c.bf16 %v1858, %v1858
        %v1923 = vpack.c.bf16 %v1859, %v1859
        %v1924 = vpack.c.bf16 %v1860, %v1860
        %v1925 = vpack.c.bf16 %v1861, %v1861
        %v1926 = vpack.c.bf16 %v1862, %v1862
        %v1927 = vpack.c.bf16 %v1863, %v1863
        %v1928 = vpack.c.bf16 %v1864, %v1864
        %v1929 = vpack.c.bf16 %v1865, %v1865
        %v1930 = vpack.c.bf16 %v1866, %v1866
        %v1931 = vpack.c.bf16 %v1867, %v1867
        %v1932 = vpack.c.bf16 %v1868, %v1868
        %v1933 = vpack.c.bf16 %v1869, %v1869
        %v1934 = vpack.c.bf16 %v1870, %v1870
        %v1935 = vpack.c.bf16 %v1871, %v1871
        %v1936 = vpack.c.bf16 %v1872, %v1872
        %v1937 = vpack.c.bf16 %v1873, %v1873
        %v1938 = vpack.c.bf16 %v1874, %v1874
        %v1939 = vpack.c.bf16 %v1875, %v1875
        %v1940 = vpack.c.bf16 %v1876, %v1876
        %v1941 = vpack.c.bf16 %v1877, %v1877
        %v1942 = vpack.c.bf16 %v1878, %v1878
        %v1943 = vpack.c.bf16 %v1879, %v1879
        %v1944 = vpack.c.bf16 %v1880, %v1880
        %v1945 = vpack.c.bf16 %v1881, %v1881
        %v1946 = vpack.c.bf16 %v1882, %v1882
        %v1947 = vpack.c.bf16 %v1883, %v1883
        %v1948 = vld [vmem:[%s508] sm:$0xf]
        %v1949 = vld [vmem:[%s508 + $0x4] sm:$0xf]
        %v1950 = vld [vmem:[%s508 + $0x8] sm:$0xf]
        %v1951 = vld [vmem:[%s508 + $0xc] sm:$0xf]
        %v1952 = vld [vmem:[%s508 + $0x10] sm:$0xf]
        %v1953 = vld [vmem:[%s508 + $0x14] sm:$0xf]
        %v1954 = vld [vmem:[%s508 + $0x18] sm:$0xf]
        %v1955 = vld [vmem:[%s508 + $0x1c] sm:$0xf]
        %v1956 = vld [vmem:[%s508 + $0x20] sm:$0xf]
        %v1957 = vld [vmem:[%s508 + $0x24] sm:$0xf]
        %v1958 = vld [vmem:[%s508 + $0x28] sm:$0xf]
        %v1959 = vld [vmem:[%s508 + $0x2c] sm:$0xf]
        %v1960 = vld [vmem:[%s508 + $0x30] sm:$0xf]
        %v1961 = vld [vmem:[%s508 + $0x34] sm:$0xf]
        %v1962 = vld [vmem:[%s508 + $0x38] sm:$0xf]
        %v1963 = vld [vmem:[%s508 + $0x3c] sm:$0xf]
        %v1964 = vld [vmem:[%s508 + $0x40] sm:$0xf]
        %v1965 = vld [vmem:[%s508 + $0x44] sm:$0xf]
        %v1966 = vld [vmem:[%s508 + $0x48] sm:$0xf]
        %v1967 = vld [vmem:[%s508 + $0x4c] sm:$0xf]
        %v1968 = vld [vmem:[%s508 + $0x50] sm:$0xf]
        %v1969 = vld [vmem:[%s508 + $0x54] sm:$0xf]
        %v1970 = vld [vmem:[%s508 + $0x58] sm:$0xf]
        %v1971 = vld [vmem:[%s508 + $0x5c] sm:$0xf]
        %v1972 = vld [vmem:[%s508 + $0x60] sm:$0xf]
        %v1973 = vld [vmem:[%s508 + $0x64] sm:$0xf]
        %v1974 = vld [vmem:[%s508 + $0x68] sm:$0xf]
        %v1975 = vld [vmem:[%s508 + $0x6c] sm:$0xf]
        %v1976 = vld [vmem:[%s508 + $0x70] sm:$0xf]
        %v1977 = vld [vmem:[%s508 + $0x74] sm:$0xf]
        %v1978 = vld [vmem:[%s508 + $0x78] sm:$0xf]
        %v1979 = vld [vmem:[%s508 + $0x7c] sm:$0xf]
        %v1980 = vunpack.c.l.bf16 %v1948
        %v1981 = vunpack.c.l.bf16 %v1949
        %v1982 = vunpack.c.l.bf16 %v1952
        %v1983 = vunpack.c.l.bf16 %v1953
        %v1984 = vunpack.c.l.bf16 %v1956
        %v1985 = vunpack.c.l.bf16 %v1957
        %v1986 = vunpack.c.l.bf16 %v1960
        %v1987 = vunpack.c.l.bf16 %v1961
        %v1988 = vunpack.c.l.bf16 %v1964
        %v1989 = vunpack.c.l.bf16 %v1965
        %v1990 = vunpack.c.l.bf16 %v1968
        %v1991 = vunpack.c.l.bf16 %v1969
        %v1992 = vunpack.c.l.bf16 %v1972
        %v1993 = vunpack.c.l.bf16 %v1973
        %v1994 = vunpack.c.l.bf16 %v1976
        %v1995 = vunpack.c.l.bf16 %v1977
        %v1996 = vunpack.c.l.bf16 %v1950
        %v1997 = vunpack.c.l.bf16 %v1951
        %v1998 = vunpack.c.l.bf16 %v1954
        %v1999 = vunpack.c.l.bf16 %v1955
        %v2000 = vunpack.c.l.bf16 %v1958
        %v2001 = vunpack.c.l.bf16 %v1959
        %v2002 = vunpack.c.l.bf16 %v1962
        %v2003 = vunpack.c.l.bf16 %v1963
        %v2004 = vunpack.c.l.bf16 %v1966
        %v2005 = vunpack.c.l.bf16 %v1967
        %v2006 = vunpack.c.l.bf16 %v1970
        %v2007 = vunpack.c.l.bf16 %v1971
        %v2008 = vunpack.c.l.bf16 %v1974
        %v2009 = vunpack.c.l.bf16 %v1975
        %v2010 = vunpack.c.l.bf16 %v1978
        %v2011 = vunpack.c.l.bf16 %v1979
        %v2012 = vadd.f32 %v1980, %v1996
        %v2013 = vadd.f32 %v1981, %v1997
        %v2014 = vadd.f32 %v1982, %v1998
        %v2015 = vadd.f32 %v1983, %v1999
        %v2016 = vadd.f32 %v1984, %v2000
        %v2017 = vadd.f32 %v1985, %v2001
        %v2018 = vadd.f32 %v1986, %v2002
        %v2019 = vadd.f32 %v1987, %v2003
        %v2020 = vadd.f32 %v1988, %v2004
        %v2021 = vadd.f32 %v1989, %v2005
        %v2022 = vadd.f32 %v1990, %v2006
        %v2023 = vadd.f32 %v1991, %v2007
        %v2024 = vadd.f32 %v1992, %v2008
        %v2025 = vadd.f32 %v1993, %v2009
        %v2026 = vadd.f32 %v1994, %v2010
        %v2027 = vadd.f32 %v1995, %v2011
        %v2044 = vcombine.high %v2012, %v2012
        %v2046 = vunpack.c.l.s4 1983009808
        %v2047 = vunpack.c.0.s8 %v2046
        %v2048 = vlaneseq
        %v2049 = vshrl.u32 %v2048, 7
        %v2050 = vsub.s32 %v2047, %v2049
        %v2051 = vrot.slane %v2012, %v2050
        %v2053 = vunpack.c.l.s4 1983009808
        %v2054 = vunpack.c.0.s8 %v2053
        %v2055 = vlaneseq
        %v2056 = vshrl.u32 %v2055, 7
        %v2057 = vsub.s32 %v2054, %v2056
        %v2058 = vrot.slane %v2044, %v2057
        %v2059 = vcombine.high %v2051, %v2051
        %v2060 = vcombine.high %v2058, %v2058
        %v2061 = vcombine.high %v2013, %v2013
        %v2063 = vunpack.c.l.s4 1983009808
        %v2064 = vunpack.c.0.s8 %v2063
        %v2065 = vlaneseq
        %v2066 = vshrl.u32 %v2065, 7
        %v2067 = vsub.s32 %v2064, %v2066
        %v2068 = vrot.slane %v2013, %v2067
        %v2070 = vunpack.c.l.s4 1983009808
        %v2071 = vunpack.c.0.s8 %v2070
        %v2072 = vlaneseq
        %v2073 = vshrl.u32 %v2072, 7
        %v2074 = vsub.s32 %v2071, %v2073
        %v2075 = vrot.slane %v2061, %v2074
        %v2076 = vcombine.high %v2068, %v2068
        %v2077 = vcombine.high %v2075, %v2075
        %v2078 = vcombine.high %v2014, %v2014
        %v2080 = vunpack.c.l.s4 1983009808
        %v2081 = vunpack.c.0.s8 %v2080
        %v2082 = vlaneseq
        %v2083 = vshrl.u32 %v2082, 7
        %v2084 = vsub.s32 %v2081, %v2083
        %v2085 = vrot.slane %v2014, %v2084
        %v2087 = vunpack.c.l.s4 1983009808
        %v2088 = vunpack.c.0.s8 %v2087
        %v2089 = vlaneseq
        %v2090 = vshrl.u32 %v2089, 7
        %v2091 = vsub.s32 %v2088, %v2090
        %v2092 = vrot.slane %v2078, %v2091
        %v2093 = vcombine.high %v2085, %v2085
        %v2094 = vcombine.high %v2092, %v2092
        %v2095 = vcombine.high %v2015, %v2015
        %v2097 = vunpack.c.l.s4 1983009808
        %v2098 = vunpack.c.0.s8 %v2097
        %v2099 = vlaneseq
        %v2100 = vshrl.u32 %v2099, 7
        %v2101 = vsub.s32 %v2098, %v2100
        %v2102 = vrot.slane %v2015, %v2101
        %v2104 = vunpack.c.l.s4 1983009808
        %v2105 = vunpack.c.0.s8 %v2104
        %v2106 = vlaneseq
        %v2107 = vshrl.u32 %v2106, 7
        %v2108 = vsub.s32 %v2105, %v2107
        %v2109 = vrot.slane %v2095, %v2108
        %v2110 = vcombine.high %v2102, %v2102
        %v2111 = vcombine.high %v2109, %v2109
        %v2112 = vcombine.high %v2016, %v2016
        %v2114 = vunpack.c.l.s4 1983009808
        %v2115 = vunpack.c.0.s8 %v2114
        %v2116 = vlaneseq
        %v2117 = vshrl.u32 %v2116, 7
        %v2118 = vsub.s32 %v2115, %v2117
        %v2119 = vrot.slane %v2016, %v2118
        %v2121 = vunpack.c.l.s4 1983009808
        %v2122 = vunpack.c.0.s8 %v2121
        %v2123 = vlaneseq
        %v2124 = vshrl.u32 %v2123, 7
        %v2125 = vsub.s32 %v2122, %v2124
        %v2126 = vrot.slane %v2112, %v2125
        %v2127 = vcombine.high %v2119, %v2119
        %v2128 = vcombine.high %v2126, %v2126
        %v2129 = vcombine.high %v2017, %v2017
        %v2131 = vunpack.c.l.s4 1983009808
        %v2132 = vunpack.c.0.s8 %v2131
        %v2133 = vlaneseq
        %v2134 = vshrl.u32 %v2133, 7
        %v2135 = vsub.s32 %v2132, %v2134
        %v2136 = vrot.slane %v2017, %v2135
        %v2138 = vunpack.c.l.s4 1983009808
        %v2139 = vunpack.c.0.s8 %v2138
        %v2140 = vlaneseq
        %v2141 = vshrl.u32 %v2140, 7
        %v2142 = vsub.s32 %v2139, %v2141
        %v2143 = vrot.slane %v2129, %v2142
        %v2144 = vcombine.high %v2136, %v2136
        %v2145 = vcombine.high %v2143, %v2143
        %v2146 = vcombine.high %v2018, %v2018
        %v2148 = vunpack.c.l.s4 1983009808
        %v2149 = vunpack.c.0.s8 %v2148
        %v2150 = vlaneseq
        %v2151 = vshrl.u32 %v2150, 7
        %v2152 = vsub.s32 %v2149, %v2151
        %v2153 = vrot.slane %v2018, %v2152
        %v2155 = vunpack.c.l.s4 1983009808
        %v2156 = vunpack.c.0.s8 %v2155
        %v2157 = vlaneseq
        %v2158 = vshrl.u32 %v2157, 7
        %v2159 = vsub.s32 %v2156, %v2158
        %v2160 = vrot.slane %v2146, %v2159
        %v2161 = vcombine.high %v2153, %v2153
        %v2162 = vcombine.high %v2160, %v2160
        %v2163 = vcombine.high %v2019, %v2019
        %v2165 = vunpack.c.l.s4 1983009808
        %v2166 = vunpack.c.0.s8 %v2165
        %v2167 = vlaneseq
        %v2168 = vshrl.u32 %v2167, 7
        %v2169 = vsub.s32 %v2166, %v2168
        %v2170 = vrot.slane %v2019, %v2169
        %v2172 = vunpack.c.l.s4 1983009808
        %v2173 = vunpack.c.0.s8 %v2172
        %v2174 = vlaneseq
        %v2175 = vshrl.u32 %v2174, 7
        %v2176 = vsub.s32 %v2173, %v2175
        %v2177 = vrot.slane %v2163, %v2176
        %v2178 = vcombine.high %v2170, %v2170
        %v2179 = vcombine.high %v2177, %v2177
        %v2180 = vcombine.high %v2020, %v2020
        %v2182 = vunpack.c.l.s4 1983009808
        %v2183 = vunpack.c.0.s8 %v2182
        %v2184 = vlaneseq
        %v2185 = vshrl.u32 %v2184, 7
        %v2186 = vsub.s32 %v2183, %v2185
        %v2187 = vrot.slane %v2020, %v2186
        %v2189 = vunpack.c.l.s4 1983009808
        %v2190 = vunpack.c.0.s8 %v2189
        %v2191 = vlaneseq
        %v2192 = vshrl.u32 %v2191, 7
        %v2193 = vsub.s32 %v2190, %v2192
        %v2194 = vrot.slane %v2180, %v2193
        %v2195 = vcombine.high %v2187, %v2187
        %v2196 = vcombine.high %v2194, %v2194
        %v2197 = vcombine.high %v2021, %v2021
        %v2199 = vunpack.c.l.s4 1983009808
        %v2200 = vunpack.c.0.s8 %v2199
        %v2201 = vlaneseq
        %v2202 = vshrl.u32 %v2201, 7
        %v2203 = vsub.s32 %v2200, %v2202
        %v2204 = vrot.slane %v2021, %v2203
        %v2206 = vunpack.c.l.s4 1983009808
        %v2207 = vunpack.c.0.s8 %v2206
        %v2208 = vlaneseq
        %v2209 = vshrl.u32 %v2208, 7
        %v2210 = vsub.s32 %v2207, %v2209
        %v2211 = vrot.slane %v2197, %v2210
        %v2212 = vcombine.high %v2204, %v2204
        %v2213 = vcombine.high %v2211, %v2211
        %v2214 = vcombine.high %v2022, %v2022
        %v2216 = vunpack.c.l.s4 1983009808
        %v2217 = vunpack.c.0.s8 %v2216
        %v2218 = vlaneseq
        %v2219 = vshrl.u32 %v2218, 7
        %v2220 = vsub.s32 %v2217, %v2219
        %v2221 = vrot.slane %v2022, %v2220
        %v2223 = vunpack.c.l.s4 1983009808
        %v2224 = vunpack.c.0.s8 %v2223
        %v2225 = vlaneseq
        %v2226 = vshrl.u32 %v2225, 7
        %v2227 = vsub.s32 %v2224, %v2226
        %v2228 = vrot.slane %v2214, %v2227
        %v2229 = vcombine.high %v2221, %v2221
        %v2230 = vcombine.high %v2228, %v2228
        %v2231 = vcombine.high %v2023, %v2023
        %v2233 = vunpack.c.l.s4 1983009808
        %v2234 = vunpack.c.0.s8 %v2233
        %v2235 = vlaneseq
        %v2236 = vshrl.u32 %v2235, 7
        %v2237 = vsub.s32 %v2234, %v2236
        %v2238 = vrot.slane %v2023, %v2237
        %v2240 = vunpack.c.l.s4 1983009808
        %v2241 = vunpack.c.0.s8 %v2240
        %v2242 = vlaneseq
        %v2243 = vshrl.u32 %v2242, 7
        %v2244 = vsub.s32 %v2241, %v2243
        %v2245 = vrot.slane %v2231, %v2244
        %v2246 = vcombine.high %v2238, %v2238
        %v2247 = vcombine.high %v2245, %v2245
        %v2248 = vcombine.high %v2024, %v2024
        %v2250 = vunpack.c.l.s4 1983009808
        %v2251 = vunpack.c.0.s8 %v2250
        %v2252 = vlaneseq
        %v2253 = vshrl.u32 %v2252, 7
        %v2254 = vsub.s32 %v2251, %v2253
        %v2255 = vrot.slane %v2024, %v2254
        %v2257 = vunpack.c.l.s4 1983009808
        %v2258 = vunpack.c.0.s8 %v2257
        %v2259 = vlaneseq
        %v2260 = vshrl.u32 %v2259, 7
        %v2261 = vsub.s32 %v2258, %v2260
        %v2262 = vrot.slane %v2248, %v2261
        %v2263 = vcombine.high %v2255, %v2255
        %v2264 = vcombine.high %v2262, %v2262
        %v2265 = vcombine.high %v2025, %v2025
        %v2267 = vunpack.c.l.s4 1983009808
        %v2268 = vunpack.c.0.s8 %v2267
        %v2269 = vlaneseq
        %v2270 = vshrl.u32 %v2269, 7
        %v2271 = vsub.s32 %v2268, %v2270
        %v2272 = vrot.slane %v2025, %v2271
        %v2274 = vunpack.c.l.s4 1983009808
        %v2275 = vunpack.c.0.s8 %v2274
        %v2276 = vlaneseq
        %v2277 = vshrl.u32 %v2276, 7
        %v2278 = vsub.s32 %v2275, %v2277
        %v2279 = vrot.slane %v2265, %v2278
        %v2280 = vcombine.high %v2272, %v2272
        %v2281 = vcombine.high %v2279, %v2279
        %v2282 = vcombine.high %v2026, %v2026
        %v2284 = vunpack.c.l.s4 1983009808
        %v2285 = vunpack.c.0.s8 %v2284
        %v2286 = vlaneseq
        %v2287 = vshrl.u32 %v2286, 7
        %v2288 = vsub.s32 %v2285, %v2287
        %v2289 = vrot.slane %v2026, %v2288
        %v2291 = vunpack.c.l.s4 1983009808
        %v2292 = vunpack.c.0.s8 %v2291
        %v2293 = vlaneseq
        %v2294 = vshrl.u32 %v2293, 7
        %v2295 = vsub.s32 %v2292, %v2294
        %v2296 = vrot.slane %v2282, %v2295
        %v2297 = vcombine.high %v2289, %v2289
        %v2298 = vcombine.high %v2296, %v2296
        %v2299 = vcombine.high %v2027, %v2027
        %v2301 = vunpack.c.l.s4 1983009808
        %v2302 = vunpack.c.0.s8 %v2301
        %v2303 = vlaneseq
        %v2304 = vshrl.u32 %v2303, 7
        %v2305 = vsub.s32 %v2302, %v2304
        %v2306 = vrot.slane %v2027, %v2305
        %v2308 = vunpack.c.l.s4 1983009808
        %v2309 = vunpack.c.0.s8 %v2308
        %v2310 = vlaneseq
        %v2311 = vshrl.u32 %v2310, 7
        %v2312 = vsub.s32 %v2309, %v2311
        %v2313 = vrot.slane %v2299, %v2312
        %v2314 = vcombine.high %v2306, %v2306
        %v2315 = vcombine.high %v2313, %v2313
        %v2380 = vrot.slane %v2051, 7
        %v2381 = vrot.slane %v2380, 2
        %v2382 = vrot.slane %v2059, 7
        %v2383 = vrot.slane %v2382, 2
        %v2384 = vrot.slane %v2058, 7
        %v2385 = vrot.slane %v2384, 2
        %v2386 = vrot.slane %v2060, 7
        %v2387 = vrot.slane %v2386, 2
        %v2388 = vrot.slane %v2068, 7
        %v2389 = vrot.slane %v2388, 2
        %v2390 = vrot.slane %v2076, 7
        %v2391 = vrot.slane %v2390, 2
        %v2392 = vrot.slane %v2075, 7
        %v2393 = vrot.slane %v2392, 2
        %v2394 = vrot.slane %v2077, 7
        %v2395 = vrot.slane %v2394, 2
        %v2396 = vrot.slane %v2085, 7
        %v2397 = vrot.slane %v2396, 2
        %v2398 = vrot.slane %v2093, 7
        %v2399 = vrot.slane %v2398, 2
        %v2400 = vrot.slane %v2092, 7
        %v2401 = vrot.slane %v2400, 2
        %v2402 = vrot.slane %v2094, 7
        %v2403 = vrot.slane %v2402, 2
        %v2404 = vrot.slane %v2102, 7
        %v2405 = vrot.slane %v2404, 2
        %v2406 = vrot.slane %v2110, 7
        %v2407 = vrot.slane %v2406, 2
        %v2408 = vrot.slane %v2109, 7
        %v2409 = vrot.slane %v2408, 2
        %v2410 = vrot.slane %v2111, 7
        %v2411 = vrot.slane %v2410, 2
        %v2412 = vrot.slane %v2119, 7
        %v2413 = vrot.slane %v2412, 2
        %v2414 = vrot.slane %v2127, 7
        %v2415 = vrot.slane %v2414, 2
        %v2416 = vrot.slane %v2126, 7
        %v2417 = vrot.slane %v2416, 2
        %v2418 = vrot.slane %v2128, 7
        %v2419 = vrot.slane %v2418, 2
        %v2420 = vrot.slane %v2136, 7
        %v2421 = vrot.slane %v2420, 2
        %v2422 = vrot.slane %v2144, 7
        %v2423 = vrot.slane %v2422, 2
        %v2424 = vrot.slane %v2143, 7
        %v2425 = vrot.slane %v2424, 2
        %v2426 = vrot.slane %v2145, 7
        %v2427 = vrot.slane %v2426, 2
        %v2428 = vrot.slane %v2153, 7
        %v2429 = vrot.slane %v2428, 2
        %v2430 = vrot.slane %v2161, 7
        %v2431 = vrot.slane %v2430, 2
        %v2432 = vrot.slane %v2160, 7
        %v2433 = vrot.slane %v2432, 2
        %v2434 = vrot.slane %v2162, 7
        %v2435 = vrot.slane %v2434, 2
        %v2436 = vrot.slane %v2170, 7
        %v2437 = vrot.slane %v2436, 2
        %v2438 = vrot.slane %v2178, 7
        %v2439 = vrot.slane %v2438, 2
        %v2440 = vrot.slane %v2177, 7
        %v2441 = vrot.slane %v2440, 2
        %v2442 = vrot.slane %v2179, 7
        %v2443 = vrot.slane %v2442, 2
        %v2444 = vrot.slane %v2187, 7
        %v2445 = vrot.slane %v2444, 2
        %v2446 = vrot.slane %v2195, 7
        %v2447 = vrot.slane %v2446, 2
        %v2448 = vrot.slane %v2194, 7
        %v2449 = vrot.slane %v2448, 2
        %v2450 = vrot.slane %v2196, 7
        %v2451 = vrot.slane %v2450, 2
        %v2452 = vrot.slane %v2204, 7
        %v2453 = vrot.slane %v2452, 2
        %v2454 = vrot.slane %v2212, 7
        %v2455 = vrot.slane %v2454, 2
        %v2456 = vrot.slane %v2211, 7
        %v2457 = vrot.slane %v2456, 2
        %v2458 = vrot.slane %v2213, 7
        %v2459 = vrot.slane %v2458, 2
        %v2460 = vrot.slane %v2221, 7
        %v2461 = vrot.slane %v2460, 2
        %v2462 = vrot.slane %v2229, 7
        %v2463 = vrot.slane %v2462, 2
        %v2464 = vrot.slane %v2228, 7
        %v2465 = vrot.slane %v2464, 2
        %v2466 = vrot.slane %v2230, 7
        %v2467 = vrot.slane %v2466, 2
        %v2468 = vrot.slane %v2238, 7
        %v2469 = vrot.slane %v2468, 2
        %v2470 = vrot.slane %v2246, 7
        %v2471 = vrot.slane %v2470, 2
        %v2472 = vrot.slane %v2245, 7
        %v2473 = vrot.slane %v2472, 2
        %v2474 = vrot.slane %v2247, 7
        %v2475 = vrot.slane %v2474, 2
        %v2476 = vrot.slane %v2255, 7
        %v2477 = vrot.slane %v2476, 2
        %v2478 = vrot.slane %v2263, 7
        %v2479 = vrot.slane %v2478, 2
        %v2480 = vrot.slane %v2262, 7
        %v2481 = vrot.slane %v2480, 2
        %v2482 = vrot.slane %v2264, 7
        %v2483 = vrot.slane %v2482, 2
        %v2484 = vrot.slane %v2272, 7
        %v2485 = vrot.slane %v2484, 2
        %v2486 = vrot.slane %v2280, 7
        %v2487 = vrot.slane %v2486, 2
        %v2488 = vrot.slane %v2279, 7
        %v2489 = vrot.slane %v2488, 2
        %v2490 = vrot.slane %v2281, 7
        %v2491 = vrot.slane %v2490, 2
        %v2492 = vrot.slane %v2289, 7
        %v2493 = vrot.slane %v2492, 2
        %v2494 = vrot.slane %v2297, 7
        %v2495 = vrot.slane %v2494, 2
        %v2496 = vrot.slane %v2296, 7
        %v2497 = vrot.slane %v2496, 2
        %v2498 = vrot.slane %v2298, 7
        %v2499 = vrot.slane %v2498, 2
        %v2500 = vrot.slane %v2306, 7
        %v2501 = vrot.slane %v2500, 2
        %v2502 = vrot.slane %v2314, 7
        %v2503 = vrot.slane %v2502, 2
        %v2504 = vrot.slane %v2313, 7
        %v2505 = vrot.slane %v2504, 2
        %v2506 = vrot.slane %v2315, 7
        %v2507 = vrot.slane %v2506, 2
        %v2572 = vadd.f32 %v2051, %v2381
        %v2573 = vadd.f32 %v2059, %v2383
        %v2574 = vadd.f32 %v2058, %v2385
        %v2575 = vadd.f32 %v2060, %v2387
        %v2576 = vadd.f32 %v2068, %v2389
        %v2577 = vadd.f32 %v2076, %v2391
        %v2578 = vadd.f32 %v2075, %v2393
        %v2579 = vadd.f32 %v2077, %v2395
        %v2580 = vadd.f32 %v2085, %v2397
        %v2581 = vadd.f32 %v2093, %v2399
        %v2582 = vadd.f32 %v2092, %v2401
        %v2583 = vadd.f32 %v2094, %v2403
        %v2584 = vadd.f32 %v2102, %v2405
        %v2585 = vadd.f32 %v2110, %v2407
        %v2586 = vadd.f32 %v2109, %v2409
        %v2587 = vadd.f32 %v2111, %v2411
        %v2588 = vadd.f32 %v2119, %v2413
        %v2589 = vadd.f32 %v2127, %v2415
        %v2590 = vadd.f32 %v2126, %v2417
        %v2591 = vadd.f32 %v2128, %v2419
        %v2592 = vadd.f32 %v2136, %v2421
        %v2593 = vadd.f32 %v2144, %v2423
        %v2594 = vadd.f32 %v2143, %v2425
        %v2595 = vadd.f32 %v2145, %v2427
        %v2596 = vadd.f32 %v2153, %v2429
        %v2597 = vadd.f32 %v2161, %v2431
        %v2598 = vadd.f32 %v2160, %v2433
        %v2599 = vadd.f32 %v2162, %v2435
        %v2600 = vadd.f32 %v2170, %v2437
        %v2601 = vadd.f32 %v2178, %v2439
        %v2602 = vadd.f32 %v2177, %v2441
        %v2603 = vadd.f32 %v2179, %v2443
        %v2604 = vadd.f32 %v2187, %v2445
        %v2605 = vadd.f32 %v2195, %v2447
        %v2606 = vadd.f32 %v2194, %v2449
        %v2607 = vadd.f32 %v2196, %v2451
        %v2608 = vadd.f32 %v2204, %v2453
        %v2609 = vadd.f32 %v2212, %v2455
        %v2610 = vadd.f32 %v2211, %v2457
        %v2611 = vadd.f32 %v2213, %v2459
        %v2612 = vadd.f32 %v2221, %v2461
        %v2613 = vadd.f32 %v2229, %v2463
        %v2614 = vadd.f32 %v2228, %v2465
        %v2615 = vadd.f32 %v2230, %v2467
        %v2616 = vadd.f32 %v2238, %v2469
        %v2617 = vadd.f32 %v2246, %v2471
        %v2618 = vadd.f32 %v2245, %v2473
        %v2619 = vadd.f32 %v2247, %v2475
        %v2620 = vadd.f32 %v2255, %v2477
        %v2621 = vadd.f32 %v2263, %v2479
        %v2622 = vadd.f32 %v2262, %v2481
        %v2623 = vadd.f32 %v2264, %v2483
        %v2624 = vadd.f32 %v2272, %v2485
        %v2625 = vadd.f32 %v2280, %v2487
        %v2626 = vadd.f32 %v2279, %v2489
        %v2627 = vadd.f32 %v2281, %v2491
        %v2628 = vadd.f32 %v2289, %v2493
        %v2629 = vadd.f32 %v2297, %v2495
        %v2630 = vadd.f32 %v2296, %v2497
        %v2631 = vadd.f32 %v2298, %v2499
        %v2632 = vadd.f32 %v2306, %v2501
        %v2633 = vadd.f32 %v2314, %v2503
        %v2634 = vadd.f32 %v2313, %v2505
        %v2635 = vadd.f32 %v2315, %v2507
        %v2636 = vmul.f32 %v2572, 0.25
        %v2637 = vmul.f32 %v2573, 0.25
        %v2638 = vmul.f32 %v2574, 0.25
        %v2639 = vmul.f32 %v2575, 0.25
        %v2640 = vmul.f32 %v2576, 0.25
        %v2641 = vmul.f32 %v2577, 0.25
        %v2642 = vmul.f32 %v2578, 0.25
        %v2643 = vmul.f32 %v2579, 0.25
        %v2644 = vmul.f32 %v2580, 0.25
        %v2645 = vmul.f32 %v2581, 0.25
        %v2646 = vmul.f32 %v2582, 0.25
        %v2647 = vmul.f32 %v2583, 0.25
        %v2648 = vmul.f32 %v2584, 0.25
        %v2649 = vmul.f32 %v2585, 0.25
        %v2650 = vmul.f32 %v2586, 0.25
        %v2651 = vmul.f32 %v2587, 0.25
        %v2652 = vmul.f32 %v2588, 0.25
        %v2653 = vmul.f32 %v2589, 0.25
        %v2654 = vmul.f32 %v2590, 0.25
        %v2655 = vmul.f32 %v2591, 0.25
        %v2656 = vmul.f32 %v2592, 0.25
        %v2657 = vmul.f32 %v2593, 0.25
        %v2658 = vmul.f32 %v2594, 0.25
        %v2659 = vmul.f32 %v2595, 0.25
        %v2660 = vmul.f32 %v2596, 0.25
        %v2661 = vmul.f32 %v2597, 0.25
        %v2662 = vmul.f32 %v2598, 0.25
        %v2663 = vmul.f32 %v2599, 0.25
        %v2664 = vmul.f32 %v2600, 0.25
        %v2665 = vmul.f32 %v2601, 0.25
        %v2666 = vmul.f32 %v2602, 0.25
        %v2667 = vmul.f32 %v2603, 0.25
        %v2668 = vmul.f32 %v2604, 0.25
        %v2669 = vmul.f32 %v2605, 0.25
        %v2670 = vmul.f32 %v2606, 0.25
        %v2671 = vmul.f32 %v2607, 0.25
        %v2672 = vmul.f32 %v2608, 0.25
        %v2673 = vmul.f32 %v2609, 0.25
        %v2674 = vmul.f32 %v2610, 0.25
        %v2675 = vmul.f32 %v2611, 0.25
        %v2676 = vmul.f32 %v2612, 0.25
        %v2677 = vmul.f32 %v2613, 0.25
        %v2678 = vmul.f32 %v2614, 0.25
        %v2679 = vmul.f32 %v2615, 0.25
        %v2680 = vmul.f32 %v2616, 0.25
        %v2681 = vmul.f32 %v2617, 0.25
        %v2682 = vmul.f32 %v2618, 0.25
        %v2683 = vmul.f32 %v2619, 0.25
        %v2684 = vmul.f32 %v2620, 0.25
        %v2685 = vmul.f32 %v2621, 0.25
        %v2686 = vmul.f32 %v2622, 0.25
        %v2687 = vmul.f32 %v2623, 0.25
        %v2688 = vmul.f32 %v2624, 0.25
        %v2689 = vmul.f32 %v2625, 0.25
        %v2690 = vmul.f32 %v2626, 0.25
        %v2691 = vmul.f32 %v2627, 0.25
        %v2692 = vmul.f32 %v2628, 0.25
        %v2693 = vmul.f32 %v2629, 0.25
        %v2694 = vmul.f32 %v2630, 0.25
        %v2695 = vmul.f32 %v2631, 0.25
        %v2696 = vmul.f32 %v2632, 0.25
        %v2697 = vmul.f32 %v2633, 0.25
        %v2698 = vmul.f32 %v2634, 0.25
        %v2699 = vmul.f32 %v2635, 0.25
        %v2700 = vpack.c.bf16 %v2636, %v2636
        %v2701 = vpack.c.bf16 %v2637, %v2637
        %v2702 = vpack.c.bf16 %v2638, %v2638
        %v2703 = vpack.c.bf16 %v2639, %v2639
        %v2704 = vpack.c.bf16 %v2640, %v2640
        %v2705 = vpack.c.bf16 %v2641, %v2641
        %v2706 = vpack.c.bf16 %v2642, %v2642
        %v2707 = vpack.c.bf16 %v2643, %v2643
        %v2708 = vpack.c.bf16 %v2644, %v2644
        %v2709 = vpack.c.bf16 %v2645, %v2645
        %v2710 = vpack.c.bf16 %v2646, %v2646
        %v2711 = vpack.c.bf16 %v2647, %v2647
        %v2712 = vpack.c.bf16 %v2648, %v2648
        %v2713 = vpack.c.bf16 %v2649, %v2649
        %v2714 = vpack.c.bf16 %v2650, %v2650
        %v2715 = vpack.c.bf16 %v2651, %v2651
        %v2716 = vpack.c.bf16 %v2652, %v2652
        %v2717 = vpack.c.bf16 %v2653, %v2653
        %v2718 = vpack.c.bf16 %v2654, %v2654
        %v2719 = vpack.c.bf16 %v2655, %v2655
        %v2720 = vpack.c.bf16 %v2656, %v2656
        %v2721 = vpack.c.bf16 %v2657, %v2657
        %v2722 = vpack.c.bf16 %v2658, %v2658
        %v2723 = vpack.c.bf16 %v2659, %v2659
        %v2724 = vpack.c.bf16 %v2660, %v2660
        %v2725 = vpack.c.bf16 %v2661, %v2661
        %v2726 = vpack.c.bf16 %v2662, %v2662
        %v2727 = vpack.c.bf16 %v2663, %v2663
        %v2728 = vpack.c.bf16 %v2664, %v2664
        %v2729 = vpack.c.bf16 %v2665, %v2665
        %v2730 = vpack.c.bf16 %v2666, %v2666
        %v2731 = vpack.c.bf16 %v2667, %v2667
        %v2732 = vpack.c.bf16 %v2668, %v2668
        %v2733 = vpack.c.bf16 %v2669, %v2669
        %v2734 = vpack.c.bf16 %v2670, %v2670
        %v2735 = vpack.c.bf16 %v2671, %v2671
        %v2736 = vpack.c.bf16 %v2672, %v2672
        %v2737 = vpack.c.bf16 %v2673, %v2673
        %v2738 = vpack.c.bf16 %v2674, %v2674
        %v2739 = vpack.c.bf16 %v2675, %v2675
        %v2740 = vpack.c.bf16 %v2676, %v2676
        %v2741 = vpack.c.bf16 %v2677, %v2677
        %v2742 = vpack.c.bf16 %v2678, %v2678
        %v2743 = vpack.c.bf16 %v2679, %v2679
        %v2744 = vpack.c.bf16 %v2680, %v2680
        %v2745 = vpack.c.bf16 %v2681, %v2681
        %v2746 = vpack.c.bf16 %v2682, %v2682
        %v2747 = vpack.c.bf16 %v2683, %v2683
        %v2748 = vpack.c.bf16 %v2684, %v2684
        %v2749 = vpack.c.bf16 %v2685, %v2685
        %v2750 = vpack.c.bf16 %v2686, %v2686
        %v2751 = vpack.c.bf16 %v2687, %v2687
        %v2752 = vpack.c.bf16 %v2688, %v2688
        %v2753 = vpack.c.bf16 %v2689, %v2689
        %v2754 = vpack.c.bf16 %v2690, %v2690
        %v2755 = vpack.c.bf16 %v2691, %v2691
        %v2756 = vpack.c.bf16 %v2692, %v2692
        %v2757 = vpack.c.bf16 %v2693, %v2693
        %v2758 = vpack.c.bf16 %v2694, %v2694
        %v2759 = vpack.c.bf16 %v2695, %v2695
        %v2760 = vpack.c.bf16 %v2696, %v2696
        %v2761 = vpack.c.bf16 %v2697, %v2697
        %v2762 = vpack.c.bf16 %v2698, %v2698
        %v2763 = vpack.c.bf16 %v2699, %v2699
        %v2764 = vld [vmem:[%s517] sm:$0x3]
        %v2765 = vld [vmem:[%s517 + $0x2] sm:$0x3]
        %v2766 = vld [vmem:[%s517 + $0x4] sm:$0x3]
        %v2767 = vld [vmem:[%s517 + $0x6] sm:$0x3]
        %v2768 = vunpack.c.l.bf16 %v2764
        %v2769 = vunpack.c.l.bf16 %v2765
        %v2770 = vunpack.c.l.bf16 %v2766
        %v2771 = vunpack.c.l.bf16 %v2767
        %v2776 = vrot.slane %v2768, 7
        %v2777 = vrot.slane %v2769, 7
        %v2778 = vrot.slane %v2770, 7
        %v2779 = vrot.slane %v2771, 7
        %vm2784 = vcmask 1040384
        %v2785 = vsel %vm2784, %v2768, %v2776
        %v2786 = vsel %vm2784, %v2769, %v2777
        %v2787 = vsel %vm2784, %v2770, %v2778
        %v2788 = vsel %vm2784, %v2771, %v2779
        %v2789 = vrot.slane %v2768, 1
        %v2790 = vrot.slane %v2769, 1
        %v2791 = vrot.slane %v2770, 1
        %v2792 = vrot.slane %v2771, 1
        %vm2797 = vcmask 1042432
        %v2798 = vsel %vm2797, %v2789, %v2768
        %v2799 = vsel %vm2797, %v2790, %v2769
        %v2800 = vsel %vm2797, %v2791, %v2770
        %v2801 = vsel %vm2797, %v2792, %v2771
        %v2802 = vmul.f32 %v2785, 0.25
        %v2803 = vmul.f32 %v2786, 0.25
        %v2804 = vmul.f32 %v2787, 0.25
        %v2805 = vmul.f32 %v2788, 0.25
        %v2806 = vmul.f32 %v2768, 0.75
        %v2807 = vmul.f32 %v2769, 0.75
        %v2808 = vmul.f32 %v2770, 0.75
        %v2809 = vmul.f32 %v2771, 0.75
        %v2810 = vadd.f32 %v2802, %v2806
        %v2811 = vadd.f32 %v2803, %v2807
        %v2812 = vadd.f32 %v2804, %v2808
        %v2813 = vadd.f32 %v2805, %v2809
        %v2814 = vmul.f32 %v2798, 0.25
        %v2815 = vmul.f32 %v2799, 0.25
        %v2816 = vmul.f32 %v2800, 0.25
        %v2817 = vmul.f32 %v2801, 0.25
        %v2818 = vadd.f32 %v2806, %v2814
        %v2819 = vadd.f32 %v2807, %v2815
        %v2820 = vadd.f32 %v2808, %v2816
        %v2821 = vadd.f32 %v2809, %v2817
        %v2827 = vunpack.c.l.s4 1966171168
        %v2828 = vunpack.c.0.s8 %v2827
        %v2829 = vlaneseq
        %v2830 = vshrl.u32 %v2829, 7
        %v2831 = vsub.s32 %v2828, %v2830
        %v2832 = vrot.slane %v2810, %v2831
        %v2833 = vcombine.high %v2832, %v2832
        %v2835 = vunpack.c.l.s4 1966171168
        %v2836 = vunpack.c.0.s8 %v2835
        %v2837 = vlaneseq
        %v2838 = vshrl.u32 %v2837, 7
        %v2839 = vsub.s32 %v2836, %v2838
        %v2840 = vrot.slane %v2832, %v2839
        %v2842 = vunpack.c.l.s4 1966171168
        %v2843 = vunpack.c.0.s8 %v2842
        %v2844 = vlaneseq
        %v2845 = vshrl.u32 %v2844, 7
        %v2846 = vsub.s32 %v2843, %v2845
        %v2847 = vrot.slane %v2833, %v2846
        %v2848 = vcombine.high %v2840, %v2840
        %v2849 = vcombine.high %v2847, %v2847
        %v2851 = vunpack.c.l.s4 1966171168
        %v2852 = vunpack.c.0.s8 %v2851
        %v2853 = vlaneseq
        %v2854 = vshrl.u32 %v2853, 7
        %v2855 = vsub.s32 %v2852, %v2854
        %v2856 = vrot.slane %v2811, %v2855
        %v2857 = vcombine.high %v2856, %v2856
        %v2859 = vunpack.c.l.s4 1966171168
        %v2860 = vunpack.c.0.s8 %v2859
        %v2861 = vlaneseq
        %v2862 = vshrl.u32 %v2861, 7
        %v2863 = vsub.s32 %v2860, %v2862
        %v2864 = vrot.slane %v2856, %v2863
        %v2866 = vunpack.c.l.s4 1966171168
        %v2867 = vunpack.c.0.s8 %v2866
        %v2868 = vlaneseq
        %v2869 = vshrl.u32 %v2868, 7
        %v2870 = vsub.s32 %v2867, %v2869
        %v2871 = vrot.slane %v2857, %v2870
        %v2872 = vcombine.high %v2864, %v2864
        %v2873 = vcombine.high %v2871, %v2871
        %v2875 = vunpack.c.l.s4 1966171168
        %v2876 = vunpack.c.0.s8 %v2875
        %v2877 = vlaneseq
        %v2878 = vshrl.u32 %v2877, 7
        %v2879 = vsub.s32 %v2876, %v2878
        %v2880 = vrot.slane %v2812, %v2879
        %v2881 = vcombine.high %v2880, %v2880
        %v2883 = vunpack.c.l.s4 1966171168
        %v2884 = vunpack.c.0.s8 %v2883
        %v2885 = vlaneseq
        %v2886 = vshrl.u32 %v2885, 7
        %v2887 = vsub.s32 %v2884, %v2886
        %v2888 = vrot.slane %v2880, %v2887
        %v2890 = vunpack.c.l.s4 1966171168
        %v2891 = vunpack.c.0.s8 %v2890
        %v2892 = vlaneseq
        %v2893 = vshrl.u32 %v2892, 7
        %v2894 = vsub.s32 %v2891, %v2893
        %v2895 = vrot.slane %v2881, %v2894
        %v2896 = vcombine.high %v2888, %v2888
        %v2897 = vcombine.high %v2895, %v2895
        %v2899 = vunpack.c.l.s4 1966171168
        %v2900 = vunpack.c.0.s8 %v2899
        %v2901 = vlaneseq
        %v2902 = vshrl.u32 %v2901, 7
        %v2903 = vsub.s32 %v2900, %v2902
        %v2904 = vrot.slane %v2813, %v2903
        %v2905 = vcombine.high %v2904, %v2904
        %v2907 = vunpack.c.l.s4 1966171168
        %v2908 = vunpack.c.0.s8 %v2907
        %v2909 = vlaneseq
        %v2910 = vshrl.u32 %v2909, 7
        %v2911 = vsub.s32 %v2908, %v2910
        %v2912 = vrot.slane %v2904, %v2911
        %v2914 = vunpack.c.l.s4 1966171168
        %v2915 = vunpack.c.0.s8 %v2914
        %v2916 = vlaneseq
        %v2917 = vshrl.u32 %v2916, 7
        %v2918 = vsub.s32 %v2915, %v2917
        %v2919 = vrot.slane %v2905, %v2918
        %v2920 = vcombine.high %v2912, %v2912
        %v2921 = vcombine.high %v2919, %v2919
        %v2943 = vunpack.c.l.s4 1966171168
        %v2944 = vunpack.c.0.s8 %v2943
        %v2945 = vlaneseq
        %v2946 = vshrl.u32 %v2945, 7
        %v2947 = vsub.s32 %v2944, %v2946
        %v2948 = vrot.slane %v2818, %v2947
        %v2949 = vcombine.high %v2948, %v2948
        %v2951 = vunpack.c.l.s4 1966171168
        %v2952 = vunpack.c.0.s8 %v2951
        %v2953 = vlaneseq
        %v2954 = vshrl.u32 %v2953, 7
        %v2955 = vsub.s32 %v2952, %v2954
        %v2956 = vrot.slane %v2948, %v2955
        %v2958 = vunpack.c.l.s4 1966171168
        %v2959 = vunpack.c.0.s8 %v2958
        %v2960 = vlaneseq
        %v2961 = vshrl.u32 %v2960, 7
        %v2962 = vsub.s32 %v2959, %v2961
        %v2963 = vrot.slane %v2949, %v2962
        %v2964 = vcombine.high %v2956, %v2956
        %v2965 = vcombine.high %v2963, %v2963
        %v2967 = vunpack.c.l.s4 1966171168
        %v2968 = vunpack.c.0.s8 %v2967
        %v2969 = vlaneseq
        %v2970 = vshrl.u32 %v2969, 7
        %v2971 = vsub.s32 %v2968, %v2970
        %v2972 = vrot.slane %v2819, %v2971
        %v2973 = vcombine.high %v2972, %v2972
        %v2975 = vunpack.c.l.s4 1966171168
        %v2976 = vunpack.c.0.s8 %v2975
        %v2977 = vlaneseq
        %v2978 = vshrl.u32 %v2977, 7
        %v2979 = vsub.s32 %v2976, %v2978
        %v2980 = vrot.slane %v2972, %v2979
        %v2982 = vunpack.c.l.s4 1966171168
        %v2983 = vunpack.c.0.s8 %v2982
        %v2984 = vlaneseq
        %v2985 = vshrl.u32 %v2984, 7
        %v2986 = vsub.s32 %v2983, %v2985
        %v2987 = vrot.slane %v2973, %v2986
        %v2988 = vcombine.high %v2980, %v2980
        %v2989 = vcombine.high %v2987, %v2987
        %v2991 = vunpack.c.l.s4 1966171168
        %v2992 = vunpack.c.0.s8 %v2991
        %v2993 = vlaneseq
        %v2994 = vshrl.u32 %v2993, 7
        %v2995 = vsub.s32 %v2992, %v2994
        %v2996 = vrot.slane %v2820, %v2995
        %v2997 = vcombine.high %v2996, %v2996
        %v2999 = vunpack.c.l.s4 1966171168
        %v3000 = vunpack.c.0.s8 %v2999
        %v3001 = vlaneseq
        %v3002 = vshrl.u32 %v3001, 7
        %v3003 = vsub.s32 %v3000, %v3002
        %v3004 = vrot.slane %v2996, %v3003
        %v3006 = vunpack.c.l.s4 1966171168
        %v3007 = vunpack.c.0.s8 %v3006
        %v3008 = vlaneseq
        %v3009 = vshrl.u32 %v3008, 7
        %v3010 = vsub.s32 %v3007, %v3009
        %v3011 = vrot.slane %v2997, %v3010
        %v3012 = vcombine.high %v3004, %v3004
        %v3013 = vcombine.high %v3011, %v3011
        %v3015 = vunpack.c.l.s4 1966171168
        %v3016 = vunpack.c.0.s8 %v3015
        %v3017 = vlaneseq
        %v3018 = vshrl.u32 %v3017, 7
        %v3019 = vsub.s32 %v3016, %v3018
        %v3020 = vrot.slane %v2821, %v3019
        %v3021 = vcombine.high %v3020, %v3020
        %v3023 = vunpack.c.l.s4 1966171168
        %v3024 = vunpack.c.0.s8 %v3023
        %v3025 = vlaneseq
        %v3026 = vshrl.u32 %v3025, 7
        %v3027 = vsub.s32 %v3024, %v3026
        %v3028 = vrot.slane %v3020, %v3027
        %v3030 = vunpack.c.l.s4 1966171168
        %v3031 = vunpack.c.0.s8 %v3030
        %v3032 = vlaneseq
        %v3033 = vshrl.u32 %v3032, 7
        %v3034 = vsub.s32 %v3031, %v3033
        %v3035 = vrot.slane %v3021, %v3034
        %v3036 = vcombine.high %v3028, %v3028
        %v3037 = vcombine.high %v3035, %v3035
        %v3038 = vlaneseq
        %v3039 = vshrl.u32 %v3038, 7
        %v3040 = vsub.s32 0, %v3039
        %v3041 = vrot.slane %v2956, %v3040
        %v3042 = vlaneseq
        %v3043 = vshrl.u32 %v3042, 7
        %v3044 = vsub.s32 0, %v3043
        %v3045 = vrot.slane %v2963, %v3044
        %v3046 = vlaneseq
        %v3047 = vshrl.u32 %v3046, 7
        %v3048 = vsub.s32 0, %v3047
        %v3049 = vrot.slane %v2964, %v3048
        %v3050 = vlaneseq
        %v3051 = vshrl.u32 %v3050, 7
        %v3052 = vsub.s32 0, %v3051
        %v3053 = vrot.slane %v2965, %v3052
        %v3054 = vlaneseq
        %v3055 = vshrl.u32 %v3054, 7
        %v3056 = vsub.s32 0, %v3055
        %v3057 = vrot.slane %v2980, %v3056
        %v3058 = vlaneseq
        %v3059 = vshrl.u32 %v3058, 7
        %v3060 = vsub.s32 0, %v3059
        %v3061 = vrot.slane %v2987, %v3060
        %v3062 = vlaneseq
        %v3063 = vshrl.u32 %v3062, 7
        %v3064 = vsub.s32 0, %v3063
        %v3065 = vrot.slane %v2988, %v3064
        %v3066 = vlaneseq
        %v3067 = vshrl.u32 %v3066, 7
        %v3068 = vsub.s32 0, %v3067
        %v3069 = vrot.slane %v2989, %v3068
        %v3070 = vlaneseq
        %v3071 = vshrl.u32 %v3070, 7
        %v3072 = vsub.s32 0, %v3071
        %v3073 = vrot.slane %v3004, %v3072
        %v3074 = vlaneseq
        %v3075 = vshrl.u32 %v3074, 7
        %v3076 = vsub.s32 0, %v3075
        %v3077 = vrot.slane %v3011, %v3076
        %v3078 = vlaneseq
        %v3079 = vshrl.u32 %v3078, 7
        %v3080 = vsub.s32 0, %v3079
        %v3081 = vrot.slane %v3012, %v3080
        %v3082 = vlaneseq
        %v3083 = vshrl.u32 %v3082, 7
        %v3084 = vsub.s32 0, %v3083
        %v3085 = vrot.slane %v3013, %v3084
        %v3086 = vlaneseq
        %v3087 = vshrl.u32 %v3086, 7
        %v3088 = vsub.s32 0, %v3087
        %v3089 = vrot.slane %v3028, %v3088
        %v3090 = vlaneseq
        %v3091 = vshrl.u32 %v3090, 7
        %v3092 = vsub.s32 0, %v3091
        %v3093 = vrot.slane %v3035, %v3092
        %v3094 = vlaneseq
        %v3095 = vshrl.u32 %v3094, 7
        %v3096 = vsub.s32 0, %v3095
        %v3097 = vrot.slane %v3036, %v3096
        %v3098 = vlaneseq
        %v3099 = vshrl.u32 %v3098, 7
        %v3100 = vsub.s32 0, %v3099
        %v3101 = vrot.slane %v3037, %v3100
        %v3118 = vsel %vm2784, %v2840, %v3041
        %v3119 = vsel %vm2784, %v2847, %v3045
        %v3120 = vsel %vm2784, %v2848, %v3049
        %v3121 = vsel %vm2784, %v2849, %v3053
        %v3122 = vsel %vm2784, %v2864, %v3057
        %v3123 = vsel %vm2784, %v2871, %v3061
        %v3124 = vsel %vm2784, %v2872, %v3065
        %v3125 = vsel %vm2784, %v2873, %v3069
        %v3126 = vsel %vm2784, %v2888, %v3073
        %v3127 = vsel %vm2784, %v2895, %v3077
        %v3128 = vsel %vm2784, %v2896, %v3081
        %v3129 = vsel %vm2784, %v2897, %v3085
        %v3130 = vsel %vm2784, %v2912, %v3089
        %v3131 = vsel %vm2784, %v2919, %v3093
        %v3132 = vsel %vm2784, %v2920, %v3097
        %v3133 = vsel %vm2784, %v2921, %v3101
        %v3134 = vmul.f32 %v3118, 0.25
        %v3135 = vmul.f32 %v3119, 0.25
        %v3136 = vmul.f32 %v3120, 0.25
        %v3137 = vmul.f32 %v3121, 0.25
        %v3138 = vmul.f32 %v3122, 0.25
        %v3139 = vmul.f32 %v3123, 0.25
        %v3140 = vmul.f32 %v3124, 0.25
        %v3141 = vmul.f32 %v3125, 0.25
        %v3142 = vmul.f32 %v3126, 0.25
        %v3143 = vmul.f32 %v3127, 0.25
        %v3144 = vmul.f32 %v3128, 0.25
        %v3145 = vmul.f32 %v3129, 0.25
        %v3146 = vmul.f32 %v3118, 0.75
        %v3147 = vmul.f32 %v3119, 0.75
        %v3148 = vmul.f32 %v3120, 0.75
        %v3149 = vmul.f32 %v3121, 0.75
        %v3150 = vmul.f32 %v3122, 0.75
        %v3151 = vmul.f32 %v3123, 0.75
        %v3152 = vmul.f32 %v3124, 0.75
        %v3153 = vmul.f32 %v3125, 0.75
        %v3154 = vmul.f32 %v3126, 0.75
        %v3155 = vmul.f32 %v3127, 0.75
        %v3156 = vmul.f32 %v3128, 0.75
        %v3157 = vmul.f32 %v3129, 0.75
        %v3158 = vmul.f32 %v3130, 0.75
        %v3159 = vmul.f32 %v3131, 0.75
        %v3160 = vmul.f32 %v3132, 0.75
        %v3161 = vmul.f32 %v3133, 0.75
        %v3162 = vadd.f32 %v3134, %v3146
        %v3163 = vadd.f32 %v3135, %v3147
        %v3164 = vadd.f32 %v3136, %v3148
        %v3165 = vadd.f32 %v3137, %v3149
        %v3166 = vadd.f32 %v3134, %v3150
        %v3167 = vadd.f32 %v3135, %v3151
        %v3168 = vadd.f32 %v3136, %v3152
        %v3169 = vadd.f32 %v3137, %v3153
        %v3170 = vadd.f32 %v3138, %v3154
        %v3171 = vadd.f32 %v3139, %v3155
        %v3172 = vadd.f32 %v3140, %v3156
        %v3173 = vadd.f32 %v3141, %v3157
        %v3174 = vadd.f32 %v3142, %v3158
        %v3175 = vadd.f32 %v3143, %v3159
        %v3176 = vadd.f32 %v3144, %v3160
        %v3177 = vadd.f32 %v3145, %v3161
        %v3178 = vmul.f32 %v3130, 0.25
        %v3179 = vmul.f32 %v3131, 0.25
        %v3180 = vmul.f32 %v3132, 0.25
        %v3181 = vmul.f32 %v3133, 0.25
        %v3182 = vadd.f32 %v3146, %v3138
        %v3183 = vadd.f32 %v3147, %v3139
        %v3184 = vadd.f32 %v3148, %v3140
        %v3185 = vadd.f32 %v3149, %v3141
        %v3186 = vadd.f32 %v3150, %v3142
        %v3187 = vadd.f32 %v3151, %v3143
        %v3188 = vadd.f32 %v3152, %v3144
        %v3189 = vadd.f32 %v3153, %v3145
        %v3190 = vadd.f32 %v3154, %v3178
        %v3191 = vadd.f32 %v3155, %v3179
        %v3192 = vadd.f32 %v3156, %v3180
        %v3193 = vadd.f32 %v3157, %v3181
        %v3194 = vadd.f32 %v3158, %v3178
        %v3195 = vadd.f32 %v3159, %v3179
        %v3196 = vadd.f32 %v3160, %v3180
        %v3197 = vadd.f32 %v3161, %v3181
        %v3230 = vcombine.low %v3162, %v3163
        %v3231 = vcombine.low %v3164, %v3165
        %v3233 = vunpack.c.l.s4 1983009808
        %v3234 = vunpack.c.0.s8 %v3233
        %v3235 = vlaneseq
        %v3236 = vshrl.u32 %v3235, 7
        %v3237 = vsub.s32 %v3234, %v3236
        %v3238 = vrot.slane %v3230, %v3237
        %v3240 = vunpack.c.l.s4 1983009808
        %v3241 = vunpack.c.0.s8 %v3240
        %v3242 = vlaneseq
        %v3243 = vshrl.u32 %v3242, 7
        %v3244 = vsub.s32 %v3241, %v3243
        %v3245 = vrot.slane %v3231, %v3244
        %v3246 = vcombine.low %v3238, %v3245
        %v3247 = vcombine.low %v3182, %v3183
        %v3248 = vcombine.low %v3184, %v3185
        %v3250 = vunpack.c.l.s4 1983009808
        %v3251 = vunpack.c.0.s8 %v3250
        %v3252 = vlaneseq
        %v3253 = vshrl.u32 %v3252, 7
        %v3254 = vsub.s32 %v3251, %v3253
        %v3255 = vrot.slane %v3247, %v3254
        %v3257 = vunpack.c.l.s4 1983009808
        %v3258 = vunpack.c.0.s8 %v3257
        %v3259 = vlaneseq
        %v3260 = vshrl.u32 %v3259, 7
        %v3261 = vsub.s32 %v3258, %v3260
        %v3262 = vrot.slane %v3248, %v3261
        %v3263 = vcombine.low %v3255, %v3262
        %v3264 = vcombine.low %v3166, %v3167
        %v3265 = vcombine.low %v3168, %v3169
        %v3267 = vunpack.c.l.s4 1983009808
        %v3268 = vunpack.c.0.s8 %v3267
        %v3269 = vlaneseq
        %v3270 = vshrl.u32 %v3269, 7
        %v3271 = vsub.s32 %v3268, %v3270
        %v3272 = vrot.slane %v3264, %v3271
        %v3274 = vunpack.c.l.s4 1983009808
        %v3275 = vunpack.c.0.s8 %v3274
        %v3276 = vlaneseq
        %v3277 = vshrl.u32 %v3276, 7
        %v3278 = vsub.s32 %v3275, %v3277
        %v3279 = vrot.slane %v3265, %v3278
        %v3280 = vcombine.low %v3272, %v3279
        %v3281 = vcombine.low %v3186, %v3187
        %v3282 = vcombine.low %v3188, %v3189
        %v3284 = vunpack.c.l.s4 1983009808
        %v3285 = vunpack.c.0.s8 %v3284
        %v3286 = vlaneseq
        %v3287 = vshrl.u32 %v3286, 7
        %v3288 = vsub.s32 %v3285, %v3287
        %v3289 = vrot.slane %v3281, %v3288
        %v3291 = vunpack.c.l.s4 1983009808
        %v3292 = vunpack.c.0.s8 %v3291
        %v3293 = vlaneseq
        %v3294 = vshrl.u32 %v3293, 7
        %v3295 = vsub.s32 %v3292, %v3294
        %v3296 = vrot.slane %v3282, %v3295
        %v3297 = vcombine.low %v3289, %v3296
        %v3298 = vcombine.low %v3170, %v3171
        %v3299 = vcombine.low %v3172, %v3173
        %v3301 = vunpack.c.l.s4 1983009808
        %v3302 = vunpack.c.0.s8 %v3301
        %v3303 = vlaneseq
        %v3304 = vshrl.u32 %v3303, 7
        %v3305 = vsub.s32 %v3302, %v3304
        %v3306 = vrot.slane %v3298, %v3305
        %v3308 = vunpack.c.l.s4 1983009808
        %v3309 = vunpack.c.0.s8 %v3308
        %v3310 = vlaneseq
        %v3311 = vshrl.u32 %v3310, 7
        %v3312 = vsub.s32 %v3309, %v3311
        %v3313 = vrot.slane %v3299, %v3312
        %v3314 = vcombine.low %v3306, %v3313
        %v3315 = vcombine.low %v3190, %v3191
        %v3316 = vcombine.low %v3192, %v3193
        %v3318 = vunpack.c.l.s4 1983009808
        %v3319 = vunpack.c.0.s8 %v3318
        %v3320 = vlaneseq
        %v3321 = vshrl.u32 %v3320, 7
        %v3322 = vsub.s32 %v3319, %v3321
        %v3323 = vrot.slane %v3315, %v3322
        %v3325 = vunpack.c.l.s4 1983009808
        %v3326 = vunpack.c.0.s8 %v3325
        %v3327 = vlaneseq
        %v3328 = vshrl.u32 %v3327, 7
        %v3329 = vsub.s32 %v3326, %v3328
        %v3330 = vrot.slane %v3316, %v3329
        %v3331 = vcombine.low %v3323, %v3330
        %v3332 = vcombine.low %v3174, %v3175
        %v3333 = vcombine.low %v3176, %v3177
        %v3335 = vunpack.c.l.s4 1983009808
        %v3336 = vunpack.c.0.s8 %v3335
        %v3337 = vlaneseq
        %v3338 = vshrl.u32 %v3337, 7
        %v3339 = vsub.s32 %v3336, %v3338
        %v3340 = vrot.slane %v3332, %v3339
        %v3342 = vunpack.c.l.s4 1983009808
        %v3343 = vunpack.c.0.s8 %v3342
        %v3344 = vlaneseq
        %v3345 = vshrl.u32 %v3344, 7
        %v3346 = vsub.s32 %v3343, %v3345
        %v3347 = vrot.slane %v3333, %v3346
        %v3348 = vcombine.low %v3340, %v3347
        %v3349 = vcombine.low %v3194, %v3195
        %v3350 = vcombine.low %v3196, %v3197
        %v3352 = vunpack.c.l.s4 1983009808
        %v3353 = vunpack.c.0.s8 %v3352
        %v3354 = vlaneseq
        %v3355 = vshrl.u32 %v3354, 7
        %v3356 = vsub.s32 %v3353, %v3355
        %v3357 = vrot.slane %v3349, %v3356
        %v3359 = vunpack.c.l.s4 1983009808
        %v3360 = vunpack.c.0.s8 %v3359
        %v3361 = vlaneseq
        %v3362 = vshrl.u32 %v3361, 7
        %v3363 = vsub.s32 %v3360, %v3362
        %v3364 = vrot.slane %v3350, %v3363
        %v3365 = vcombine.low %v3357, %v3364
        %v3374 = vpack.c.bf16 %v3246, %v3246
        %v3375 = vpack.c.bf16 %v3263, %v3263
        %v3376 = vpack.c.bf16 %v3280, %v3280
        %v3377 = vpack.c.bf16 %v3297, %v3297
        %v3378 = vpack.c.bf16 %v3314, %v3314
        %v3379 = vpack.c.bf16 %v3331, %v3331
        %v3380 = vpack.c.bf16 %v3348, %v3348
        %v3381 = vpack.c.bf16 %v3365, %v3365
        %v3446 = vunpack.c.l.b16 %v1884
        %v3447 = vunpack.c.l.b16 %v1885
        %v3448 = vunpack.c.l.b16 %v1886
        %v3449 = vunpack.c.l.b16 %v1887
        %v3450 = vunpack.c.l.b16 %v1888
        %v3451 = vunpack.c.l.b16 %v1889
        %v3452 = vunpack.c.l.b16 %v1890
        %v3453 = vunpack.c.l.b16 %v1891
        %v3454 = vunpack.c.l.b16 %v1892
        %v3455 = vunpack.c.l.b16 %v1893
        %v3456 = vunpack.c.l.b16 %v1894
        %v3457 = vunpack.c.l.b16 %v1895
        %v3458 = vunpack.c.l.b16 %v1896
        %v3459 = vunpack.c.l.b16 %v1897
        %v3460 = vunpack.c.l.b16 %v1898
        %v3461 = vunpack.c.l.b16 %v1899
        %v3462 = vunpack.c.l.b16 %v1900
        %v3463 = vunpack.c.l.b16 %v1901
        %v3464 = vunpack.c.l.b16 %v1902
        %v3465 = vunpack.c.l.b16 %v1903
        %v3466 = vunpack.c.l.b16 %v1904
        %v3467 = vunpack.c.l.b16 %v1905
        %v3468 = vunpack.c.l.b16 %v1906
        %v3469 = vunpack.c.l.b16 %v1907
        %v3470 = vunpack.c.l.b16 %v1908
        %v3471 = vunpack.c.l.b16 %v1909
        %v3472 = vunpack.c.l.b16 %v1910
        %v3473 = vunpack.c.l.b16 %v1911
        %v3474 = vunpack.c.l.b16 %v1912
        %v3475 = vunpack.c.l.b16 %v1913
        %v3476 = vunpack.c.l.b16 %v1914
        %v3477 = vunpack.c.l.b16 %v1915
        %v3478 = vunpack.c.l.b16 %v1916
        %v3479 = vunpack.c.l.b16 %v1917
        %v3480 = vunpack.c.l.b16 %v1918
        %v3481 = vunpack.c.l.b16 %v1919
        %v3482 = vunpack.c.l.b16 %v1920
        %v3483 = vunpack.c.l.b16 %v1921
        %v3484 = vunpack.c.l.b16 %v1922
        %v3485 = vunpack.c.l.b16 %v1923
        %v3486 = vunpack.c.l.b16 %v1924
        %v3487 = vunpack.c.l.b16 %v1925
        %v3488 = vunpack.c.l.b16 %v1926
        %v3489 = vunpack.c.l.b16 %v1927
        %v3490 = vunpack.c.l.b16 %v1928
        %v3491 = vunpack.c.l.b16 %v1929
        %v3492 = vunpack.c.l.b16 %v1930
        %v3493 = vunpack.c.l.b16 %v1931
        %v3494 = vunpack.c.l.b16 %v1932
        %v3495 = vunpack.c.l.b16 %v1933
        %v3496 = vunpack.c.l.b16 %v1934
        %v3497 = vunpack.c.l.b16 %v1935
        %v3498 = vunpack.c.l.b16 %v1936
        %v3499 = vunpack.c.l.b16 %v1937
        %v3500 = vunpack.c.l.b16 %v1938
        %v3501 = vunpack.c.l.b16 %v1939
        %v3502 = vunpack.c.l.b16 %v1940
        %v3503 = vunpack.c.l.b16 %v1941
        %v3504 = vunpack.c.l.b16 %v1942
        %v3505 = vunpack.c.l.b16 %v1943
        %v3506 = vunpack.c.l.b16 %v1944
        %v3507 = vunpack.c.l.b16 %v1945
        %v3508 = vunpack.c.l.b16 %v1946
        %v3509 = vunpack.c.l.b16 %v1947
        %v3510 = vrot.slane %v3447, 7
        %vm3511 = vcmask 1041409
        %v3512 = vsel %vm3511, %v3510, %v3446
        %v3513 = vrot.slane %v3448, 6
        %vm3514 = vcmask 1042434
        %v3515 = vsel %vm3514, %v3513, %v3512
        %v3516 = vrot.slane %v3449, 5
        %vm3517 = vcmask 1043459
        %v3518 = vsel %vm3517, %v3516, %v3515
        %v3519 = vrot.slane %v3450, 4
        %vm3520 = vcmask 1044484
        %v3521 = vsel %vm3520, %v3519, %v3518
        %v3522 = vrot.slane %v3451, 3
        %vm3523 = vcmask 1045509
        %v3524 = vsel %vm3523, %v3522, %v3521
        %v3525 = vrot.slane %v3452, 2
        %vm3526 = vcmask 1046534
        %v3527 = vsel %vm3526, %v3525, %v3524
        %v3528 = vrot.slane %v3453, 1
        %vm3529 = vcmask 1047559
        %v3530 = vsel %vm3529, %v3528, %v3527
        %v3531 = vrot.slane %v3455, 7
        %v3532 = vsel %vm3511, %v3531, %v3454
        %v3533 = vrot.slane %v3456, 6
        %v3534 = vsel %vm3514, %v3533, %v3532
        %v3535 = vrot.slane %v3457, 5
        %v3536 = vsel %vm3517, %v3535, %v3534
        %v3537 = vrot.slane %v3458, 4
        %v3538 = vsel %vm3520, %v3537, %v3536
        %v3539 = vrot.slane %v3459, 3
        %v3540 = vsel %vm3523, %v3539, %v3538
        %v3541 = vrot.slane %v3460, 2
        %v3542 = vsel %vm3526, %v3541, %v3540
        %v3543 = vrot.slane %v3461, 1
        %v3544 = vsel %vm3529, %v3543, %v3542
        %v3545 = vrot.slane %v3463, 7
        %v3546 = vsel %vm3511, %v3545, %v3462
        %v3547 = vrot.slane %v3464, 6
        %v3548 = vsel %vm3514, %v3547, %v3546
        %v3549 = vrot.slane %v3465, 5
        %v3550 = vsel %vm3517, %v3549, %v3548
        %v3551 = vrot.slane %v3466, 4
        %v3552 = vsel %vm3520, %v3551, %v3550
        %v3553 = vrot.slane %v3467, 3
        %v3554 = vsel %vm3523, %v3553, %v3552
        %v3555 = vrot.slane %v3468, 2
        %v3556 = vsel %vm3526, %v3555, %v3554
        %v3557 = vrot.slane %v3469, 1
        %v3558 = vsel %vm3529, %v3557, %v3556
        %v3559 = vrot.slane %v3471, 7
        %v3560 = vsel %vm3511, %v3559, %v3470
        %v3561 = vrot.slane %v3472, 6
        %v3562 = vsel %vm3514, %v3561, %v3560
        %v3563 = vrot.slane %v3473, 5
        %v3564 = vsel %vm3517, %v3563, %v3562
        %v3565 = vrot.slane %v3474, 4
        %v3566 = vsel %vm3520, %v3565, %v3564
        %v3567 = vrot.slane %v3475, 3
        %v3568 = vsel %vm3523, %v3567, %v3566
        %v3569 = vrot.slane %v3476, 2
        %v3570 = vsel %vm3526, %v3569, %v3568
        %v3571 = vrot.slane %v3477, 1
        %v3572 = vsel %vm3529, %v3571, %v3570
        %v3573 = vrot.slane %v3479, 7
        %v3574 = vsel %vm3511, %v3573, %v3478
        %v3575 = vrot.slane %v3480, 6
        %v3576 = vsel %vm3514, %v3575, %v3574
        %v3577 = vrot.slane %v3481, 5
        %v3578 = vsel %vm3517, %v3577, %v3576
        %v3579 = vrot.slane %v3482, 4
        %v3580 = vsel %vm3520, %v3579, %v3578
        %v3581 = vrot.slane %v3483, 3
        %v3582 = vsel %vm3523, %v3581, %v3580
        %v3583 = vrot.slane %v3484, 2
        %v3584 = vsel %vm3526, %v3583, %v3582
        %v3585 = vrot.slane %v3485, 1
        %v3586 = vsel %vm3529, %v3585, %v3584
        %v3587 = vrot.slane %v3487, 7
        %v3588 = vsel %vm3511, %v3587, %v3486
        %v3589 = vrot.slane %v3488, 6
        %v3590 = vsel %vm3514, %v3589, %v3588
        %v3591 = vrot.slane %v3489, 5
        %v3592 = vsel %vm3517, %v3591, %v3590
        %v3593 = vrot.slane %v3490, 4
        %v3594 = vsel %vm3520, %v3593, %v3592
        %v3595 = vrot.slane %v3491, 3
        %v3596 = vsel %vm3523, %v3595, %v3594
        %v3597 = vrot.slane %v3492, 2
        %v3598 = vsel %vm3526, %v3597, %v3596
        %v3599 = vrot.slane %v3493, 1
        %v3600 = vsel %vm3529, %v3599, %v3598
        %v3601 = vrot.slane %v3495, 7
        %v3602 = vsel %vm3511, %v3601, %v3494
        %v3603 = vrot.slane %v3496, 6
        %v3604 = vsel %vm3514, %v3603, %v3602
        %v3605 = vrot.slane %v3497, 5
        %v3606 = vsel %vm3517, %v3605, %v3604
        %v3607 = vrot.slane %v3498, 4
        %v3608 = vsel %vm3520, %v3607, %v3606
        %v3609 = vrot.slane %v3499, 3
        %v3610 = vsel %vm3523, %v3609, %v3608
        %v3611 = vrot.slane %v3500, 2
        %v3612 = vsel %vm3526, %v3611, %v3610
        %v3613 = vrot.slane %v3501, 1
        %v3614 = vsel %vm3529, %v3613, %v3612
        %v3615 = vrot.slane %v3503, 7
        %v3616 = vsel %vm3511, %v3615, %v3502
        %v3617 = vrot.slane %v3504, 6
        %v3618 = vsel %vm3514, %v3617, %v3616
        %v3619 = vrot.slane %v3505, 5
        %v3620 = vsel %vm3517, %v3619, %v3618
        %v3621 = vrot.slane %v3506, 4
        %v3622 = vsel %vm3520, %v3621, %v3620
        %v3623 = vrot.slane %v3507, 3
        %v3624 = vsel %vm3523, %v3623, %v3622
        %v3625 = vrot.slane %v3508, 2
        %v3626 = vsel %vm3526, %v3625, %v3624
        %v3627 = vrot.slane %v3509, 1
        %v3628 = vsel %vm3529, %v3627, %v3626
        %v3629 = vpack.c.b16 %v3544, %v3530
        %v3630 = vpack.c.b16 %v3572, %v3558
        %v3631 = vpack.c.b16 %v3600, %v3586
        %v3632 = vpack.c.b16 %v3628, %v3614
        %v3697 = vunpack.c.l.b16 %v2700
        %v3698 = vunpack.c.l.b16 %v2701
        %v3699 = vunpack.c.l.b16 %v2702
        %v3700 = vunpack.c.l.b16 %v2703
        %v3701 = vunpack.c.l.b16 %v2704
        %v3702 = vunpack.c.l.b16 %v2705
        %v3703 = vunpack.c.l.b16 %v2706
        %v3704 = vunpack.c.l.b16 %v2707
        %v3705 = vunpack.c.l.b16 %v2708
        %v3706 = vunpack.c.l.b16 %v2709
        %v3707 = vunpack.c.l.b16 %v2710
        %v3708 = vunpack.c.l.b16 %v2711
        %v3709 = vunpack.c.l.b16 %v2712
        %v3710 = vunpack.c.l.b16 %v2713
        %v3711 = vunpack.c.l.b16 %v2714
        %v3712 = vunpack.c.l.b16 %v2715
        %v3713 = vunpack.c.l.b16 %v2716
        %v3714 = vunpack.c.l.b16 %v2717
        %v3715 = vunpack.c.l.b16 %v2718
        %v3716 = vunpack.c.l.b16 %v2719
        %v3717 = vunpack.c.l.b16 %v2720
        %v3718 = vunpack.c.l.b16 %v2721
        %v3719 = vunpack.c.l.b16 %v2722
        %v3720 = vunpack.c.l.b16 %v2723
        %v3721 = vunpack.c.l.b16 %v2724
        %v3722 = vunpack.c.l.b16 %v2725
        %v3723 = vunpack.c.l.b16 %v2726
        %v3724 = vunpack.c.l.b16 %v2727
        %v3725 = vunpack.c.l.b16 %v2728
        %v3726 = vunpack.c.l.b16 %v2729
        %v3727 = vunpack.c.l.b16 %v2730
        %v3728 = vunpack.c.l.b16 %v2731
        %v3729 = vunpack.c.l.b16 %v2732
        %v3730 = vunpack.c.l.b16 %v2733
        %v3731 = vunpack.c.l.b16 %v2734
        %v3732 = vunpack.c.l.b16 %v2735
        %v3733 = vunpack.c.l.b16 %v2736
        %v3734 = vunpack.c.l.b16 %v2737
        %v3735 = vunpack.c.l.b16 %v2738
        %v3736 = vunpack.c.l.b16 %v2739
        %v3737 = vunpack.c.l.b16 %v2740
        %v3738 = vunpack.c.l.b16 %v2741
        %v3739 = vunpack.c.l.b16 %v2742
        %v3740 = vunpack.c.l.b16 %v2743
        %v3741 = vunpack.c.l.b16 %v2744
        %v3742 = vunpack.c.l.b16 %v2745
        %v3743 = vunpack.c.l.b16 %v2746
        %v3744 = vunpack.c.l.b16 %v2747
        %v3745 = vunpack.c.l.b16 %v2748
        %v3746 = vunpack.c.l.b16 %v2749
        %v3747 = vunpack.c.l.b16 %v2750
        %v3748 = vunpack.c.l.b16 %v2751
        %v3749 = vunpack.c.l.b16 %v2752
        %v3750 = vunpack.c.l.b16 %v2753
        %v3751 = vunpack.c.l.b16 %v2754
        %v3752 = vunpack.c.l.b16 %v2755
        %v3753 = vunpack.c.l.b16 %v2756
        %v3754 = vunpack.c.l.b16 %v2757
        %v3755 = vunpack.c.l.b16 %v2758
        %v3756 = vunpack.c.l.b16 %v2759
        %v3757 = vunpack.c.l.b16 %v2760
        %v3758 = vunpack.c.l.b16 %v2761
        %v3759 = vunpack.c.l.b16 %v2762
        %v3760 = vunpack.c.l.b16 %v2763
        %v3761 = vrot.slane %v3698, 7
        %v3762 = vsel %vm3511, %v3761, %v3697
        %v3763 = vrot.slane %v3699, 6
        %v3764 = vsel %vm3514, %v3763, %v3762
        %v3765 = vrot.slane %v3700, 5
        %v3766 = vsel %vm3517, %v3765, %v3764
        %v3767 = vrot.slane %v3701, 4
        %v3768 = vsel %vm3520, %v3767, %v3766
        %v3769 = vrot.slane %v3702, 3
        %v3770 = vsel %vm3523, %v3769, %v3768
        %v3771 = vrot.slane %v3703, 2
        %v3772 = vsel %vm3526, %v3771, %v3770
        %v3773 = vrot.slane %v3704, 1
        %v3774 = vsel %vm3529, %v3773, %v3772
        %v3775 = vrot.slane %v3706, 7
        %v3776 = vsel %vm3511, %v3775, %v3705
        %v3777 = vrot.slane %v3707, 6
        %v3778 = vsel %vm3514, %v3777, %v3776
        %v3779 = vrot.slane %v3708, 5
        %v3780 = vsel %vm3517, %v3779, %v3778
        %v3781 = vrot.slane %v3709, 4
        %v3782 = vsel %vm3520, %v3781, %v3780
        %v3783 = vrot.slane %v3710, 3
        %v3784 = vsel %vm3523, %v3783, %v3782
        %v3785 = vrot.slane %v3711, 2
        %v3786 = vsel %vm3526, %v3785, %v3784
        %v3787 = vrot.slane %v3712, 1
        %v3788 = vsel %vm3529, %v3787, %v3786
        %v3789 = vrot.slane %v3714, 7
        %v3790 = vsel %vm3511, %v3789, %v3713
        %v3791 = vrot.slane %v3715, 6
        %v3792 = vsel %vm3514, %v3791, %v3790
        %v3793 = vrot.slane %v3716, 5
        %v3794 = vsel %vm3517, %v3793, %v3792
        %v3795 = vrot.slane %v3717, 4
        %v3796 = vsel %vm3520, %v3795, %v3794
        %v3797 = vrot.slane %v3718, 3
        %v3798 = vsel %vm3523, %v3797, %v3796
        %v3799 = vrot.slane %v3719, 2
        %v3800 = vsel %vm3526, %v3799, %v3798
        %v3801 = vrot.slane %v3720, 1
        %v3802 = vsel %vm3529, %v3801, %v3800
        %v3803 = vrot.slane %v3722, 7
        %v3804 = vsel %vm3511, %v3803, %v3721
        %v3805 = vrot.slane %v3723, 6
        %v3806 = vsel %vm3514, %v3805, %v3804
        %v3807 = vrot.slane %v3724, 5
        %v3808 = vsel %vm3517, %v3807, %v3806
        %v3809 = vrot.slane %v3725, 4
        %v3810 = vsel %vm3520, %v3809, %v3808
        %v3811 = vrot.slane %v3726, 3
        %v3812 = vsel %vm3523, %v3811, %v3810
        %v3813 = vrot.slane %v3727, 2
        %v3814 = vsel %vm3526, %v3813, %v3812
        %v3815 = vrot.slane %v3728, 1
        %v3816 = vsel %vm3529, %v3815, %v3814
        %v3817 = vrot.slane %v3730, 7
        %v3818 = vsel %vm3511, %v3817, %v3729
        %v3819 = vrot.slane %v3731, 6
        %v3820 = vsel %vm3514, %v3819, %v3818
        %v3821 = vrot.slane %v3732, 5
        %v3822 = vsel %vm3517, %v3821, %v3820
        %v3823 = vrot.slane %v3733, 4
        %v3824 = vsel %vm3520, %v3823, %v3822
        %v3825 = vrot.slane %v3734, 3
        %v3826 = vsel %vm3523, %v3825, %v3824
        %v3827 = vrot.slane %v3735, 2
        %v3828 = vsel %vm3526, %v3827, %v3826
        %v3829 = vrot.slane %v3736, 1
        %v3830 = vsel %vm3529, %v3829, %v3828
        %v3831 = vrot.slane %v3738, 7
        %v3832 = vsel %vm3511, %v3831, %v3737
        %v3833 = vrot.slane %v3739, 6
        %v3834 = vsel %vm3514, %v3833, %v3832
        %v3835 = vrot.slane %v3740, 5
        %v3836 = vsel %vm3517, %v3835, %v3834
        %v3837 = vrot.slane %v3741, 4
        %v3838 = vsel %vm3520, %v3837, %v3836
        %v3839 = vrot.slane %v3742, 3
        %v3840 = vsel %vm3523, %v3839, %v3838
        %v3841 = vrot.slane %v3743, 2
        %v3842 = vsel %vm3526, %v3841, %v3840
        %v3843 = vrot.slane %v3744, 1
        %v3844 = vsel %vm3529, %v3843, %v3842
        %v3845 = vrot.slane %v3746, 7
        %v3846 = vsel %vm3511, %v3845, %v3745
        %v3847 = vrot.slane %v3747, 6
        %v3848 = vsel %vm3514, %v3847, %v3846
        %v3849 = vrot.slane %v3748, 5
        %v3850 = vsel %vm3517, %v3849, %v3848
        %v3851 = vrot.slane %v3749, 4
        %v3852 = vsel %vm3520, %v3851, %v3850
        %v3853 = vrot.slane %v3750, 3
        %v3854 = vsel %vm3523, %v3853, %v3852
        %v3855 = vrot.slane %v3751, 2
        %v3856 = vsel %vm3526, %v3855, %v3854
        %v3857 = vrot.slane %v3752, 1
        %v3858 = vsel %vm3529, %v3857, %v3856
        %v3859 = vrot.slane %v3754, 7
        %v3860 = vsel %vm3511, %v3859, %v3753
        %v3861 = vrot.slane %v3755, 6
        %v3862 = vsel %vm3514, %v3861, %v3860
        %v3863 = vrot.slane %v3756, 5
        %v3864 = vsel %vm3517, %v3863, %v3862
        %v3865 = vrot.slane %v3757, 4
        %v3866 = vsel %vm3520, %v3865, %v3864
        %v3867 = vrot.slane %v3758, 3
        %v3868 = vsel %vm3523, %v3867, %v3866
        %v3869 = vrot.slane %v3759, 2
        %v3870 = vsel %vm3526, %v3869, %v3868
        %v3871 = vrot.slane %v3760, 1
        %v3872 = vsel %vm3529, %v3871, %v3870
        %v3873 = vpack.c.b16 %v3788, %v3774
        %v3874 = vpack.c.b16 %v3816, %v3802
        %v3875 = vpack.c.b16 %v3844, %v3830
        %v3876 = vpack.c.b16 %v3872, %v3858
        %3877 = vrot.lane.b32.xlu0 %v3873, 8
        %v3878 = vpop.permute.xlu0 %3877
        %3879 = vrot.lane.b32.xlu0 %v3874, 8
        %v3880 = vpop.permute.xlu0 %3879
        %3881 = vrot.lane.b32.xlu0 %v3875, 8
        %v3882 = vpop.permute.xlu0 %3881
        %3883 = vrot.lane.b32.xlu0 %v3876, 8
        %v3884 = vpop.permute.xlu0 %3883
        %v3893 = vunpack.c.l.b16 %v596
        %v3894 = vunpack.c.l.b16 %v597
        %v3895 = vunpack.c.l.b16 %v598
        %v3896 = vunpack.c.l.b16 %v599
        %v3897 = vunpack.c.l.b16 %v600
        %v3898 = vunpack.c.l.b16 %v601
        %v3899 = vunpack.c.l.b16 %v602
        %v3900 = vunpack.c.l.b16 %v603
        %v3901 = vpack.c.b16 %v3894, %v3893
        %v3902 = vpack.c.b16 %v3896, %v3895
        %v3903 = vpack.c.b16 %v3898, %v3897
        %v3904 = vpack.c.b16 %v3900, %v3899
        %3905 = vrot.lane.b32.xlu0 %v3901, 24
        %v3906 = vpop.permute.xlu0 %3905
        %3907 = vrot.lane.b32.xlu0 %v3902, 24
        %v3908 = vpop.permute.xlu0 %3907
        %3909 = vrot.lane.b32.xlu0 %v3903, 24
        %v3910 = vpop.permute.xlu0 %3909
        %3911 = vrot.lane.b32.xlu0 %v3904, 24
        %v3912 = vpop.permute.xlu0 %3911
        %v3921 = vunpack.c.l.b16 %v3374
        %v3922 = vunpack.c.l.b16 %v3375
        %v3923 = vunpack.c.l.b16 %v3376
        %v3924 = vunpack.c.l.b16 %v3377
        %v3925 = vunpack.c.l.b16 %v3378
        %v3926 = vunpack.c.l.b16 %v3379
        %v3927 = vunpack.c.l.b16 %v3380
        %v3928 = vunpack.c.l.b16 %v3381
        %v3929 = vpack.c.b16 %v3922, %v3921
        %v3930 = vpack.c.b16 %v3924, %v3923
        %v3931 = vpack.c.b16 %v3926, %v3925
        %v3932 = vpack.c.b16 %v3928, %v3927
        %3933 = vrot.lane.b32.xlu0 %v3929, 40
        %v3934 = vpop.permute.xlu0 %3933
        %3935 = vrot.lane.b32.xlu0 %v3930, 40
        %v3936 = vpop.permute.xlu0 %3935
        %3937 = vrot.lane.b32.xlu0 %v3931, 40
        %v3938 = vpop.permute.xlu0 %3937
        %3939 = vrot.lane.b32.xlu0 %v3932, 40
        %v3940 = vpop.permute.xlu0 %3939
        %vm3941 = vcmask 64512
        %v3944 = vsel %vm3941, %v3629, %v3878
        %v3947 = vsel %vm3941, %v3630, %v3880
        %v3950 = vsel %vm3941, %v3631, %v3882
        %v3953 = vsel %vm3941, %v3632, %v3884
        %vm3954 = vcmask 195584
        %v3956 = vsel %vm3954, %v3944, %v3906
        %v3958 = vsel %vm3954, %v3947, %v3908
        %v3960 = vsel %vm3954, %v3950, %v3910
        %v3962 = vsel %vm3954, %v3953, %v3912
        %vm3963 = vcmask 326656
        %v3965 = vsel %vm3963, %v3956, %v3934
        %v3967 = vsel %vm3963, %v3958, %v3936
        %v3969 = vsel %vm3963, %v3960, %v3938
        %v3971 = vsel %vm3963, %v3962, %v3940
        %v3972 = vld [vmem:[#allocation7] sm:$0xf]
        %v3973 = vld [vmem:[#allocation7 + $0x4] sm:$0xf]
        %v3974 = vld [vmem:[#allocation7 + $0x8] sm:$0xf]
        %v3975 = vld [vmem:[#allocation7 + $0xc] sm:$0xf]
        %v3976 = vld [vmem:[#allocation7 + $0x10] sm:$0xf]
        %v3977 = vld [vmem:[#allocation7 + $0x14] sm:$0xf]
        %v3978 = vld [vmem:[#allocation7 + $0x18] sm:$0xf]
        %v3979 = vld [vmem:[#allocation7 + $0x1c] sm:$0xf]
        %v3980 = vld [vmem:[%s5] sm:$0x1]
        %v3982 = vlaneseq
        %v3983 = vshrl.u32 %v3982, 7
        %v3984 = vsub.s32 0, %v3983
        %v3985 = vrot.slane %v3980, %v3984
        %v3995 = vunpack.c.l.b16 %v3972
        %v3996 = vunpack.c.l.b16 %v3973
        %v3997 = vunpack.c.l.b16 %v3974
        %v3998 = vunpack.c.l.b16 %v3975
        %v3999 = vunpack.c.l.b16 %v3976
        %v4000 = vunpack.c.l.b16 %v3977
        %v4001 = vunpack.c.l.b16 %v3978
        %v4002 = vunpack.c.l.b16 %v3979
        %v4003 = vpack.c.b16 %v3996, %v3995
        %v4004 = vpack.c.b16 %v3998, %v3997
        %v4005 = vpack.c.b16 %v4000, %v3999
        %v4006 = vpack.c.b16 %v4002, %v4001
        %vm4011 = vcmask 523264
        %v4012 = vsel %vm4011, %v3965, 0
        %v4014 = vsel %vm4011, %v3967, 0
        %v4016 = vsel %vm4011, %v3969, 0
        %v4018 = vsel %vm4011, %v3971, 0
        %4020 = vmatprep.subr.bf16.mxu0 0
        %4021 = vmatpush1.bf16.msra.mxu0 %v4003
        %4022 = vmatprep.subr.bf16.mxu0 0
        %4023 = vmatpush1.bf16.msra.mxu0 %v4004
        %4024 = vmatprep.subr.bf16.mxu0 0
        %4025 = vmatpush1.bf16.msra.mxu0 %v4005
        %4026 = vmatprep.subr.bf16.mxu0 0
        %4027 = vmatpush1.bf16.msra.mxu0 %v4006
        %4028 = vmatprep.subr.bf16.mxu0 0
        %4029 = vmatpush1.bf16.msra.mxu0 0
        %4030 = vmatprep.subr.bf16.mxu0 0
        %4031 = vmatpush1.bf16.msra.mxu0 0
        %4032 = vmatprep.subr.bf16.mxu0 0
        %4033 = vmatpush1.bf16.msra.mxu0 0
        %4034 = vmatprep.subr.bf16.mxu0 0
        %4035 = vmatpush1.bf16.msra.mxu0 0
        %4036 = vmatprep.subr.bf16.mxu0 0
        %4037 = vmatpush1.bf16.msra.mxu0 0
        %4038 = vmatprep.subr.bf16.mxu0 0
        %4039 = vmatpush1.bf16.msra.mxu0 0
        %4040 = vmatprep.subr.bf16.mxu0 0
        %4041 = vmatpush1.bf16.msra.mxu0 0
        %4042 = vmatprep.subr.bf16.mxu0 0
        %4043 = vmatpush1.bf16.msra.mxu0 0
        %4044 = vmatprep.subr.bf16.mxu0 0
        %4045 = vmatpush1.bf16.msra.mxu0 0
        %4046 = vmatprep.subr.bf16.mxu0 0
        %4047 = vmatpush1.bf16.msra.mxu0 0
        %4048 = vmatprep.subr.bf16.mxu0 0
        %4049 = vmatpush1.bf16.msra.mxu0 0
        %4050 = vmatprep.subr.bf16.mxu0 0
        %4051 = vmatpush1.bf16.msra.mxu0 0
        %4052 = vmatprep.mubr.bf16.mxu0 0
        %4053 = vmatmul.mubr.bf16.gmra.mrb[0].mxu0 %v4012
        %v4054 = vpop.f32.mrb[0].mxu0
        %v4055 = vadd.f32 %v3985, %v4054
        %v4056 = vpop.f32.mrb[0].mxu0
        %v4057 = vpop.f32.mrb[0].mxu0
        %v4058 = vadd.f32 %v3985, %v4057
        %v4059 = vpop.f32.mrb[0].mxu0
        %4060 = vmatprep.mubr.bf16.mxu0 0
        %4061 = vmatmul.mubr.bf16.gmra.mrb[0].mxu0 %v4014
        %v4062 = vpop.f32.mrb[0].mxu0
        %v4063 = vadd.f32 %v3985, %v4062
        %v4064 = vpop.f32.mrb[0].mxu0
        %v4065 = vpop.f32.mrb[0].mxu0
        %v4066 = vadd.f32 %v3985, %v4065
        %v4067 = vpop.f32.mrb[0].mxu0
        %4068 = vmatprep.mubr.bf16.mxu0 0
        %4069 = vmatmul.mubr.bf16.gmra.mrb[0].mxu0 %v4016
        %v4070 = vpop.f32.mrb[0].mxu0
        %v4071 = vadd.f32 %v3985, %v4070
        %v4072 = vpop.f32.mrb[0].mxu0
        %v4073 = vpop.f32.mrb[0].mxu0
        %v4074 = vadd.f32 %v3985, %v4073
        %v4075 = vpop.f32.mrb[0].mxu0
        %4076 = vmatprep.mubr.bf16.mxu0 0
        %4077 = vmatmul.mubr.bf16.gmra.mrb[0].mxu0 %v4018
        %v4078 = vpop.f32.mrb[0].mxu0
        %v4079 = vadd.f32 %v3985, %v4078
        %v4080 = vpop.f32.mrb[0].mxu0
        %v4081 = vpop.f32.mrb[0].mxu0
        %v4082 = vadd.f32 %v3985, %v4081
        %v4083 = vpop.f32.mrb[0].mxu0
        %4084 = vdwg.mxu0
        %v4085 = vxor.u32 %v4055, 2147483648
        %v4086 = vxor.u32 %v4058, 2147483648
        %v4087 = vxor.u32 %v4063, 2147483648
        %v4088 = vxor.u32 %v4066, 2147483648
        %v4089 = vxor.u32 %v4071, 2147483648
        %v4090 = vxor.u32 %v4074, 2147483648
        %v4091 = vxor.u32 %v4079, 2147483648
        %v4092 = vxor.u32 %v4082, 2147483648
        %v4093 = vmul.f32 %v4085, 1.442695
        %v4094 = vpow.pop %v4093
        %v4095 = vmul.f32 %v4086, 1.442695
        %v4096 = vpow.pop %v4095
        %v4097 = vmul.f32 %v4087, 1.442695
        %v4098 = vpow.pop %v4097
        %v4099 = vmul.f32 %v4088, 1.442695
        %v4100 = vpow.pop %v4099
        %v4101 = vmul.f32 %v4089, 1.442695
        %v4102 = vpow.pop %v4101
        %v4103 = vmul.f32 %v4090, 1.442695
        %v4104 = vpow.pop %v4103
        %v4105 = vmul.f32 %v4091, 1.442695
        %v4106 = vpow.pop %v4105
        %v4107 = vmul.f32 %v4092, 1.442695
        %v4108 = vpow.pop %v4107
        %v4109 = vadd.f32 %v4094, 1.0
        %v4110 = vadd.f32 %v4096, 1.0
        %v4111 = vadd.f32 %v4098, 1.0
        %v4112 = vadd.f32 %v4100, 1.0
        %v4113 = vadd.f32 %v4102, 1.0
        %v4114 = vadd.f32 %v4104, 1.0
        %v4115 = vadd.f32 %v4106, 1.0
        %v4116 = vadd.f32 %v4108, 1.0
        %v4117 = vrcp.pop %v4109
        %v4118 = vmul.f32 1.0, %v4117
        %v4119 = vrcp.pop %v4110
        %v4120 = vmul.f32 1.0, %v4119
        %v4121 = vrcp.pop %v4111
        %v4122 = vmul.f32 1.0, %v4121
        %v4123 = vrcp.pop %v4112
        %v4124 = vmul.f32 1.0, %v4123
        %v4125 = vrcp.pop %v4113
        %v4126 = vmul.f32 1.0, %v4125
        %v4127 = vrcp.pop %v4114
        %v4128 = vmul.f32 1.0, %v4127
        %v4129 = vrcp.pop %v4115
        %v4130 = vmul.f32 1.0, %v4129
        %v4131 = vrcp.pop %v4116
        %v4132 = vmul.f32 1.0, %v4131
        %v4133 = vmul.f32 %v4055, %v4118
        %v4134 = vmul.f32 %v4058, %v4120
        %v4135 = vmul.f32 %v4063, %v4122
        %v4136 = vmul.f32 %v4066, %v4124
        %v4137 = vmul.f32 %v4071, %v4126
        %v4138 = vmul.f32 %v4074, %v4128
        %v4139 = vmul.f32 %v4079, %v4130
        %v4140 = vmul.f32 %v4082, %v4132
        %v4141 = vpack.c.bf16 %v4134, %v4133
        %v4142 = vpack.c.bf16 %v4136, %v4135
        %v4143 = vpack.c.bf16 %v4138, %v4137
        %v4144 = vpack.c.bf16 %v4140, %v4139
        %v4149 = vunpack.c.l.b16 %v4141
        %v4150 = vunpack.c.h.b16 %v4141
        %v4151 = vunpack.c.l.b16 %v4142
        %v4152 = vunpack.c.h.b16 %v4142
        %v4153 = vunpack.c.l.b16 %v4143
        %v4154 = vunpack.c.h.b16 %v4143
        %v4155 = vunpack.c.l.b16 %v4144
        %v4156 = vunpack.c.h.b16 %v4144
        %v4157 = vpack.c.b16 %v4149, %v4149
        %v4158 = vpack.c.b16 %v4150, %v4150
        %v4159 = vpack.c.b16 %v4151, %v4151
        %v4160 = vpack.c.b16 %v4152, %v4152
        %v4161 = vpack.c.b16 %v4153, %v4153
        %v4162 = vpack.c.b16 %v4154, %v4154
        %v4163 = vpack.c.b16 %v4155, %v4155
        %v4164 = vpack.c.b16 %v4156, %v4156
        %v4166 = vshrl.u32 0, 16
        %v4168 = vrot.slane %v4166, 7
        %v4169 = vshll.u32 0, 16
        %v4171 = vor.u32 %v4168, %v4169
        %v4173 = vshrl.u32 %v4157, 16
        %v4175 = vrot.slane %v4173, 7
        %v4176 = vshll.u32 %v4157, 16
        %v4178 = vor.u32 %v4175, %v4176
        %v4180 = vshrl.u32 %v4158, 16
        %v4182 = vrot.slane %v4180, 7
        %v4183 = vshll.u32 %v4158, 16
        %v4185 = vor.u32 %v4182, %v4183
        %v4187 = vshrl.u32 %v4159, 16
        %v4189 = vrot.slane %v4187, 7
        %v4190 = vshll.u32 %v4159, 16
        %v4192 = vor.u32 %v4189, %v4190
        %v4194 = vshrl.u32 %v4160, 16
        %v4196 = vrot.slane %v4194, 7
        %v4197 = vshll.u32 %v4160, 16
        %v4199 = vor.u32 %v4196, %v4197
        %v4201 = vshrl.u32 %v4161, 16
        %v4203 = vrot.slane %v4201, 7
        %v4204 = vshll.u32 %v4161, 16
        %v4206 = vor.u32 %v4203, %v4204
        %v4208 = vshrl.u32 %v4162, 16
        %v4210 = vrot.slane %v4208, 7
        %v4211 = vshll.u32 %v4162, 16
        %v4213 = vor.u32 %v4210, %v4211
        %v4215 = vshrl.u32 %v4163, 16
        %v4217 = vrot.slane %v4215, 7
        %v4218 = vshll.u32 %v4163, 16
        %v4220 = vor.u32 %v4217, %v4218
        %v4222 = vshrl.u32 %v4164, 16
        %v4224 = vrot.slane %v4222, 7
        %v4225 = vshll.u32 %v4164, 16
        %v4227 = vor.u32 %v4224, %v4225
        %vm4237 = vcmask 1040384
        %vm4238 = vsmask.f32 256
        %vm4239 = vmand %vm4237, %vm4238
        %v4240 = vsel %vm4239, 0, %v4171
        %v4241 = vsel %vm4239, 0, %v4178
        %v4242 = vsel %vm4239, 0, %v4185
        %v4243 = vsel %vm4239, 0, %v4192
        %v4244 = vsel %vm4239, 0, %v4199
        %v4245 = vsel %vm4239, 0, %v4206
        %v4246 = vsel %vm4239, 0, %v4213
        %v4247 = vsel %vm4239, 0, %v4220
        %v4248 = vsel %vm4239, 0, %v4227
        %vm4249 = vcmask 1044480
        %vm4250 = vsmask.f32 4352
        %vm4251 = vmand %vm4249, %vm4250
        %v4252 = vsel %vm4251, %v4240, 0
        %v4253 = vsel %vm4251, %v4241, 0
        %v4254 = vsel %vm4251, %v4242, 0
        %v4255 = vsel %vm4251, %v4243, 0
        %v4256 = vsel %vm4251, %v4244, 0
        %v4257 = vsel %vm4251, %v4245, 0
        %v4258 = vsel %vm4251, %v4246, 0
        %v4259 = vsel %vm4251, %v4247, 0
        %v4260 = vsel %vm4251, %v4248, 0
        %v4262 = vshrl.u32 %v4252, 16
        %v4264 = vshll.u32 %v4252, 16
        %v4266 = vrot.slane %v4264, 1
        %v4267 = vor.u32 %v4262, %v4266
        %v4269 = vshrl.u32 %v4253, 16
        %v4271 = vshll.u32 %v4253, 16
        %v4273 = vrot.slane %v4271, 1
        %v4274 = vor.u32 %v4269, %v4273
        %v4276 = vshrl.u32 %v4254, 16
        %v4278 = vshll.u32 %v4254, 16
        %v4280 = vrot.slane %v4278, 1
        %v4281 = vor.u32 %v4276, %v4280
        %v4283 = vshrl.u32 %v4255, 16
        %v4285 = vshll.u32 %v4255, 16
        %v4287 = vrot.slane %v4285, 1
        %v4288 = vor.u32 %v4283, %v4287
        %v4290 = vshrl.u32 %v4256, 16
        %v4292 = vshll.u32 %v4256, 16
        %v4294 = vrot.slane %v4292, 1
        %v4295 = vor.u32 %v4290, %v4294
        %v4297 = vshrl.u32 %v4257, 16
        %v4299 = vshll.u32 %v4257, 16
        %v4301 = vrot.slane %v4299, 1
        %v4302 = vor.u32 %v4297, %v4301
        %v4304 = vshrl.u32 %v4258, 16
        %v4306 = vshll.u32 %v4258, 16
        %v4308 = vrot.slane %v4306, 1
        %v4309 = vor.u32 %v4304, %v4308
        %v4311 = vshrl.u32 %v4259, 16
        %v4313 = vshll.u32 %v4259, 16
        %v4315 = vrot.slane %v4313, 1
        %v4316 = vor.u32 %v4311, %v4315
        %v4325 = vrot.slane %v4252, 1
        %v4326 = vrot.slane %v4253, 1
        %v4327 = vrot.slane %v4254, 1
        %v4328 = vrot.slane %v4255, 1
        %v4329 = vrot.slane %v4256, 1
        %v4330 = vrot.slane %v4257, 1
        %v4331 = vrot.slane %v4258, 1
        %v4332 = vrot.slane %v4259, 1
        %v4334 = vshrl.u32 %v4260, 16
        %v4336 = vshll.u32 %v4260, 16
        %v4338 = vrot.slane %v4336, 1
        %v4339 = vor.u32 %v4334, %v4338
        %v4341 = vrot.slane %v4260, 1
        %v4342 = vunpack.c.l.b16 %v4252
        %v4343 = vunpack.c.l.b16 %v4267
        %v4344 = vunpack.c.l.b16 %v4325
        %v4345 = vunpack.c.l.b16 %v4253
        %v4346 = vunpack.c.l.b16 %v4274
        %v4347 = vunpack.c.l.b16 %v4326
        %v4348 = vunpack.c.l.b16 %v4254
        %v4349 = vunpack.c.l.b16 %v4281
        %v4350 = vunpack.c.l.b16 %v4327
        %v4351 = vunpack.c.l.b16 %v4255
        %v4352 = vunpack.c.l.b16 %v4288
        %v4353 = vunpack.c.l.b16 %v4328
        %v4354 = vunpack.c.l.b16 %v4256
        %v4355 = vunpack.c.l.b16 %v4295
        %v4356 = vunpack.c.l.b16 %v4329
        %v4357 = vunpack.c.l.b16 %v4257
        %v4358 = vunpack.c.l.b16 %v4302
        %v4359 = vunpack.c.l.b16 %v4330
        %v4360 = vunpack.c.l.b16 %v4258
        %v4361 = vunpack.c.l.b16 %v4309
        %v4362 = vunpack.c.l.b16 %v4331
        %v4363 = vunpack.c.l.b16 %v4259
        %v4364 = vunpack.c.l.b16 %v4316
        %v4365 = vunpack.c.l.b16 %v4332
        %v4366 = vunpack.c.l.b16 %v4260
        %v4367 = vunpack.c.l.b16 %v4339
        %v4368 = vunpack.c.l.b16 %v4341
        %v4369 = vld [vmem:[%s6] sm:$0xf]
        %v4370 = vld [vmem:[%s6 + $0x4] sm:$0xf]
        %v4371 = vld [vmem:[%s6 + $0x8] sm:$0xf]
        %v4372 = vld [vmem:[%s6 + $0xc] sm:$0xf]
        %v4373 = vld [vmem:[%s6 + $0x10] sm:$0xf]
        %v4374 = vld [vmem:[%s6 + $0x14] sm:$0xf]
        %v4375 = vld [vmem:[%s6 + $0x18] sm:$0xf]
        %v4376 = vld [vmem:[%s6 + $0x1c] sm:$0xf]
        %v4377 = vld [vmem:[%s6 + $0x20] sm:$0xf]
        %v4378 = vld [vmem:[%s6 + $0x24] sm:$0xf]
        %v4379 = vld [vmem:[%s6 + $0x28] sm:$0xf]
        %v4380 = vld [vmem:[%s6 + $0x2c] sm:$0xf]
        %v4381 = vld [vmem:[%s6 + $0x30] sm:$0xf]
        %v4382 = vld [vmem:[%s6 + $0x34] sm:$0xf]
        %v4383 = vld [vmem:[%s6 + $0x38] sm:$0xf]
        %v4384 = vld [vmem:[%s6 + $0x3c] sm:$0xf]
        %v4385 = vld [vmem:[%s6 + $0x40] sm:$0xf]
        %v4386 = vld [vmem:[%s6 + $0x44] sm:$0xf]
        %v4387 = vld [vmem:[%s6 + $0x48] sm:$0xf]
        %v4388 = vld [vmem:[%s6 + $0x4c] sm:$0xf]
        %v4389 = vld [vmem:[%s6 + $0x50] sm:$0xf]
        %v4390 = vld [vmem:[%s6 + $0x54] sm:$0xf]
        %v4391 = vld [vmem:[%s6 + $0x58] sm:$0xf]
        %v4392 = vld [vmem:[%s6 + $0x5c] sm:$0xf]
        %v4393 = vld [vmem:[%s6 + $0x60] sm:$0xf]
        %v4394 = vld [vmem:[%s6 + $0x64] sm:$0xf]
        %v4395 = vld [vmem:[%s6 + $0x68] sm:$0xf]
        %v4396 = vld [vmem:[%s6 + $0x6c] sm:$0xf]
        %v4397 = vld [vmem:[%s6 + $0x70] sm:$0xf]
        %v4398 = vld [vmem:[%s6 + $0x74] sm:$0xf]
        %v4399 = vld [vmem:[%s6 + $0x78] sm:$0xf]
        %v4400 = vld [vmem:[%s6 + $0x7c] sm:$0xf]
        %v4401 = vld [vmem:[%s6 + $0x80] sm:$0xf]
        %v4402 = vld [vmem:[%s6 + $0x84] sm:$0xf]
        %v4403 = vld [vmem:[%s6 + $0x88] sm:$0xf]
        %v4404 = vld [vmem:[%s6 + $0x8c] sm:$0xf]
        %v4405 = vld [vmem:[%s6 + $0x90] sm:$0xf]
        %v4406 = vld [vmem:[%s6 + $0x94] sm:$0xf]
        %v4407 = vld [vmem:[%s6 + $0x98] sm:$0xf]
        %v4408 = vld [vmem:[%s6 + $0x9c] sm:$0xf]
        %v4409 = vld [vmem:[%s6 + $0xa0] sm:$0xf]
        %v4410 = vld [vmem:[%s6 + $0xa4] sm:$0xf]
        %v4411 = vld [vmem:[%s6 + $0xa8] sm:$0xf]
        %v4412 = vld [vmem:[%s6 + $0xac] sm:$0xf]
        %v4413 = vld [vmem:[%s6 + $0xb0] sm:$0xf]
        %v4414 = vld [vmem:[%s6 + $0xb4] sm:$0xf]
        %v4415 = vld [vmem:[%s6 + $0xb8] sm:$0xf]
        %v4416 = vld [vmem:[%s6 + $0xbc] sm:$0xf]
        %v4417 = vld [vmem:[%s6 + $0xc0] sm:$0xf]
        %v4418 = vld [vmem:[%s6 + $0xc4] sm:$0xf]
        %v4419 = vld [vmem:[%s6 + $0xc8] sm:$0xf]
        %v4420 = vld [vmem:[%s6 + $0xcc] sm:$0xf]
        %v4421 = vld [vmem:[%s6 + $0xd0] sm:$0xf]
        %v4422 = vld [vmem:[%s6 + $0xd4] sm:$0xf]
        %v4423 = vld [vmem:[%s6 + $0xd8] sm:$0xf]
        %v4424 = vld [vmem:[%s6 + $0xdc] sm:$0xf]
        %v4425 = vld [vmem:[%s6 + $0xe0] sm:$0xf]
        %v4426 = vld [vmem:[%s6 + $0xe4] sm:$0xf]
        %v4427 = vld [vmem:[%s6 + $0xe8] sm:$0xf]
        %v4428 = vld [vmem:[%s6 + $0xec] sm:$0xf]
        %v4429 = vld [vmem:[%s6 + $0xf0] sm:$0xf]
        %v4430 = vld [vmem:[%s6 + $0xf4] sm:$0xf]
        %v4431 = vld [vmem:[%s6 + $0xf8] sm:$0xf]
        %v4432 = vld [vmem:[%s6 + $0xfc] sm:$0xf]
        %v4433 = vld [vmem:[%s6 + $0x100] sm:$0xf]
        %v4434 = vld [vmem:[%s6 + $0x104] sm:$0xf]
        %v4435 = vld [vmem:[%s6 + $0x108] sm:$0xf]
        %v4436 = vld [vmem:[%s6 + $0x10c] sm:$0xf]
        %v4437 = vld [vmem:[%s6 + $0x110] sm:$0xf]
        %v4438 = vld [vmem:[%s6 + $0x114] sm:$0xf]
        %v4439 = vld [vmem:[%s6 + $0x118] sm:$0xf]
        %v4440 = vld [vmem:[%s6 + $0x11c] sm:$0xf]
        %v4441 = vld [vmem:[%s6 + $0x120] sm:$0xf]
        %v4442 = vld [vmem:[%s6 + $0x124] sm:$0xf]
        %v4443 = vld [vmem:[%s6 + $0x128] sm:$0xf]
        %v4444 = vld [vmem:[%s6 + $0x12c] sm:$0xf]
        %v4445 = vld [vmem:[%s6 + $0x130] sm:$0xf]
        %v4446 = vld [vmem:[%s6 + $0x134] sm:$0xf]
        %v4447 = vld [vmem:[%s6 + $0x138] sm:$0xf]
        %v4448 = vld [vmem:[%s6 + $0x13c] sm:$0xf]
        %v4449 = vld [vmem:[%s6 + $0x140] sm:$0xf]
        %v4450 = vld [vmem:[%s6 + $0x144] sm:$0xf]
        %v4451 = vld [vmem:[%s6 + $0x148] sm:$0xf]
        %v4452 = vld [vmem:[%s6 + $0x14c] sm:$0xf]
        %v4453 = vld [vmem:[%s6 + $0x150] sm:$0xf]
        %v4454 = vld [vmem:[%s6 + $0x154] sm:$0xf]
        %v4455 = vld [vmem:[%s6 + $0x158] sm:$0xf]
        %v4456 = vld [vmem:[%s6 + $0x15c] sm:$0xf]
        %v4457 = vld [vmem:[%s6 + $0x160] sm:$0xf]
        %v4458 = vld [vmem:[%s6 + $0x164] sm:$0xf]
        %v4459 = vld [vmem:[%s6 + $0x168] sm:$0xf]
        %v4460 = vld [vmem:[%s6 + $0x16c] sm:$0xf]
        %v4461 = vld [vmem:[%s6 + $0x170] sm:$0xf]
        %v4462 = vld [vmem:[%s6 + $0x174] sm:$0xf]
        %v4463 = vld [vmem:[%s6 + $0x178] sm:$0xf]
        %v4464 = vld [vmem:[%s6 + $0x17c] sm:$0xf]
        %v4465 = vld [vmem:[%s6 + $0x180] sm:$0xf]
        %v4466 = vld [vmem:[%s6 + $0x184] sm:$0xf]
        %v4467 = vld [vmem:[%s6 + $0x188] sm:$0xf]
        %v4468 = vld [vmem:[%s6 + $0x18c] sm:$0xf]
        %v4469 = vld [vmem:[%s6 + $0x190] sm:$0xf]
        %v4470 = vld [vmem:[%s6 + $0x194] sm:$0xf]
        %v4471 = vld [vmem:[%s6 + $0x198] sm:$0xf]
        %v4472 = vld [vmem:[%s6 + $0x19c] sm:$0xf]
        %v4473 = vld [vmem:[%s6 + $0x1a0] sm:$0xf]
        %v4474 = vld [vmem:[%s6 + $0x1a4] sm:$0xf]
        %v4475 = vld [vmem:[%s6 + $0x1a8] sm:$0xf]
        %v4476 = vld [vmem:[%s6 + $0x1ac] sm:$0xf]
        %v4477 = vld [vmem:[%s6 + $0x1b0] sm:$0xf]
        %v4478 = vld [vmem:[%s6 + $0x1b4] sm:$0xf]
        %v4479 = vld [vmem:[%s6 + $0x1b8] sm:$0xf]
        %v4480 = vld [vmem:[%s6 + $0x1bc] sm:$0xf]
        %v4481 = vld [vmem:[%s6 + $0x1c0] sm:$0xf]
        %v4482 = vld [vmem:[%s6 + $0x1c4] sm:$0xf]
        %v4483 = vld [vmem:[%s6 + $0x1c8] sm:$0xf]
        %v4484 = vld [vmem:[%s6 + $0x1cc] sm:$0xf]
        %v4485 = vld [vmem:[%s6 + $0x1d0] sm:$0xf]
        %v4486 = vld [vmem:[%s6 + $0x1d4] sm:$0xf]
        %v4487 = vld [vmem:[%s6 + $0x1d8] sm:$0xf]
        %v4488 = vld [vmem:[%s6 + $0x1dc] sm:$0xf]
        %v4489 = vld [vmem:[%s6 + $0x1e0] sm:$0xf]
        %v4490 = vld [vmem:[%s6 + $0x1e4] sm:$0xf]
        %v4491 = vld [vmem:[%s6 + $0x1e8] sm:$0xf]
        %v4492 = vld [vmem:[%s6 + $0x1ec] sm:$0xf]
        %v4493 = vld [vmem:[%s6 + $0x1f0] sm:$0xf]
        %v4494 = vld [vmem:[%s6 + $0x1f4] sm:$0xf]
        %v4495 = vld [vmem:[%s6 + $0x1f8] sm:$0xf]
        %v4496 = vld [vmem:[%s6 + $0x1fc] sm:$0xf]
        %v4497 = vld [vmem:[%s6 + $0x200] sm:$0xf]
        %v4498 = vld [vmem:[%s6 + $0x204] sm:$0xf]
        %v4499 = vld [vmem:[%s6 + $0x208] sm:$0xf]
        %v4500 = vld [vmem:[%s6 + $0x20c] sm:$0xf]
        %v4501 = vld [vmem:[%s6 + $0x210] sm:$0xf]
        %v4502 = vld [vmem:[%s6 + $0x214] sm:$0xf]
        %v4503 = vld [vmem:[%s6 + $0x218] sm:$0xf]
        %v4504 = vld [vmem:[%s6 + $0x21c] sm:$0xf]
        %v4505 = vld [vmem:[%s6 + $0x220] sm:$0xf]
        %v4506 = vld [vmem:[%s6 + $0x224] sm:$0xf]
        %v4507 = vld [vmem:[%s6 + $0x228] sm:$0xf]
        %v4508 = vld [vmem:[%s6 + $0x22c] sm:$0xf]
        %v4509 = vld [vmem:[%s6 + $0x230] sm:$0xf]
        %v4510 = vld [vmem:[%s6 + $0x234] sm:$0xf]
        %v4511 = vld [vmem:[%s6 + $0x238] sm:$0xf]
        %v4512 = vld [vmem:[%s6 + $0x23c] sm:$0xf]
        %v4513 = vld [vmem:[%s7] sm:$0x1]
        %v4515 = vlaneseq
        %v4516 = vshrl.u32 %v4515, 7
        %v4517 = vsub.s32 0, %v4516
        %v4518 = vrot.slane %v4513, %v4517
        %v4520 = vpack.c.b16 %v4345, %v4342
        %v4521 = vpack.c.b16 %v4346, %v4343
        %v4522 = vpack.c.b16 %v4347, %v4344
        %v4523 = vpack.c.b16 %v4348, %v4345
        %v4524 = vpack.c.b16 %v4349, %v4346
        %v4525 = vpack.c.b16 %v4350, %v4347
        %v4526 = vpack.c.b16 %v4351, %v4348
        %v4527 = vpack.c.b16 %v4352, %v4349
        %v4528 = vpack.c.b16 %v4353, %v4350
        %v4529 = vpack.c.b16 %v4354, %v4351
        %v4530 = vpack.c.b16 %v4355, %v4352
        %v4531 = vpack.c.b16 %v4356, %v4353
        %v4532 = vpack.c.b16 %v4357, %v4354
        %v4533 = vpack.c.b16 %v4358, %v4355
        %v4534 = vpack.c.b16 %v4359, %v4356
        %v4535 = vpack.c.b16 %v4360, %v4357
        %v4536 = vpack.c.b16 %v4361, %v4358
        %v4537 = vpack.c.b16 %v4362, %v4359
        %v4538 = vpack.c.b16 %v4363, %v4360
        %v4539 = vpack.c.b16 %v4364, %v4361
        %v4540 = vpack.c.b16 %v4365, %v4362
        %v4541 = vpack.c.b16 %v4366, %v4363
        %v4542 = vpack.c.b16 %v4367, %v4364
        %v4543 = vpack.c.b16 %v4368, %v4365
        %v4544 = vpack.c.b16 %v4342, %v4366
        %v4545 = vpack.c.b16 %v4343, %v4367
        %v4546 = vpack.c.b16 %v4344, %v4368
        %v4718 = vunpack.c.l.b16 %v4369
        %v4719 = vunpack.c.l.b16 %v4370
        %v4720 = vunpack.c.l.b16 %v4371
        %v4721 = vunpack.c.l.b16 %v4372
        %v4722 = vunpack.c.l.b16 %v4373
        %v4723 = vunpack.c.l.b16 %v4374
        %v4724 = vunpack.c.l.b16 %v4375
        %v4725 = vunpack.c.l.b16 %v4376
        %v4726 = vunpack.c.l.b16 %v4377
        %v4727 = vunpack.c.l.b16 %v4378
        %v4728 = vunpack.c.l.b16 %v4379
        %v4729 = vunpack.c.l.b16 %v4380
        %v4730 = vunpack.c.l.b16 %v4381
        %v4731 = vunpack.c.l.b16 %v4382
        %v4732 = vunpack.c.l.b16 %v4383
        %v4733 = vunpack.c.l.b16 %v4384
        %v4734 = vunpack.c.l.b16 %v4385
        %v4735 = vunpack.c.l.b16 %v4386
        %v4736 = vunpack.c.l.b16 %v4387
        %v4737 = vunpack.c.l.b16 %v4388
        %v4738 = vunpack.c.l.b16 %v4389
        %v4739 = vunpack.c.l.b16 %v4390
        %v4740 = vunpack.c.l.b16 %v4391
        %v4741 = vunpack.c.l.b16 %v4392
        %v4742 = vunpack.c.l.b16 %v4393
        %v4743 = vunpack.c.l.b16 %v4394
        %v4744 = vunpack.c.l.b16 %v4395
        %v4745 = vunpack.c.l.b16 %v4396
        %v4746 = vunpack.c.l.b16 %v4397
        %v4747 = vunpack.c.l.b16 %v4398
        %v4748 = vunpack.c.l.b16 %v4399
        %v4749 = vunpack.c.l.b16 %v4400
        %v4750 = vunpack.c.l.b16 %v4401
        %v4751 = vunpack.c.l.b16 %v4402
        %v4752 = vunpack.c.l.b16 %v4403
        %v4753 = vunpack.c.l.b16 %v4404
        %v4754 = vunpack.c.l.b16 %v4405
        %v4755 = vunpack.c.l.b16 %v4406
        %v4756 = vunpack.c.l.b16 %v4407
        %v4757 = vunpack.c.l.b16 %v4408
        %v4758 = vunpack.c.l.b16 %v4409
        %v4759 = vunpack.c.l.b16 %v4410
        %v4760 = vunpack.c.l.b16 %v4411
        %v4761 = vunpack.c.l.b16 %v4412
        %v4762 = vunpack.c.l.b16 %v4413
        %v4763 = vunpack.c.l.b16 %v4414
        %v4764 = vunpack.c.l.b16 %v4415
        %v4765 = vunpack.c.l.b16 %v4416
        %v4766 = vunpack.c.l.b16 %v4417
        %v4767 = vunpack.c.l.b16 %v4418
        %v4768 = vunpack.c.l.b16 %v4419
        %v4769 = vunpack.c.l.b16 %v4420
        %v4770 = vunpack.c.l.b16 %v4421
        %v4771 = vunpack.c.l.b16 %v4422
        %v4772 = vunpack.c.l.b16 %v4423
        %v4773 = vunpack.c.l.b16 %v4424
        %v4774 = vunpack.c.l.b16 %v4425
        %v4775 = vunpack.c.l.b16 %v4426
        %v4776 = vunpack.c.l.b16 %v4427
        %v4777 = vunpack.c.l.b16 %v4428
        %v4778 = vunpack.c.l.b16 %v4429
        %v4779 = vunpack.c.l.b16 %v4430
        %v4780 = vunpack.c.l.b16 %v4431
        %v4781 = vunpack.c.l.b16 %v4432
        %v4782 = vunpack.c.l.b16 %v4433
        %v4783 = vunpack.c.l.b16 %v4434
        %v4784 = vunpack.c.l.b16 %v4435
        %v4785 = vunpack.c.l.b16 %v4436
        %v4786 = vunpack.c.l.b16 %v4437
        %v4787 = vunpack.c.l.b16 %v4438
        %v4788 = vunpack.c.l.b16 %v4439
        %v4789 = vunpack.c.l.b16 %v4440
        %v4790 = vunpack.c.l.b16 %v4441
        %v4791 = vunpack.c.l.b16 %v4442
        %v4792 = vunpack.c.l.b16 %v4443
        %v4793 = vunpack.c.l.b16 %v4444
        %v4794 = vunpack.c.l.b16 %v4445
        %v4795 = vunpack.c.l.b16 %v4446
        %v4796 = vunpack.c.l.b16 %v4447
        %v4797 = vunpack.c.l.b16 %v4448
        %v4798 = vunpack.c.l.b16 %v4449
        %v4799 = vunpack.c.l.b16 %v4450
        %v4800 = vunpack.c.l.b16 %v4451
        %v4801 = vunpack.c.l.b16 %v4452
        %v4802 = vunpack.c.l.b16 %v4453
        %v4803 = vunpack.c.l.b16 %v4454
        %v4804 = vunpack.c.l.b16 %v4455
        %v4805 = vunpack.c.l.b16 %v4456
        %v4806 = vunpack.c.l.b16 %v4457
        %v4807 = vunpack.c.l.b16 %v4458
        %v4808 = vunpack.c.l.b16 %v4459
        %v4809 = vunpack.c.l.b16 %v4460
        %v4810 = vunpack.c.l.b16 %v4461
        %v4811 = vunpack.c.l.b16 %v4462
        %v4812 = vunpack.c.l.b16 %v4463
        %v4813 = vunpack.c.l.b16 %v4464
        %v4814 = vunpack.c.l.b16 %v4465
        %v4815 = vunpack.c.l.b16 %v4466
        %v4816 = vunpack.c.l.b16 %v4467
        %v4817 = vunpack.c.l.b16 %v4468
        %v4818 = vunpack.c.l.b16 %v4469
        %v4819 = vunpack.c.l.b16 %v4470
        %v4820 = vunpack.c.l.b16 %v4471
        %v4821 = vunpack.c.l.b16 %v4472
        %v4822 = vunpack.c.l.b16 %v4473
        %v4823 = vunpack.c.l.b16 %v4474
        %v4824 = vunpack.c.l.b16 %v4475
        %v4825 = vunpack.c.l.b16 %v4476
        %v4826 = vunpack.c.l.b16 %v4477
        %v4827 = vunpack.c.l.b16 %v4478
        %v4828 = vunpack.c.l.b16 %v4479
        %v4829 = vunpack.c.l.b16 %v4480
        %v4830 = vunpack.c.l.b16 %v4481
        %v4831 = vunpack.c.l.b16 %v4482
        %v4832 = vunpack.c.l.b16 %v4483
        %v4833 = vunpack.c.l.b16 %v4484
        %v4834 = vunpack.c.l.b16 %v4485
        %v4835 = vunpack.c.l.b16 %v4486
        %v4836 = vunpack.c.l.b16 %v4487
        %v4837 = vunpack.c.l.b16 %v4488
        %v4838 = vunpack.c.l.b16 %v4489
        %v4839 = vunpack.c.l.b16 %v4490
        %v4840 = vunpack.c.l.b16 %v4491
        %v4841 = vunpack.c.l.b16 %v4492
        %v4842 = vunpack.c.l.b16 %v4493
        %v4843 = vunpack.c.l.b16 %v4494
        %v4844 = vunpack.c.l.b16 %v4495
        %v4845 = vunpack.c.l.b16 %v4496
        %v4846 = vunpack.c.l.b16 %v4497
        %v4847 = vunpack.c.l.b16 %v4498
        %v4848 = vunpack.c.l.b16 %v4499
        %v4849 = vunpack.c.l.b16 %v4500
        %v4850 = vunpack.c.l.b16 %v4501
        %v4851 = vunpack.c.l.b16 %v4502
        %v4852 = vunpack.c.l.b16 %v4503
        %v4853 = vunpack.c.l.b16 %v4504
        %v4854 = vunpack.c.l.b16 %v4505
        %v4855 = vunpack.c.l.b16 %v4506
        %v4856 = vunpack.c.l.b16 %v4507
        %v4857 = vunpack.c.l.b16 %v4508
        %v4858 = vunpack.c.l.b16 %v4509
        %v4859 = vunpack.c.l.b16 %v4510
        %v4860 = vunpack.c.l.b16 %v4511
        %v4861 = vunpack.c.l.b16 %v4512
        %v4862 = vpack.c.b16 %v4719, %v4718
        %v4863 = vpack.c.b16 %v4721, %v4720
        %v4864 = vpack.c.b16 %v4723, %v4722
        %v4865 = vpack.c.b16 %v4725, %v4724
        %v4866 = vpack.c.b16 %v4727, %v4726
        %v4867 = vpack.c.b16 %v4729, %v4728
        %v4868 = vpack.c.b16 %v4731, %v4730
        %v4869 = vpack.c.b16 %v4733, %v4732
        %v4870 = vpack.c.b16 %v4735, %v4734
        %v4871 = vpack.c.b16 %v4737, %v4736
        %v4872 = vpack.c.b16 %v4739, %v4738
        %v4873 = vpack.c.b16 %v4741, %v4740
        %v4874 = vpack.c.b16 %v4743, %v4742
        %v4875 = vpack.c.b16 %v4745, %v4744
        %v4876 = vpack.c.b16 %v4747, %v4746
        %v4877 = vpack.c.b16 %v4749, %v4748
        %v4878 = vpack.c.b16 %v4751, %v4750
        %v4879 = vpack.c.b16 %v4753, %v4752
        %v4880 = vpack.c.b16 %v4755, %v4754
        %v4881 = vpack.c.b16 %v4757, %v4756
        %v4882 = vpack.c.b16 %v4759, %v4758
        %v4883 = vpack.c.b16 %v4761, %v4760
        %v4884 = vpack.c.b16 %v4763, %v4762
        %v4885 = vpack.c.b16 %v4765, %v4764
        %v4886 = vpack.c.b16 %v4767, %v4766
        %v4887 = vpack.c.b16 %v4769, %v4768
        %v4888 = vpack.c.b16 %v4771, %v4770
        %v4889 = vpack.c.b16 %v4773, %v4772
        %v4890 = vpack.c.b16 %v4775, %v4774
        %v4891 = vpack.c.b16 %v4777, %v4776
        %v4892 = vpack.c.b16 %v4779, %v4778
        %v4893 = vpack.c.b16 %v4781, %v4780
        %v4894 = vpack.c.b16 %v4783, %v4782
        %v4895 = vpack.c.b16 %v4785, %v4784
        %v4896 = vpack.c.b16 %v4787, %v4786
        %v4897 = vpack.c.b16 %v4789, %v4788
        %v4898 = vpack.c.b16 %v4791, %v4790
        %v4899 = vpack.c.b16 %v4793, %v4792
        %v4900 = vpack.c.b16 %v4795, %v4794
        %v4901 = vpack.c.b16 %v4797, %v4796
        %v4902 = vpack.c.b16 %v4799, %v4798
        %v4903 = vpack.c.b16 %v4801, %v4800
        %v4904 = vpack.c.b16 %v4803, %v4802
        %v4905 = vpack.c.b16 %v4805, %v4804
        %v4906 = vpack.c.b16 %v4807, %v4806
        %v4907 = vpack.c.b16 %v4809, %v4808
        %v4908 = vpack.c.b16 %v4811, %v4810
        %v4909 = vpack.c.b16 %v4813, %v4812
        %v4910 = vpack.c.b16 %v4815, %v4814
        %v4911 = vpack.c.b16 %v4817, %v4816
        %v4912 = vpack.c.b16 %v4819, %v4818
        %v4913 = vpack.c.b16 %v4821, %v4820
        %v4914 = vpack.c.b16 %v4823, %v4822
        %v4915 = vpack.c.b16 %v4825, %v4824
        %v4916 = vpack.c.b16 %v4827, %v4826
        %v4917 = vpack.c.b16 %v4829, %v4828
        %v4918 = vpack.c.b16 %v4831, %v4830
        %v4919 = vpack.c.b16 %v4833, %v4832
        %v4920 = vpack.c.b16 %v4835, %v4834
        %v4921 = vpack.c.b16 %v4837, %v4836
        %v4922 = vpack.c.b16 %v4839, %v4838
        %v4923 = vpack.c.b16 %v4841, %v4840
        %v4924 = vpack.c.b16 %v4843, %v4842
        %v4925 = vpack.c.b16 %v4845, %v4844
        %v4926 = vpack.c.b16 %v4847, %v4846
        %v4927 = vpack.c.b16 %v4849, %v4848
        %v4928 = vpack.c.b16 %v4851, %v4850
        %v4929 = vpack.c.b16 %v4853, %v4852
        %v4930 = vpack.c.b16 %v4855, %v4854
        %v4931 = vpack.c.b16 %v4857, %v4856
        %v4932 = vpack.c.b16 %v4859, %v4858
        %v4933 = vpack.c.b16 %v4861, %v4860
        %5006 = vmatprep.subr.bf16.mxu0 0
        %5007 = vmatpush1.bf16.msra.mxu0 %v4862
        %5008 = vmatprep.subr.bf16.mxu0 0
        %5009 = vmatpush1.bf16.msra.mxu0 %v4863
        %5010 = vmatprep.subr.bf16.mxu0 0
        %5011 = vmatpush1.bf16.msra.mxu0 %v4864
        %5012 = vmatprep.subr.bf16.mxu0 0
        %5013 = vmatpush1.bf16.msra.mxu0 %v4865
        %5014 = vmatprep.subr.bf16.mxu0 0
        %5015 = vmatpush1.bf16.msra.mxu0 %v4866
        %5016 = vmatprep.subr.bf16.mxu0 0
        %5017 = vmatpush1.bf16.msra.mxu0 %v4867
        %5018 = vmatprep.subr.bf16.mxu0 0
        %5019 = vmatpush1.bf16.msra.mxu0 %v4868
        %5020 = vmatprep.subr.bf16.mxu0 0
        %5021 = vmatpush1.bf16.msra.mxu0 %v4869
        %5022 = vmatprep.subr.bf16.mxu0 0
        %5023 = vmatpush1.bf16.msra.mxu0 %v4870
        %5024 = vmatprep.subr.bf16.mxu0 0
        %5025 = vmatpush1.bf16.msra.mxu0 %v4871
        %5026 = vmatprep.subr.bf16.mxu0 0
        %5027 = vmatpush1.bf16.msra.mxu0 %v4872
        %5028 = vmatprep.subr.bf16.mxu0 0
        %5029 = vmatpush1.bf16.msra.mxu0 %v4873
        %5030 = vmatprep.subr.bf16.mxu0 0
        %5031 = vmatpush1.bf16.msra.mxu0 %v4874
        %5032 = vmatprep.subr.bf16.mxu0 0
        %5033 = vmatpush1.bf16.msra.mxu0 %v4875
        %5034 = vmatprep.subr.bf16.mxu0 0
        %5035 = vmatpush1.bf16.msra.mxu0 %v4876
        %5036 = vmatprep.subr.bf16.mxu0 0
        %5037 = vmatpush1.bf16.msra.mxu0 %v4877
        %5038 = vmatprep.mubr.bf16.mxu0 %v4521
        %5039 = vmatmul.mubr.bf16.gmra.mrb[0].mxu0 %v4520
        %v5040 = vpop.f32.mrb[0].mxu0
        %v5041 = vadd.f32 %v4518, %v5040
        %v5042 = vpop.f32.mrb[0].mxu0
        %v5043 = vpop.f32.mrb[0].mxu0
        %v5044 = vadd.f32 %v4518, %v5043
        %v5045 = vpop.f32.mrb[0].mxu0
        %5046 = vmatprep.mubr.bf16.mxu0 %v4527
        %5047 = vmatmul.mubr.bf16.gmra.mrb[0].mxu0 %v4526
        %v5048 = vpop.f32.mrb[0].mxu0
        %v5049 = vadd.f32 %v4518, %v5048
        %v5050 = vpop.f32.mrb[0].mxu0
        %v5051 = vpop.f32.mrb[0].mxu0
        %v5052 = vadd.f32 %v4518, %v5051
        %v5053 = vpop.f32.mrb[0].mxu0
        %5054 = vmatprep.mubr.bf16.mxu0 %v4533
        %5055 = vmatmul.mubr.bf16.gmra.mrb[0].mxu0 %v4532
        %v5056 = vpop.f32.mrb[0].mxu0
        %v5057 = vadd.f32 %v4518, %v5056
        %v5058 = vpop.f32.mrb[0].mxu0
        %v5059 = vpop.f32.mrb[0].mxu0
        %v5060 = vadd.f32 %v4518, %v5059
        %v5061 = vpop.f32.mrb[0].mxu0
        %5062 = vmatprep.mubr.bf16.mxu0 %v4539
        %5063 = vmatmul.mubr.bf16.gmra.mrb[0].mxu0 %v4538
        %v5064 = vpop.f32.mrb[0].mxu0
        %v5065 = vadd.f32 %v4518, %v5064
        %v5066 = vpop.f32.mrb[0].mxu0
        %v5067 = vpop.f32.mrb[0].mxu0
        %v5068 = vadd.f32 %v4518, %v5067
        %v5069 = vpop.f32.mrb[0].mxu0
        %5070 = vdwg.mxu0
        %5071 = vmatprep.subr.bf16.mxu0 0
        %5072 = vmatpush1.bf16.msra.mxu0 %v4878
        %5073 = vmatprep.subr.bf16.mxu0 0
        %5074 = vmatpush1.bf16.msra.mxu0 %v4879
        %5075 = vmatprep.subr.bf16.mxu0 0
        %5076 = vmatpush1.bf16.msra.mxu0 %v4880
        %5077 = vmatprep.subr.bf16.mxu0 0
        %5078 = vmatpush1.bf16.msra.mxu0 %v4881
        %5079 = vmatprep.subr.bf16.mxu0 0
        %5080 = vmatpush1.bf16.msra.mxu0 %v4882
        %5081 = vmatprep.subr.bf16.mxu0 0
        %5082 = vmatpush1.bf16.msra.mxu0 %v4883
        %5083 = vmatprep.subr.bf16.mxu0 0
        %5084 = vmatpush1.bf16.msra.mxu0 %v4884
        %5085 = vmatprep.subr.bf16.mxu0 0
        %5086 = vmatpush1.bf16.msra.mxu0 %v4885
        %5087 = vmatprep.subr.bf16.mxu0 0
        %5088 = vmatpush1.bf16.msra.mxu0 %v4886
        %5089 = vmatprep.subr.bf16.mxu0 0
        %5090 = vmatpush1.bf16.msra.mxu0 %v4887
        %5091 = vmatprep.subr.bf16.mxu0 0
        %5092 = vmatpush1.bf16.msra.mxu0 %v4888
        %5093 = vmatprep.subr.bf16.mxu0 0
        %5094 = vmatpush1.bf16.msra.mxu0 %v4889
        %5095 = vmatprep.subr.bf16.mxu0 0
        %5096 = vmatpush1.bf16.msra.mxu0 %v4890
        %5097 = vmatprep.subr.bf16.mxu0 0
        %5098 = vmatpush1.bf16.msra.mxu0 %v4891
        %5099 = vmatprep.subr.bf16.mxu0 0
        %5100 = vmatpush1.bf16.msra.mxu0 %v4892
        %5101 = vmatprep.subr.bf16.mxu0 0
        %5102 = vmatpush1.bf16.msra.mxu0 %v4893
        %5103 = vmatprep.mubr.bf16.mxu0 %v4523
        %5104 = vmatmul.mubr.bf16.gmra.mrb[0].mxu0 %v4522
        %v5105 = vpop.f32.mrb[0].mxu0
        %v5106 = vadd.f32 %v5041, %v5105
        %v5107 = vpop.f32.mrb[0].mxu0
        %v5108 = vpop.f32.mrb[0].mxu0
        %v5109 = vadd.f32 %v5044, %v5108
        %v5110 = vpop.f32.mrb[0].mxu0
        %5111 = vmatprep.mubr.bf16.mxu0 %v4529
        %5112 = vmatmul.mubr.bf16.gmra.mrb[0].mxu0 %v4528
        %v5113 = vpop.f32.mrb[0].mxu0
        %v5114 = vadd.f32 %v5049, %v5113
        %v5115 = vpop.f32.mrb[0].mxu0
        %v5116 = vpop.f32.mrb[0].mxu0
        %v5117 = vadd.f32 %v5052, %v5116
        %v5118 = vpop.f32.mrb[0].mxu0
        %5119 = vmatprep.mubr.bf16.mxu0 %v4535
        %5120 = vmatmul.mubr.bf16.gmra.mrb[0].mxu0 %v4534
        %v5121 = vpop.f32.mrb[0].mxu0
        %v5122 = vadd.f32 %v5057, %v5121
        %v5123 = vpop.f32.mrb[0].mxu0
        %v5124 = vpop.f32.mrb[0].mxu0
        %v5125 = vadd.f32 %v5060, %v5124
        %v5126 = vpop.f32.mrb[0].mxu0
        %5127 = vmatprep.mubr.bf16.mxu0 %v4541
        %5128 = vmatmul.mubr.bf16.gmra.mrb[0].mxu0 %v4540
        %v5129 = vpop.f32.mrb[0].mxu0
        %v5130 = vadd.f32 %v5065, %v5129
        %v5131 = vpop.f32.mrb[0].mxu0
        %v5132 = vpop.f32.mrb[0].mxu0
        %v5133 = vadd.f32 %v5068, %v5132
        %v5134 = vpop.f32.mrb[0].mxu0
        %5135 = vdwg.mxu0
        %5136 = vmatprep.subr.bf16.mxu0 0
        %5137 = vmatpush1.bf16.msra.mxu0 %v4894
        %5138 = vmatprep.subr.bf16.mxu0 0
        %5139 = vmatpush1.bf16.msra.mxu0 %v4895
        %5140 = vmatprep.subr.bf16.mxu0 0
        %5141 = vmatpush1.bf16.msra.mxu0 %v4896
        %5142 = vmatprep.subr.bf16.mxu0 0
        %5143 = vmatpush1.bf16.msra.mxu0 %v4897
        %5144 = vmatprep.subr.bf16.mxu0 0
        %5145 = vmatpush1.bf16.msra.mxu0 %v4898
        %5146 = vmatprep.subr.bf16.mxu0 0
        %5147 = vmatpush1.bf16.msra.mxu0 %v4899
        %5148 = vmatprep.subr.bf16.mxu0 0
        %5149 = vmatpush1.bf16.msra.mxu0 %v4900
        %5150 = vmatprep.subr.bf16.mxu0 0
        %5151 = vmatpush1.bf16.msra.mxu0 %v4901
        %5152 = vmatprep.subr.bf16.mxu0 0
        %5153 = vmatpush1.bf16.msra.mxu0 %v4902
        %5154 = vmatprep.subr.bf16.mxu0 0
        %5155 = vmatpush1.bf16.msra.mxu0 %v4903
        %5156 = vmatprep.subr.bf16.mxu0 0
        %5157 = vmatpush1.bf16.msra.mxu0 %v4904
        %5158 = vmatprep.subr.bf16.mxu0 0
        %5159 = vmatpush1.bf16.msra.mxu0 %v4905
        %5160 = vmatprep.subr.bf16.mxu0 0
        %5161 = vmatpush1.bf16.msra.mxu0 %v4906
        %5162 = vmatprep.subr.bf16.mxu0 0
        %5163 = vmatpush1.bf16.msra.mxu0 %v4907
        %5164 = vmatprep.subr.bf16.mxu0 0
        %5165 = vmatpush1.bf16.msra.mxu0 %v4908
        %5166 = vmatprep.subr.bf16.mxu0 0
        %5167 = vmatpush1.bf16.msra.mxu0 %v4909
        %5168 = vmatprep.mubr.bf16.mxu0 %v4525
        %5169 = vmatmul.mubr.bf16.gmra.mrb[0].mxu0 %v4524
        %v5170 = vpop.f32.mrb[0].mxu0
        %v5171 = vadd.f32 %v5106, %v5170
        %v5172 = vpop.f32.mrb[0].mxu0
        %v5173 = vpop.f32.mrb[0].mxu0
        %v5174 = vadd.f32 %v5109, %v5173
        %v5175 = vpop.f32.mrb[0].mxu0
        %5176 = vmatprep.mubr.bf16.mxu0 %v4531
        %5177 = vmatmul.mubr.bf16.gmra.mrb[0].mxu0 %v4530
        %v5178 = vpop.f32.mrb[0].mxu0
        %v5179 = vadd.f32 %v5114, %v5178
        %v5180 = vpop.f32.mrb[0].mxu0
        %v5181 = vpop.f32.mrb[0].mxu0
        %v5182 = vadd.f32 %v5117, %v5181
        %v5183 = vpop.f32.mrb[0].mxu0
        %5184 = vmatprep.mubr.bf16.mxu0 %v4537
        %5185 = vmatmul.mubr.bf16.gmra.mrb[0].mxu0 %v4536
        %v5186 = vpop.f32.mrb[0].mxu0
        %v5187 = vadd.f32 %v5122, %v5186
        %v5188 = vpop.f32.mrb[0].mxu0
        %v5189 = vpop.f32.mrb[0].mxu0
        %v5190 = vadd.f32 %v5125, %v5189
        %v5191 = vpop.f32.mrb[0].mxu0
        %5192 = vmatprep.mubr.bf16.mxu0 %v4543
        %5193 = vmatmul.mubr.bf16.gmra.mrb[0].mxu0 %v4542
        %v5194 = vpop.f32.mrb[0].mxu0
        %v5195 = vadd.f32 %v5130, %v5194
        %v5196 = vpop.f32.mrb[0].mxu0
        %v5197 = vpop.f32.mrb[0].mxu0
        %v5198 = vadd.f32 %v5133, %v5197
        %v5199 = vpop.f32.mrb[0].mxu0
        %5200 = vdwg.mxu0
        %5201 = vmatprep.subr.bf16.mxu0 0
        %5202 = vmatpush1.bf16.msra.mxu0 %v4910
        %5203 = vmatprep.subr.bf16.mxu0 0
        %5204 = vmatpush1.bf16.msra.mxu0 %v4911
        %5205 = vmatprep.subr.bf16.mxu0 0
        %5206 = vmatpush1.bf16.msra.mxu0 %v4912
        %5207 = vmatprep.subr.bf16.mxu0 0
        %5208 = vmatpush1.bf16.msra.mxu0 %v4913
        %5209 = vmatprep.subr.bf16.mxu0 0
        %5210 = vmatpush1.bf16.msra.mxu0 %v4914
        %5211 = vmatprep.subr.bf16.mxu0 0
        %5212 = vmatpush1.bf16.msra.mxu0 %v4915
        %5213 = vmatprep.subr.bf16.mxu0 0
        %5214 = vmatpush1.bf16.msra.mxu0 %v4916
        %5215 = vmatprep.subr.bf16.mxu0 0
        %5216 = vmatpush1.bf16.msra.mxu0 %v4917
        %5217 = vmatprep.subr.bf16.mxu0 0
        %5218 = vmatpush1.bf16.msra.mxu0 %v4918
        %5219 = vmatprep.subr.bf16.mxu0 0
        %5220 = vmatpush1.bf16.msra.mxu0 %v4919
        %5221 = vmatprep.subr.bf16.mxu0 0
        %5222 = vmatpush1.bf16.msra.mxu0 %v4920
        %5223 = vmatprep.subr.bf16.mxu0 0
        %5224 = vmatpush1.bf16.msra.mxu0 %v4921
        %5225 = vmatprep.subr.bf16.mxu0 0
        %5226 = vmatpush1.bf16.msra.mxu0 %v4922
        %5227 = vmatprep.subr.bf16.mxu0 0
        %5228 = vmatpush1.bf16.msra.mxu0 %v4923
        %5229 = vmatprep.subr.bf16.mxu0 0
        %5230 = vmatpush1.bf16.msra.mxu0 %v4924
        %5231 = vmatprep.subr.bf16.mxu0 0
        %5232 = vmatpush1.bf16.msra.mxu0 %v4925
        %5233 = vmatprep.mubr.bf16.mxu0 %v4527
        %5234 = vmatmul.mubr.bf16.gmra.mrb[0].mxu0 %v4526
        %v5235 = vpop.f32.mrb[0].mxu0
        %v5236 = vadd.f32 %v5171, %v5235
        %v5237 = vpop.f32.mrb[0].mxu0
        %v5238 = vpop.f32.mrb[0].mxu0
        %v5239 = vadd.f32 %v5174, %v5238
        %v5240 = vpop.f32.mrb[0].mxu0
        %5241 = vmatprep.mubr.bf16.mxu0 %v4533
        %5242 = vmatmul.mubr.bf16.gmra.mrb[0].mxu0 %v4532
        %v5243 = vpop.f32.mrb[0].mxu0
        %v5244 = vadd.f32 %v5179, %v5243
        %v5245 = vpop.f32.mrb[0].mxu0
        %v5246 = vpop.f32.mrb[0].mxu0
        %v5247 = vadd.f32 %v5182, %v5246
        %v5248 = vpop.f32.mrb[0].mxu0
        %5249 = vmatprep.mubr.bf16.mxu0 %v4539
        %5250 = vmatmul.mubr.bf16.gmra.mrb[0].mxu0 %v4538
        %v5251 = vpop.f32.mrb[0].mxu0
        %v5252 = vadd.f32 %v5187, %v5251
        %v5253 = vpop.f32.mrb[0].mxu0
        %v5254 = vpop.f32.mrb[0].mxu0
        %v5255 = vadd.f32 %v5190, %v5254
        %v5256 = vpop.f32.mrb[0].mxu0
        %5257 = vmatprep.mubr.bf16.mxu0 %v4545
        %5258 = vmatmul.mubr.bf16.gmra.mrb[0].mxu0 %v4544
        %v5259 = vpop.f32.mrb[0].mxu0
        %v5260 = vadd.f32 %v5195, %v5259
        %v5261 = vpop.f32.mrb[0].mxu0
        %v5262 = vpop.f32.mrb[0].mxu0
        %v5263 = vadd.f32 %v5198, %v5262
        %v5264 = vpop.f32.mrb[0].mxu0
        %5265 = vdwg.mxu0
        %5266 = vmatprep.subr.bf16.mxu0 0
        %5267 = vmatpush1.bf16.msra.mxu0 %v4926
        %5268 = vmatprep.subr.bf16.mxu0 0
        %5269 = vmatpush1.bf16.msra.mxu0 %v4927
        %5270 = vmatprep.subr.bf16.mxu0 0
        %5271 = vmatpush1.bf16.msra.mxu0 %v4928
        %5272 = vmatprep.subr.bf16.mxu0 0
        %5273 = vmatpush1.bf16.msra.mxu0 %v4929
        %5274 = vmatprep.subr.bf16.mxu0 0
        %5275 = vmatpush1.bf16.msra.mxu0 %v4930
        %5276 = vmatprep.subr.bf16.mxu0 0
        %5277 = vmatpush1.bf16.msra.mxu0 %v4931
        %5278 = vmatprep.subr.bf16.mxu0 0
        %5279 = vmatpush1.bf16.msra.mxu0 %v4932
        %5280 = vmatprep.subr.bf16.mxu0 0
        %5281 = vmatpush1.bf16.msra.mxu0 %v4933
        %5282 = vmatprep.subr.bf16.mxu0 0
        %5283 = vmatpush1.bf16.msra.mxu0 0
        %5284 = vmatprep.subr.bf16.mxu0 0
        %5285 = vmatpush1.bf16.msra.mxu0 0
        %5286 = vmatprep.subr.bf16.mxu0 0
        %5287 = vmatpush1.bf16.msra.mxu0 0
        %5288 = vmatprep.subr.bf16.mxu0 0
        %5289 = vmatpush1.bf16.msra.mxu0 0
        %5290 = vmatprep.subr.bf16.mxu0 0
        %5291 = vmatpush1.bf16.msra.mxu0 0
        %5292 = vmatprep.subr.bf16.mxu0 0
        %5293 = vmatpush1.bf16.msra.mxu0 0
        %5294 = vmatprep.subr.bf16.mxu0 0
        %5295 = vmatpush1.bf16.msra.mxu0 0
        %5296 = vmatprep.subr.bf16.mxu0 0
        %5297 = vmatpush1.bf16.msra.mxu0 0
        %5298 = vmatprep.mubr.bf16.mxu0 0
        %5299 = vmatmul.mubr.bf16.gmra.mrb[0].mxu0 %v4528
        %v5300 = vpop.f32.mrb[0].mxu0
        %v5301 = vadd.f32 %v5236, %v5300
        %v5302 = vpop.f32.mrb[0].mxu0
        %v5303 = vpop.f32.mrb[0].mxu0
        %v5304 = vadd.f32 %v5239, %v5303
        %v5305 = vpop.f32.mrb[0].mxu0
        %5306 = vmatprep.mubr.bf16.mxu0 0
        %5307 = vmatmul.mubr.bf16.gmra.mrb[0].mxu0 %v4534
        %v5308 = vpop.f32.mrb[0].mxu0
        %v5309 = vadd.f32 %v5244, %v5308
        %v5310 = vpop.f32.mrb[0].mxu0
        %v5311 = vpop.f32.mrb[0].mxu0
        %v5312 = vadd.f32 %v5247, %v5311
        %v5313 = vpop.f32.mrb[0].mxu0
        %5314 = vmatprep.mubr.bf16.mxu0 0
        %5315 = vmatmul.mubr.bf16.gmra.mrb[0].mxu0 %v4540
        %v5316 = vpop.f32.mrb[0].mxu0
        %v5317 = vadd.f32 %v5252, %v5316
        %v5318 = vpop.f32.mrb[0].mxu0
        %v5319 = vpop.f32.mrb[0].mxu0
        %v5320 = vadd.f32 %v5255, %v5319
        %v5321 = vpop.f32.mrb[0].mxu0
        %5322 = vmatprep.mubr.bf16.mxu0 0
        %5323 = vmatmul.mubr.bf16.gmra.mrb[0].mxu0 %v4546
        %v5324 = vpop.f32.mrb[0].mxu0
        %v5325 = vadd.f32 %v5260, %v5324
        %v5326 = vpop.f32.mrb[0].mxu0
        %v5327 = vpop.f32.mrb[0].mxu0
        %v5328 = vadd.f32 %v5263, %v5327
        %v5329 = vpop.f32.mrb[0].mxu0
        %5330 = vdwg.mxu0
        %v5331 = vmax.f32 %v5301, 0.0
        %v5332 = vmax.f32 %v5304, 0.0
        %v5333 = vmax.f32 %v5309, 0.0
        %v5334 = vmax.f32 %v5312, 0.0
        %v5335 = vmax.f32 %v5317, 0.0
        %v5336 = vmax.f32 %v5320, 0.0
        %v5337 = vmax.f32 %v5325, 0.0
        %v5338 = vmax.f32 %v5328, 0.0
        %v5339 = vpack.c.bf16 %v5332, %v5331
        %v5340 = vpack.c.bf16 %v5334, %v5333
        %v5341 = vpack.c.bf16 %v5336, %v5335
        %v5342 = vpack.c.bf16 %v5338, %v5337
        %v5347 = vunpack.c.l.b16 %v5339
        %v5348 = vunpack.c.h.b16 %v5339
        %v5349 = vunpack.c.l.b16 %v5340
        %v5350 = vunpack.c.h.b16 %v5340
        %v5351 = vunpack.c.l.b16 %v5341
        %v5352 = vunpack.c.h.b16 %v5341
        %v5353 = vunpack.c.l.b16 %v5342
        %v5354 = vunpack.c.h.b16 %v5342
        %v5355 = vpack.c.b16 %v5347, %v5347
        %v5356 = vpack.c.b16 %v5348, %v5348
        %v5357 = vpack.c.b16 %v5349, %v5349
        %v5358 = vpack.c.b16 %v5350, %v5350
        %v5359 = vpack.c.b16 %v5351, %v5351
        %v5360 = vpack.c.b16 %v5352, %v5352
        %v5361 = vpack.c.b16 %v5353, %v5353
        %v5362 = vpack.c.b16 %v5354, %v5354
        %v5364 = vshrl.u32 %v5355, 16
        %v5366 = vrot.slane %v5364, 7
        %v5367 = vshll.u32 %v5355, 16
        %v5369 = vor.u32 %v5366, %v5367
        %v5371 = vshrl.u32 %v5356, 16
        %v5373 = vrot.slane %v5371, 7
        %v5374 = vshll.u32 %v5356, 16
        %v5376 = vor.u32 %v5373, %v5374
        %v5378 = vshrl.u32 %v5357, 16
        %v5380 = vrot.slane %v5378, 7
        %v5381 = vshll.u32 %v5357, 16
        %v5383 = vor.u32 %v5380, %v5381
        %v5385 = vshrl.u32 %v5358, 16
        %v5387 = vrot.slane %v5385, 7
        %v5388 = vshll.u32 %v5358, 16
        %v5390 = vor.u32 %v5387, %v5388
        %v5392 = vshrl.u32 %v5359, 16
        %v5394 = vrot.slane %v5392, 7
        %v5395 = vshll.u32 %v5359, 16
        %v5397 = vor.u32 %v5394, %v5395
        %v5399 = vshrl.u32 %v5360, 16
        %v5401 = vrot.slane %v5399, 7
        %v5402 = vshll.u32 %v5360, 16
        %v5404 = vor.u32 %v5401, %v5402
        %v5406 = vshrl.u32 %v5361, 16
        %v5408 = vrot.slane %v5406, 7
        %v5409 = vshll.u32 %v5361, 16
        %v5411 = vor.u32 %v5408, %v5409
        %v5413 = vshrl.u32 %v5362, 16
        %v5415 = vrot.slane %v5413, 7
        %v5416 = vshll.u32 %v5362, 16
        %v5418 = vor.u32 %v5415, %v5416
        %v5427 = vsel %vm4239, 0, %v5369
        %v5428 = vsel %vm4239, 0, %v5376
        %v5429 = vsel %vm4239, 0, %v5383
        %v5430 = vsel %vm4239, 0, %v5390
        %v5431 = vsel %vm4239, 0, %v5397
        %v5432 = vsel %vm4239, 0, %v5404
        %v5433 = vsel %vm4239, 0, %v5411
        %v5434 = vsel %vm4239, 0, %v5418
        %v5435 = vsel %vm4251, %v5427, 0
        %v5436 = vsel %vm4251, %v5428, 0
        %v5437 = vsel %vm4251, %v5429, 0
        %v5438 = vsel %vm4251, %v5430, 0
        %v5439 = vsel %vm4251, %v5431, 0
        %v5440 = vsel %vm4251, %v5432, 0
        %v5441 = vsel %vm4251, %v5433, 0
        %v5442 = vsel %vm4251, %v5434, 0
        %v5444 = vshrl.u32 %v5435, 16
        %v5446 = vshll.u32 %v5435, 16
        %v5448 = vrot.slane %v5446, 1
        %v5449 = vor.u32 %v5444, %v5448
        %v5451 = vshrl.u32 %v5436, 16
        %v5453 = vshll.u32 %v5436, 16
        %v5455 = vrot.slane %v5453, 1
        %v5456 = vor.u32 %v5451, %v5455
        %v5458 = vshrl.u32 %v5437, 16
        %v5460 = vshll.u32 %v5437, 16
        %v5462 = vrot.slane %v5460, 1
        %v5463 = vor.u32 %v5458, %v5462
        %v5465 = vshrl.u32 %v5438, 16
        %v5467 = vshll.u32 %v5438, 16
        %v5469 = vrot.slane %v5467, 1
        %v5470 = vor.u32 %v5465, %v5469
        %v5472 = vshrl.u32 %v5439, 16
        %v5474 = vshll.u32 %v5439, 16
        %v5476 = vrot.slane %v5474, 1
        %v5477 = vor.u32 %v5472, %v5476
        %v5479 = vshrl.u32 %v5440, 16
        %v5481 = vshll.u32 %v5440, 16
        %v5483 = vrot.slane %v5481, 1
        %v5484 = vor.u32 %v5479, %v5483
        %v5486 = vshrl.u32 %v5441, 16
        %v5488 = vshll.u32 %v5441, 16
        %v5490 = vrot.slane %v5488, 1
        %v5491 = vor.u32 %v5486, %v5490
        %v5499 = vrot.slane %v5435, 1
        %v5500 = vrot.slane %v5436, 1
        %v5501 = vrot.slane %v5437, 1
        %v5502 = vrot.slane %v5438, 1
        %v5503 = vrot.slane %v5439, 1
        %v5504 = vrot.slane %v5440, 1
        %v5505 = vrot.slane %v5441, 1
        %v5507 = vshrl.u32 %v5442, 16
        %v5509 = vshll.u32 %v5442, 16
        %v5511 = vrot.slane %v5509, 1
        %v5512 = vor.u32 %v5507, %v5511
        %v5514 = vrot.slane %v5442, 1
        %v5515 = vunpack.c.l.b16 %v5435
        %v5516 = vunpack.c.l.b16 %v5449
        %v5517 = vunpack.c.l.b16 %v5499
        %v5518 = vunpack.c.l.b16 %v5436
        %v5519 = vunpack.c.l.b16 %v5456
        %v5520 = vunpack.c.l.b16 %v5500
        %v5521 = vunpack.c.l.b16 %v5437
        %v5522 = vunpack.c.l.b16 %v5463
        %v5523 = vunpack.c.l.b16 %v5501
        %v5524 = vunpack.c.l.b16 %v5438
        %v5525 = vunpack.c.l.b16 %v5470
        %v5526 = vunpack.c.l.b16 %v5502
        %v5527 = vunpack.c.l.b16 %v5439
        %v5528 = vunpack.c.l.b16 %v5477
        %v5529 = vunpack.c.l.b16 %v5503
        %v5530 = vunpack.c.l.b16 %v5440
        %v5531 = vunpack.c.l.b16 %v5484
        %v5532 = vunpack.c.l.b16 %v5504
        %v5533 = vunpack.c.l.b16 %v5441
        %v5534 = vunpack.c.l.b16 %v5491
        %v5535 = vunpack.c.l.b16 %v5505
        %v5536 = vunpack.c.l.b16 %v5442
        %v5537 = vunpack.c.l.b16 %v5512
        %v5538 = vunpack.c.l.b16 %v5514
        %v5539 = vld [vmem:[%s8] sm:$0xf]
        %v5540 = vld [vmem:[%s8 + $0x4] sm:$0xf]
        %v5541 = vld [vmem:[%s8 + $0x8] sm:$0xf]
        %v5542 = vld [vmem:[%s8 + $0xc] sm:$0xf]
        %v5543 = vld [vmem:[%s8 + $0x10] sm:$0xf]
        %v5544 = vld [vmem:[%s8 + $0x14] sm:$0xf]
        %v5545 = vld [vmem:[%s8 + $0x18] sm:$0xf]
        %v5546 = vld [vmem:[%s8 + $0x1c] sm:$0xf]
        %v5547 = vld [vmem:[%s8 + $0x20] sm:$0xf]
        %v5548 = vld [vmem:[%s8 + $0x24] sm:$0xf]
        %v5549 = vld [vmem:[%s8 + $0x28] sm:$0xf]
        %v5550 = vld [vmem:[%s8 + $0x2c] sm:$0xf]
        %v5551 = vld [vmem:[%s8 + $0x30] sm:$0xf]
        %v5552 = vld [vmem:[%s8 + $0x34] sm:$0xf]
        %v5553 = vld [vmem:[%s8 + $0x38] sm:$0xf]
        %v5554 = vld [vmem:[%s8 + $0x3c] sm:$0xf]
        %v5555 = vld [vmem:[%s8 + $0x40] sm:$0xf]
        %v5556 = vld [vmem:[%s8 + $0x44] sm:$0xf]
        %v5557 = vld [vmem:[%s8 + $0x48] sm:$0xf]
        %v5558 = vld [vmem:[%s8 + $0x4c] sm:$0xf]
        %v5559 = vld [vmem:[%s8 + $0x50] sm:$0xf]
        %v5560 = vld [vmem:[%s8 + $0x54] sm:$0xf]
        %v5561 = vld [vmem:[%s8 + $0x58] sm:$0xf]
        %v5562 = vld [vmem:[%s8 + $0x5c] sm:$0xf]
        %v5563 = vld [vmem:[%s8 + $0x60] sm:$0xf]
        %v5564 = vld [vmem:[%s8 + $0x64] sm:$0xf]
        %v5565 = vld [vmem:[%s8 + $0x68] sm:$0xf]
        %v5566 = vld [vmem:[%s8 + $0x6c] sm:$0xf]
        %v5567 = vld [vmem:[%s8 + $0x70] sm:$0xf]
        %v5568 = vld [vmem:[%s8 + $0x74] sm:$0xf]
        %v5569 = vld [vmem:[%s8 + $0x78] sm:$0xf]
        %v5570 = vld [vmem:[%s8 + $0x7c] sm:$0xf]
        %v5571 = vld [vmem:[%s8 + $0x80] sm:$0xf]
        %v5572 = vld [vmem:[%s8 + $0x84] sm:$0xf]
        %v5573 = vld [vmem:[%s8 + $0x88] sm:$0xf]
        %v5574 = vld [vmem:[%s8 + $0x8c] sm:$0xf]
        %v5575 = vld [vmem:[%s8 + $0x90] sm:$0xf]
        %v5576 = vld [vmem:[%s8 + $0x94] sm:$0xf]
        %v5577 = vld [vmem:[%s8 + $0x98] sm:$0xf]
        %v5578 = vld [vmem:[%s8 + $0x9c] sm:$0xf]
        %v5579 = vld [vmem:[%s8 + $0xa0] sm:$0xf]
        %v5580 = vld [vmem:[%s8 + $0xa4] sm:$0xf]
        %v5581 = vld [vmem:[%s8 + $0xa8] sm:$0xf]
        %v5582 = vld [vmem:[%s8 + $0xac] sm:$0xf]
        %v5583 = vld [vmem:[%s8 + $0xb0] sm:$0xf]
        %v5584 = vld [vmem:[%s8 + $0xb4] sm:$0xf]
        %v5585 = vld [vmem:[%s8 + $0xb8] sm:$0xf]
        %v5586 = vld [vmem:[%s8 + $0xbc] sm:$0xf]
        %v5587 = vld [vmem:[%s8 + $0xc0] sm:$0xf]
        %v5588 = vld [vmem:[%s8 + $0xc4] sm:$0xf]
        %v5589 = vld [vmem:[%s8 + $0xc8] sm:$0xf]
        %v5590 = vld [vmem:[%s8 + $0xcc] sm:$0xf]
        %v5591 = vld [vmem:[%s8 + $0xd0] sm:$0xf]
        %v5592 = vld [vmem:[%s8 + $0xd4] sm:$0xf]
        %v5593 = vld [vmem:[%s8 + $0xd8] sm:$0xf]
        %v5594 = vld [vmem:[%s8 + $0xdc] sm:$0xf]
        %v5595 = vld [vmem:[%s8 + $0xe0] sm:$0xf]
        %v5596 = vld [vmem:[%s8 + $0xe4] sm:$0xf]
        %v5597 = vld [vmem:[%s8 + $0xe8] sm:$0xf]
        %v5598 = vld [vmem:[%s8 + $0xec] sm:$0xf]
        %v5599 = vld [vmem:[%s8 + $0xf0] sm:$0xf]
        %v5600 = vld [vmem:[%s8 + $0xf4] sm:$0xf]
        %v5601 = vld [vmem:[%s8 + $0xf8] sm:$0xf]
        %v5602 = vld [vmem:[%s8 + $0xfc] sm:$0xf]
        %v5603 = vld [vmem:[%s8 + $0x100] sm:$0xf]
        %v5604 = vld [vmem:[%s8 + $0x104] sm:$0xf]
        %v5605 = vld [vmem:[%s8 + $0x108] sm:$0xf]
        %v5606 = vld [vmem:[%s8 + $0x10c] sm:$0xf]
        %v5607 = vld [vmem:[%s8 + $0x110] sm:$0xf]
        %v5608 = vld [vmem:[%s8 + $0x114] sm:$0xf]
        %v5609 = vld [vmem:[%s8 + $0x118] sm:$0xf]
        %v5610 = vld [vmem:[%s8 + $0x11c] sm:$0xf]
        %v5611 = vld [vmem:[%s8 + $0x120] sm:$0xf]
        %v5612 = vld [vmem:[%s8 + $0x124] sm:$0xf]
        %v5613 = vld [vmem:[%s8 + $0x128] sm:$0xf]
        %v5614 = vld [vmem:[%s8 + $0x12c] sm:$0xf]
        %v5615 = vld [vmem:[%s8 + $0x130] sm:$0xf]
        %v5616 = vld [vmem:[%s8 + $0x134] sm:$0xf]
        %v5617 = vld [vmem:[%s8 + $0x138] sm:$0xf]
        %v5618 = vld [vmem:[%s8 + $0x13c] sm:$0xf]
        %v5619 = vld [vmem:[%s8 + $0x140] sm:$0xf]
        %v5620 = vld [vmem:[%s8 + $0x144] sm:$0xf]
        %v5621 = vld [vmem:[%s8 + $0x148] sm:$0xf]
        %v5622 = vld [vmem:[%s8 + $0x14c] sm:$0xf]
        %v5623 = vld [vmem:[%s8 + $0x150] sm:$0xf]
        %v5624 = vld [vmem:[%s8 + $0x154] sm:$0xf]
        %v5625 = vld [vmem:[%s8 + $0x158] sm:$0xf]
        %v5626 = vld [vmem:[%s8 + $0x15c] sm:$0xf]
        %v5627 = vld [vmem:[%s8 + $0x160] sm:$0xf]
        %v5628 = vld [vmem:[%s8 + $0x164] sm:$0xf]
        %v5629 = vld [vmem:[%s8 + $0x168] sm:$0xf]
        %v5630 = vld [vmem:[%s8 + $0x16c] sm:$0xf]
        %v5631 = vld [vmem:[%s8 + $0x170] sm:$0xf]
        %v5632 = vld [vmem:[%s8 + $0x174] sm:$0xf]
        %v5633 = vld [vmem:[%s8 + $0x178] sm:$0xf]
        %v5634 = vld [vmem:[%s8 + $0x17c] sm:$0xf]
        %v5635 = vld [vmem:[%s8 + $0x180] sm:$0xf]
        %v5636 = vld [vmem:[%s8 + $0x184] sm:$0xf]
        %v5637 = vld [vmem:[%s8 + $0x188] sm:$0xf]
        %v5638 = vld [vmem:[%s8 + $0x18c] sm:$0xf]
        %v5639 = vld [vmem:[%s8 + $0x190] sm:$0xf]
        %v5640 = vld [vmem:[%s8 + $0x194] sm:$0xf]
        %v5641 = vld [vmem:[%s8 + $0x198] sm:$0xf]
        %v5642 = vld [vmem:[%s8 + $0x19c] sm:$0xf]
        %v5643 = vld [vmem:[%s8 + $0x1a0] sm:$0xf]
        %v5644 = vld [vmem:[%s8 + $0x1a4] sm:$0xf]
        %v5645 = vld [vmem:[%s8 + $0x1a8] sm:$0xf]
        %v5646 = vld [vmem:[%s8 + $0x1ac] sm:$0xf]
        %v5647 = vld [vmem:[%s8 + $0x1b0] sm:$0xf]
        %v5648 = vld [vmem:[%s8 + $0x1b4] sm:$0xf]
        %v5649 = vld [vmem:[%s8 + $0x1b8] sm:$0xf]
        %v5650 = vld [vmem:[%s8 + $0x1bc] sm:$0xf]
        %v5651 = vld [vmem:[%s8 + $0x1c0] sm:$0xf]
        %v5652 = vld [vmem:[%s8 + $0x1c4] sm:$0xf]
        %v5653 = vld [vmem:[%s8 + $0x1c8] sm:$0xf]
        %v5654 = vld [vmem:[%s8 + $0x1cc] sm:$0xf]
        %v5655 = vld [vmem:[%s8 + $0x1d0] sm:$0xf]
        %v5656 = vld [vmem:[%s8 + $0x1d4] sm:$0xf]
        %v5657 = vld [vmem:[%s8 + $0x1d8] sm:$0xf]
        %v5658 = vld [vmem:[%s8 + $0x1dc] sm:$0xf]
        %v5659 = vld [vmem:[%s8 + $0x1e0] sm:$0xf]
        %v5660 = vld [vmem:[%s8 + $0x1e4] sm:$0xf]
        %v5661 = vld [vmem:[%s8 + $0x1e8] sm:$0xf]
        %v5662 = vld [vmem:[%s8 + $0x1ec] sm:$0xf]
        %v5663 = vld [vmem:[%s8 + $0x1f0] sm:$0xf]
        %v5664 = vld [vmem:[%s8 + $0x1f4] sm:$0xf]
        %v5665 = vld [vmem:[%s8 + $0x1f8] sm:$0xf]
        %v5666 = vld [vmem:[%s8 + $0x1fc] sm:$0xf]
        %v5667 = vld [vmem:[%s8 + $0x200] sm:$0xf]
        %v5668 = vld [vmem:[%s8 + $0x204] sm:$0xf]
        %v5669 = vld [vmem:[%s8 + $0x208] sm:$0xf]
        %v5670 = vld [vmem:[%s8 + $0x20c] sm:$0xf]
        %v5671 = vld [vmem:[%s8 + $0x210] sm:$0xf]
        %v5672 = vld [vmem:[%s8 + $0x214] sm:$0xf]
        %v5673 = vld [vmem:[%s8 + $0x218] sm:$0xf]
        %v5674 = vld [vmem:[%s8 + $0x21c] sm:$0xf]
        %v5675 = vld [vmem:[%s8 + $0x220] sm:$0xf]
        %v5676 = vld [vmem:[%s8 + $0x224] sm:$0xf]
        %v5677 = vld [vmem:[%s8 + $0x228] sm:$0xf]
        %v5678 = vld [vmem:[%s8 + $0x22c] sm:$0xf]
        %v5679 = vld [vmem:[%s8 + $0x230] sm:$0xf]
        %v5680 = vld [vmem:[%s8 + $0x234] sm:$0xf]
        %v5681 = vld [vmem:[%s8 + $0x238] sm:$0xf]
        %v5682 = vld [vmem:[%s8 + $0x23c] sm:$0xf]
        %v5683 = vld [vmem:[%s9] sm:$0x1]
        %v5685 = vlaneseq
        %v5686 = vshrl.u32 %v5685, 7
        %v5687 = vsub.s32 0, %v5686
        %v5688 = vrot.slane %v5683, %v5687
        %v5690 = vpack.c.b16 %v5515, %v4342
        %v5691 = vpack.c.b16 %v5516, %v4343
        %v5692 = vpack.c.b16 %v5517, %v4344
        %v5693 = vpack.c.b16 %v5518, %v5515
        %v5694 = vpack.c.b16 %v5519, %v5516
        %v5695 = vpack.c.b16 %v5520, %v5517
        %v5696 = vpack.c.b16 %v5521, %v5518
        %v5697 = vpack.c.b16 %v5522, %v5519
        %v5698 = vpack.c.b16 %v5523, %v5520
        %v5699 = vpack.c.b16 %v5524, %v5521
        %v5700 = vpack.c.b16 %v5525, %v5522
        %v5701 = vpack.c.b16 %v5526, %v5523
        %v5702 = vpack.c.b16 %v5527, %v5524
        %v5703 = vpack.c.b16 %v5528, %v5525
        %v5704 = vpack.c.b16 %v5529, %v5526
        %v5705 = vpack.c.b16 %v5530, %v5527
        %v5706 = vpack.c.b16 %v5531, %v5528
        %v5707 = vpack.c.b16 %v5532, %v5529
        %v5708 = vpack.c.b16 %v5533, %v5530
        %v5709 = vpack.c.b16 %v5534, %v5531
        %v5710 = vpack.c.b16 %v5535, %v5532
        %v5711 = vpack.c.b16 %v5536, %v5533
        %v5712 = vpack.c.b16 %v5537, %v5534
        %v5713 = vpack.c.b16 %v5538, %v5535
        %v5714 = vpack.c.b16 %v4342, %v5536
        %v5715 = vpack.c.b16 %v4343, %v5537
        %v5716 = vpack.c.b16 %v4344, %v5538
        %v5888 = vunpack.c.l.b16 %v5539
        %v5889 = vunpack.c.l.b16 %v5540
        %v5890 = vunpack.c.l.b16 %v5541
        %v5891 = vunpack.c.l.b16 %v5542
        %v5892 = vunpack.c.l.b16 %v5543
        %v5893 = vunpack.c.l.b16 %v5544
        %v5894 = vunpack.c.l.b16 %v5545
        %v5895 = vunpack.c.l.b16 %v5546
        %v5896 = vunpack.c.l.b16 %v5547
        %v5897 = vunpack.c.l.b16 %v5548
        %v5898 = vunpack.c.l.b16 %v5549
        %v5899 = vunpack.c.l.b16 %v5550
        %v5900 = vunpack.c.l.b16 %v5551
        %v5901 = vunpack.c.l.b16 %v5552
        %v5902 = vunpack.c.l.b16 %v5553
        %v5903 = vunpack.c.l.b16 %v5554
        %v5904 = vunpack.c.l.b16 %v5555
        %v5905 = vunpack.c.l.b16 %v5556
        %v5906 = vunpack.c.l.b16 %v5557
        %v5907 = vunpack.c.l.b16 %v5558
        %v5908 = vunpack.c.l.b16 %v5559
        %v5909 = vunpack.c.l.b16 %v5560
        %v5910 = vunpack.c.l.b16 %v5561
        %v5911 = vunpack.c.l.b16 %v5562
        %v5912 = vunpack.c.l.b16 %v5563
        %v5913 = vunpack.c.l.b16 %v5564
        %v5914 = vunpack.c.l.b16 %v5565
        %v5915 = vunpack.c.l.b16 %v5566
        %v5916 = vunpack.c.l.b16 %v5567
        %v5917 = vunpack.c.l.b16 %v5568
        %v5918 = vunpack.c.l.b16 %v5569
        %v5919 = vunpack.c.l.b16 %v5570
        %v5920 = vunpack.c.l.b16 %v5571
        %v5921 = vunpack.c.l.b16 %v5572
        %v5922 = vunpack.c.l.b16 %v5573
        %v5923 = vunpack.c.l.b16 %v5574
        %v5924 = vunpack.c.l.b16 %v5575
        %v5925 = vunpack.c.l.b16 %v5576
        %v5926 = vunpack.c.l.b16 %v5577
        %v5927 = vunpack.c.l.b16 %v5578
        %v5928 = vunpack.c.l.b16 %v5579
        %v5929 = vunpack.c.l.b16 %v5580
        %v5930 = vunpack.c.l.b16 %v5581
        %v5931 = vunpack.c.l.b16 %v5582
        %v5932 = vunpack.c.l.b16 %v5583
        %v5933 = vunpack.c.l.b16 %v5584
        %v5934 = vunpack.c.l.b16 %v5585
        %v5935 = vunpack.c.l.b16 %v5586
        %v5936 = vunpack.c.l.b16 %v5587
        %v5937 = vunpack.c.l.b16 %v5588
        %v5938 = vunpack.c.l.b16 %v5589
        %v5939 = vunpack.c.l.b16 %v5590
        %v5940 = vunpack.c.l.b16 %v5591
        %v5941 = vunpack.c.l.b16 %v5592
        %v5942 = vunpack.c.l.b16 %v5593
        %v5943 = vunpack.c.l.b16 %v5594
        %v5944 = vunpack.c.l.b16 %v5595
        %v5945 = vunpack.c.l.b16 %v5596
        %v5946 = vunpack.c.l.b16 %v5597
        %v5947 = vunpack.c.l.b16 %v5598
        %v5948 = vunpack.c.l.b16 %v5599
        %v5949 = vunpack.c.l.b16 %v5600
        %v5950 = vunpack.c.l.b16 %v5601
        %v5951 = vunpack.c.l.b16 %v5602
        %v5952 = vunpack.c.l.b16 %v5603
        %v5953 = vunpack.c.l.b16 %v5604
        %v5954 = vunpack.c.l.b16 %v5605
        %v5955 = vunpack.c.l.b16 %v5606
        %v5956 = vunpack.c.l.b16 %v5607
        %v5957 = vunpack.c.l.b16 %v5608
        %v5958 = vunpack.c.l.b16 %v5609
        %v5959 = vunpack.c.l.b16 %v5610
        %v5960 = vunpack.c.l.b16 %v5611
        %v5961 = vunpack.c.l.b16 %v5612
        %v5962 = vunpack.c.l.b16 %v5613
        %v5963 = vunpack.c.l.b16 %v5614
        %v5964 = vunpack.c.l.b16 %v5615
        %v5965 = vunpack.c.l.b16 %v5616
        %v5966 = vunpack.c.l.b16 %v5617
        %v5967 = vunpack.c.l.b16 %v5618
        %v5968 = vunpack.c.l.b16 %v5619
        %v5969 = vunpack.c.l.b16 %v5620
        %v5970 = vunpack.c.l.b16 %v5621
        %v5971 = vunpack.c.l.b16 %v5622
        %v5972 = vunpack.c.l.b16 %v5623
        %v5973 = vunpack.c.l.b16 %v5624
        %v5974 = vunpack.c.l.b16 %v5625
        %v5975 = vunpack.c.l.b16 %v5626
        %v5976 = vunpack.c.l.b16 %v5627
        %v5977 = vunpack.c.l.b16 %v5628
        %v5978 = vunpack.c.l.b16 %v5629
        %v5979 = vunpack.c.l.b16 %v5630
        %v5980 = vunpack.c.l.b16 %v5631
        %v5981 = vunpack.c.l.b16 %v5632
        %v5982 = vunpack.c.l.b16 %v5633
        %v5983 = vunpack.c.l.b16 %v5634
        %v5984 = vunpack.c.l.b16 %v5635
        %v5985 = vunpack.c.l.b16 %v5636
        %v5986 = vunpack.c.l.b16 %v5637
        %v5987 = vunpack.c.l.b16 %v5638
        %v5988 = vunpack.c.l.b16 %v5639
        %v5989 = vunpack.c.l.b16 %v5640
        %v5990 = vunpack.c.l.b16 %v5641
        %v5991 = vunpack.c.l.b16 %v5642
        %v5992 = vunpack.c.l.b16 %v5643
        %v5993 = vunpack.c.l.b16 %v5644
        %v5994 = vunpack.c.l.b16 %v5645
        %v5995 = vunpack.c.l.b16 %v5646
        %v5996 = vunpack.c.l.b16 %v5647
        %v5997 = vunpack.c.l.b16 %v5648
        %v5998 = vunpack.c.l.b16 %v5649
        %v5999 = vunpack.c.l.b16 %v5650
        %v6000 = vunpack.c.l.b16 %v5651
        %v6001 = vunpack.c.l.b16 %v5652
        %v6002 = vunpack.c.l.b16 %v5653
        %v6003 = vunpack.c.l.b16 %v5654
        %v6004 = vunpack.c.l.b16 %v5655
        %v6005 = vunpack.c.l.b16 %v5656
        %v6006 = vunpack.c.l.b16 %v5657
        %v6007 = vunpack.c.l.b16 %v5658
        %v6008 = vunpack.c.l.b16 %v5659
        %v6009 = vunpack.c.l.b16 %v5660
        %v6010 = vunpack.c.l.b16 %v5661
        %v6011 = vunpack.c.l.b16 %v5662
        %v6012 = vunpack.c.l.b16 %v5663
        %v6013 = vunpack.c.l.b16 %v5664
        %v6014 = vunpack.c.l.b16 %v5665
        %v6015 = vunpack.c.l.b16 %v5666
        %v6016 = vunpack.c.l.b16 %v5667
        %v6017 = vunpack.c.l.b16 %v5668
        %v6018 = vunpack.c.l.b16 %v5669
        %v6019 = vunpack.c.l.b16 %v5670
        %v6020 = vunpack.c.l.b16 %v5671
        %v6021 = vunpack.c.l.b16 %v5672
        %v6022 = vunpack.c.l.b16 %v5673
        %v6023 = vunpack.c.l.b16 %v5674
        %v6024 = vunpack.c.l.b16 %v5675
        %v6025 = vunpack.c.l.b16 %v5676
        %v6026 = vunpack.c.l.b16 %v5677
        %v6027 = vunpack.c.l.b16 %v5678
        %v6028 = vunpack.c.l.b16 %v5679
        %v6029 = vunpack.c.l.b16 %v5680
        %v6030 = vunpack.c.l.b16 %v5681
        %v6031 = vunpack.c.l.b16 %v5682
        %v6032 = vpack.c.b16 %v5889, %v5888
        %v6033 = vpack.c.b16 %v5891, %v5890
        %v6034 = vpack.c.b16 %v5893, %v5892
        %v6035 = vpack.c.b16 %v5895, %v5894
        %v6036 = vpack.c.b16 %v5897, %v5896
        %v6037 = vpack.c.b16 %v5899, %v5898
        %v6038 = vpack.c.b16 %v5901, %v5900
        %v6039 = vpack.c.b16 %v5903, %v5902
        %v6040 = vpack.c.b16 %v5905, %v5904
        %v6041 = vpack.c.b16 %v5907, %v5906
        %v6042 = vpack.c.b16 %v5909, %v5908
        %v6043 = vpack.c.b16 %v5911, %v5910
        %v6044 = vpack.c.b16 %v5913, %v5912
        %v6045 = vpack.c.b16 %v5915, %v5914
        %v6046 = vpack.c.b16 %v5917, %v5916
        %v6047 = vpack.c.b16 %v5919, %v5918
        %v6048 = vpack.c.b16 %v5921, %v5920
        %v6049 = vpack.c.b16 %v5923, %v5922
        %v6050 = vpack.c.b16 %v5925, %v5924
        %v6051 = vpack.c.b16 %v5927, %v5926
        %v6052 = vpack.c.b16 %v5929, %v5928
        %v6053 = vpack.c.b16 %v5931, %v5930
        %v6054 = vpack.c.b16 %v5933, %v5932
        %v6055 = vpack.c.b16 %v5935, %v5934
        %v6056 = vpack.c.b16 %v5937, %v5936
        %v6057 = vpack.c.b16 %v5939, %v5938
        %v6058 = vpack.c.b16 %v5941, %v5940
        %v6059 = vpack.c.b16 %v5943, %v5942
        %v6060 = vpack.c.b16 %v5945, %v5944
        %v6061 = vpack.c.b16 %v5947, %v5946
        %v6062 = vpack.c.b16 %v5949, %v5948
        %v6063 = vpack.c.b16 %v5951, %v5950
        %v6064 = vpack.c.b16 %v5953, %v5952
        %v6065 = vpack.c.b16 %v5955, %v5954
        %v6066 = vpack.c.b16 %v5957, %v5956
        %v6067 = vpack.c.b16 %v5959, %v5958
        %v6068 = vpack.c.b16 %v5961, %v5960
        %v6069 = vpack.c.b16 %v5963, %v5962
        %v6070 = vpack.c.b16 %v5965, %v5964
        %v6071 = vpack.c.b16 %v5967, %v5966
        %v6072 = vpack.c.b16 %v5969, %v5968
        %v6073 = vpack.c.b16 %v5971, %v5970
        %v6074 = vpack.c.b16 %v5973, %v5972
        %v6075 = vpack.c.b16 %v5975, %v5974
        %v6076 = vpack.c.b16 %v5977, %v5976
        %v6077 = vpack.c.b16 %v5979, %v5978
        %v6078 = vpack.c.b16 %v5981, %v5980
        %v6079 = vpack.c.b16 %v5983, %v5982
        %v6080 = vpack.c.b16 %v5985, %v5984
        %v6081 = vpack.c.b16 %v5987, %v5986
        %v6082 = vpack.c.b16 %v5989, %v5988
        %v6083 = vpack.c.b16 %v5991, %v5990
        %v6084 = vpack.c.b16 %v5993, %v5992
        %v6085 = vpack.c.b16 %v5995, %v5994
        %v6086 = vpack.c.b16 %v5997, %v5996
        %v6087 = vpack.c.b16 %v5999, %v5998
        %v6088 = vpack.c.b16 %v6001, %v6000
        %v6089 = vpack.c.b16 %v6003, %v6002
        %v6090 = vpack.c.b16 %v6005, %v6004
        %v6091 = vpack.c.b16 %v6007, %v6006
        %v6092 = vpack.c.b16 %v6009, %v6008
        %v6093 = vpack.c.b16 %v6011, %v6010
        %v6094 = vpack.c.b16 %v6013, %v6012
        %v6095 = vpack.c.b16 %v6015, %v6014
        %v6096 = vpack.c.b16 %v6017, %v6016
        %v6097 = vpack.c.b16 %v6019, %v6018
        %v6098 = vpack.c.b16 %v6021, %v6020
        %v6099 = vpack.c.b16 %v6023, %v6022
        %v6100 = vpack.c.b16 %v6025, %v6024
        %v6101 = vpack.c.b16 %v6027, %v6026
        %v6102 = vpack.c.b16 %v6029, %v6028
        %v6103 = vpack.c.b16 %v6031, %v6030
        %6176 = vmatprep.subr.bf16.mxu0 0
        %6177 = vmatpush1.bf16.msra.mxu0 %v6032
        %6178 = vmatprep.subr.bf16.mxu0 0
        %6179 = vmatpush1.bf16.msra.mxu0 %v6033
        %6180 = vmatprep.subr.bf16.mxu0 0
        %6181 = vmatpush1.bf16.msra.mxu0 %v6034
        %6182 = vmatprep.subr.bf16.mxu0 0
        %6183 = vmatpush1.bf16.msra.mxu0 %v6035
        %6184 = vmatprep.subr.bf16.mxu0 0
        %6185 = vmatpush1.bf16.msra.mxu0 %v6036
        %6186 = vmatprep.subr.bf16.mxu0 0
        %6187 = vmatpush1.bf16.msra.mxu0 %v6037
        %6188 = vmatprep.subr.bf16.mxu0 0
        %6189 = vmatpush1.bf16.msra.mxu0 %v6038
        %6190 = vmatprep.subr.bf16.mxu0 0
        %6191 = vmatpush1.bf16.msra.mxu0 %v6039
        %6192 = vmatprep.subr.bf16.mxu0 0
        %6193 = vmatpush1.bf16.msra.mxu0 %v6040
        %6194 = vmatprep.subr.bf16.mxu0 0
        %6195 = vmatpush1.bf16.msra.mxu0 %v6041
        %6196 = vmatprep.subr.bf16.mxu0 0
        %6197 = vmatpush1.bf16.msra.mxu0 %v6042
        %6198 = vmatprep.subr.bf16.mxu0 0
        %6199 = vmatpush1.bf16.msra.mxu0 %v6043
        %6200 = vmatprep.subr.bf16.mxu0 0
        %6201 = vmatpush1.bf16.msra.mxu0 %v6044
        %6202 = vmatprep.subr.bf16.mxu0 0
        %6203 = vmatpush1.bf16.msra.mxu0 %v6045
        %6204 = vmatprep.subr.bf16.mxu0 0
        %6205 = vmatpush1.bf16.msra.mxu0 %v6046
        %6206 = vmatprep.subr.bf16.mxu0 0
        %6207 = vmatpush1.bf16.msra.mxu0 %v6047
        %6208 = vmatprep.mubr.bf16.mxu0 %v5691
        %6209 = vmatmul.mubr.bf16.gmra.mrb[0].mxu0 %v5690
        %v6210 = vpop.f32.mrb[0].mxu0
        %v6211 = vadd.f32 %v5688, %v6210
        %v6212 = vpop.f32.mrb[0].mxu0
        %v6213 = vpop.f32.mrb[0].mxu0
        %v6214 = vadd.f32 %v5688, %v6213
        %v6215 = vpop.f32.mrb[0].mxu0
        %6216 = vmatprep.mubr.bf16.mxu0 %v5697
        %6217 = vmatmul.mubr.bf16.gmra.mrb[0].mxu0 %v5696
        %v6218 = vpop.f32.mrb[0].mxu0
        %v6219 = vadd.f32 %v5688, %v6218
        %v6220 = vpop.f32.mrb[0].mxu0
        %v6221 = vpop.f32.mrb[0].mxu0
        %v6222 = vadd.f32 %v5688, %v6221
        %v6223 = vpop.f32.mrb[0].mxu0
        %6224 = vmatprep.mubr.bf16.mxu0 %v5703
        %6225 = vmatmul.mubr.bf16.gmra.mrb[0].mxu0 %v5702
        %v6226 = vpop.f32.mrb[0].mxu0
        %v6227 = vadd.f32 %v5688, %v6226
        %v6228 = vpop.f32.mrb[0].mxu0
        %v6229 = vpop.f32.mrb[0].mxu0
        %v6230 = vadd.f32 %v5688, %v6229
        %v6231 = vpop.f32.mrb[0].mxu0
        %6232 = vmatprep.mubr.bf16.mxu0 %v5709
        %6233 = vmatmul.mubr.bf16.gmra.mrb[0].mxu0 %v5708
        %v6234 = vpop.f32.mrb[0].mxu0
        %v6235 = vadd.f32 %v5688, %v6234
        %v6236 = vpop.f32.mrb[0].mxu0
        %v6237 = vpop.f32.mrb[0].mxu0
        %v6238 = vadd.f32 %v5688, %v6237
        %v6239 = vpop.f32.mrb[0].mxu0
        %6240 = vdwg.mxu0
        %6241 = vmatprep.subr.bf16.mxu0 0
        %6242 = vmatpush1.bf16.msra.mxu0 %v6048
        %6243 = vmatprep.subr.bf16.mxu0 0
        %6244 = vmatpush1.bf16.msra.mxu0 %v6049
        %6245 = vmatprep.subr.bf16.mxu0 0
        %6246 = vmatpush1.bf16.msra.mxu0 %v6050
        %6247 = vmatprep.subr.bf16.mxu0 0
        %6248 = vmatpush1.bf16.msra.mxu0 %v6051
        %6249 = vmatprep.subr.bf16.mxu0 0
        %6250 = vmatpush1.bf16.msra.mxu0 %v6052
        %6251 = vmatprep.subr.bf16.mxu0 0
        %6252 = vmatpush1.bf16.msra.mxu0 %v6053
        %6253 = vmatprep.subr.bf16.mxu0 0
        %6254 = vmatpush1.bf16.msra.mxu0 %v6054
        %6255 = vmatprep.subr.bf16.mxu0 0
        %6256 = vmatpush1.bf16.msra.mxu0 %v6055
        %6257 = vmatprep.subr.bf16.mxu0 0
        %6258 = vmatpush1.bf16.msra.mxu0 %v6056
        %6259 = vmatprep.subr.bf16.mxu0 0
        %6260 = vmatpush1.bf16.msra.mxu0 %v6057
        %6261 = vmatprep.subr.bf16.mxu0 0
        %6262 = vmatpush1.bf16.msra.mxu0 %v6058
        %6263 = vmatprep.subr.bf16.mxu0 0
        %6264 = vmatpush1.bf16.msra.mxu0 %v6059
        %6265 = vmatprep.subr.bf16.mxu0 0
        %6266 = vmatpush1.bf16.msra.mxu0 %v6060
        %6267 = vmatprep.subr.bf16.mxu0 0
        %6268 = vmatpush1.bf16.msra.mxu0 %v6061
        %6269 = vmatprep.subr.bf16.mxu0 0
        %6270 = vmatpush1.bf16.msra.mxu0 %v6062
        %6271 = vmatprep.subr.bf16.mxu0 0
        %6272 = vmatpush1.bf16.msra.mxu0 %v6063
        %6273 = vmatprep.mubr.bf16.mxu0 %v5693
        %6274 = vmatmul.mubr.bf16.gmra.mrb[0].mxu0 %v5692
        %v6275 = vpop.f32.mrb[0].mxu0
        %v6276 = vadd.f32 %v6211, %v6275
        %v6277 = vpop.f32.mrb[0].mxu0
        %v6278 = vpop.f32.mrb[0].mxu0
        %v6279 = vadd.f32 %v6214, %v6278
        %v6280 = vpop.f32.mrb[0].mxu0
        %6281 = vmatprep.mubr.bf16.mxu0 %v5699
        %6282 = vmatmul.mubr.bf16.gmra.mrb[0].mxu0 %v5698
        %v6283 = vpop.f32.mrb[0].mxu0
        %v6284 = vadd.f32 %v6219, %v6283
        %v6285 = vpop.f32.mrb[0].mxu0
        %v6286 = vpop.f32.mrb[0].mxu0
        %v6287 = vadd.f32 %v6222, %v6286
        %v6288 = vpop.f32.mrb[0].mxu0
        %6289 = vmatprep.mubr.bf16.mxu0 %v5705
        %6290 = vmatmul.mubr.bf16.gmra.mrb[0].mxu0 %v5704
        %v6291 = vpop.f32.mrb[0].mxu0
        %v6292 = vadd.f32 %v6227, %v6291
        %v6293 = vpop.f32.mrb[0].mxu0
        %v6294 = vpop.f32.mrb[0].mxu0
        %v6295 = vadd.f32 %v6230, %v6294
        %v6296 = vpop.f32.mrb[0].mxu0
        %6297 = vmatprep.mubr.bf16.mxu0 %v5711
        %6298 = vmatmul.mubr.bf16.gmra.mrb[0].mxu0 %v5710
        %v6299 = vpop.f32.mrb[0].mxu0
        %v6300 = vadd.f32 %v6235, %v6299
        %v6301 = vpop.f32.mrb[0].mxu0
        %v6302 = vpop.f32.mrb[0].mxu0
        %v6303 = vadd.f32 %v6238, %v6302
        %v6304 = vpop.f32.mrb[0].mxu0
        %6305 = vdwg.mxu0
        %6306 = vmatprep.subr.bf16.mxu0 0
        %6307 = vmatpush1.bf16.msra.mxu0 %v6064
        %6308 = vmatprep.subr.bf16.mxu0 0
        %6309 = vmatpush1.bf16.msra.mxu0 %v6065
        %6310 = vmatprep.subr.bf16.mxu0 0
        %6311 = vmatpush1.bf16.msra.mxu0 %v6066
        %6312 = vmatprep.subr.bf16.mxu0 0
        %6313 = vmatpush1.bf16.msra.mxu0 %v6067
        %6314 = vmatprep.subr.bf16.mxu0 0
        %6315 = vmatpush1.bf16.msra.mxu0 %v6068
        %6316 = vmatprep.subr.bf16.mxu0 0
        %6317 = vmatpush1.bf16.msra.mxu0 %v6069
        %6318 = vmatprep.subr.bf16.mxu0 0
        %6319 = vmatpush1.bf16.msra.mxu0 %v6070
        %6320 = vmatprep.subr.bf16.mxu0 0
        %6321 = vmatpush1.bf16.msra.mxu0 %v6071
        %6322 = vmatprep.subr.bf16.mxu0 0
        %6323 = vmatpush1.bf16.msra.mxu0 %v6072
        %6324 = vmatprep.subr.bf16.mxu0 0
        %6325 = vmatpush1.bf16.msra.mxu0 %v6073
        %6326 = vmatprep.subr.bf16.mxu0 0
        %6327 = vmatpush1.bf16.msra.mxu0 %v6074
        %6328 = vmatprep.subr.bf16.mxu0 0
        %6329 = vmatpush1.bf16.msra.mxu0 %v6075
        %6330 = vmatprep.subr.bf16.mxu0 0
        %6331 = vmatpush1.bf16.msra.mxu0 %v6076
        %6332 = vmatprep.subr.bf16.mxu0 0
        %6333 = vmatpush1.bf16.msra.mxu0 %v6077
        %6334 = vmatprep.subr.bf16.mxu0 0
        %6335 = vmatpush1.bf16.msra.mxu0 %v6078
        %6336 = vmatprep.subr.bf16.mxu0 0
        %6337 = vmatpush1.bf16.msra.mxu0 %v6079
        %6338 = vmatprep.mubr.bf16.mxu0 %v5695
        %6339 = vmatmul.mubr.bf16.gmra.mrb[0].mxu0 %v5694
        %v6340 = vpop.f32.mrb[0].mxu0
        %v6341 = vadd.f32 %v6276, %v6340
        %v6342 = vpop.f32.mrb[0].mxu0
        %v6343 = vpop.f32.mrb[0].mxu0
        %v6344 = vadd.f32 %v6279, %v6343
        %v6345 = vpop.f32.mrb[0].mxu0
        %6346 = vmatprep.mubr.bf16.mxu0 %v5701
        %6347 = vmatmul.mubr.bf16.gmra.mrb[0].mxu0 %v5700
        %v6348 = vpop.f32.mrb[0].mxu0
        %v6349 = vadd.f32 %v6284, %v6348
        %v6350 = vpop.f32.mrb[0].mxu0
        %v6351 = vpop.f32.mrb[0].mxu0
        %v6352 = vadd.f32 %v6287, %v6351
        %v6353 = vpop.f32.mrb[0].mxu0
        %6354 = vmatprep.mubr.bf16.mxu0 %v5707
        %6355 = vmatmul.mubr.bf16.gmra.mrb[0].mxu0 %v5706
        %v6356 = vpop.f32.mrb[0].mxu0
        %v6357 = vadd.f32 %v6292, %v6356
        %v6358 = vpop.f32.mrb[0].mxu0
        %v6359 = vpop.f32.mrb[0].mxu0
        %v6360 = vadd.f32 %v6295, %v6359
        %v6361 = vpop.f32.mrb[0].mxu0
        %6362 = vmatprep.mubr.bf16.mxu0 %v5713
        %6363 = vmatmul.mubr.bf16.gmra.mrb[0].mxu0 %v5712
        %v6364 = vpop.f32.mrb[0].mxu0
        %v6365 = vadd.f32 %v6300, %v6364
        %v6366 = vpop.f32.mrb[0].mxu0
        %v6367 = vpop.f32.mrb[0].mxu0
        %v6368 = vadd.f32 %v6303, %v6367
        %v6369 = vpop.f32.mrb[0].mxu0
        %6370 = vdwg.mxu0
        %6371 = vmatprep.subr.bf16.mxu0 0
        %6372 = vmatpush1.bf16.msra.mxu0 %v6080
        %6373 = vmatprep.subr.bf16.mxu0 0
        %6374 = vmatpush1.bf16.msra.mxu0 %v6081
        %6375 = vmatprep.subr.bf16.mxu0 0
        %6376 = vmatpush1.bf16.msra.mxu0 %v6082
        %6377 = vmatprep.subr.bf16.mxu0 0
        %6378 = vmatpush1.bf16.msra.mxu0 %v6083
        %6379 = vmatprep.subr.bf16.mxu0 0
        %6380 = vmatpush1.bf16.msra.mxu0 %v6084
        %6381 = vmatprep.subr.bf16.mxu0 0
        %6382 = vmatpush1.bf16.msra.mxu0 %v6085
        %6383 = vmatprep.subr.bf16.mxu0 0
        %6384 = vmatpush1.bf16.msra.mxu0 %v6086
        %6385 = vmatprep.subr.bf16.mxu0 0
        %6386 = vmatpush1.bf16.msra.mxu0 %v6087
        %6387 = vmatprep.subr.bf16.mxu0 0
        %6388 = vmatpush1.bf16.msra.mxu0 %v6088
        %6389 = vmatprep.subr.bf16.mxu0 0
        %6390 = vmatpush1.bf16.msra.mxu0 %v6089
        %6391 = vmatprep.subr.bf16.mxu0 0
        %6392 = vmatpush1.bf16.msra.mxu0 %v6090
        %6393 = vmatprep.subr.bf16.mxu0 0
        %6394 = vmatpush1.bf16.msra.mxu0 %v6091
        %6395 = vmatprep.subr.bf16.mxu0 0
        %6396 = vmatpush1.bf16.msra.mxu0 %v6092
        %6397 = vmatprep.subr.bf16.mxu0 0
        %6398 = vmatpush1.bf16.msra.mxu0 %v6093
        %6399 = vmatprep.subr.bf16.mxu0 0
        %6400 = vmatpush1.bf16.msra.mxu0 %v6094
        %6401 = vmatprep.subr.bf16.mxu0 0
        %6402 = vmatpush1.bf16.msra.mxu0 %v6095
        %6403 = vmatprep.mubr.bf16.mxu0 %v5697
        %6404 = vmatmul.mubr.bf16.gmra.mrb[0].mxu0 %v5696
        %v6405 = vpop.f32.mrb[0].mxu0
        %v6406 = vadd.f32 %v6341, %v6405
        %v6407 = vpop.f32.mrb[0].mxu0
        %v6408 = vpop.f32.mrb[0].mxu0
        %v6409 = vadd.f32 %v6344, %v6408
        %v6410 = vpop.f32.mrb[0].mxu0
        %6411 = vmatprep.mubr.bf16.mxu0 %v5703
        %6412 = vmatmul.mubr.bf16.gmra.mrb[0].mxu0 %v5702
        %v6413 = vpop.f32.mrb[0].mxu0
        %v6414 = vadd.f32 %v6349, %v6413
        %v6415 = vpop.f32.mrb[0].mxu0
        %v6416 = vpop.f32.mrb[0].mxu0
        %v6417 = vadd.f32 %v6352, %v6416
        %v6418 = vpop.f32.mrb[0].mxu0
        %6419 = vmatprep.mubr.bf16.mxu0 %v5709
        %6420 = vmatmul.mubr.bf16.gmra.mrb[0].mxu0 %v5708
        %v6421 = vpop.f32.mrb[0].mxu0
        %v6422 = vadd.f32 %v6357, %v6421
        %v6423 = vpop.f32.mrb[0].mxu0
        %v6424 = vpop.f32.mrb[0].mxu0
        %v6425 = vadd.f32 %v6360, %v6424
        %v6426 = vpop.f32.mrb[0].mxu0
        %6427 = vmatprep.mubr.bf16.mxu0 %v5715
        %6428 = vmatmul.mubr.bf16.gmra.mrb[0].mxu0 %v5714
        %v6429 = vpop.f32.mrb[0].mxu0
        %v6430 = vadd.f32 %v6365, %v6429
        %v6431 = vpop.f32.mrb[0].mxu0
        %v6432 = vpop.f32.mrb[0].mxu0
        %v6433 = vadd.f32 %v6368, %v6432
        %v6434 = vpop.f32.mrb[0].mxu0
        %6435 = vdwg.mxu0
        %6436 = vmatprep.subr.bf16.mxu0 0
        %6437 = vmatpush1.bf16.msra.mxu0 %v6096
        %6438 = vmatprep.subr.bf16.mxu0 0
        %6439 = vmatpush1.bf16.msra.mxu0 %v6097
        %6440 = vmatprep.subr.bf16.mxu0 0
        %6441 = vmatpush1.bf16.msra.mxu0 %v6098
        %6442 = vmatprep.subr.bf16.mxu0 0
        %6443 = vmatpush1.bf16.msra.mxu0 %v6099
        %6444 = vmatprep.subr.bf16.mxu0 0
        %6445 = vmatpush1.bf16.msra.mxu0 %v6100
        %6446 = vmatprep.subr.bf16.mxu0 0
        %6447 = vmatpush1.bf16.msra.mxu0 %v6101
        %6448 = vmatprep.subr.bf16.mxu0 0
        %6449 = vmatpush1.bf16.msra.mxu0 %v6102
        %6450 = vmatprep.subr.bf16.mxu0 0
        %6451 = vmatpush1.bf16.msra.mxu0 %v6103
        %6452 = vmatprep.subr.bf16.mxu0 0
        %6453 = vmatpush1.bf16.msra.mxu0 0
        %6454 = vmatprep.subr.bf16.mxu0 0
        %6455 = vmatpush1.bf16.msra.mxu0 0
        %6456 = vmatprep.subr.bf16.mxu0 0
        %6457 = vmatpush1.bf16.msra.mxu0 0
        %6458 = vmatprep.subr.bf16.mxu0 0
        %6459 = vmatpush1.bf16.msra.mxu0 0
        %6460 = vmatprep.subr.bf16.mxu0 0
        %6461 = vmatpush1.bf16.msra.mxu0 0
        %6462 = vmatprep.subr.bf16.mxu0 0
        %6463 = vmatpush1.bf16.msra.mxu0 0
        %6464 = vmatprep.subr.bf16.mxu0 0
        %6465 = vmatpush1.bf16.msra.mxu0 0
        %6466 = vmatprep.subr.bf16.mxu0 0
        %6467 = vmatpush1.bf16.msra.mxu0 0
        %6468 = vmatprep.mubr.bf16.mxu0 0
        %6469 = vmatmul.mubr.bf16.gmra.mrb[0].mxu0 %v5698
        %v6470 = vpop.f32.mrb[0].mxu0
        %v6471 = vadd.f32 %v6406, %v6470
        %v6472 = vpop.f32.mrb[0].mxu0
        %v6473 = vpop.f32.mrb[0].mxu0
        %v6474 = vadd.f32 %v6409, %v6473
        %v6475 = vpop.f32.mrb[0].mxu0
        %6476 = vmatprep.mubr.bf16.mxu0 0
        %6477 = vmatmul.mubr.bf16.gmra.mrb[0].mxu0 %v5704
        %v6478 = vpop.f32.mrb[0].mxu0
        %v6479 = vadd.f32 %v6414, %v6478
        %v6480 = vpop.f32.mrb[0].mxu0
        %v6481 = vpop.f32.mrb[0].mxu0
        %v6482 = vadd.f32 %v6417, %v6481
        %v6483 = vpop.f32.mrb[0].mxu0
        %6484 = vmatprep.mubr.bf16.mxu0 0
        %6485 = vmatmul.mubr.bf16.gmra.mrb[0].mxu0 %v5710
        %v6486 = vpop.f32.mrb[0].mxu0
        %v6487 = vadd.f32 %v6422, %v6486
        %v6488 = vpop.f32.mrb[0].mxu0
        %v6489 = vpop.f32.mrb[0].mxu0
        %v6490 = vadd.f32 %v6425, %v6489
        %v6491 = vpop.f32.mrb[0].mxu0
        %6492 = vmatprep.mubr.bf16.mxu0 0
        %6493 = vmatmul.mubr.bf16.gmra.mrb[0].mxu0 %v5716
        %v6494 = vpop.f32.mrb[0].mxu0
        %v6495 = vadd.f32 %v6430, %v6494
        %v6496 = vpop.f32.mrb[0].mxu0
        %v6497 = vpop.f32.mrb[0].mxu0
        %v6498 = vadd.f32 %v6433, %v6497
        %v6499 = vpop.f32.mrb[0].mxu0
        %6500 = vdwg.mxu0
        %v6501 = vmax.f32 %v6471, 0.0
        %v6502 = vmax.f32 %v6474, 0.0
        %v6503 = vmax.f32 %v6479, 0.0
        %v6504 = vmax.f32 %v6482, 0.0
        %v6505 = vmax.f32 %v6487, 0.0
        %v6506 = vmax.f32 %v6490, 0.0
        %v6507 = vmax.f32 %v6495, 0.0
        %v6508 = vmax.f32 %v6498, 0.0
        %v6509 = vpack.c.bf16 %v6502, %v6501
        %v6510 = vpack.c.bf16 %v6504, %v6503
        %v6511 = vpack.c.bf16 %v6506, %v6505
        %v6512 = vpack.c.bf16 %v6508, %v6507
        %v6517 = vunpack.c.l.b16 %v6509
        %v6518 = vunpack.c.h.b16 %v6509
        %v6519 = vunpack.c.l.b16 %v6510
        %v6520 = vunpack.c.h.b16 %v6510
        %v6521 = vunpack.c.l.b16 %v6511
        %v6522 = vunpack.c.h.b16 %v6511
        %v6523 = vunpack.c.l.b16 %v6512
        %v6524 = vunpack.c.h.b16 %v6512
        %v6525 = vpack.c.b16 %v6517, %v6517
        %v6526 = vpack.c.b16 %v6518, %v6518
        %v6527 = vpack.c.b16 %v6519, %v6519
        %v6528 = vpack.c.b16 %v6520, %v6520
        %v6529 = vpack.c.b16 %v6521, %v6521
        %v6530 = vpack.c.b16 %v6522, %v6522
        %v6531 = vpack.c.b16 %v6523, %v6523
        %v6532 = vpack.c.b16 %v6524, %v6524
        %v6534 = vshrl.u32 %v6525, 16
        %v6536 = vrot.slane %v6534, 7
        %v6537 = vshll.u32 %v6525, 16
        %v6539 = vor.u32 %v6536, %v6537
        %v6541 = vshrl.u32 %v6526, 16
        %v6543 = vrot.slane %v6541, 7
        %v6544 = vshll.u32 %v6526, 16
        %v6546 = vor.u32 %v6543, %v6544
        %v6548 = vshrl.u32 %v6527, 16
        %v6550 = vrot.slane %v6548, 7
        %v6551 = vshll.u32 %v6527, 16
        %v6553 = vor.u32 %v6550, %v6551
        %v6555 = vshrl.u32 %v6528, 16
        %v6557 = vrot.slane %v6555, 7
        %v6558 = vshll.u32 %v6528, 16
        %v6560 = vor.u32 %v6557, %v6558
        %v6562 = vshrl.u32 %v6529, 16
        %v6564 = vrot.slane %v6562, 7
        %v6565 = vshll.u32 %v6529, 16
        %v6567 = vor.u32 %v6564, %v6565
        %v6569 = vshrl.u32 %v6530, 16
        %v6571 = vrot.slane %v6569, 7
        %v6572 = vshll.u32 %v6530, 16
        %v6574 = vor.u32 %v6571, %v6572
        %v6576 = vshrl.u32 %v6531, 16
        %v6578 = vrot.slane %v6576, 7
        %v6579 = vshll.u32 %v6531, 16
        %v6581 = vor.u32 %v6578, %v6579
        %v6583 = vshrl.u32 %v6532, 16
        %v6585 = vrot.slane %v6583, 7
        %v6586 = vshll.u32 %v6532, 16
        %v6588 = vor.u32 %v6585, %v6586
        %v6597 = vsel %vm4239, 0, %v6539
        %v6598 = vsel %vm4239, 0, %v6546
        %v6599 = vsel %vm4239, 0, %v6553
        %v6600 = vsel %vm4239, 0, %v6560
        %v6601 = vsel %vm4239, 0, %v6567
        %v6602 = vsel %vm4239, 0, %v6574
        %v6603 = vsel %vm4239, 0, %v6581
        %v6604 = vsel %vm4239, 0, %v6588
        %v6605 = vsel %vm4251, %v6597, 0
        %v6606 = vsel %vm4251, %v6598, 0
        %v6607 = vsel %vm4251, %v6599, 0
        %v6608 = vsel %vm4251, %v6600, 0
        %v6609 = vsel %vm4251, %v6601, 0
        %v6610 = vsel %vm4251, %v6602, 0
        %v6611 = vsel %vm4251, %v6603, 0
        %v6612 = vsel %vm4251, %v6604, 0
        %v6614 = vshrl.u32 %v6605, 16
        %v6616 = vshll.u32 %v6605, 16
        %v6618 = vrot.slane %v6616, 1
        %v6619 = vor.u32 %v6614, %v6618
        %v6621 = vshrl.u32 %v6606, 16
        %v6623 = vshll.u32 %v6606, 16
        %v6625 = vrot.slane %v6623, 1
        %v6626 = vor.u32 %v6621, %v6625
        %v6628 = vshrl.u32 %v6607, 16
        %v6630 = vshll.u32 %v6607, 16
        %v6632 = vrot.slane %v6630, 1
        %v6633 = vor.u32 %v6628, %v6632
        %v6635 = vshrl.u32 %v6608, 16
        %v6637 = vshll.u32 %v6608, 16
        %v6639 = vrot.slane %v6637, 1
        %v6640 = vor.u32 %v6635, %v6639
        %v6642 = vshrl.u32 %v6609, 16
        %v6644 = vshll.u32 %v6609, 16
        %v6646 = vrot.slane %v6644, 1
        %v6647 = vor.u32 %v6642, %v6646
        %v6649 = vshrl.u32 %v6610, 16
        %v6651 = vshll.u32 %v6610, 16
        %v6653 = vrot.slane %v6651, 1
        %v6654 = vor.u32 %v6649, %v6653
        %v6656 = vshrl.u32 %v6611, 16
        %v6658 = vshll.u32 %v6611, 16
        %v6660 = vrot.slane %v6658, 1
        %v6661 = vor.u32 %v6656, %v6660
        %v6669 = vrot.slane %v6605, 1
        %v6670 = vrot.slane %v6606, 1
        %v6671 = vrot.slane %v6607, 1
        %v6672 = vrot.slane %v6608, 1
        %v6673 = vrot.slane %v6609, 1
        %v6674 = vrot.slane %v6610, 1
        %v6675 = vrot.slane %v6611, 1
        %v6677 = vshrl.u32 %v6612, 16
        %v6679 = vshll.u32 %v6612, 16
        %v6681 = vrot.slane %v6679, 1
        %v6682 = vor.u32 %v6677, %v6681
        %v6684 = vrot.slane %v6612, 1
        %v6685 = vunpack.c.l.b16 %v6605
        %v6686 = vunpack.c.l.b16 %v6619
        %v6687 = vunpack.c.l.b16 %v6669
        %v6688 = vunpack.c.l.b16 %v6606
        %v6689 = vunpack.c.l.b16 %v6626
        %v6690 = vunpack.c.l.b16 %v6670
        %v6691 = vunpack.c.l.b16 %v6607
        %v6692 = vunpack.c.l.b16 %v6633
        %v6693 = vunpack.c.l.b16 %v6671
        %v6694 = vunpack.c.l.b16 %v6608
        %v6695 = vunpack.c.l.b16 %v6640
        %v6696 = vunpack.c.l.b16 %v6672
        %v6697 = vunpack.c.l.b16 %v6609
        %v6698 = vunpack.c.l.b16 %v6647
        %v6699 = vunpack.c.l.b16 %v6673
        %v6700 = vunpack.c.l.b16 %v6610
        %v6701 = vunpack.c.l.b16 %v6654
        %v6702 = vunpack.c.l.b16 %v6674
        %v6703 = vunpack.c.l.b16 %v6611
        %v6704 = vunpack.c.l.b16 %v6661
        %v6705 = vunpack.c.l.b16 %v6675
        %v6706 = vunpack.c.l.b16 %v6612
        %v6707 = vunpack.c.l.b16 %v6682
        %v6708 = vunpack.c.l.b16 %v6684
        %v6709 = vld [vmem:[#allocation8] sm:$0xf]
        %v6710 = vld [vmem:[#allocation8 + $0x4] sm:$0xf]
        %v6711 = vld [vmem:[#allocation8 + $0x8] sm:$0xf]
        %v6712 = vld [vmem:[#allocation8 + $0xc] sm:$0xf]
        %v6713 = vld [vmem:[#allocation8 + $0x10] sm:$0xf]
        %v6714 = vld [vmem:[#allocation8 + $0x14] sm:$0xf]
        %v6715 = vld [vmem:[#allocation8 + $0x18] sm:$0xf]
        %v6716 = vld [vmem:[#allocation8 + $0x1c] sm:$0xf]
        %v6717 = vld [vmem:[#allocation8 + $0x20] sm:$0xf]
        %v6718 = vld [vmem:[#allocation8 + $0x24] sm:$0xf]
        %v6719 = vld [vmem:[#allocation8 + $0x28] sm:$0xf]
        %v6720 = vld [vmem:[#allocation8 + $0x2c] sm:$0xf]
        %v6721 = vld [vmem:[#allocation8 + $0x30] sm:$0xf]
        %v6722 = vld [vmem:[#allocation8 + $0x34] sm:$0xf]
        %v6723 = vld [vmem:[#allocation8 + $0x38] sm:$0xf]
        %v6724 = vld [vmem:[#allocation8 + $0x3c] sm:$0xf]
        %v6725 = vld [vmem:[#allocation8 + $0x40] sm:$0xf]
        %v6726 = vld [vmem:[#allocation8 + $0x44] sm:$0xf]
        %v6727 = vld [vmem:[#allocation8 + $0x48] sm:$0xf]
        %v6728 = vld [vmem:[#allocation8 + $0x4c] sm:$0xf]
        %v6729 = vld [vmem:[#allocation8 + $0x50] sm:$0xf]
        %v6730 = vld [vmem:[#allocation8 + $0x54] sm:$0xf]
        %v6731 = vld [vmem:[#allocation8 + $0x58] sm:$0xf]
        %v6732 = vld [vmem:[#allocation8 + $0x5c] sm:$0xf]
        %v6733 = vld [vmem:[#allocation8 + $0x60] sm:$0xf]
        %v6734 = vld [vmem:[#allocation8 + $0x64] sm:$0xf]
        %v6735 = vld [vmem:[#allocation8 + $0x68] sm:$0xf]
        %v6736 = vld [vmem:[#allocation8 + $0x6c] sm:$0xf]
        %v6737 = vld [vmem:[#allocation8 + $0x70] sm:$0xf]
        %v6738 = vld [vmem:[#allocation8 + $0x74] sm:$0xf]
        %v6739 = vld [vmem:[#allocation8 + $0x78] sm:$0xf]
        %v6740 = vld [vmem:[#allocation8 + $0x7c] sm:$0xf]
        %v6741 = vld [vmem:[#allocation8 + $0x80] sm:$0xf]
        %v6742 = vld [vmem:[#allocation8 + $0x84] sm:$0xf]
        %v6743 = vld [vmem:[#allocation8 + $0x88] sm:$0xf]
        %v6744 = vld [vmem:[#allocation8 + $0x8c] sm:$0xf]
        %v6745 = vld [vmem:[#allocation8 + $0x90] sm:$0xf]
        %v6746 = vld [vmem:[#allocation8 + $0x94] sm:$0xf]
        %v6747 = vld [vmem:[#allocation8 + $0x98] sm:$0xf]
        %v6748 = vld [vmem:[#allocation8 + $0x9c] sm:$0xf]
        %v6749 = vld [vmem:[#allocation8 + $0xa0] sm:$0xf]
        %v6750 = vld [vmem:[#allocation8 + $0xa4] sm:$0xf]
        %v6751 = vld [vmem:[#allocation8 + $0xa8] sm:$0xf]
        %v6752 = vld [vmem:[#allocation8 + $0xac] sm:$0xf]
        %v6753 = vld [vmem:[#allocation8 + $0xb0] sm:$0xf]
        %v6754 = vld [vmem:[#allocation8 + $0xb4] sm:$0xf]
        %v6755 = vld [vmem:[#allocation8 + $0xb8] sm:$0xf]
        %v6756 = vld [vmem:[#allocation8 + $0xbc] sm:$0xf]
        %v6757 = vld [vmem:[#allocation8 + $0xc0] sm:$0xf]
        %v6758 = vld [vmem:[#allocation8 + $0xc4] sm:$0xf]
        %v6759 = vld [vmem:[#allocation8 + $0xc8] sm:$0xf]
        %v6760 = vld [vmem:[#allocation8 + $0xcc] sm:$0xf]
        %v6761 = vld [vmem:[#allocation8 + $0xd0] sm:$0xf]
        %v6762 = vld [vmem:[#allocation8 + $0xd4] sm:$0xf]
        %v6763 = vld [vmem:[#allocation8 + $0xd8] sm:$0xf]
        %v6764 = vld [vmem:[#allocation8 + $0xdc] sm:$0xf]
        %v6765 = vld [vmem:[#allocation8 + $0xe0] sm:$0xf]
        %v6766 = vld [vmem:[#allocation8 + $0xe4] sm:$0xf]
        %v6767 = vld [vmem:[#allocation8 + $0xe8] sm:$0xf]
        %v6768 = vld [vmem:[#allocation8 + $0xec] sm:$0xf]
        %v6769 = vld [vmem:[#allocation8 + $0xf0] sm:$0xf]
        %v6770 = vld [vmem:[#allocation8 + $0xf4] sm:$0xf]
        %v6771 = vld [vmem:[#allocation8 + $0xf8] sm:$0xf]
        %v6772 = vld [vmem:[#allocation8 + $0xfc] sm:$0xf]
        %v6773 = vld [vmem:[#allocation8 + $0x100] sm:$0xf]
        %v6774 = vld [vmem:[#allocation8 + $0x104] sm:$0xf]
        %v6775 = vld [vmem:[#allocation8 + $0x108] sm:$0xf]
        %v6776 = vld [vmem:[#allocation8 + $0x10c] sm:$0xf]
        %v6777 = vld [vmem:[#allocation8 + $0x110] sm:$0xf]
        %v6778 = vld [vmem:[#allocation8 + $0x114] sm:$0xf]
        %v6779 = vld [vmem:[#allocation8 + $0x118] sm:$0xf]
        %v6780 = vld [vmem:[#allocation8 + $0x11c] sm:$0xf]
        %v6781 = vld [vmem:[#allocation8 + $0x120] sm:$0xf]
        %v6782 = vld [vmem:[#allocation8 + $0x124] sm:$0xf]
        %v6783 = vld [vmem:[#allocation8 + $0x128] sm:$0xf]
        %v6784 = vld [vmem:[#allocation8 + $0x12c] sm:$0xf]
        %v6785 = vld [vmem:[#allocation8 + $0x130] sm:$0xf]
        %v6786 = vld [vmem:[#allocation8 + $0x134] sm:$0xf]
        %v6787 = vld [vmem:[#allocation8 + $0x138] sm:$0xf]
        %v6788 = vld [vmem:[#allocation8 + $0x13c] sm:$0xf]
        %v6789 = vld [vmem:[#allocation8 + $0x140] sm:$0xf]
        %v6790 = vld [vmem:[#allocation8 + $0x144] sm:$0xf]
        %v6791 = vld [vmem:[#allocation8 + $0x148] sm:$0xf]
        %v6792 = vld [vmem:[#allocation8 + $0x14c] sm:$0xf]
        %v6793 = vld [vmem:[#allocation8 + $0x150] sm:$0xf]
        %v6794 = vld [vmem:[#allocation8 + $0x154] sm:$0xf]
        %v6795 = vld [vmem:[#allocation8 + $0x158] sm:$0xf]
        %v6796 = vld [vmem:[#allocation8 + $0x15c] sm:$0xf]
        %v6797 = vld [vmem:[#allocation8 + $0x160] sm:$0xf]
        %v6798 = vld [vmem:[#allocation8 + $0x164] sm:$0xf]
        %v6799 = vld [vmem:[#allocation8 + $0x168] sm:$0xf]
        %v6800 = vld [vmem:[#allocation8 + $0x16c] sm:$0xf]
        %v6801 = vld [vmem:[#allocation8 + $0x170] sm:$0xf]
        %v6802 = vld [vmem:[#allocation8 + $0x174] sm:$0xf]
        %v6803 = vld [vmem:[#allocation8 + $0x178] sm:$0xf]
        %v6804 = vld [vmem:[#allocation8 + $0x17c] sm:$0xf]
        %v6805 = vld [vmem:[#allocation8 + $0x180] sm:$0xf]
        %v6806 = vld [vmem:[#allocation8 + $0x184] sm:$0xf]
        %v6807 = vld [vmem:[#allocation8 + $0x188] sm:$0xf]
        %v6808 = vld [vmem:[#allocation8 + $0x18c] sm:$0xf]
        %v6809 = vld [vmem:[#allocation8 + $0x190] sm:$0xf]
        %v6810 = vld [vmem:[#allocation8 + $0x194] sm:$0xf]
        %v6811 = vld [vmem:[#allocation8 + $0x198] sm:$0xf]
        %v6812 = vld [vmem:[#allocation8 + $0x19c] sm:$0xf]
        %v6813 = vld [vmem:[#allocation8 + $0x1a0] sm:$0xf]
        %v6814 = vld [vmem:[#allocation8 + $0x1a4] sm:$0xf]
        %v6815 = vld [vmem:[#allocation8 + $0x1a8] sm:$0xf]
        %v6816 = vld [vmem:[#allocation8 + $0x1ac] sm:$0xf]
        %v6817 = vld [vmem:[#allocation8 + $0x1b0] sm:$0xf]
        %v6818 = vld [vmem:[#allocation8 + $0x1b4] sm:$0xf]
        %v6819 = vld [vmem:[#allocation8 + $0x1b8] sm:$0xf]
        %v6820 = vld [vmem:[#allocation8 + $0x1bc] sm:$0xf]
        %v6821 = vld [vmem:[#allocation8 + $0x1c0] sm:$0xf]
        %v6822 = vld [vmem:[#allocation8 + $0x1c4] sm:$0xf]
        %v6823 = vld [vmem:[#allocation8 + $0x1c8] sm:$0xf]
        %v6824 = vld [vmem:[#allocation8 + $0x1cc] sm:$0xf]
        %v6825 = vld [vmem:[#allocation8 + $0x1d0] sm:$0xf]
        %v6826 = vld [vmem:[#allocation8 + $0x1d4] sm:$0xf]
        %v6827 = vld [vmem:[#allocation8 + $0x1d8] sm:$0xf]
        %v6828 = vld [vmem:[#allocation8 + $0x1dc] sm:$0xf]
        %v6829 = vld [vmem:[#allocation8 + $0x1e0] sm:$0xf]
        %v6830 = vld [vmem:[#allocation8 + $0x1e4] sm:$0xf]
        %v6831 = vld [vmem:[#allocation8 + $0x1e8] sm:$0xf]
        %v6832 = vld [vmem:[#allocation8 + $0x1ec] sm:$0xf]
        %v6833 = vld [vmem:[#allocation8 + $0x1f0] sm:$0xf]
        %v6834 = vld [vmem:[#allocation8 + $0x1f4] sm:$0xf]
        %v6835 = vld [vmem:[#allocation8 + $0x1f8] sm:$0xf]
        %v6836 = vld [vmem:[#allocation8 + $0x1fc] sm:$0xf]
        %v6837 = vld [vmem:[#allocation8 + $0x200] sm:$0xf]
        %v6838 = vld [vmem:[#allocation8 + $0x204] sm:$0xf]
        %v6839 = vld [vmem:[#allocation8 + $0x208] sm:$0xf]
        %v6840 = vld [vmem:[#allocation8 + $0x20c] sm:$0xf]
        %v6841 = vld [vmem:[#allocation8 + $0x210] sm:$0xf]
        %v6842 = vld [vmem:[#allocation8 + $0x214] sm:$0xf]
        %v6843 = vld [vmem:[#allocation8 + $0x218] sm:$0xf]
        %v6844 = vld [vmem:[#allocation8 + $0x21c] sm:$0xf]
        %v6845 = vld [vmem:[#allocation8 + $0x220] sm:$0xf]
        %v6846 = vld [vmem:[#allocation8 + $0x224] sm:$0xf]
        %v6847 = vld [vmem:[#allocation8 + $0x228] sm:$0xf]
        %v6848 = vld [vmem:[#allocation8 + $0x22c] sm:$0xf]
        %v6849 = vld [vmem:[#allocation8 + $0x230] sm:$0xf]
        %v6850 = vld [vmem:[#allocation8 + $0x234] sm:$0xf]
        %v6851 = vld [vmem:[#allocation8 + $0x238] sm:$0xf]
        %v6852 = vld [vmem:[#allocation8 + $0x23c] sm:$0xf]
        %v6853 = vld [vmem:[%s11] sm:$0x1]
        %v6855 = vlaneseq
        %v6856 = vshrl.u32 %v6855, 7
        %v6857 = vsub.s32 0, %v6856
        %v6858 = vrot.slane %v6853, %v6857
        %v6860 = vpack.c.b16 %v6685, %v4342
        %v6861 = vpack.c.b16 %v6686, %v4343
        %v6862 = vpack.c.b16 %v6687, %v4344
        %v6863 = vpack.c.b16 %v6688, %v6685
        %v6864 = vpack.c.b16 %v6689, %v6686
        %v6865 = vpack.c.b16 %v6690, %v6687
        %v6866 = vpack.c.b16 %v6691, %v6688
        %v6867 = vpack.c.b16 %v6692, %v6689
        %v6868 = vpack.c.b16 %v6693, %v6690
        %v6869 = vpack.c.b16 %v6694, %v6691
        %v6870 = vpack.c.b16 %v6695, %v6692
        %v6871 = vpack.c.b16 %v6696, %v6693
        %v6872 = vpack.c.b16 %v6697, %v6694
        %v6873 = vpack.c.b16 %v6698, %v6695
        %v6874 = vpack.c.b16 %v6699, %v6696
        %v6875 = vpack.c.b16 %v6700, %v6697
        %v6876 = vpack.c.b16 %v6701, %v6698
        %v6877 = vpack.c.b16 %v6702, %v6699
        %v6878 = vpack.c.b16 %v6703, %v6700
        %v6879 = vpack.c.b16 %v6704, %v6701
        %v6880 = vpack.c.b16 %v6705, %v6702
        %v6881 = vpack.c.b16 %v6706, %v6703
        %v6882 = vpack.c.b16 %v6707, %v6704
        %v6883 = vpack.c.b16 %v6708, %v6705
        %v6884 = vpack.c.b16 %v4342, %v6706
        %v6885 = vpack.c.b16 %v4343, %v6707
        %v6886 = vpack.c.b16 %v4344, %v6708
        %v7058 = vunpack.c.l.b16 %v6709
        %v7059 = vunpack.c.l.b16 %v6710
        %v7060 = vunpack.c.l.b16 %v6711
        %v7061 = vunpack.c.l.b16 %v6712
        %v7062 = vunpack.c.l.b16 %v6713
        %v7063 = vunpack.c.l.b16 %v6714
        %v7064 = vunpack.c.l.b16 %v6715
        %v7065 = vunpack.c.l.b16 %v6716
        %v7066 = vunpack.c.l.b16 %v6717
        %v7067 = vunpack.c.l.b16 %v6718
        %v7068 = vunpack.c.l.b16 %v6719
        %v7069 = vunpack.c.l.b16 %v6720
        %v7070 = vunpack.c.l.b16 %v6721
        %v7071 = vunpack.c.l.b16 %v6722
        %v7072 = vunpack.c.l.b16 %v6723
        %v7073 = vunpack.c.l.b16 %v6724
        %v7074 = vunpack.c.l.b16 %v6725
        %v7075 = vunpack.c.l.b16 %v6726
        %v7076 = vunpack.c.l.b16 %v6727
        %v7077 = vunpack.c.l.b16 %v6728
        %v7078 = vunpack.c.l.b16 %v6729
        %v7079 = vunpack.c.l.b16 %v6730
        %v7080 = vunpack.c.l.b16 %v6731
        %v7081 = vunpack.c.l.b16 %v6732
        %v7082 = vunpack.c.l.b16 %v6733
        %v7083 = vunpack.c.l.b16 %v6734
        %v7084 = vunpack.c.l.b16 %v6735
        %v7085 = vunpack.c.l.b16 %v6736
        %v7086 = vunpack.c.l.b16 %v6737
        %v7087 = vunpack.c.l.b16 %v6738
        %v7088 = vunpack.c.l.b16 %v6739
        %v7089 = vunpack.c.l.b16 %v6740
        %v7090 = vunpack.c.l.b16 %v6741
        %v7091 = vunpack.c.l.b16 %v6742
        %v7092 = vunpack.c.l.b16 %v6743
        %v7093 = vunpack.c.l.b16 %v6744
        %v7094 = vunpack.c.l.b16 %v6745
        %v7095 = vunpack.c.l.b16 %v6746
        %v7096 = vunpack.c.l.b16 %v6747
        %v7097 = vunpack.c.l.b16 %v6748
        %v7098 = vunpack.c.l.b16 %v6749
        %v7099 = vunpack.c.l.b16 %v6750
        %v7100 = vunpack.c.l.b16 %v6751
        %v7101 = vunpack.c.l.b16 %v6752
        %v7102 = vunpack.c.l.b16 %v6753
        %v7103 = vunpack.c.l.b16 %v6754
        %v7104 = vunpack.c.l.b16 %v6755
        %v7105 = vunpack.c.l.b16 %v6756
        %v7106 = vunpack.c.l.b16 %v6757
        %v7107 = vunpack.c.l.b16 %v6758
        %v7108 = vunpack.c.l.b16 %v6759
        %v7109 = vunpack.c.l.b16 %v6760
        %v7110 = vunpack.c.l.b16 %v6761
        %v7111 = vunpack.c.l.b16 %v6762
        %v7112 = vunpack.c.l.b16 %v6763
        %v7113 = vunpack.c.l.b16 %v6764
        %v7114 = vunpack.c.l.b16 %v6765
        %v7115 = vunpack.c.l.b16 %v6766
        %v7116 = vunpack.c.l.b16 %v6767
        %v7117 = vunpack.c.l.b16 %v6768
        %v7118 = vunpack.c.l.b16 %v6769
        %v7119 = vunpack.c.l.b16 %v6770
        %v7120 = vunpack.c.l.b16 %v6771
        %v7121 = vunpack.c.l.b16 %v6772
        %v7122 = vunpack.c.l.b16 %v6773
        %v7123 = vunpack.c.l.b16 %v6774
        %v7124 = vunpack.c.l.b16 %v6775
        %v7125 = vunpack.c.l.b16 %v6776
        %v7126 = vunpack.c.l.b16 %v6777
        %v7127 = vunpack.c.l.b16 %v6778
        %v7128 = vunpack.c.l.b16 %v6779
        %v7129 = vunpack.c.l.b16 %v6780
        %v7130 = vunpack.c.l.b16 %v6781
        %v7131 = vunpack.c.l.b16 %v6782
        %v7132 = vunpack.c.l.b16 %v6783
        %v7133 = vunpack.c.l.b16 %v6784
        %v7134 = vunpack.c.l.b16 %v6785
        %v7135 = vunpack.c.l.b16 %v6786
        %v7136 = vunpack.c.l.b16 %v6787
        %v7137 = vunpack.c.l.b16 %v6788
        %v7138 = vunpack.c.l.b16 %v6789
        %v7139 = vunpack.c.l.b16 %v6790
        %v7140 = vunpack.c.l.b16 %v6791
        %v7141 = vunpack.c.l.b16 %v6792
        %v7142 = vunpack.c.l.b16 %v6793
        %v7143 = vunpack.c.l.b16 %v6794
        %v7144 = vunpack.c.l.b16 %v6795
        %v7145 = vunpack.c.l.b16 %v6796
        %v7146 = vunpack.c.l.b16 %v6797
        %v7147 = vunpack.c.l.b16 %v6798
        %v7148 = vunpack.c.l.b16 %v6799
        %v7149 = vunpack.c.l.b16 %v6800
        %v7150 = vunpack.c.l.b16 %v6801
        %v7151 = vunpack.c.l.b16 %v6802
        %v7152 = vunpack.c.l.b16 %v6803
        %v7153 = vunpack.c.l.b16 %v6804
        %v7154 = vunpack.c.l.b16 %v6805
        %v7155 = vunpack.c.l.b16 %v6806
        %v7156 = vunpack.c.l.b16 %v6807
        %v7157 = vunpack.c.l.b16 %v6808
        %v7158 = vunpack.c.l.b16 %v6809
        %v7159 = vunpack.c.l.b16 %v6810
        %v7160 = vunpack.c.l.b16 %v6811
        %v7161 = vunpack.c.l.b16 %v6812
        %v7162 = vunpack.c.l.b16 %v6813
        %v7163 = vunpack.c.l.b16 %v6814
        %v7164 = vunpack.c.l.b16 %v6815
        %v7165 = vunpack.c.l.b16 %v6816
        %v7166 = vunpack.c.l.b16 %v6817
        %v7167 = vunpack.c.l.b16 %v6818
        %v7168 = vunpack.c.l.b16 %v6819
        %v7169 = vunpack.c.l.b16 %v6820
        %v7170 = vunpack.c.l.b16 %v6821
        %v7171 = vunpack.c.l.b16 %v6822
        %v7172 = vunpack.c.l.b16 %v6823
        %v7173 = vunpack.c.l.b16 %v6824
        %v7174 = vunpack.c.l.b16 %v6825
        %v7175 = vunpack.c.l.b16 %v6826
        %v7176 = vunpack.c.l.b16 %v6827
        %v7177 = vunpack.c.l.b16 %v6828
        %v7178 = vunpack.c.l.b16 %v6829
        %v7179 = vunpack.c.l.b16 %v6830
        %v7180 = vunpack.c.l.b16 %v6831
        %v7181 = vunpack.c.l.b16 %v6832
        %v7182 = vunpack.c.l.b16 %v6833
        %v7183 = vunpack.c.l.b16 %v6834
        %v7184 = vunpack.c.l.b16 %v6835
        %v7185 = vunpack.c.l.b16 %v6836
        %v7186 = vunpack.c.l.b16 %v6837
        %v7187 = vunpack.c.l.b16 %v6838
        %v7188 = vunpack.c.l.b16 %v6839
        %v7189 = vunpack.c.l.b16 %v6840
        %v7190 = vunpack.c.l.b16 %v6841
        %v7191 = vunpack.c.l.b16 %v6842
        %v7192 = vunpack.c.l.b16 %v6843
        %v7193 = vunpack.c.l.b16 %v6844
        %v7194 = vunpack.c.l.b16 %v6845
        %v7195 = vunpack.c.l.b16 %v6846
        %v7196 = vunpack.c.l.b16 %v6847
        %v7197 = vunpack.c.l.b16 %v6848
        %v7198 = vunpack.c.l.b16 %v6849
        %v7199 = vunpack.c.l.b16 %v6850
        %v7200 = vunpack.c.l.b16 %v6851
        %v7201 = vunpack.c.l.b16 %v6852
        %v7202 = vpack.c.b16 %v7059, %v7058
        %v7203 = vpack.c.b16 %v7061, %v7060
        %v7204 = vpack.c.b16 %v7063, %v7062
        %v7205 = vpack.c.b16 %v7065, %v7064
        %v7206 = vpack.c.b16 %v7067, %v7066
        %v7207 = vpack.c.b16 %v7069, %v7068
        %v7208 = vpack.c.b16 %v7071, %v7070
        %v7209 = vpack.c.b16 %v7073, %v7072
        %v7210 = vpack.c.b16 %v7075, %v7074
        %v7211 = vpack.c.b16 %v7077, %v7076
        %v7212 = vpack.c.b16 %v7079, %v7078
        %v7213 = vpack.c.b16 %v7081, %v7080
        %v7214 = vpack.c.b16 %v7083, %v7082
        %v7215 = vpack.c.b16 %v7085, %v7084
        %v7216 = vpack.c.b16 %v7087, %v7086
        %v7217 = vpack.c.b16 %v7089, %v7088
        %v7218 = vpack.c.b16 %v7091, %v7090
        %v7219 = vpack.c.b16 %v7093, %v7092
        %v7220 = vpack.c.b16 %v7095, %v7094
        %v7221 = vpack.c.b16 %v7097, %v7096
        %v7222 = vpack.c.b16 %v7099, %v7098
        %v7223 = vpack.c.b16 %v7101, %v7100
        %v7224 = vpack.c.b16 %v7103, %v7102
        %v7225 = vpack.c.b16 %v7105, %v7104
        %v7226 = vpack.c.b16 %v7107, %v7106
        %v7227 = vpack.c.b16 %v7109, %v7108
        %v7228 = vpack.c.b16 %v7111, %v7110
        %v7229 = vpack.c.b16 %v7113, %v7112
        %v7230 = vpack.c.b16 %v7115, %v7114
        %v7231 = vpack.c.b16 %v7117, %v7116
        %v7232 = vpack.c.b16 %v7119, %v7118
        %v7233 = vpack.c.b16 %v7121, %v7120
        %v7234 = vpack.c.b16 %v7123, %v7122
        %v7235 = vpack.c.b16 %v7125, %v7124
        %v7236 = vpack.c.b16 %v7127, %v7126
        %v7237 = vpack.c.b16 %v7129, %v7128
        %v7238 = vpack.c.b16 %v7131, %v7130
        %v7239 = vpack.c.b16 %v7133, %v7132
        %v7240 = vpack.c.b16 %v7135, %v7134
        %v7241 = vpack.c.b16 %v7137, %v7136
        %v7242 = vpack.c.b16 %v7139, %v7138
        %v7243 = vpack.c.b16 %v7141, %v7140
        %v7244 = vpack.c.b16 %v7143, %v7142
        %v7245 = vpack.c.b16 %v7145, %v7144
        %v7246 = vpack.c.b16 %v7147, %v7146
        %v7247 = vpack.c.b16 %v7149, %v7148
        %v7248 = vpack.c.b16 %v7151, %v7150
        %v7249 = vpack.c.b16 %v7153, %v7152
        %v7250 = vpack.c.b16 %v7155, %v7154
        %v7251 = vpack.c.b16 %v7157, %v7156
        %v7252 = vpack.c.b16 %v7159, %v7158
        %v7253 = vpack.c.b16 %v7161, %v7160
        %v7254 = vpack.c.b16 %v7163, %v7162
        %v7255 = vpack.c.b16 %v7165, %v7164
        %v7256 = vpack.c.b16 %v7167, %v7166
        %v7257 = vpack.c.b16 %v7169, %v7168
        %v7258 = vpack.c.b16 %v7171, %v7170
        %v7259 = vpack.c.b16 %v7173, %v7172
        %v7260 = vpack.c.b16 %v7175, %v7174
        %v7261 = vpack.c.b16 %v7177, %v7176
        %v7262 = vpack.c.b16 %v7179, %v7178
        %v7263 = vpack.c.b16 %v7181, %v7180
        %v7264 = vpack.c.b16 %v7183, %v7182
        %v7265 = vpack.c.b16 %v7185, %v7184
        %v7266 = vpack.c.b16 %v7187, %v7186
        %v7267 = vpack.c.b16 %v7189, %v7188
        %v7268 = vpack.c.b16 %v7191, %v7190
        %v7269 = vpack.c.b16 %v7193, %v7192
        %v7270 = vpack.c.b16 %v7195, %v7194
        %v7271 = vpack.c.b16 %v7197, %v7196
        %v7272 = vpack.c.b16 %v7199, %v7198
        %v7273 = vpack.c.b16 %v7201, %v7200
        %7346 = vmatprep.subr.bf16.mxu0 0
        %7347 = vmatpush1.bf16.msra.mxu0 %v7202
        %7348 = vmatprep.subr.bf16.mxu0 0
        %7349 = vmatpush1.bf16.msra.mxu0 %v7203
        %7350 = vmatprep.subr.bf16.mxu0 0
        %7351 = vmatpush1.bf16.msra.mxu0 %v7204
        %7352 = vmatprep.subr.bf16.mxu0 0
        %7353 = vmatpush1.bf16.msra.mxu0 %v7205
        %7354 = vmatprep.subr.bf16.mxu0 0
        %7355 = vmatpush1.bf16.msra.mxu0 %v7206
        %7356 = vmatprep.subr.bf16.mxu0 0
        %7357 = vmatpush1.bf16.msra.mxu0 %v7207
        %7358 = vmatprep.subr.bf16.mxu0 0
        %7359 = vmatpush1.bf16.msra.mxu0 %v7208
        %7360 = vmatprep.subr.bf16.mxu0 0
        %7361 = vmatpush1.bf16.msra.mxu0 %v7209
        %7362 = vmatprep.subr.bf16.mxu0 0
        %7363 = vmatpush1.bf16.msra.mxu0 %v7210
        %7364 = vmatprep.subr.bf16.mxu0 0
        %7365 = vmatpush1.bf16.msra.mxu0 %v7211
        %7366 = vmatprep.subr.bf16.mxu0 0
        %7367 = vmatpush1.bf16.msra.mxu0 %v7212
        %7368 = vmatprep.subr.bf16.mxu0 0
        %7369 = vmatpush1.bf16.msra.mxu0 %v7213
        %7370 = vmatprep.subr.bf16.mxu0 0
        %7371 = vmatpush1.bf16.msra.mxu0 %v7214
        %7372 = vmatprep.subr.bf16.mxu0 0
        %7373 = vmatpush1.bf16.msra.mxu0 %v7215
        %7374 = vmatprep.subr.bf16.mxu0 0
        %7375 = vmatpush1.bf16.msra.mxu0 %v7216
        %7376 = vmatprep.subr.bf16.mxu0 0
        %7377 = vmatpush1.bf16.msra.mxu0 %v7217
        %7378 = vmatprep.mubr.bf16.mxu0 %v6861
        %7379 = vmatmul.mubr.bf16.gmra.mrb[0].mxu0 %v6860
        %v7380 = vpop.f32.mrb[0].mxu0
        %v7381 = vadd.f32 %v6858, %v7380
        %v7382 = vpop.f32.mrb[0].mxu0
        %v7383 = vpop.f32.mrb[0].mxu0
        %v7384 = vadd.f32 %v6858, %v7383
        %v7385 = vpop.f32.mrb[0].mxu0
        %7386 = vmatprep.mubr.bf16.mxu0 %v6867
        %7387 = vmatmul.mubr.bf16.gmra.mrb[0].mxu0 %v6866
        %v7388 = vpop.f32.mrb[0].mxu0
        %v7389 = vadd.f32 %v6858, %v7388
        %v7390 = vpop.f32.mrb[0].mxu0
        %v7391 = vpop.f32.mrb[0].mxu0
        %v7392 = vadd.f32 %v6858, %v7391
        %v7393 = vpop.f32.mrb[0].mxu0
        %7394 = vmatprep.mubr.bf16.mxu0 %v6873
        %7395 = vmatmul.mubr.bf16.gmra.mrb[0].mxu0 %v6872
        %v7396 = vpop.f32.mrb[0].mxu0
        %v7397 = vadd.f32 %v6858, %v7396
        %v7398 = vpop.f32.mrb[0].mxu0
        %v7399 = vpop.f32.mrb[0].mxu0
        %v7400 = vadd.f32 %v6858, %v7399
        %v7401 = vpop.f32.mrb[0].mxu0
        %7402 = vmatprep.mubr.bf16.mxu0 %v6879
        %7403 = vmatmul.mubr.bf16.gmra.mrb[0].mxu0 %v6878
        %v7404 = vpop.f32.mrb[0].mxu0
        %v7405 = vadd.f32 %v6858, %v7404
        %v7406 = vpop.f32.mrb[0].mxu0
        %v7407 = vpop.f32.mrb[0].mxu0
        %v7408 = vadd.f32 %v6858, %v7407
        %v7409 = vpop.f32.mrb[0].mxu0
        %7410 = vdwg.mxu0
        %7411 = vmatprep.subr.bf16.mxu0 0
        %7412 = vmatpush1.bf16.msra.mxu0 %v7218
        %7413 = vmatprep.subr.bf16.mxu0 0
        %7414 = vmatpush1.bf16.msra.mxu0 %v7219
        %7415 = vmatprep.subr.bf16.mxu0 0
        %7416 = vmatpush1.bf16.msra.mxu0 %v7220
        %7417 = vmatprep.subr.bf16.mxu0 0
        %7418 = vmatpush1.bf16.msra.mxu0 %v7221
        %7419 = vmatprep.subr.bf16.mxu0 0
        %7420 = vmatpush1.bf16.msra.mxu0 %v7222
        %7421 = vmatprep.subr.bf16.mxu0 0
        %7422 = vmatpush1.bf16.msra.mxu0 %v7223
        %7423 = vmatprep.subr.bf16.mxu0 0
        %7424 = vmatpush1.bf16.msra.mxu0 %v7224
        %7425 = vmatprep.subr.bf16.mxu0 0
        %7426 = vmatpush1.bf16.msra.mxu0 %v7225
        %7427 = vmatprep.subr.bf16.mxu0 0
        %7428 = vmatpush1.bf16.msra.mxu0 %v7226
        %7429 = vmatprep.subr.bf16.mxu0 0
        %7430 = vmatpush1.bf16.msra.mxu0 %v7227
        %7431 = vmatprep.subr.bf16.mxu0 0
        %7432 = vmatpush1.bf16.msra.mxu0 %v7228
        %7433 = vmatprep.subr.bf16.mxu0 0
        %7434 = vmatpush1.bf16.msra.mxu0 %v7229
        %7435 = vmatprep.subr.bf16.mxu0 0
        %7436 = vmatpush1.bf16.msra.mxu0 %v7230
        %7437 = vmatprep.subr.bf16.mxu0 0
        %7438 = vmatpush1.bf16.msra.mxu0 %v7231
        %7439 = vmatprep.subr.bf16.mxu0 0
        %7440 = vmatpush1.bf16.msra.mxu0 %v7232
        %7441 = vmatprep.subr.bf16.mxu0 0
        %7442 = vmatpush1.bf16.msra.mxu0 %v7233
        %7443 = vmatprep.mubr.bf16.mxu0 %v6863
        %7444 = vmatmul.mubr.bf16.gmra.mrb[0].mxu0 %v6862
        %v7445 = vpop.f32.mrb[0].mxu0
        %v7446 = vadd.f32 %v7381, %v7445
        %v7447 = vpop.f32.mrb[0].mxu0
        %v7448 = vpop.f32.mrb[0].mxu0
        %v7449 = vadd.f32 %v7384, %v7448
        %v7450 = vpop.f32.mrb[0].mxu0
        %7451 = vmatprep.mubr.bf16.mxu0 %v6869
        %7452 = vmatmul.mubr.bf16.gmra.mrb[0].mxu0 %v6868
        %v7453 = vpop.f32.mrb[0].mxu0
        %v7454 = vadd.f32 %v7389, %v7453
        %v7455 = vpop.f32.mrb[0].mxu0
        %v7456 = vpop.f32.mrb[0].mxu0
        %v7457 = vadd.f32 %v7392, %v7456
        %v7458 = vpop.f32.mrb[0].mxu0
        %7459 = vmatprep.mubr.bf16.mxu0 %v6875
        %7460 = vmatmul.mubr.bf16.gmra.mrb[0].mxu0 %v6874
        %v7461 = vpop.f32.mrb[0].mxu0
        %v7462 = vadd.f32 %v7397, %v7461
        %v7463 = vpop.f32.mrb[0].mxu0
        %v7464 = vpop.f32.mrb[0].mxu0
        %v7465 = vadd.f32 %v7400, %v7464
        %v7466 = vpop.f32.mrb[0].mxu0
        %7467 = vmatprep.mubr.bf16.mxu0 %v6881
        %7468 = vmatmul.mubr.bf16.gmra.mrb[0].mxu0 %v6880
        %v7469 = vpop.f32.mrb[0].mxu0
        %v7470 = vadd.f32 %v7405, %v7469
        %v7471 = vpop.f32.mrb[0].mxu0
        %v7472 = vpop.f32.mrb[0].mxu0
        %v7473 = vadd.f32 %v7408, %v7472
        %v7474 = vpop.f32.mrb[0].mxu0
        %7475 = vdwg.mxu0
        %7476 = vmatprep.subr.bf16.mxu0 0
        %7477 = vmatpush1.bf16.msra.mxu0 %v7234
        %7478 = vmatprep.subr.bf16.mxu0 0
        %7479 = vmatpush1.bf16.msra.mxu0 %v7235
        %7480 = vmatprep.subr.bf16.mxu0 0
        %7481 = vmatpush1.bf16.msra.mxu0 %v7236
        %7482 = vmatprep.subr.bf16.mxu0 0
        %7483 = vmatpush1.bf16.msra.mxu0 %v7237
        %7484 = vmatprep.subr.bf16.mxu0 0
        %7485 = vmatpush1.bf16.msra.mxu0 %v7238
        %7486 = vmatprep.subr.bf16.mxu0 0
        %7487 = vmatpush1.bf16.msra.mxu0 %v7239
        %7488 = vmatprep.subr.bf16.mxu0 0
        %7489 = vmatpush1.bf16.msra.mxu0 %v7240
        %7490 = vmatprep.subr.bf16.mxu0 0
        %7491 = vmatpush1.bf16.msra.mxu0 %v7241
        %7492 = vmatprep.subr.bf16.mxu0 0
        %7493 = vmatpush1.bf16.msra.mxu0 %v7242
        %7494 = vmatprep.subr.bf16.mxu0 0
        %7495 = vmatpush1.bf16.msra.mxu0 %v7243
        %7496 = vmatprep.subr.bf16.mxu0 0
        %7497 = vmatpush1.bf16.msra.mxu0 %v7244
        %7498 = vmatprep.subr.bf16.mxu0 0
        %7499 = vmatpush1.bf16.msra.mxu0 %v7245
        %7500 = vmatprep.subr.bf16.mxu0 0
        %7501 = vmatpush1.bf16.msra.mxu0 %v7246
        %7502 = vmatprep.subr.bf16.mxu0 0
        %7503 = vmatpush1.bf16.msra.mxu0 %v7247
        %7504 = vmatprep.subr.bf16.mxu0 0
        %7505 = vmatpush1.bf16.msra.mxu0 %v7248
        %7506 = vmatprep.subr.bf16.mxu0 0
        %7507 = vmatpush1.bf16.msra.mxu0 %v7249
        %7508 = vmatprep.mubr.bf16.mxu0 %v6865
        %7509 = vmatmul.mubr.bf16.gmra.mrb[0].mxu0 %v6864
        %v7510 = vpop.f32.mrb[0].mxu0
        %v7511 = vadd.f32 %v7446, %v7510
        %v7512 = vpop.f32.mrb[0].mxu0
        %v7513 = vpop.f32.mrb[0].mxu0
        %v7514 = vadd.f32 %v7449, %v7513
        %v7515 = vpop.f32.mrb[0].mxu0
        %7516 = vmatprep.mubr.bf16.mxu0 %v6871
        %7517 = vmatmul.mubr.bf16.gmra.mrb[0].mxu0 %v6870
        %v7518 = vpop.f32.mrb[0].mxu0
        %v7519 = vadd.f32 %v7454, %v7518
        %v7520 = vpop.f32.mrb[0].mxu0
        %v7521 = vpop.f32.mrb[0].mxu0
        %v7522 = vadd.f32 %v7457, %v7521
        %v7523 = vpop.f32.mrb[0].mxu0
        %7524 = vmatprep.mubr.bf16.mxu0 %v6877
        %7525 = vmatmul.mubr.bf16.gmra.mrb[0].mxu0 %v6876
        %v7526 = vpop.f32.mrb[0].mxu0
        %v7527 = vadd.f32 %v7462, %v7526
        %v7528 = vpop.f32.mrb[0].mxu0
        %v7529 = vpop.f32.mrb[0].mxu0
        %v7530 = vadd.f32 %v7465, %v7529
        %v7531 = vpop.f32.mrb[0].mxu0
        %7532 = vmatprep.mubr.bf16.mxu0 %v6883
        %7533 = vmatmul.mubr.bf16.gmra.mrb[0].mxu0 %v6882
        %v7534 = vpop.f32.mrb[0].mxu0
        %v7535 = vadd.f32 %v7470, %v7534
        %v7536 = vpop.f32.mrb[0].mxu0
        %v7537 = vpop.f32.mrb[0].mxu0
        %v7538 = vadd.f32 %v7473, %v7537
        %v7539 = vpop.f32.mrb[0].mxu0
        %7540 = vdwg.mxu0
        %7541 = vmatprep.subr.bf16.mxu0 0
        %7542 = vmatpush1.bf16.msra.mxu0 %v7250
        %7543 = vmatprep.subr.bf16.mxu0 0
        %7544 = vmatpush1.bf16.msra.mxu0 %v7251
        %7545 = vmatprep.subr.bf16.mxu0 0
        %7546 = vmatpush1.bf16.msra.mxu0 %v7252
        %7547 = vmatprep.subr.bf16.mxu0 0
        %7548 = vmatpush1.bf16.msra.mxu0 %v7253
        %7549 = vmatprep.subr.bf16.mxu0 0
        %7550 = vmatpush1.bf16.msra.mxu0 %v7254
        %7551 = vmatprep.subr.bf16.mxu0 0
        %7552 = vmatpush1.bf16.msra.mxu0 %v7255
        %7553 = vmatprep.subr.bf16.mxu0 0
        %7554 = vmatpush1.bf16.msra.mxu0 %v7256
        %7555 = vmatprep.subr.bf16.mxu0 0
        %7556 = vmatpush1.bf16.msra.mxu0 %v7257
        %7557 = vmatprep.subr.bf16.mxu0 0
        %7558 = vmatpush1.bf16.msra.mxu0 %v7258
        %7559 = vmatprep.subr.bf16.mxu0 0
        %7560 = vmatpush1.bf16.msra.mxu0 %v7259
        %7561 = vmatprep.subr.bf16.mxu0 0
        %7562 = vmatpush1.bf16.msra.mxu0 %v7260
        %7563 = vmatprep.subr.bf16.mxu0 0
        %7564 = vmatpush1.bf16.msra.mxu0 %v7261
        %7565 = vmatprep.subr.bf16.mxu0 0
        %7566 = vmatpush1.bf16.msra.mxu0 %v7262
        %7567 = vmatprep.subr.bf16.mxu0 0
        %7568 = vmatpush1.bf16.msra.mxu0 %v7263
        %7569 = vmatprep.subr.bf16.mxu0 0
        %7570 = vmatpush1.bf16.msra.mxu0 %v7264
        %7571 = vmatprep.subr.bf16.mxu0 0
        %7572 = vmatpush1.bf16.msra.mxu0 %v7265
        %7573 = vmatprep.mubr.bf16.mxu0 %v6867
        %7574 = vmatmul.mubr.bf16.gmra.mrb[0].mxu0 %v6866
        %v7575 = vpop.f32.mrb[0].mxu0
        %v7576 = vadd.f32 %v7511, %v7575
        %v7577 = vpop.f32.mrb[0].mxu0
        %v7578 = vpop.f32.mrb[0].mxu0
        %v7579 = vadd.f32 %v7514, %v7578
        %v7580 = vpop.f32.mrb[0].mxu0
        %7581 = vmatprep.mubr.bf16.mxu0 %v6873
        %7582 = vmatmul.mubr.bf16.gmra.mrb[0].mxu0 %v6872
        %v7583 = vpop.f32.mrb[0].mxu0
        %v7584 = vadd.f32 %v7519, %v7583
        %v7585 = vpop.f32.mrb[0].mxu0
        %v7586 = vpop.f32.mrb[0].mxu0
        %v7587 = vadd.f32 %v7522, %v7586
        %v7588 = vpop.f32.mrb[0].mxu0
        %7589 = vmatprep.mubr.bf16.mxu0 %v6879
        %7590 = vmatmul.mubr.bf16.gmra.mrb[0].mxu0 %v6878
        %v7591 = vpop.f32.mrb[0].mxu0
        %v7592 = vadd.f32 %v7527, %v7591
        %v7593 = vpop.f32.mrb[0].mxu0
        %v7594 = vpop.f32.mrb[0].mxu0
        %v7595 = vadd.f32 %v7530, %v7594
        %v7596 = vpop.f32.mrb[0].mxu0
        %7597 = vmatprep.mubr.bf16.mxu0 %v6885
        %7598 = vmatmul.mubr.bf16.gmra.mrb[0].mxu0 %v6884
        %v7599 = vpop.f32.mrb[0].mxu0
        %v7600 = vadd.f32 %v7535, %v7599
        %v7601 = vpop.f32.mrb[0].mxu0
        %v7602 = vpop.f32.mrb[0].mxu0
        %v7603 = vadd.f32 %v7538, %v7602
        %v7604 = vpop.f32.mrb[0].mxu0
        %7605 = vdwg.mxu0
        %7606 = vmatprep.subr.bf16.mxu0 0
        %7607 = vmatpush1.bf16.msra.mxu0 %v7266
        %7608 = vmatprep.subr.bf16.mxu0 0
        %7609 = vmatpush1.bf16.msra.mxu0 %v7267
        %7610 = vmatprep.subr.bf16.mxu0 0
        %7611 = vmatpush1.bf16.msra.mxu0 %v7268
        %7612 = vmatprep.subr.bf16.mxu0 0
        %7613 = vmatpush1.bf16.msra.mxu0 %v7269
        %7614 = vmatprep.subr.bf16.mxu0 0
        %7615 = vmatpush1.bf16.msra.mxu0 %v7270
        %7616 = vmatprep.subr.bf16.mxu0 0
        %7617 = vmatpush1.bf16.msra.mxu0 %v7271
        %7618 = vmatprep.subr.bf16.mxu0 0
        %7619 = vmatpush1.bf16.msra.mxu0 %v7272
        %7620 = vmatprep.subr.bf16.mxu0 0
        %7621 = vmatpush1.bf16.msra.mxu0 %v7273
        %7622 = vmatprep.subr.bf16.mxu0 0
        %7623 = vmatpush1.bf16.msra.mxu0 0
        %7624 = vmatprep.subr.bf16.mxu0 0
        %7625 = vmatpush1.bf16.msra.mxu0 0
        %7626 = vmatprep.subr.bf16.mxu0 0
        %7627 = vmatpush1.bf16.msra.mxu0 0
        %7628 = vmatprep.subr.bf16.mxu0 0
        %7629 = vmatpush1.bf16.msra.mxu0 0
        %7630 = vmatprep.subr.bf16.mxu0 0
        %7631 = vmatpush1.bf16.msra.mxu0 0
        %7632 = vmatprep.subr.bf16.mxu0 0
        %7633 = vmatpush1.bf16.msra.mxu0 0
        %7634 = vmatprep.subr.bf16.mxu0 0
        %7635 = vmatpush1.bf16.msra.mxu0 0
        %7636 = vmatprep.subr.bf16.mxu0 0
        %7637 = vmatpush1.bf16.msra.mxu0 0
        %7638 = vmatprep.mubr.bf16.mxu0 0
        %7639 = vmatmul.mubr.bf16.gmra.mrb[0].mxu0 %v6868
        %v7640 = vpop.f32.mrb[0].mxu0
        %v7641 = vadd.f32 %v7576, %v7640
        %v7642 = vpop.f32.mrb[0].mxu0
        %v7643 = vpop.f32.mrb[0].mxu0
        %v7644 = vadd.f32 %v7579, %v7643
        %v7645 = vpop.f32.mrb[0].mxu0
        %7646 = vmatprep.mubr.bf16.mxu0 0
        %7647 = vmatmul.mubr.bf16.gmra.mrb[0].mxu0 %v6874
        %v7648 = vpop.f32.mrb[0].mxu0
        %v7649 = vadd.f32 %v7584, %v7648
        %v7650 = vpop.f32.mrb[0].mxu0
        %v7651 = vpop.f32.mrb[0].mxu0
        %v7652 = vadd.f32 %v7587, %v7651
        %v7653 = vpop.f32.mrb[0].mxu0
        %7654 = vmatprep.mubr.bf16.mxu0 0
        %7655 = vmatmul.mubr.bf16.gmra.mrb[0].mxu0 %v6880
        %v7656 = vpop.f32.mrb[0].mxu0
        %v7657 = vadd.f32 %v7592, %v7656
        %v7658 = vpop.f32.mrb[0].mxu0
        %v7659 = vpop.f32.mrb[0].mxu0
        %v7660 = vadd.f32 %v7595, %v7659
        %v7661 = vpop.f32.mrb[0].mxu0
        %7662 = vmatprep.mubr.bf16.mxu0 0
        %7663 = vmatmul.mubr.bf16.gmra.mrb[0].mxu0 %v6886
        %v7664 = vpop.f32.mrb[0].mxu0
        %v7665 = vadd.f32 %v7600, %v7664
        %v7666 = vpop.f32.mrb[0].mxu0
        %v7667 = vpop.f32.mrb[0].mxu0
        %v7668 = vadd.f32 %v7603, %v7667
        %v7669 = vpop.f32.mrb[0].mxu0
        %7670 = vdwg.mxu0
        %v7671 = vmax.f32 %v7641, 0.0
        %v7672 = vmax.f32 %v7644, 0.0
        %v7673 = vmax.f32 %v7649, 0.0
        %v7674 = vmax.f32 %v7652, 0.0
        %v7675 = vmax.f32 %v7657, 0.0
        %v7676 = vmax.f32 %v7660, 0.0
        %v7677 = vmax.f32 %v7665, 0.0
        %v7678 = vmax.f32 %v7668, 0.0
        %v7679 = vpack.c.bf16 %v7672, %v7671
        %v7680 = vpack.c.bf16 %v7674, %v7673
        %v7681 = vpack.c.bf16 %v7676, %v7675
        %v7682 = vpack.c.bf16 %v7678, %v7677
        %v7683 = vld [vmem:[%s12] sm:$0xf]
        %v7684 = vld [vmem:[%s12 + $0x4] sm:$0xf]
        %v7685 = vld [vmem:[%s12 + $0x8] sm:$0xf]
        %v7686 = vld [vmem:[%s12 + $0xc] sm:$0xf]
        %v7687 = vld [vmem:[%s12 + $0x10] sm:$0xf]
        %v7688 = vld [vmem:[%s12 + $0x14] sm:$0xf]
        %v7689 = vld [vmem:[%s12 + $0x18] sm:$0xf]
        %v7690 = vld [vmem:[%s12 + $0x1c] sm:$0xf]
        %v7691 = vld [vmem:[%s12 + $0x20] sm:$0xf]
        %v7692 = vld [vmem:[%s12 + $0x24] sm:$0xf]
        %v7693 = vld [vmem:[%s12 + $0x28] sm:$0xf]
        %v7694 = vld [vmem:[%s12 + $0x2c] sm:$0xf]
        %v7695 = vld [vmem:[%s12 + $0x30] sm:$0xf]
        %v7696 = vld [vmem:[%s12 + $0x34] sm:$0xf]
        %v7697 = vld [vmem:[%s12 + $0x38] sm:$0xf]
        %v7698 = vld [vmem:[%s12 + $0x3c] sm:$0xf]
        %v7699 = vld [vmem:[%s13] sm:$0x1]
        %v7701 = vlaneseq
        %v7702 = vshrl.u32 %v7701, 7
        %v7703 = vsub.s32 0, %v7702
        %v7704 = vrot.slane %v7699, %v7703
        %v7722 = vunpack.c.l.b16 %v7683
        %v7723 = vunpack.c.l.b16 %v7684
        %v7724 = vunpack.c.l.b16 %v7685
        %v7725 = vunpack.c.l.b16 %v7686
        %v7726 = vunpack.c.l.b16 %v7687
        %v7727 = vunpack.c.l.b16 %v7688
        %v7728 = vunpack.c.l.b16 %v7689
        %v7729 = vunpack.c.l.b16 %v7690
        %v7730 = vunpack.c.l.b16 %v7691
        %v7731 = vunpack.c.l.b16 %v7692
        %v7732 = vunpack.c.l.b16 %v7693
        %v7733 = vunpack.c.l.b16 %v7694
        %v7734 = vunpack.c.l.b16 %v7695
        %v7735 = vunpack.c.l.b16 %v7696
        %v7736 = vunpack.c.l.b16 %v7697
        %v7737 = vunpack.c.l.b16 %v7698
        %v7738 = vpack.c.b16 %v7723, %v7722
        %v7739 = vpack.c.b16 %v7725, %v7724
        %v7740 = vpack.c.b16 %v7727, %v7726
        %v7741 = vpack.c.b16 %v7729, %v7728
        %v7742 = vpack.c.b16 %v7731, %v7730
        %v7743 = vpack.c.b16 %v7733, %v7732
        %v7744 = vpack.c.b16 %v7735, %v7734
        %v7745 = vpack.c.b16 %v7737, %v7736
        %7754 = vmatprep.subr.bf16.mxu0 0
        %7755 = vmatpush1.bf16.msra.mxu0 %v7738
        %7756 = vmatprep.subr.bf16.mxu0 0
        %7757 = vmatpush1.bf16.msra.mxu0 %v7739
        %7758 = vmatprep.subr.bf16.mxu0 0
        %7759 = vmatpush1.bf16.msra.mxu0 %v7740
        %7760 = vmatprep.subr.bf16.mxu0 0
        %7761 = vmatpush1.bf16.msra.mxu0 %v7741
        %7762 = vmatprep.subr.bf16.mxu0 0
        %7763 = vmatpush1.bf16.msra.mxu0 %v7742
        %7764 = vmatprep.subr.bf16.mxu0 0
        %7765 = vmatpush1.bf16.msra.mxu0 %v7743
        %7766 = vmatprep.subr.bf16.mxu0 0
        %7767 = vmatpush1.bf16.msra.mxu0 %v7744
        %7768 = vmatprep.subr.bf16.mxu0 0
        %7769 = vmatpush1.bf16.msra.mxu0 %v7745
        %7770 = vmatprep.subr.bf16.mxu0 0
        %7771 = vmatpush1.bf16.msra.mxu0 0
        %7772 = vmatprep.subr.bf16.mxu0 0
        %7773 = vmatpush1.bf16.msra.mxu0 0
        %7774 = vmatprep.subr.bf16.mxu0 0
        %7775 = vmatpush1.bf16.msra.mxu0 0
        %7776 = vmatprep.subr.bf16.mxu0 0
        %7777 = vmatpush1.bf16.msra.mxu0 0
        %7778 = vmatprep.subr.bf16.mxu0 0
        %7779 = vmatpush1.bf16.msra.mxu0 0
        %7780 = vmatprep.subr.bf16.mxu0 0
        %7781 = vmatpush1.bf16.msra.mxu0 0
        %7782 = vmatprep.subr.bf16.mxu0 0
        %7783 = vmatpush1.bf16.msra.mxu0 0
        %7784 = vmatprep.subr.bf16.mxu0 0
        %7785 = vmatpush1.bf16.msra.mxu0 0
        %7786 = vmatprep.mubr.bf16.mxu0 0
        %7787 = vmatmul.mubr.bf16.gmra.mrb[0].mxu0 %v7679
        %v7788 = vpop.f32.mrb[0].mxu0
        %v7789 = vadd.f32 %v7704, %v7788
        %v7790 = vpop.f32.mrb[0].mxu0
        %v7791 = vpop.f32.mrb[0].mxu0
        %v7792 = vadd.f32 %v7704, %v7791
        %v7793 = vpop.f32.mrb[0].mxu0
        %7794 = vmatprep.mubr.bf16.mxu0 0
        %7795 = vmatmul.mubr.bf16.gmra.mrb[0].mxu0 %v7680
        %v7796 = vpop.f32.mrb[0].mxu0
        %v7797 = vadd.f32 %v7704, %v7796
        %v7798 = vpop.f32.mrb[0].mxu0
        %v7799 = vpop.f32.mrb[0].mxu0
        %v7800 = vadd.f32 %v7704, %v7799
        %v7801 = vpop.f32.mrb[0].mxu0
        %7802 = vmatprep.mubr.bf16.mxu0 0
        %7803 = vmatmul.mubr.bf16.gmra.mrb[0].mxu0 %v7681
        %v7804 = vpop.f32.mrb[0].mxu0
        %v7805 = vadd.f32 %v7704, %v7804
        %v7806 = vpop.f32.mrb[0].mxu0
        %v7807 = vpop.f32.mrb[0].mxu0
        %v7808 = vadd.f32 %v7704, %v7807
        %v7809 = vpop.f32.mrb[0].mxu0
        %7810 = vmatprep.mubr.bf16.mxu0 0
        %7811 = vmatmul.mubr.bf16.gmra.mrb[0].mxu0 %v7682
        %v7812 = vpop.f32.mrb[0].mxu0
        %v7813 = vadd.f32 %v7704, %v7812
        %v7814 = vpop.f32.mrb[0].mxu0
        %v7815 = vpop.f32.mrb[0].mxu0
        %v7816 = vadd.f32 %v7704, %v7815
        %v7817 = vpop.f32.mrb[0].mxu0
        %7818 = vdwg.mxu0
        %v7819 = vxor.u32 %v7789, 2147483648
        %v7820 = vxor.u32 %v7792, 2147483648
        %v7821 = vxor.u32 %v7797, 2147483648
        %v7822 = vxor.u32 %v7800, 2147483648
        %v7823 = vxor.u32 %v7805, 2147483648
        %v7824 = vxor.u32 %v7808, 2147483648
        %v7825 = vxor.u32 %v7813, 2147483648
        %v7826 = vxor.u32 %v7816, 2147483648
        %v7827 = vmul.f32 %v7819, 1.442695
        %v7828 = vpow.pop %v7827
        %v7829 = vmul.f32 %v7820, 1.442695
        %v7830 = vpow.pop %v7829
        %v7831 = vmul.f32 %v7821, 1.442695
        %v7832 = vpow.pop %v7831
        %v7833 = vmul.f32 %v7822, 1.442695
        %v7834 = vpow.pop %v7833
        %v7835 = vmul.f32 %v7823, 1.442695
        %v7836 = vpow.pop %v7835
        %v7837 = vmul.f32 %v7824, 1.442695
        %v7838 = vpow.pop %v7837
        %v7839 = vmul.f32 %v7825, 1.442695
        %v7840 = vpow.pop %v7839
        %v7841 = vmul.f32 %v7826, 1.442695
        %v7842 = vpow.pop %v7841
        %v7843 = vadd.f32 %v7828, 1.0
        %v7844 = vadd.f32 %v7830, 1.0
        %v7845 = vadd.f32 %v7832, 1.0
        %v7846 = vadd.f32 %v7834, 1.0
        %v7847 = vadd.f32 %v7836, 1.0
        %v7848 = vadd.f32 %v7838, 1.0
        %v7849 = vadd.f32 %v7840, 1.0
        %v7850 = vadd.f32 %v7842, 1.0
        %v7851 = vrcp.pop %v7843
        %v7852 = vmul.f32 1.0, %v7851
        %v7853 = vrcp.pop %v7844
        %v7854 = vmul.f32 1.0, %v7853
        %v7855 = vrcp.pop %v7845
        %v7856 = vmul.f32 1.0, %v7855
        %v7857 = vrcp.pop %v7846
        %v7858 = vmul.f32 1.0, %v7857
        %v7859 = vrcp.pop %v7847
        %v7860 = vmul.f32 1.0, %v7859
        %v7861 = vrcp.pop %v7848
        %v7862 = vmul.f32 1.0, %v7861
        %v7863 = vrcp.pop %v7849
        %v7864 = vmul.f32 1.0, %v7863
        %v7865 = vrcp.pop %v7850
        %v7866 = vmul.f32 1.0, %v7865
        %v7867 = vmul.f32 %v7789, %v7852
        %v7868 = vmul.f32 %v7792, %v7854
        %v7869 = vmul.f32 %v7797, %v7856
        %v7870 = vmul.f32 %v7800, %v7858
        %v7871 = vmul.f32 %v7805, %v7860
        %v7872 = vmul.f32 %v7808, %v7862
        %v7873 = vmul.f32 %v7813, %v7864
        %v7874 = vmul.f32 %v7816, %v7866
        %v7875 = vpack.c.bf16 %v7868, %v7867
        %v7876 = vpack.c.bf16 %v7870, %v7869
        %v7877 = vpack.c.bf16 %v7872, %v7871
        %v7878 = vpack.c.bf16 %v7874, %v7873
        %v7883 = vunpack.c.l.b16 %v7875
        %v7884 = vunpack.c.h.b16 %v7875
        %v7885 = vunpack.c.l.b16 %v7876
        %v7886 = vunpack.c.h.b16 %v7876
        %v7887 = vunpack.c.l.b16 %v7877
        %v7888 = vunpack.c.h.b16 %v7877
        %v7889 = vunpack.c.l.b16 %v7878
        %v7890 = vunpack.c.h.b16 %v7878
        %v7891 = vpack.c.b16 %v7883, %v7883
        %v7892 = vpack.c.b16 %v7884, %v7884
        %v7893 = vpack.c.b16 %v7885, %v7885
        %v7894 = vpack.c.b16 %v7886, %v7886
        %v7895 = vpack.c.b16 %v7887, %v7887
        %v7896 = vpack.c.b16 %v7888, %v7888
        %v7897 = vpack.c.b16 %v7889, %v7889
        %v7898 = vpack.c.b16 %v7890, %v7890
        %7907 = vst [vmem:[%s584] sm:$0xf] %v7891
        %7908 = vst [vmem:[%s584 + $0x4] sm:$0xf] %v7892
        %7909 = vst [vmem:[%s584 + $0x8] sm:$0xf] %v7893
        %7910 = vst [vmem:[%s584 + $0xc] sm:$0xf] %v7894
        %7911 = vst [vmem:[%s584 + $0x10] sm:$0xf] %v7895
        %7912 = vst [vmem:[%s584 + $0x14] sm:$0xf] %v7896
        %7913 = vst [vmem:[%s584 + $0x18] sm:$0xf] %v7897
        %7914 = vst [vmem:[%s584 + $0x1c] sm:$0xf] %v7898
        %s7915 = sand.u32 %s357, 1
        %s7916 = scalar_lea.sflag [#allocation4], %s7915
        %s7917 = sand.u32 %s357, 1
        %s7918 = smul.addr %s7917, 32
        %s7919 = scalar_lea.vmem [#allocation10], %s7918
        // Predicated region
        $region93: #{tpu_custom_call.1} parent=75 // pred_check
          %p7920 = pneg %p367
        $region94: #{tpu_custom_call.1} parent=75 // pred_check_branch
          %7922 = sbr.rel (%p7920) target = $region96
        $region95: #{tpu_custom_call.1} parent=75 // pred_region
          %s7924 = ssub.s32 512, 512
          %7925 = vsyncadd %s7916, %s7924
          %s7926 = smul.addr %s35, 8
          %s7927 = smul.addr %s7926, 64
          %s7928 = scalar_lea.hbm %s14, %s7927
          %s7929 = sshll.u32 %s7919, 4
          %s7930 = int_to_ptr.vmem [resolvable:$true] %s7929
          %7935 = dma.vmem_to_hbm [thread:$0]  %s7930, 512, %s7928, %s7916, 64, 64, 4
        $region96: #{tpu_custom_call.1} parent=75 // pred_fallthru
          _
      $region76: #{tpu_custom_call.1} parent=5 // pred_fallthru
        _
      %p7936 = scmp.le.s32.totalorder 2, %s30
      // Predicated region
      $region97: #{tpu_custom_call.1} parent=5 // pred_check
        %p7937 = pneg %p7936
      $region98: #{tpu_custom_call.1} parent=5 // pred_check_branch
        %7939 = sbr.rel (%p7937) target = $region100
      $region99: #{tpu_custom_call.1} parent=5 // pred_region
        %s7940 = ssub.s32 %s30, 2
        // Predicated region
        $region101: #{tpu_custom_call.1} parent=99 // pred_check
          %p7941 = pneg %p373
        $region102: #{tpu_custom_call.1} parent=99 // pred_check_branch
          %7943 = sbr.rel (%p7941) target = $region104
        $region103: #{tpu_custom_call.1} parent=99 // pred_region
          %s7944 = sand.u32 %s358, 1
          %s7945 = scalar_lea.sflag [#allocation4], %s7944
          %s7946 = sand.u32 %s358, 1
          %s7947 = smul.addr %s7946, 32
          %s7948 = scalar_lea.vmem [#allocation10], %s7947
          %7949 = dma.done %s7945, 512
        $region104: #{tpu_custom_call.1} parent=99 // pred_fallthru
          _
      $region100: #{tpu_custom_call.1} parent=5 // pred_fallthru
        _
    $region6: #{tpu_custom_call.1} parent=1 // loop_footer
      %s34 = sadd.s32 1, %s30
    $region7: #{tpu_custom_call.1} parent=1 // loop_footer_branch
      %29 = sbr.rel target = $region3
    $region8: #{tpu_custom_call.1} parent=1 // loop_exit
      _
    %7950 = vsyncpa [#allocation3], 1
    %s7951 = scalar_lea.sflag [#allocation3], 1
    %7952 = vsyncpa %s7951, 1
    %7953 = vsyncpa [#allocation6], 1
    %s7954 = scalar_lea.sflag [#allocation6], 1
    %7955 = vsyncpa %s7954, 1
    %7956 = vsyncpa [#allocation9], 1
    %7957 = vsyncpa [#allocation4], 1
    %s7958 = scalar_lea.sflag [#allocation4], 1
    %7959 = vsyncpa %s7958, 1

</llo_original>
